<compile_context>
chip_gen: v7x
topology: tpu7x:2x2x1
jax: 0.10.0
libtpu: 0.0.40
codegen_flags: <defaults>
</compile_context>

<pallas_src>
import jax
import jax.numpy as jnp
from jax.experimental import pallas as pl
from jax.experimental.pallas import tpu as pltpu

IN_DIM, H1, H2, H3, OUT_DIM = 4096, 1024, 256, 64, 7


def classifier_kernel(x_ref,
                      w1_ref, b1_ref,
                      w2_ref, b2_ref,
                      w3_ref, b3_ref,
                      w4_ref, b4_ref,
                      out_ref,
                      h1_acc,
                      *, tk):
    k = pl.program_id(0)

    # Initialize the fc1 accumulator with the broadcast bias on the first step
    # (saves a second (B, H1) temporary and keeps the broadcast out of the loop).
    @pl.when(k == 0)
    def _():
        h1_acc[...] = jnp.broadcast_to(b1_ref[...], h1_acc.shape)

    # fc1 partial product: slice the K chunk from the resident x block,
    # (B, tk) @ (tk, H1), bf16 inputs, f32 accumulate on the MXU.
    kstart = pl.multiple_of(k * tk, tk)
    x_chunk = x_ref[:, pl.ds(kstart, tk)].astype(jnp.bfloat16)
    h1_acc[...] += jnp.dot(
        x_chunk,
        w1_ref[...],
        preferred_element_type=jnp.float32,
    )

    # Epilogue on the last reduction step: dropout(identity) -> relu -> fc2..fc4.
    @pl.when(k == pl.num_programs(0) - 1)
    def _():
        h = jnp.maximum(h1_acc[...], 0.0)                       # relu(fc1)

        h = jnp.dot(h.astype(jnp.bfloat16), w2_ref[...],        # fc2 (bf16 weight)
                    preferred_element_type=jnp.float32)
        h = jnp.maximum(h + b2_ref[...], 0.0)                   # relu

        h = jnp.dot(h, w3_ref[...],                             # fc3 (f32)
                    preferred_element_type=jnp.float32)
        h = jnp.maximum(h + b3_ref[...], 0.0)                   # relu

        h = jnp.dot(h, w4_ref[...],                             # fc4 (f32)
                    preferred_element_type=jnp.float32)
        out_ref[...] = (h + b4_ref[...]).astype(out_ref.dtype)


def classifier_forward(x, params, *, tk=2048):
    """x: (B, 4096) float32.

    params: w1 (4096,1024) bf16, w2 (1024,256) bf16, w3 (256,64) f32,
            w4 (64,7) f32, biases b1..b4 as (1, out) f32.
    tk: K-tile for the fc1 reduction. 2048 -> 2 grid steps, 8 MiB of
        double-buffered w1 in VMEM (fits v5e's 16 MiB default scoped limit).
    """
    B = x.shape[0]
    w1, b1 = params["w1"], params["b1"]
    w2, b2 = params["w2"], params["b2"]
    w3, b3 = params["w3"], params["b3"]
    w4, b4 = params["w4"], params["b4"]

    assert IN_DIM % tk == 0
    ksteps = IN_DIM // tk

    def const_spec(shape):
        # Block that never changes across the K grid: fetch once, single buffer.
        return pl.BlockSpec(shape, lambda k: (0,) * len(shape),
                            pipeline_mode=pl.Buffered(1))

    flops = 2 * B * (IN_DIM * H1 + H1 * H2 + H2 * H3 + H3 * OUT_DIM)
    bytes_accessed = int(
        x.size * x.dtype.itemsize
        + sum(int(p.size * p.dtype.itemsize)
              for p in (w1, b1, w2, b2, w3, b3, w4, b4))
        + B * OUT_DIM * 4
    )

    import functools
    kernel = functools.partial(classifier_kernel, tk=tk)

    out = pl.pallas_call(
        kernel,
        out_shape=jax.ShapeDtypeStruct((B, OUT_DIM), jnp.float32),
        grid_spec=pltpu.PrefetchScalarGridSpec(
            num_scalar_prefetch=0,
            grid=(ksteps,),
            in_specs=[
                # x: one resident full block (128 KiB at B=8), sliced in-kernel.
                const_spec(x.shape),
                # w1: K-tiled bf16 stream, double-buffered (default Buffered(2)).
                pl.BlockSpec((tk, H1), lambda k: (k, 0)),
                const_spec(b1.shape),
                const_spec(w2.shape), const_spec(b2.shape),
                const_spec(w3.shape), const_spec(b3.shape),
                const_spec(w4.shape), const_spec(b4.shape),
            ],
            out_specs=pl.BlockSpec((B, OUT_DIM), lambda k: (0, 0)),
            scratch_shapes=[pltpu.VMEM((B, H1), jnp.float32)],
        ),
        compiler_params=pltpu.CompilerParams(
            dimension_semantics=("arbitrary",),   # K reduction axis
        ),
        cost_estimate=pl.CostEstimate(
            flops=flops, transcendentals=0, bytes_accessed=bytes_accessed),
    )(x, w1, b1, w2, b2, w3, b3, w4, b4)
    return out


def init_params(key):
    dims = [(IN_DIM, H1), (H1, H2), (H2, H3), (H3, OUT_DIM)]
    # fc1/fc2 weights in bf16 (bandwidth-dominant), fc3/fc4 + biases in f32.
    w_dtypes = [jnp.bfloat16, jnp.bfloat16, jnp.float32, jnp.float32]
    params = {}
    for idx, ((fan_in, fan_out), wdt) in enumerate(zip(dims, w_dtypes), start=1):
        key, kw, kb = jax.random.split(key, 3)
        bound = 1.0 / jnp.sqrt(fan_in)
        w = jax.random.uniform(kw, (fan_in, fan_out), jnp.float32,
                               minval=-bound, maxval=bound)
        params[f"w{idx}"] = w.astype(wdt)
        params[f"b{idx}"] = jax.random.uniform(kb, (1, fan_out), jnp.float32,
                                               minval=-bound, maxval=bound)
    return params


def reference_forward(x, params):
    # Mirrors the kernel's numerics: bf16-quantized x / fc2-activation and
    # bf16 w1/w2 (exact products, f32 accumulate), f32 for fc3/fc4.
    f32 = jnp.float32
    xq = x.astype(jnp.bfloat16).astype(f32)
    h = jnp.maximum(xq @ params["w1"].astype(f32) + params["b1"], 0.0)
    hq = h.astype(jnp.bfloat16).astype(f32)
    h = jnp.maximum(hq @ params["w2"].astype(f32) + params["b2"], 0.0)
    h = jnp.maximum(h @ params["w3"] + params["b3"], 0.0)
    return h @ params["w4"] + params["b4"]


if __name__ == "__main__":
    key = jax.random.PRNGKey(0)
    key, kx = jax.random.split(key)
    B = 8
    x = jax.random.normal(kx, (B, IN_DIM), jnp.float32)
    params = init_params(key)

    out = classifier_forward(x, params)
    out = jax.block_until_ready(out)

    ref = reference_forward(x, params)
    assert out.shape == (B, OUT_DIM)
    assert jnp.allclose(out, ref, atol=2e-3, rtol=2e-3), "mismatch vs reference"
    print("KERNEL_OK")
</pallas_src>

<mosaic_0001>
module attributes {stable_mosaic.version = 11 : i64} {
  func.func @classifier_kernel(%arg0: i32, %arg1: memref<8x4096xf32, #tpu.memory_space<vmem>>, %arg2: memref<2048x1024xbf16, #tpu.memory_space<vmem>>, %arg3: memref<1x1024xf32, #tpu.memory_space<vmem>>, %arg4: memref<1024x256xbf16, #tpu.memory_space<vmem>>, %arg5: memref<1x256xf32, #tpu.memory_space<vmem>>, %arg6: memref<256x64xf32, #tpu.memory_space<vmem>>, %arg7: memref<1x64xf32, #tpu.memory_space<vmem>>, %arg8: memref<64x7xf32, #tpu.memory_space<vmem>>, %arg9: memref<1x7xf32, #tpu.memory_space<vmem>>, %arg10: memref<8x7xf32, #tpu.memory_space<vmem>>, %arg11: memref<8x1024xf32, #tpu.memory_space<vmem>>) attributes {dimension_semantics = [#tpu.dimension_semantics<arbitrary>], iteration_bounds = array<i64: 2>, scalar_prefetch = 0 : i64, scratch_operands = 1 : i64, tpu.core_type = #tpu.core_type<tc>, window_params = [{pipeline_mode = #tpu.pipeline_mode<synchronous>, transform_indices = @transform_0, window_bounds = array<i64: 8, 4096>}, {transform_indices = @transform_1, window_bounds = array<i64: 2048, 1024>}, {pipeline_mode = #tpu.pipeline_mode<synchronous>, transform_indices = @transform_2, window_bounds = array<i64: 1, 1024>}, {pipeline_mode = #tpu.pipeline_mode<synchronous>, transform_indices = @transform_3, window_bounds = array<i64: 1024, 256>}, {pipeline_mode = #tpu.pipeline_mode<synchronous>, transform_indices = @transform_4, window_bounds = array<i64: 1, 256>}, {pipeline_mode = #tpu.pipeline_mode<synchronous>, transform_indices = @transform_5, window_bounds = array<i64: 256, 64>}, {pipeline_mode = #tpu.pipeline_mode<synchronous>, transform_indices = @transform_6, window_bounds = array<i64: 1, 64>}, {pipeline_mode = #tpu.pipeline_mode<synchronous>, transform_indices = @transform_7, window_bounds = array<i64: 64, 7>}, {pipeline_mode = #tpu.pipeline_mode<synchronous>, transform_indices = @transform_8, window_bounds = array<i64: 1, 7>}, {pipeline_mode = #tpu.pipeline_mode<synchronous>, transform_indices = @transform_9, window_bounds = array<i64: 8, 7>}]} {
    %c0_i32 = arith.constant 0 : i32
    %0 = arith.cmpi eq, %arg0, %c0_i32 : i32
    %1 = arith.extui %0 : i1 to i32
    %c0_i32_0 = arith.constant 0 : i32
    %2 = arith.cmpi ne, %1, %c0_i32_0 : i32
    scf.if %2 {
      %c0_8 = arith.constant 0 : index
      %c0_9 = arith.constant 0 : index
      %16 = vector.load %arg3[%c0_8, %c0_9] : memref<1x1024xf32, #tpu.memory_space<vmem>>, vector<1x1024xf32>
      %17 = vector.shape_cast %16 : vector<1x1024xf32> to vector<1x1024xf32>
      %18 = vector.broadcast %17 : vector<1x1024xf32> to vector<8x1024xf32>
      %c0_10 = arith.constant 0 : index
      %c0_11 = arith.constant 0 : index
      %19 = vector.load %arg11[%c0_10, %c0_11] : memref<8x1024xf32, #tpu.memory_space<vmem>>, vector<8x1024xf32>
      tpu.vector_store %arg11[%c0_10, %c0_11], %18 {strides = array<i32>} : memref<8x1024xf32, #tpu.memory_space<vmem>>, vector<8x1024xf32>,
    } else {
    }
    %c2048_i32 = arith.constant 2048 : i32
    %3 = arith.muli %arg0, %c2048_i32 : i32
    %4 = tpu.assume_multiple %3, 2048 : i32
    %c0 = arith.constant 0 : index
    %5 = arith.index_cast %4 : i32 to index
    %6 = vector.load %arg1[%c0, %5] : memref<8x4096xf32, #tpu.memory_space<vmem>>, vector<8x2048xf32>
    %7 = arith.truncf %6 : vector<8x2048xf32> to vector<8x2048xbf16>
    %c0_1 = arith.constant 0 : index
    %c0_2 = arith.constant 0 : index
    %8 = vector.load %arg11[%c0_1, %c0_2] : memref<8x1024xf32, #tpu.memory_space<vmem>>, vector<8x1024xf32>
    %c0_3 = arith.constant 0 : index
    %c0_4 = arith.constant 0 : index
    %9 = vector.load %arg2[%c0_3, %c0_4] : memref<2048x1024xbf16, #tpu.memory_space<vmem>>, vector<2048x1024xbf16>
    %cst = arith.constant dense<0.000000e+00> : vector<8x1024xf32>
    %10 = tpu.matmul %7, %9, %cst {dimension_numbers = #tpu.dot_dimension_numbers<[1], [0], [0], [1], [0, 0, 1, 1], [], []>} : vector<8x2048xbf16>, vector<2048x1024xbf16>, vector<8x1024xf32> -> vector<8x1024xf32>
    %11 = arith.addf %8, %10 : vector<8x1024xf32>
    %c0_5 = arith.constant 0 : index
    %c0_6 = arith.constant 0 : index
    %12 = vector.load %arg11[%c0_5, %c0_6] : memref<8x1024xf32, #tpu.memory_space<vmem>>, vector<8x1024xf32>
    tpu.vector_store %arg11[%c0_5, %c0_6], %11 {strides = array<i32>} : memref<8x1024xf32, #tpu.memory_space<vmem>>, vector<8x1024xf32>,
    %c1_i32 = arith.constant 1 : i32
    %13 = arith.cmpi eq, %arg0, %c1_i32 : i32
    %14 = arith.extui %13 : i1 to i32
    %c0_i32_7 = arith.constant 0 : i32
    %15 = arith.cmpi ne, %14, %c0_i32_7 : i32
    scf.if %15 {
      %c0_8 = arith.constant 0 : index
      %c0_9 = arith.constant 0 : index
      %16 = vector.load %arg11[%c0_8, %c0_9] : memref<8x1024xf32, #tpu.memory_space<vmem>>, vector<8x1024xf32>
      %cst_10 = arith.constant 0.000000e+00 : f32
      %17 = vector.broadcast %cst_10 : f32 to vector<8x1024xf32>
      %18 = arith.maximumf %16, %17 : vector<8x1024xf32>
      %19 = arith.truncf %18 : vector<8x1024xf32> to vector<8x1024xbf16>
      %c0_11 = arith.constant 0 : index
      %c0_12 = arith.constant 0 : index
      %20 = vector.load %arg4[%c0_11, %c0_12] : memref<1024x256xbf16, #tpu.memory_space<vmem>>, vector<1024x256xbf16>
      %cst_13 = arith.constant dense<0.000000e+00> : vector<8x256xf32>
      %21 = tpu.matmul %19, %20, %cst_13 {dimension_numbers = #tpu.dot_dimension_numbers<[1], [0], [0], [1], [0, 0, 1, 1], [], []>} : vector<8x1024xbf16>, vector<1024x256xbf16>, vector<8x256xf32> -> vector<8x256xf32>
      %c0_14 = arith.constant 0 : index
      %c0_15 = arith.constant 0 : index
      %22 = vector.load %arg5[%c0_14, %c0_15] : memref<1x256xf32, #tpu.memory_space<vmem>>, vector<1x256xf32>
      %23 = vector.broadcast %22 : vector<1x256xf32> to vector<8x256xf32>
      %24 = arith.addf %21, %23 : vector<8x256xf32>
      %cst_16 = arith.constant 0.000000e+00 : f32
      %25 = vector.broadcast %cst_16 : f32 to vector<8x256xf32>
      %26 = arith.maximumf %24, %25 : vector<8x256xf32>
      %c0_17 = arith.constant 0 : index
      %c0_18 = arith.constant 0 : index
      %27 = vector.load %arg6[%c0_17, %c0_18] : memref<256x64xf32, #tpu.memory_space<vmem>>, vector<256x64xf32>
      %cst_19 = arith.constant dense<0.000000e+00> : vector<8x64xf32>
      %28 = tpu.matmul %26, %27, %cst_19 {dimension_numbers = #tpu.dot_dimension_numbers<[1], [0], [0], [1], [0, 0, 1, 1], [], []>} : vector<8x256xf32>, vector<256x64xf32>, vector<8x64xf32> -> vector<8x64xf32>
      %c0_20 = arith.constant 0 : index
      %c0_21 = arith.constant 0 : index
      %29 = vector.load %arg7[%c0_20, %c0_21] : memref<1x64xf32, #tpu.memory_space<vmem>>, vector<1x64xf32>
      %30 = vector.broadcast %29 : vector<1x64xf32> to vector<8x64xf32>
      %31 = arith.addf %28, %30 : vector<8x64xf32>
      %cst_22 = arith.constant 0.000000e+00 : f32
      %32 = vector.broadcast %cst_22 : f32 to vector<8x64xf32>
      %33 = arith.maximumf %31, %32 : vector<8x64xf32>
      %c0_23 = arith.constant 0 : index
      %c0_24 = arith.constant 0 : index
      %34 = vector.load %arg8[%c0_23, %c0_24] : memref<64x7xf32, #tpu.memory_space<vmem>>, vector<64x7xf32>
      %cst_25 = arith.constant dense<0.000000e+00> : vector<8x7xf32>
      %35 = tpu.matmul %33, %34, %cst_25 {dimension_numbers = #tpu.dot_dimension_numbers<[1], [0], [0], [1], [0, 0, 1, 1], [], []>} : vector<8x64xf32>, vector<64x7xf32>, vector<8x7xf32> -> vector<8x7xf32>
      %c0_26 = arith.constant 0 : index
      %c0_27 = arith.constant 0 : index
      %36 = vector.load %arg9[%c0_26, %c0_27] : memref<1x7xf32, #tpu.memory_space<vmem>>, vector<1x7xf32>
      %37 = vector.broadcast %36 : vector<1x7xf32> to vector<8x7xf32>
      %38 = arith.addf %35, %37 : vector<8x7xf32>
      %c0_28 = arith.constant 0 : index
      %c0_29 = arith.constant 0 : index
      %39 = vector.load %arg10[%c0_28, %c0_29] : memref<8x7xf32, #tpu.memory_space<vmem>>, vector<8x7xf32>
      tpu.vector_store %arg10[%c0_28, %c0_29], %38 {strides = array<i32>} : memref<8x7xf32, #tpu.memory_space<vmem>>, vector<8x7xf32>,
    } else {
    }
    return
  }
  func.func @transform_0(%arg0: i32) -> (i32, i32) {
    %c0_i32 = arith.constant 0 : i32
    %c0_i32_0 = arith.constant 0 : i32
    %c0_i32_1 = arith.constant 0 : i32
    return %c0_i32, %c0_i32_0 : i32, i32
  }
  func.func @transform_1(%arg0: i32) -> (i32, i32) {
    %c0_i32 = arith.constant 0 : i32
    %c0_i32_0 = arith.constant 0 : i32
    return %arg0, %c0_i32 : i32, i32
  }
  func.func @transform_2(%arg0: i32) -> (i32, i32) {
    %c0_i32 = arith.constant 0 : i32
    %c0_i32_0 = arith.constant 0 : i32
    %c0_i32_1 = arith.constant 0 : i32
    return %c0_i32, %c0_i32_0 : i32, i32
  }
  func.func @transform_3(%arg0: i32) -> (i32, i32) {
    %c0_i32 = arith.constant 0 : i32
    %c0_i32_0 = arith.constant 0 : i32
    %c0_i32_1 = arith.constant 0 : i32
    return %c0_i32, %c0_i32_0 : i32, i32
  }
  func.func @transform_4(%arg0: i32) -> (i32, i32) {
    %c0_i32 = arith.constant 0 : i32
    %c0_i32_0 = arith.constant 0 : i32
    %c0_i32_1 = arith.constant 0 : i32
    return %c0_i32, %c0_i32_0 : i32, i32
  }
  func.func @transform_5(%arg0: i32) -> (i32, i32) {
    %c0_i32 = arith.constant 0 : i32
    %c0_i32_0 = arith.constant 0 : i32
    %c0_i32_1 = arith.constant 0 : i32
    return %c0_i32, %c0_i32_0 : i32, i32
  }
  func.func @transform_6(%arg0: i32) -> (i32, i32) {
    %c0_i32 = arith.constant 0 : i32
    %c0_i32_0 = arith.constant 0 : i32
    %c0_i32_1 = arith.constant 0 : i32
    return %c0_i32, %c0_i32_0 : i32, i32
  }
  func.func @transform_7(%arg0: i32) -> (i32, i32) {
    %c0_i32 = arith.constant 0 : i32
    %c0_i32_0 = arith.constant 0 : i32
    %c0_i32_1 = arith.constant 0 : i32
    return %c0_i32, %c0_i32_0 : i32, i32
  }
  func.func @transform_8(%arg0: i32) -> (i32, i32) {
    %c0_i32 = arith.constant 0 : i32
    %c0_i32_0 = arith.constant 0 : i32
    %c0_i32_1 = arith.constant 0 : i32
    return %c0_i32, %c0_i32_0 : i32, i32
  }
  func.func @transform_9(%arg0: i32) -> (i32, i32) {
    %c0_i32 = arith.constant 0 : i32
    %c0_i32_0 = arith.constant 0 : i32
    %c0_i32_1 = arith.constant 0 : i32
    return %c0_i32, %c0_i32_0 : i32, i32
  }
}

</mosaic_0001>

<llo_original>
// kernel: tpu_custom_call.1
$region0: #{tpu_custom_call.1}
  #allocation0 [shape = 'u32[]', space=smem, size = 0x4, offset = 0x4, fixed_abs, tag = 'smem constant byte address 0x4 - core index']
  #allocation1 [shape = 'u32[144,128]{1,0:T(1,128)}', space=vmem, size = 0x12000, scoped, tag = 'internal scratch']
  #allocation2 [shape = 'f32[8,1024]{1,0:T(8,128)}', space=vmem, size = 0x8000, scoped, tag = 'scratch operand']
  %s0 = inlined_call_operand.hbm [shape: f32[8,4096], index: 0, kind: input, shape index: {}]
  %s1 = inlined_call_operand.hbm [shape: bf16[4096,1024], index: 1, kind: input, shape index: {}]
  %s2 = inlined_call_operand.hbm [shape: f32[1,1024], index: 2, kind: input, shape index: {}]
  %s3 = inlined_call_operand.hbm [shape: bf16[1024,256], index: 3, kind: input, shape index: {}]
  %s4 = inlined_call_operand.hbm [shape: f32[1,256], index: 4, kind: input, shape index: {}]
  %s5 = inlined_call_operand.vmem [shape: f32[256,64], index: 5, kind: input, shape index: {}]
  %s6 = inlined_call_operand.hbm [shape: f32[1,64], index: 6, kind: input, shape index: {}]
  %s7 = inlined_call_operand.vmem [shape: f32[64,7], index: 7, kind: input, shape index: {}]
  %s8 = inlined_call_operand.hbm [shape: f32[1,7], index: 8, kind: input, shape index: {}]
  %s9 = inlined_call_operand.hbm [shape: f32[8,7], index: 9, kind: output, shape index: {}]
  %s10 = sld [smem:[#allocation0]]
  $region105: #{tpu_custom_call.1} parent=0
    _
  %s12 = ssub.s32 1, %s10
  %s13 = scalar_select 0, %s12, %s10
  $region1: #{tpu_custom_call.1} parent=0
    #allocation3 [shape = 'u8[131072]{0}', space=vmem, size = 0x20000, scoped, tag = 'input window, operand 0, single buffered']
    #allocation4 [shape = 's32[2]{0}', space=sflag, size = 0x8, scoped, tag = 'scoped memory for tpu_custom_call.1']
    #allocation5 [shape = 's32[2]{0}', space=sflag, size = 0x8, scoped, tag = 'scoped memory for tpu_custom_call.1']
    #allocation6 [shape = 'u8[8388608]{0}', space=vmem, size = 0x800000, scoped, tag = 'input window, operand 1']
    #allocation7 [shape = 's32[2]{0}', space=sflag, size = 0x8, scoped, tag = 'scoped memory for tpu_custom_call.1']
    #allocation8 [shape = 'u8[4096]{0}', space=vmem, size = 0x1000, scoped, tag = 'input window, operand 2, single buffered']
    #allocation9 [shape = 'u8[524288]{0}', space=vmem, size = 0x80000, scoped, tag = 'input window, operand 3, single buffered']
    #allocation10 [shape = 's32[1]{0}', space=sflag, size = 0x4, scoped, tag = 'scoped memory for tpu_custom_call.1']
    #allocation11 [shape = 'u8[1024]{0}', space=vmem, size = 0x400, scoped, tag = 'input window, operand 4, single buffered']
    #allocation12 [shape = 'u8[512]{0}', space=vmem, size = 0x400, scoped, tag = 'input window, operand 6, single buffered']
    #allocation13 [shape = 's32[1]{0}', space=sflag, size = 0x4, scoped, tag = 'scoped memory for tpu_custom_call.1']
    #allocation14 [shape = 'u8[512]{0}', space=vmem, size = 0x400, scoped, tag = 'input window, operand 8, single buffered']
    #allocation15 [shape = 'u8[4096]{0}', space=vmem, size = 0x1000, scoped, tag = 'output window, operand 0, single buffered']
    %14 = vsyncpa [#allocation4], 0
    %15 = vsyncpa [#allocation7], 0
    %s16 = scalar_lea.sflag [#allocation7], 1
    %17 = vsyncpa %s16, 0
    %18 = vsyncpa [#allocation10], 0
    %19 = vsyncpa [#allocation13], 0
    %20 = vsyncpa [#allocation5], 0
    loop: start=0, step=1, limit=4
    $region2: #{tpu_custom_call.1} parent=1 // loop_pre_header
      _
    $region3: #{tpu_custom_call.1} parent=1 // loop_header
      %s22 = sphi 0, %s26
      %p23 = scmp.ge.s32.totalorder %s22, 4
      %s30 = sphi 0, %s30
      %s32 = sphi 0, %s30
      %s33 = sphi 0, %s32
      %s47 = sphi 0, %s33
      %s53 = sphi 0, %s55
      %s56 = sphi 0, %s53
      %s57 = sphi 0, %s56
      %s73 = sphi 0, %s57
      %s77 = sphi 0, %s77
      %s79 = sphi 0, %s77
      %s80 = sphi 0, %s79
      %s94 = sphi 0, %s80
      %s98 = sphi 0, %s98
      %s100 = sphi 0, %s98
      %s101 = sphi 0, %s100
      %s115 = sphi 0, %s101
      %s119 = sphi 0, %s119
      %s121 = sphi 0, %s119
      %s122 = sphi 0, %s121
      %s136 = sphi 0, %s122
      %s140 = sphi 0, %s140
      %s142 = sphi 0, %s140
      %s143 = sphi 0, %s142
      %s157 = sphi 0, %s143
      %s161 = sphi 0, %s161
      %s163 = sphi 0, %s161
      %s164 = sphi 0, %s163
      %s178 = sphi 0, %s164
      %s182 = sphi 0, %s182
      %s184 = sphi 0, %s182
      %s185 = sphi 0, %s184
      %s199 = sphi 0, %s185
      %s203 = sphi 0, %s203
      %s205 = sphi 0, %s203
      %s206 = sphi 0, %s205
      %s220 = sphi 0, %s206
      %s224 = sphi 0, %s224
      %s226 = sphi 0, %s224
      %s227 = sphi 0, %s226
      %s241 = sphi 0, %s227
    $region4: #{tpu_custom_call.1} parent=1 // loop_header_branch
      %25 = sbr.rel (%p23) target = $region8
    $region5: #{tpu_custom_call.1} parent=1 // loop_body
      %s27 = ssub.s32 %s22, 1
      %s28 = ssub.s32 %s22, 2
      %s29 = sadd.s32 %s22, 1
      %s31 = sadd.s32 %s30, 1
      %p34 = scmp.eq.s32.totalorder %s22, 1
      %p35 = scmp.ne.s32.totalorder %s30, %s32
      %p36 = scmp.eq.s32.totalorder %s22, 0
      %p37 = por %p35, %p36
      %p38 = scmp.ne.s32.totalorder %s30, %s32
      %p39 = scmp.eq.s32.totalorder %s27, 1
      %p40 = por %p38, %p39
      %p41 = scmp.ne.s32.totalorder %s32, %s33
      %p42 = scmp.eq.s32.totalorder %s27, 0
      %p43 = por %p41, %p42
      %p44 = scmp.ne.s32.totalorder %s32, %s33
      %p45 = scmp.eq.s32.totalorder %s28, 1
      %p46 = por %p44, %p45
      %p48 = scmp.ne.s32.totalorder %s33, %s47
      %p49 = scmp.eq.s32.totalorder %s28, 0
      %p50 = por %p48, %p49
      %s51 = ssub.s32 %s22, %s29
      %p52 = scmp.eq.s32.totalorder %s51, 0
      %s54 = sadd.s32 %s53, 1
      %s55 = scalar_select %p52, %s53, %s54
      %p58 = pneg %p52
      %p59 = scmp.eq.s32.totalorder %s22, 1
      %p60 = por %p58, %p59
      %p61 = scmp.ne.s32.totalorder %s53, %s56
      %p62 = scmp.eq.s32.totalorder %s22, 0
      %p63 = por %p61, %p62
      %p64 = scmp.ne.s32.totalorder %s53, %s56
      %p65 = scmp.eq.s32.totalorder %s27, 1
      %p66 = por %p64, %p65
      %p67 = scmp.ne.s32.totalorder %s56, %s57
      %p68 = scmp.eq.s32.totalorder %s27, 0
      %p69 = por %p67, %p68
      %p70 = scmp.ne.s32.totalorder %s56, %s57
      %p71 = scmp.eq.s32.totalorder %s28, 1
      %p72 = por %p70, %p71
      %p74 = scmp.ne.s32.totalorder %s57, %s73
      %p75 = scmp.eq.s32.totalorder %s28, 0
      %p76 = por %p74, %p75
      %s78 = sadd.s32 %s77, 1
      %p81 = scmp.eq.s32.totalorder %s22, 1
      %p82 = scmp.ne.s32.totalorder %s77, %s79
      %p83 = scmp.eq.s32.totalorder %s22, 0
      %p84 = por %p82, %p83
      %p85 = scmp.ne.s32.totalorder %s77, %s79
      %p86 = scmp.eq.s32.totalorder %s27, 1
      %p87 = por %p85, %p86
      %p88 = scmp.ne.s32.totalorder %s79, %s80
      %p89 = scmp.eq.s32.totalorder %s27, 0
      %p90 = por %p88, %p89
      %p91 = scmp.ne.s32.totalorder %s79, %s80
      %p92 = scmp.eq.s32.totalorder %s28, 1
      %p93 = por %p91, %p92
      %p95 = scmp.ne.s32.totalorder %s80, %s94
      %p96 = scmp.eq.s32.totalorder %s28, 0
      %p97 = por %p95, %p96
      %s99 = sadd.s32 %s98, 1
      %p102 = scmp.eq.s32.totalorder %s22, 1
      %p103 = scmp.ne.s32.totalorder %s98, %s100
      %p104 = scmp.eq.s32.totalorder %s22, 0
      %p105 = por %p103, %p104
      %p106 = scmp.ne.s32.totalorder %s98, %s100
      %p107 = scmp.eq.s32.totalorder %s27, 1
      %p108 = por %p106, %p107
      %p109 = scmp.ne.s32.totalorder %s100, %s101
      %p110 = scmp.eq.s32.totalorder %s27, 0
      %p111 = por %p109, %p110
      %p112 = scmp.ne.s32.totalorder %s100, %s101
      %p113 = scmp.eq.s32.totalorder %s28, 1
      %p114 = por %p112, %p113
      %p116 = scmp.ne.s32.totalorder %s101, %s115
      %p117 = scmp.eq.s32.totalorder %s28, 0
      %p118 = por %p116, %p117
      %s120 = sadd.s32 %s119, 1
      %p123 = scmp.eq.s32.totalorder %s22, 1
      %p124 = scmp.ne.s32.totalorder %s119, %s121
      %p125 = scmp.eq.s32.totalorder %s22, 0
      %p126 = por %p124, %p125
      %p127 = scmp.ne.s32.totalorder %s119, %s121
      %p128 = scmp.eq.s32.totalorder %s27, 1
      %p129 = por %p127, %p128
      %p130 = scmp.ne.s32.totalorder %s121, %s122
      %p131 = scmp.eq.s32.totalorder %s27, 0
      %p132 = por %p130, %p131
      %p133 = scmp.ne.s32.totalorder %s121, %s122
      %p134 = scmp.eq.s32.totalorder %s28, 1
      %p135 = por %p133, %p134
      %p137 = scmp.ne.s32.totalorder %s122, %s136
      %p138 = scmp.eq.s32.totalorder %s28, 0
      %p139 = por %p137, %p138
      %s141 = sadd.s32 %s140, 1
      %p144 = scmp.eq.s32.totalorder %s22, 1
      %p145 = scmp.ne.s32.totalorder %s140, %s142
      %p146 = scmp.eq.s32.totalorder %s22, 0
      %p147 = por %p145, %p146
      %p148 = scmp.ne.s32.totalorder %s140, %s142
      %p149 = scmp.eq.s32.totalorder %s27, 1
      %p150 = por %p148, %p149
      %p151 = scmp.ne.s32.totalorder %s142, %s143
      %p152 = scmp.eq.s32.totalorder %s27, 0
      %p153 = por %p151, %p152
      %p154 = scmp.ne.s32.totalorder %s142, %s143
      %p155 = scmp.eq.s32.totalorder %s28, 1
      %p156 = por %p154, %p155
      %p158 = scmp.ne.s32.totalorder %s143, %s157
      %p159 = scmp.eq.s32.totalorder %s28, 0
      %p160 = por %p158, %p159
      %s162 = sadd.s32 %s161, 1
      %p165 = scmp.eq.s32.totalorder %s22, 1
      %p166 = scmp.ne.s32.totalorder %s161, %s163
      %p167 = scmp.eq.s32.totalorder %s22, 0
      %p168 = por %p166, %p167
      %p169 = scmp.ne.s32.totalorder %s161, %s163
      %p170 = scmp.eq.s32.totalorder %s27, 1
      %p171 = por %p169, %p170
      %p172 = scmp.ne.s32.totalorder %s163, %s164
      %p173 = scmp.eq.s32.totalorder %s27, 0
      %p174 = por %p172, %p173
      %p175 = scmp.ne.s32.totalorder %s163, %s164
      %p176 = scmp.eq.s32.totalorder %s28, 1
      %p177 = por %p175, %p176
      %p179 = scmp.ne.s32.totalorder %s164, %s178
      %p180 = scmp.eq.s32.totalorder %s28, 0
      %p181 = por %p179, %p180
      %s183 = sadd.s32 %s182, 1
      %p186 = scmp.eq.s32.totalorder %s22, 1
      %p187 = scmp.ne.s32.totalorder %s182, %s184
      %p188 = scmp.eq.s32.totalorder %s22, 0
      %p189 = por %p187, %p188
      %p190 = scmp.ne.s32.totalorder %s182, %s184
      %p191 = scmp.eq.s32.totalorder %s27, 1
      %p192 = por %p190, %p191
      %p193 = scmp.ne.s32.totalorder %s184, %s185
      %p194 = scmp.eq.s32.totalorder %s27, 0
      %p195 = por %p193, %p194
      %p196 = scmp.ne.s32.totalorder %s184, %s185
      %p197 = scmp.eq.s32.totalorder %s28, 1
      %p198 = por %p196, %p197
      %p200 = scmp.ne.s32.totalorder %s185, %s199
      %p201 = scmp.eq.s32.totalorder %s28, 0
      %p202 = por %p200, %p201
      %s204 = sadd.s32 %s203, 1
      %p207 = scmp.eq.s32.totalorder %s22, 1
      %p208 = scmp.ne.s32.totalorder %s203, %s205
      %p209 = scmp.eq.s32.totalorder %s22, 0
      %p210 = por %p208, %p209
      %p211 = scmp.ne.s32.totalorder %s203, %s205
      %p212 = scmp.eq.s32.totalorder %s27, 1
      %p213 = por %p211, %p212
      %p214 = scmp.ne.s32.totalorder %s205, %s206
      %p215 = scmp.eq.s32.totalorder %s27, 0
      %p216 = por %p214, %p215
      %p217 = scmp.ne.s32.totalorder %s205, %s206
      %p218 = scmp.eq.s32.totalorder %s28, 1
      %p219 = por %p217, %p218
      %p221 = scmp.ne.s32.totalorder %s206, %s220
      %p222 = scmp.eq.s32.totalorder %s28, 0
      %p223 = por %p221, %p222
      %s225 = sadd.s32 %s224, 1
      %p228 = scmp.eq.s32.totalorder %s22, 1
      %p229 = scmp.ne.s32.totalorder %s224, %s226
      %p230 = scmp.eq.s32.totalorder %s22, 0
      %p231 = por %p229, %p230
      %p232 = scmp.ne.s32.totalorder %s224, %s226
      %p233 = scmp.eq.s32.totalorder %s27, 1
      %p234 = por %p232, %p233
      %p235 = scmp.ne.s32.totalorder %s226, %s227
      %p236 = scmp.eq.s32.totalorder %s27, 0
      %p237 = por %p235, %p236
      %p238 = scmp.ne.s32.totalorder %s226, %s227
      %p239 = scmp.eq.s32.totalorder %s28, 1
      %p240 = por %p238, %p239
      %p242 = scmp.ne.s32.totalorder %s227, %s241
      %p243 = scmp.eq.s32.totalorder %s28, 0
      %p244 = por %p242, %p243
      %p245 = scmp.le.s32.totalorder 1, %s22
      %p246 = scmp.lt.s32.totalorder %s22, 3
      %p247 = pnand %p245, %p246
      %p248 = pneg %p247
      // Predicated region
      $region9: #{tpu_custom_call.1} parent=5 // pred_check
        _
      $region10: #{tpu_custom_call.1} parent=5 // pred_check_branch
        %250 = sbr.rel (%p247) target = $region12
      $region11: #{tpu_custom_call.1} parent=5 // pred_region
        %s251 = ssub.s32 %s22, 1
        // Predicated region
        $region13: #{tpu_custom_call.1} parent=11 // pred_check
          %p252 = pneg %p43
        $region14: #{tpu_custom_call.1} parent=11 // pred_check_branch
          %254 = sbr.rel (%p252) target = $region16
        $region15: #{tpu_custom_call.1} parent=11 // pred_region
          %s256 = ssub.s32 4096, 4096
          %257 = vsyncadd [#allocation4], %s256
          %s259 = sshll.u32 [#allocation3], 4
          %s260 = int_to_ptr.vmem [resolvable:$true] %s259
          %262 = dma.hbm_to_vmem [thread:$0]  %s0, 4096, %s260, [#allocation4]
        $region16: #{tpu_custom_call.1} parent=11 // pred_fallthru
          _
        // Predicated region
        $region17: #{tpu_custom_call.1} parent=11 // pred_check
          %p263 = pneg %p90
        $region18: #{tpu_custom_call.1} parent=11 // pred_check_branch
          %265 = sbr.rel (%p263) target = $region20
        $region19: #{tpu_custom_call.1} parent=11 // pred_region
          %s267 = ssub.s32 128, 128
          %268 = vsyncadd [#allocation7], %s267
          %s270 = sshll.u32 [#allocation8], 4
          %s271 = int_to_ptr.vmem [resolvable:$true] %s270
          %273 = dma.hbm_to_vmem [thread:$0]  %s2, 128, %s271, [#allocation7]
        $region20: #{tpu_custom_call.1} parent=11 // pred_fallthru
          _
        // Predicated region
        $region21: #{tpu_custom_call.1} parent=11 // pred_check
          %p274 = pneg %p111
        $region22: #{tpu_custom_call.1} parent=11 // pred_check_branch
          %276 = sbr.rel (%p274) target = $region24
        $region23: #{tpu_custom_call.1} parent=11 // pred_region
          %s278 = ssub.s32 16384, 16384
          %279 = vsyncadd [#allocation10], %s278
          %s280 = sshll.u32 [#allocation9], 4
          %s281 = int_to_ptr.vmem [resolvable:$true] %s280
          %286 = dma.hbm_to_vmem [thread:$0]  %s3, 16384, %s281, [#allocation10], 128, 128, 8
        $region24: #{tpu_custom_call.1} parent=11 // pred_fallthru
          _
        // Predicated region
        $region25: #{tpu_custom_call.1} parent=11 // pred_check
          %p287 = pneg %p132
        $region26: #{tpu_custom_call.1} parent=11 // pred_check_branch
          %289 = sbr.rel (%p287) target = $region28
        $region27: #{tpu_custom_call.1} parent=11 // pred_region
          %s291 = ssub.s32 32, 32
          %292 = vsyncadd [#allocation10], %s291
          %s294 = sshll.u32 [#allocation11], 4
          %s295 = int_to_ptr.vmem [resolvable:$true] %s294
          %297 = dma.hbm_to_vmem [thread:$0]  %s4, 32, %s295, [#allocation10]
        $region28: #{tpu_custom_call.1} parent=11 // pred_fallthru
          _
        // Predicated region
        $region29: #{tpu_custom_call.1} parent=11 // pred_check
          %p298 = pneg %p153
        $region30: #{tpu_custom_call.1} parent=11 // pred_check_branch
          %300 = sbr.rel (%p298) target = $region32
        $region31: #{tpu_custom_call.1} parent=11 // pred_region
          _
        $region32: #{tpu_custom_call.1} parent=11 // pred_fallthru
          _
        // Predicated region
        $region33: #{tpu_custom_call.1} parent=11 // pred_check
          %p301 = pneg %p174
        $region34: #{tpu_custom_call.1} parent=11 // pred_check_branch
          %303 = sbr.rel (%p301) target = $region36
        $region35: #{tpu_custom_call.1} parent=11 // pred_region
          %s305 = ssub.s32 16, 16
          %306 = vsyncadd [#allocation13], %s305
          %s308 = sshll.u32 [#allocation12], 4
          %s309 = int_to_ptr.vmem [resolvable:$true] %s308
          %311 = dma.hbm_to_vmem [thread:$0]  %s6, 16, %s309, [#allocation13]
        $region36: #{tpu_custom_call.1} parent=11 // pred_fallthru
          _
        // Predicated region
        $region37: #{tpu_custom_call.1} parent=11 // pred_check
          %p312 = pneg %p195
        $region38: #{tpu_custom_call.1} parent=11 // pred_check_branch
          %314 = sbr.rel (%p312) target = $region40
        $region39: #{tpu_custom_call.1} parent=11 // pred_region
          _
        $region40: #{tpu_custom_call.1} parent=11 // pred_fallthru
          _
        // Predicated region
        $region41: #{tpu_custom_call.1} parent=11 // pred_check
          %p315 = pneg %p216
        $region42: #{tpu_custom_call.1} parent=11 // pred_check_branch
          %317 = sbr.rel (%p315) target = $region44
        $region43: #{tpu_custom_call.1} parent=11 // pred_region
          %s319 = ssub.s32 16, 16
          %320 = vsyncadd [#allocation13], %s319
          %s322 = sshll.u32 [#allocation14], 4
          %s323 = int_to_ptr.vmem [resolvable:$true] %s322
          %325 = dma.hbm_to_vmem [thread:$0]  %s8, 16, %s323, [#allocation13]
        $region44: #{tpu_custom_call.1} parent=11 // pred_fallthru
          _
      $region12: #{tpu_custom_call.1} parent=5 // pred_fallthru
        _
      %p326 = scmp.lt.s32.totalorder %s22, 2
      // Predicated region
      $region45: #{tpu_custom_call.1} parent=5 // pred_check
        %p327 = pneg %p326
      $region46: #{tpu_custom_call.1} parent=5 // pred_check_branch
        %329 = sbr.rel (%p327) target = $region48
      $region47: #{tpu_custom_call.1} parent=5 // pred_region
        // Predicated region
        $region49: #{tpu_custom_call.1} parent=47 // pred_check
          %p330 = pneg %p63
        $region50: #{tpu_custom_call.1} parent=47 // pred_check_branch
          %332 = sbr.rel (%p330) target = $region52
        $region51: #{tpu_custom_call.1} parent=47 // pred_region
          %s333 = sand.u32 %s22, 1
          %s334 = scalar_lea.sflag [#allocation7], %s333
          %s335 = sand.u32 %s53, 1
          %s336 = smul.addr %s335, 8192
          %s337 = scalar_lea.vmem [#allocation6], %s336
          %s338 = smul.u32 256, %s22
          %s340 = ssub.s32 131072, 131072
          %341 = vsyncadd %s334, %s340
          %s342 = smul.addr %s338, 8
          %s343 = smul.addr %s342, 64
          %s344 = scalar_lea.hbm %s1, %s343
          %s345 = sshll.u32 %s337, 4
          %s346 = int_to_ptr.vmem [resolvable:$true] %s345
          %351 = dma.hbm_to_vmem [thread:$0]  %s344, 131072, %s346, %s334, 512, 512, 32
        $region52: #{tpu_custom_call.1} parent=47 // pred_fallthru
          _
      $region48: #{tpu_custom_call.1} parent=5 // pred_fallthru
        _
      %p352 = scmp.le.s32.totalorder 1, %s22
      %p353 = scmp.lt.s32.totalorder %s22, 3
      %p354 = pnand %p352, %p353
      %p355 = pneg %p354
      // Predicated region
      $region53: #{tpu_custom_call.1} parent=5 // pred_check
        _
      $region54: #{tpu_custom_call.1} parent=5 // pred_check_branch
        %357 = sbr.rel (%p354) target = $region56
      $region55: #{tpu_custom_call.1} parent=5 // pred_region
        %s358 = ssub.s32 %s22, 1
        // Predicated region
        $region57: #{tpu_custom_call.1} parent=55 // pred_check
          %p359 = pneg %p43
        $region58: #{tpu_custom_call.1} parent=55 // pred_check_branch
          %361 = sbr.rel (%p359) target = $region60
        $region59: #{tpu_custom_call.1} parent=55 // pred_region
          %362 = dma.done [#allocation4], 4096
        $region60: #{tpu_custom_call.1} parent=55 // pred_fallthru
          _
        %s363 = sand.u32 %s27, 1
        %s364 = scalar_lea.sflag [#allocation7], %s363
        %s365 = sand.u32 %s56, 1
        %s366 = smul.addr %s365, 8192
        %s367 = scalar_lea.vmem [#allocation6], %s366
        // Predicated region
        $region61: #{tpu_custom_call.1} parent=55 // pred_check
          %p368 = pneg %p69
        $region62: #{tpu_custom_call.1} parent=55 // pred_check_branch
          %370 = sbr.rel (%p368) target = $region64
        $region63: #{tpu_custom_call.1} parent=55 // pred_region
          %371 = dma.done %s364, 131072
        $region64: #{tpu_custom_call.1} parent=55 // pred_fallthru
          _
        // Predicated region
        $region65: #{tpu_custom_call.1} parent=55 // pred_check
          %p372 = pneg %p90
        $region66: #{tpu_custom_call.1} parent=55 // pred_check_branch
          %374 = sbr.rel (%p372) target = $region68
        $region67: #{tpu_custom_call.1} parent=55 // pred_region
          %375 = dma.done [#allocation7], 128
        $region68: #{tpu_custom_call.1} parent=55 // pred_fallthru
          _
        // Predicated region
        $region69: #{tpu_custom_call.1} parent=55 // pred_check
          %p376 = pneg %p111
        $region70: #{tpu_custom_call.1} parent=55 // pred_check_branch
          %378 = sbr.rel (%p376) target = $region72
        $region71: #{tpu_custom_call.1} parent=55 // pred_region
          %379 = dma.done [#allocation10], 16384
        $region72: #{tpu_custom_call.1} parent=55 // pred_fallthru
          _
        // Predicated region
        $region73: #{tpu_custom_call.1} parent=55 // pred_check
          %p380 = pneg %p132
        $region74: #{tpu_custom_call.1} parent=55 // pred_check_branch
          %382 = sbr.rel (%p380) target = $region76
        $region75: #{tpu_custom_call.1} parent=55 // pred_region
          %383 = dma.done [#allocation10], 32
        $region76: #{tpu_custom_call.1} parent=55 // pred_fallthru
          _
        // Predicated region
        $region77: #{tpu_custom_call.1} parent=55 // pred_check
          %p384 = pneg %p174
        $region78: #{tpu_custom_call.1} parent=55 // pred_check_branch
          %386 = sbr.rel (%p384) target = $region80
        $region79: #{tpu_custom_call.1} parent=55 // pred_region
          %387 = dma.done [#allocation13], 16
        $region80: #{tpu_custom_call.1} parent=55 // pred_fallthru
          _
        // Predicated region
        $region81: #{tpu_custom_call.1} parent=55 // pred_check
          %p388 = pneg %p216
        $region82: #{tpu_custom_call.1} parent=55 // pred_check_branch
          %390 = sbr.rel (%p388) target = $region84
        $region83: #{tpu_custom_call.1} parent=55 // pred_region
          %391 = dma.done [#allocation13], 16
        $region84: #{tpu_custom_call.1} parent=55 // pred_fallthru
          _
        %p392 = pneg %p43
        %p393 = pneg %p40
        %s394 = sand.u32 %s27, 1
        %s395 = scalar_lea.sflag [#allocation7], %s394
        %s396 = sand.u32 %s56, 1
        %s397 = smul.addr %s396, 8192
        %s398 = scalar_lea.vmem [#allocation6], %s397
        %p399 = pneg %p69
        %p400 = pneg %p66
        %p401 = pneg %p90
        %p402 = pneg %p87
        %p403 = pneg %p111
        %p404 = pneg %p108
        %p405 = pneg %p132
        %p406 = pneg %p129
        %p407 = pneg %p153
        %p408 = pneg %p150
        %p409 = pneg %p174
        %p410 = pneg %p171
        %p411 = pneg %p195
        %p412 = pneg %p192
        %p413 = pneg %p216
        %p414 = pneg %p213
        %p415 = pneg %p237
        %p416 = pneg %p234
        %s417 = smul.u32 256, %s27
        %p418 = scmp.eq.s32.totalorder %s27, 0
        // Predicated region
        $region85: #{tpu_custom_call.1} parent=55 // pred_check
          %p419 = pneg %p418
        $region86: #{tpu_custom_call.1} parent=55 // pred_check_branch
          %421 = sbr.rel (%p419) target = $region88
        $region87: #{tpu_custom_call.1} parent=55 // pred_region
          %v422 = vld [vmem:[#allocation8] sm:$0xff]
          %v424 = vlaneseq
          %v425 = vshrl.u32 %v424, 7
          %v426 = vsub.s32 0, %v425
          %v427 = vrot.slane %v422, %v426
          %v428 = vlaneseq
          %v429 = vshrl.u32 %v428, 7
          %v430 = vsub.s32 1, %v429
          %v431 = vrot.slane %v422, %v430
          %v432 = vlaneseq
          %v433 = vshrl.u32 %v432, 7
          %v434 = vsub.s32 2, %v433
          %v435 = vrot.slane %v422, %v434
          %v436 = vlaneseq
          %v437 = vshrl.u32 %v436, 7
          %v438 = vsub.s32 3, %v437
          %v439 = vrot.slane %v422, %v438
          %v440 = vlaneseq
          %v441 = vshrl.u32 %v440, 7
          %v442 = vsub.s32 4, %v441
          %v443 = vrot.slane %v422, %v442
          %v444 = vlaneseq
          %v445 = vshrl.u32 %v444, 7
          %v446 = vsub.s32 5, %v445
          %v447 = vrot.slane %v422, %v446
          %v448 = vlaneseq
          %v449 = vshrl.u32 %v448, 7
          %v450 = vsub.s32 6, %v449
          %v451 = vrot.slane %v422, %v450
          %v452 = vlaneseq
          %v453 = vshrl.u32 %v452, 7
          %v454 = vsub.s32 7, %v453
          %v455 = vrot.slane %v422, %v454
          %464 = vst [vmem:[#allocation2] sm:$0xff] %v427
          %465 = vst [vmem:[#allocation2 + $0x8] sm:$0xff] %v431
          %466 = vst [vmem:[#allocation2 + $0x10] sm:$0xff] %v435
          %467 = vst [vmem:[#allocation2 + $0x18] sm:$0xff] %v439
          %468 = vst [vmem:[#allocation2 + $0x20] sm:$0xff] %v443
          %469 = vst [vmem:[#allocation2 + $0x28] sm:$0xff] %v447
          %470 = vst [vmem:[#allocation2 + $0x30] sm:$0xff] %v451
          %471 = vst [vmem:[#allocation2 + $0x38] sm:$0xff] %v455
        $region88: #{tpu_custom_call.1} parent=55 // pred_fallthru
          _
        %s472 = smul.u32 %s27, 2048
        %s473 = sshra.s32 %s472, 7
        %s474 = sand.u32 %s472, 127
        %s475 = smul.addr %s473, 8
        %s476 = scalar_lea.vmem [#allocation3], %s475
        %v477 = vld [vmem:[%s476] sm:$0xff]
        %v478 = vld [vmem:[%s476 + $0x8] sm:$0xff]
        %v479 = vld [vmem:[%s476 + $0x10] sm:$0xff]
        %v480 = vld [vmem:[%s476 + $0x18] sm:$0xff]
        %v481 = vld [vmem:[%s476 + $0x20] sm:$0xff]
        %v482 = vld [vmem:[%s476 + $0x28] sm:$0xff]
        %v483 = vld [vmem:[%s476 + $0x30] sm:$0xff]
        %v484 = vld [vmem:[%s476 + $0x38] sm:$0xff]
        %v485 = vld [vmem:[%s476 + $0x40] sm:$0xff]
        %v486 = vld [vmem:[%s476 + $0x48] sm:$0xff]
        %v487 = vld [vmem:[%s476 + $0x50] sm:$0xff]
        %v488 = vld [vmem:[%s476 + $0x58] sm:$0xff]
        %v489 = vld [vmem:[%s476 + $0x60] sm:$0xff]
        %v490 = vld [vmem:[%s476 + $0x68] sm:$0xff]
        %v491 = vld [vmem:[%s476 + $0x70] sm:$0xff]
        %v492 = vld [vmem:[%s476 + $0x78] sm:$0xff]
        %v493 = vpack.c.bf16 %v477, %v477
        %v494 = vpack.c.bf16 %v478, %v478
        %v495 = vpack.c.bf16 %v479, %v479
        %v496 = vpack.c.bf16 %v480, %v480
        %v497 = vpack.c.bf16 %v481, %v481
        %v498 = vpack.c.bf16 %v482, %v482
        %v499 = vpack.c.bf16 %v483, %v483
        %v500 = vpack.c.bf16 %v484, %v484
        %v501 = vpack.c.bf16 %v485, %v485
        %v502 = vpack.c.bf16 %v486, %v486
        %v503 = vpack.c.bf16 %v487, %v487
        %v504 = vpack.c.bf16 %v488, %v488
        %v505 = vpack.c.bf16 %v489, %v489
        %v506 = vpack.c.bf16 %v490, %v490
        %v507 = vpack.c.bf16 %v491, %v491
        %v508 = vpack.c.bf16 %v492, %v492
        %v509 = vld [vmem:[#allocation2] sm:$0xff]
        %v510 = vld [vmem:[#allocation2 + $0x8] sm:$0xff]
        %v511 = vld [vmem:[#allocation2 + $0x10] sm:$0xff]
        %v512 = vld [vmem:[#allocation2 + $0x18] sm:$0xff]
        %v513 = vld [vmem:[#allocation2 + $0x20] sm:$0xff]
        %v514 = vld [vmem:[#allocation2 + $0x28] sm:$0xff]
        %v515 = vld [vmem:[#allocation2 + $0x30] sm:$0xff]
        %v516 = vld [vmem:[#allocation2 + $0x38] sm:$0xff]
        %v517 = vld [vmem:[%s367] sm:$0xff]
        %v518 = vld [vmem:[%s367 + $0x8] sm:$0xff]
        %v519 = vld [vmem:[%s367 + $0x10] sm:$0xff]
        %v520 = vld [vmem:[%s367 + $0x18] sm:$0xff]
        %v521 = vld [vmem:[%s367 + $0x20] sm:$0xff]
        %v522 = vld [vmem:[%s367 + $0x28] sm:$0xff]
        %v523 = vld [vmem:[%s367 + $0x30] sm:$0xff]
        %v524 = vld [vmem:[%s367 + $0x38] sm:$0xff]
        %v525 = vld [vmem:[%s367 + $0x40] sm:$0xff]
        %v526 = vld [vmem:[%s367 + $0x48] sm:$0xff]
        %v527 = vld [vmem:[%s367 + $0x50] sm:$0xff]
        %v528 = vld [vmem:[%s367 + $0x58] sm:$0xff]
        %v529 = vld [vmem:[%s367 + $0x60] sm:$0xff]
        %v530 = vld [vmem:[%s367 + $0x68] sm:$0xff]
        %v531 = vld [vmem:[%s367 + $0x70] sm:$0xff]
        %v532 = vld [vmem:[%s367 + $0x78] sm:$0xff]
        %v533 = vld [vmem:[%s367 + $0x80] sm:$0xff]
        %v534 = vld [vmem:[%s367 + $0x88] sm:$0xff]
        %v535 = vld [vmem:[%s367 + $0x90] sm:$0xff]
        %v536 = vld [vmem:[%s367 + $0x98] sm:$0xff]
        %v537 = vld [vmem:[%s367 + $0xa0] sm:$0xff]
        %v538 = vld [vmem:[%s367 + $0xa8] sm:$0xff]
        %v539 = vld [vmem:[%s367 + $0xb0] sm:$0xff]
        %v540 = vld [vmem:[%s367 + $0xb8] sm:$0xff]
        %v541 = vld [vmem:[%s367 + $0xc0] sm:$0xff]
        %v542 = vld [vmem:[%s367 + $0xc8] sm:$0xff]
        %v543 = vld [vmem:[%s367 + $0xd0] sm:$0xff]
        %v544 = vld [vmem:[%s367 + $0xd8] sm:$0xff]
        %v545 = vld [vmem:[%s367 + $0xe0] sm:$0xff]
        %v546 = vld [vmem:[%s367 + $0xe8] sm:$0xff]
        %v547 = vld [vmem:[%s367 + $0xf0] sm:$0xff]
        %v548 = vld [vmem:[%s367 + $0xf8] sm:$0xff]
        %v549 = vld [vmem:[%s367 + $0x100] sm:$0xff]
        %v550 = vld [vmem:[%s367 + $0x108] sm:$0xff]
        %v551 = vld [vmem:[%s367 + $0x110] sm:$0xff]
        %v552 = vld [vmem:[%s367 + $0x118] sm:$0xff]
        %v553 = vld [vmem:[%s367 + $0x120] sm:$0xff]
        %v554 = vld [vmem:[%s367 + $0x128] sm:$0xff]
        %v555 = vld [vmem:[%s367 + $0x130] sm:$0xff]
        %v556 = vld [vmem:[%s367 + $0x138] sm:$0xff]
        %v557 = vld [vmem:[%s367 + $0x140] sm:$0xff]
        %v558 = vld [vmem:[%s367 + $0x148] sm:$0xff]
        %v559 = vld [vmem:[%s367 + $0x150] sm:$0xff]
        %v560 = vld [vmem:[%s367 + $0x158] sm:$0xff]
        %v561 = vld [vmem:[%s367 + $0x160] sm:$0xff]
        %v562 = vld [vmem:[%s367 + $0x168] sm:$0xff]
        %v563 = vld [vmem:[%s367 + $0x170] sm:$0xff]
        %v564 = vld [vmem:[%s367 + $0x178] sm:$0xff]
        %v565 = vld [vmem:[%s367 + $0x180] sm:$0xff]
        %v566 = vld [vmem:[%s367 + $0x188] sm:$0xff]
        %v567 = vld [vmem:[%s367 + $0x190] sm:$0xff]
        %v568 = vld [vmem:[%s367 + $0x198] sm:$0xff]
        %v569 = vld [vmem:[%s367 + $0x1a0] sm:$0xff]
        %v570 = vld [vmem:[%s367 + $0x1a8] sm:$0xff]
        %v571 = vld [vmem:[%s367 + $0x1b0] sm:$0xff]
        %v572 = vld [vmem:[%s367 + $0x1b8] sm:$0xff]
        %v573 = vld [vmem:[%s367 + $0x1c0] sm:$0xff]
        %v574 = vld [vmem:[%s367 + $0x1c8] sm:$0xff]
        %v575 = vld [vmem:[%s367 + $0x1d0] sm:$0xff]
        %v576 = vld [vmem:[%s367 + $0x1d8] sm:$0xff]
        %v577 = vld [vmem:[%s367 + $0x1e0] sm:$0xff]
        %v578 = vld [vmem:[%s367 + $0x1e8] sm:$0xff]
        %v579 = vld [vmem:[%s367 + $0x1f0] sm:$0xff]
        %v580 = vld [vmem:[%s367 + $0x1f8] sm:$0xff]
        %v581 = vld [vmem:[%s367 + $0x200] sm:$0xff]
        %v582 = vld [vmem:[%s367 + $0x208] sm:$0xff]
        %v583 = vld [vmem:[%s367 + $0x210] sm:$0xff]
        %v584 = vld [vmem:[%s367 + $0x218] sm:$0xff]
        %v585 = vld [vmem:[%s367 + $0x220] sm:$0xff]
        %v586 = vld [vmem:[%s367 + $0x228] sm:$0xff]
        %v587 = vld [vmem:[%s367 + $0x230] sm:$0xff]
        %v588 = vld [vmem:[%s367 + $0x238] sm:$0xff]
        %v589 = vld [vmem:[%s367 + $0x240] sm:$0xff]
        %v590 = vld [vmem:[%s367 + $0x248] sm:$0xff]
        %v591 = vld [vmem:[%s367 + $0x250] sm:$0xff]
        %v592 = vld [vmem:[%s367 + $0x258] sm:$0xff]
        %v593 = vld [vmem:[%s367 + $0x260] sm:$0xff]
        %v594 = vld [vmem:[%s367 + $0x268] sm:$0xff]
        %v595 = vld [vmem:[%s367 + $0x270] sm:$0xff]
        %v596 = vld [vmem:[%s367 + $0x278] sm:$0xff]
        %v597 = vld [vmem:[%s367 + $0x280] sm:$0xff]
        %v598 = vld [vmem:[%s367 + $0x288] sm:$0xff]
        %v599 = vld [vmem:[%s367 + $0x290] sm:$0xff]
        %v600 = vld [vmem:[%s367 + $0x298] sm:$0xff]
        %v601 = vld [vmem:[%s367 + $0x2a0] sm:$0xff]
        %v602 = vld [vmem:[%s367 + $0x2a8] sm:$0xff]
        %v603 = vld [vmem:[%s367 + $0x2b0] sm:$0xff]
        %v604 = vld [vmem:[%s367 + $0x2b8] sm:$0xff]
        %v605 = vld [vmem:[%s367 + $0x2c0] sm:$0xff]
        %v606 = vld [vmem:[%s367 + $0x2c8] sm:$0xff]
        %v607 = vld [vmem:[%s367 + $0x2d0] sm:$0xff]
        %v608 = vld [vmem:[%s367 + $0x2d8] sm:$0xff]
        %v609 = vld [vmem:[%s367 + $0x2e0] sm:$0xff]
        %v610 = vld [vmem:[%s367 + $0x2e8] sm:$0xff]
        %v611 = vld [vmem:[%s367 + $0x2f0] sm:$0xff]
        %v612 = vld [vmem:[%s367 + $0x2f8] sm:$0xff]
        %v613 = vld [vmem:[%s367 + $0x300] sm:$0xff]
        %v614 = vld [vmem:[%s367 + $0x308] sm:$0xff]
        %v615 = vld [vmem:[%s367 + $0x310] sm:$0xff]
        %v616 = vld [vmem:[%s367 + $0x318] sm:$0xff]
        %v617 = vld [vmem:[%s367 + $0x320] sm:$0xff]
        %v618 = vld [vmem:[%s367 + $0x328] sm:$0xff]
        %v619 = vld [vmem:[%s367 + $0x330] sm:$0xff]
        %v620 = vld [vmem:[%s367 + $0x338] sm:$0xff]
        %v621 = vld [vmem:[%s367 + $0x340] sm:$0xff]
        %v622 = vld [vmem:[%s367 + $0x348] sm:$0xff]
        %v623 = vld [vmem:[%s367 + $0x350] sm:$0xff]
        %v624 = vld [vmem:[%s367 + $0x358] sm:$0xff]
        %v625 = vld [vmem:[%s367 + $0x360] sm:$0xff]
        %v626 = vld [vmem:[%s367 + $0x368] sm:$0xff]
        %v627 = vld [vmem:[%s367 + $0x370] sm:$0xff]
        %v628 = vld [vmem:[%s367 + $0x378] sm:$0xff]
        %v629 = vld [vmem:[%s367 + $0x380] sm:$0xff]
        %v630 = vld [vmem:[%s367 + $0x388] sm:$0xff]
        %v631 = vld [vmem:[%s367 + $0x390] sm:$0xff]
        %v632 = vld [vmem:[%s367 + $0x398] sm:$0xff]
        %v633 = vld [vmem:[%s367 + $0x3a0] sm:$0xff]
        %v634 = vld [vmem:[%s367 + $0x3a8] sm:$0xff]
        %v635 = vld [vmem:[%s367 + $0x3b0] sm:$0xff]
        %v636 = vld [vmem:[%s367 + $0x3b8] sm:$0xff]
        %v637 = vld [vmem:[%s367 + $0x3c0] sm:$0xff]
        %v638 = vld [vmem:[%s367 + $0x3c8] sm:$0xff]
        %v639 = vld [vmem:[%s367 + $0x3d0] sm:$0xff]
        %v640 = vld [vmem:[%s367 + $0x3d8] sm:$0xff]
        %v641 = vld [vmem:[%s367 + $0x3e0] sm:$0xff]
        %v642 = vld [vmem:[%s367 + $0x3e8] sm:$0xff]
        %v643 = vld [vmem:[%s367 + $0x3f0] sm:$0xff]
        %v644 = vld [vmem:[%s367 + $0x3f8] sm:$0xff]
        %v645 = vld [vmem:[%s367 + $0x400] sm:$0xff]
        %v646 = vld [vmem:[%s367 + $0x408] sm:$0xff]
        %v647 = vld [vmem:[%s367 + $0x410] sm:$0xff]
        %v648 = vld [vmem:[%s367 + $0x418] sm:$0xff]
        %v649 = vld [vmem:[%s367 + $0x420] sm:$0xff]
        %v650 = vld [vmem:[%s367 + $0x428] sm:$0xff]
        %v651 = vld [vmem:[%s367 + $0x430] sm:$0xff]
        %v652 = vld [vmem:[%s367 + $0x438] sm:$0xff]
        %v653 = vld [vmem:[%s367 + $0x440] sm:$0xff]
        %v654 = vld [vmem:[%s367 + $0x448] sm:$0xff]
        %v655 = vld [vmem:[%s367 + $0x450] sm:$0xff]
        %v656 = vld [vmem:[%s367 + $0x458] sm:$0xff]
        %v657 = vld [vmem:[%s367 + $0x460] sm:$0xff]
        %v658 = vld [vmem:[%s367 + $0x468] sm:$0xff]
        %v659 = vld [vmem:[%s367 + $0x470] sm:$0xff]
        %v660 = vld [vmem:[%s367 + $0x478] sm:$0xff]
        %v661 = vld [vmem:[%s367 + $0x480] sm:$0xff]
        %v662 = vld [vmem:[%s367 + $0x488] sm:$0xff]
        %v663 = vld [vmem:[%s367 + $0x490] sm:$0xff]
        %v664 = vld [vmem:[%s367 + $0x498] sm:$0xff]
        %v665 = vld [vmem:[%s367 + $0x4a0] sm:$0xff]
        %v666 = vld [vmem:[%s367 + $0x4a8] sm:$0xff]
        %v667 = vld [vmem:[%s367 + $0x4b0] sm:$0xff]
        %v668 = vld [vmem:[%s367 + $0x4b8] sm:$0xff]
        %v669 = vld [vmem:[%s367 + $0x4c0] sm:$0xff]
        %v670 = vld [vmem:[%s367 + $0x4c8] sm:$0xff]
        %v671 = vld [vmem:[%s367 + $0x4d0] sm:$0xff]
        %v672 = vld [vmem:[%s367 + $0x4d8] sm:$0xff]
        %v673 = vld [vmem:[%s367 + $0x4e0] sm:$0xff]
        %v674 = vld [vmem:[%s367 + $0x4e8] sm:$0xff]
        %v675 = vld [vmem:[%s367 + $0x4f0] sm:$0xff]
        %v676 = vld [vmem:[%s367 + $0x4f8] sm:$0xff]
        %v677 = vld [vmem:[%s367 + $0x500] sm:$0xff]
        %v678 = vld [vmem:[%s367 + $0x508] sm:$0xff]
        %v679 = vld [vmem:[%s367 + $0x510] sm:$0xff]
        %v680 = vld [vmem:[%s367 + $0x518] sm:$0xff]
        %v681 = vld [vmem:[%s367 + $0x520] sm:$0xff]
        %v682 = vld [vmem:[%s367 + $0x528] sm:$0xff]
        %v683 = vld [vmem:[%s367 + $0x530] sm:$0xff]
        %v684 = vld [vmem:[%s367 + $0x538] sm:$0xff]
        %v685 = vld [vmem:[%s367 + $0x540] sm:$0xff]
        %v686 = vld [vmem:[%s367 + $0x548] sm:$0xff]
        %v687 = vld [vmem:[%s367 + $0x550] sm:$0xff]
        %v688 = vld [vmem:[%s367 + $0x558] sm:$0xff]
        %v689 = vld [vmem:[%s367 + $0x560] sm:$0xff]
        %v690 = vld [vmem:[%s367 + $0x568] sm:$0xff]
        %v691 = vld [vmem:[%s367 + $0x570] sm:$0xff]
        %v692 = vld [vmem:[%s367 + $0x578] sm:$0xff]
        %v693 = vld [vmem:[%s367 + $0x580] sm:$0xff]
        %v694 = vld [vmem:[%s367 + $0x588] sm:$0xff]
        %v695 = vld [vmem:[%s367 + $0x590] sm:$0xff]
        %v696 = vld [vmem:[%s367 + $0x598] sm:$0xff]
        %v697 = vld [vmem:[%s367 + $0x5a0] sm:$0xff]
        %v698 = vld [vmem:[%s367 + $0x5a8] sm:$0xff]
        %v699 = vld [vmem:[%s367 + $0x5b0] sm:$0xff]
        %v700 = vld [vmem:[%s367 + $0x5b8] sm:$0xff]
        %v701 = vld [vmem:[%s367 + $0x5c0] sm:$0xff]
        %v702 = vld [vmem:[%s367 + $0x5c8] sm:$0xff]
        %v703 = vld [vmem:[%s367 + $0x5d0] sm:$0xff]
        %v704 = vld [vmem:[%s367 + $0x5d8] sm:$0xff]
        %v705 = vld [vmem:[%s367 + $0x5e0] sm:$0xff]
        %v706 = vld [vmem:[%s367 + $0x5e8] sm:$0xff]
        %v707 = vld [vmem:[%s367 + $0x5f0] sm:$0xff]
        %v708 = vld [vmem:[%s367 + $0x5f8] sm:$0xff]
        %v709 = vld [vmem:[%s367 + $0x600] sm:$0xff]
        %v710 = vld [vmem:[%s367 + $0x608] sm:$0xff]
        %v711 = vld [vmem:[%s367 + $0x610] sm:$0xff]
        %v712 = vld [vmem:[%s367 + $0x618] sm:$0xff]
        %v713 = vld [vmem:[%s367 + $0x620] sm:$0xff]
        %v714 = vld [vmem:[%s367 + $0x628] sm:$0xff]
        %v715 = vld [vmem:[%s367 + $0x630] sm:$0xff]
        %v716 = vld [vmem:[%s367 + $0x638] sm:$0xff]
        %v717 = vld [vmem:[%s367 + $0x640] sm:$0xff]
        %v718 = vld [vmem:[%s367 + $0x648] sm:$0xff]
        %v719 = vld [vmem:[%s367 + $0x650] sm:$0xff]
        %v720 = vld [vmem:[%s367 + $0x658] sm:$0xff]
        %v721 = vld [vmem:[%s367 + $0x660] sm:$0xff]
        %v722 = vld [vmem:[%s367 + $0x668] sm:$0xff]
        %v723 = vld [vmem:[%s367 + $0x670] sm:$0xff]
        %v724 = vld [vmem:[%s367 + $0x678] sm:$0xff]
        %v725 = vld [vmem:[%s367 + $0x680] sm:$0xff]
        %v726 = vld [vmem:[%s367 + $0x688] sm:$0xff]
        %v727 = vld [vmem:[%s367 + $0x690] sm:$0xff]
        %v728 = vld [vmem:[%s367 + $0x698] sm:$0xff]
        %v729 = vld [vmem:[%s367 + $0x6a0] sm:$0xff]
        %v730 = vld [vmem:[%s367 + $0x6a8] sm:$0xff]
        %v731 = vld [vmem:[%s367 + $0x6b0] sm:$0xff]
        %v732 = vld [vmem:[%s367 + $0x6b8] sm:$0xff]
        %v733 = vld [vmem:[%s367 + $0x6c0] sm:$0xff]
        %v734 = vld [vmem:[%s367 + $0x6c8] sm:$0xff]
        %v735 = vld [vmem:[%s367 + $0x6d0] sm:$0xff]
        %v736 = vld [vmem:[%s367 + $0x6d8] sm:$0xff]
        %v737 = vld [vmem:[%s367 + $0x6e0] sm:$0xff]
        %v738 = vld [vmem:[%s367 + $0x6e8] sm:$0xff]
        %v739 = vld [vmem:[%s367 + $0x6f0] sm:$0xff]
        %v740 = vld [vmem:[%s367 + $0x6f8] sm:$0xff]
        %v741 = vld [vmem:[%s367 + $0x700] sm:$0xff]
        %v742 = vld [vmem:[%s367 + $0x708] sm:$0xff]
        %v743 = vld [vmem:[%s367 + $0x710] sm:$0xff]
        %v744 = vld [vmem:[%s367 + $0x718] sm:$0xff]
        %v745 = vld [vmem:[%s367 + $0x720] sm:$0xff]
        %v746 = vld [vmem:[%s367 + $0x728] sm:$0xff]
        %v747 = vld [vmem:[%s367 + $0x730] sm:$0xff]
        %v748 = vld [vmem:[%s367 + $0x738] sm:$0xff]
        %v749 = vld [vmem:[%s367 + $0x740] sm:$0xff]
        %v750 = vld [vmem:[%s367 + $0x748] sm:$0xff]
        %v751 = vld [vmem:[%s367 + $0x750] sm:$0xff]
        %v752 = vld [vmem:[%s367 + $0x758] sm:$0xff]
        %v753 = vld [vmem:[%s367 + $0x760] sm:$0xff]
        %v754 = vld [vmem:[%s367 + $0x768] sm:$0xff]
        %v755 = vld [vmem:[%s367 + $0x770] sm:$0xff]
        %v756 = vld [vmem:[%s367 + $0x778] sm:$0xff]
        %v757 = vld [vmem:[%s367 + $0x780] sm:$0xff]
        %v758 = vld [vmem:[%s367 + $0x788] sm:$0xff]
        %v759 = vld [vmem:[%s367 + $0x790] sm:$0xff]
        %v760 = vld [vmem:[%s367 + $0x798] sm:$0xff]
        %v761 = vld [vmem:[%s367 + $0x7a0] sm:$0xff]
        %v762 = vld [vmem:[%s367 + $0x7a8] sm:$0xff]
        %v763 = vld [vmem:[%s367 + $0x7b0] sm:$0xff]
        %v764 = vld [vmem:[%s367 + $0x7b8] sm:$0xff]
        %v765 = vld [vmem:[%s367 + $0x7c0] sm:$0xff]
        %v766 = vld [vmem:[%s367 + $0x7c8] sm:$0xff]
        %v767 = vld [vmem:[%s367 + $0x7d0] sm:$0xff]
        %v768 = vld [vmem:[%s367 + $0x7d8] sm:$0xff]
        %v769 = vld [vmem:[%s367 + $0x7e0] sm:$0xff]
        %v770 = vld [vmem:[%s367 + $0x7e8] sm:$0xff]
        %v771 = vld [vmem:[%s367 + $0x7f0] sm:$0xff]
        %v772 = vld [vmem:[%s367 + $0x7f8] sm:$0xff]
        %v773 = vld [vmem:[%s367 + $0x800] sm:$0xff]
        %v774 = vld [vmem:[%s367 + $0x808] sm:$0xff]
        %v775 = vld [vmem:[%s367 + $0x810] sm:$0xff]
        %v776 = vld [vmem:[%s367 + $0x818] sm:$0xff]
        %v777 = vld [vmem:[%s367 + $0x820] sm:$0xff]
        %v778 = vld [vmem:[%s367 + $0x828] sm:$0xff]
        %v779 = vld [vmem:[%s367 + $0x830] sm:$0xff]
        %v780 = vld [vmem:[%s367 + $0x838] sm:$0xff]
        %v781 = vld [vmem:[%s367 + $0x840] sm:$0xff]
        %v782 = vld [vmem:[%s367 + $0x848] sm:$0xff]
        %v783 = vld [vmem:[%s367 + $0x850] sm:$0xff]
        %v784 = vld [vmem:[%s367 + $0x858] sm:$0xff]
        %v785 = vld [vmem:[%s367 + $0x860] sm:$0xff]
        %v786 = vld [vmem:[%s367 + $0x868] sm:$0xff]
        %v787 = vld [vmem:[%s367 + $0x870] sm:$0xff]
        %v788 = vld [vmem:[%s367 + $0x878] sm:$0xff]
        %v789 = vld [vmem:[%s367 + $0x880] sm:$0xff]
        %v790 = vld [vmem:[%s367 + $0x888] sm:$0xff]
        %v791 = vld [vmem:[%s367 + $0x890] sm:$0xff]
        %v792 = vld [vmem:[%s367 + $0x898] sm:$0xff]
        %v793 = vld [vmem:[%s367 + $0x8a0] sm:$0xff]
        %v794 = vld [vmem:[%s367 + $0x8a8] sm:$0xff]
        %v795 = vld [vmem:[%s367 + $0x8b0] sm:$0xff]
        %v796 = vld [vmem:[%s367 + $0x8b8] sm:$0xff]
        %v797 = vld [vmem:[%s367 + $0x8c0] sm:$0xff]
        %v798 = vld [vmem:[%s367 + $0x8c8] sm:$0xff]
        %v799 = vld [vmem:[%s367 + $0x8d0] sm:$0xff]
        %v800 = vld [vmem:[%s367 + $0x8d8] sm:$0xff]
        %v801 = vld [vmem:[%s367 + $0x8e0] sm:$0xff]
        %v802 = vld [vmem:[%s367 + $0x8e8] sm:$0xff]
        %v803 = vld [vmem:[%s367 + $0x8f0] sm:$0xff]
        %v804 = vld [vmem:[%s367 + $0x8f8] sm:$0xff]
        %v805 = vld [vmem:[%s367 + $0x900] sm:$0xff]
        %v806 = vld [vmem:[%s367 + $0x908] sm:$0xff]
        %v807 = vld [vmem:[%s367 + $0x910] sm:$0xff]
        %v808 = vld [vmem:[%s367 + $0x918] sm:$0xff]
        %v809 = vld [vmem:[%s367 + $0x920] sm:$0xff]
        %v810 = vld [vmem:[%s367 + $0x928] sm:$0xff]
        %v811 = vld [vmem:[%s367 + $0x930] sm:$0xff]
        %v812 = vld [vmem:[%s367 + $0x938] sm:$0xff]
        %v813 = vld [vmem:[%s367 + $0x940] sm:$0xff]
        %v814 = vld [vmem:[%s367 + $0x948] sm:$0xff]
        %v815 = vld [vmem:[%s367 + $0x950] sm:$0xff]
        %v816 = vld [vmem:[%s367 + $0x958] sm:$0xff]
        %v817 = vld [vmem:[%s367 + $0x960] sm:$0xff]
        %v818 = vld [vmem:[%s367 + $0x968] sm:$0xff]
        %v819 = vld [vmem:[%s367 + $0x970] sm:$0xff]
        %v820 = vld [vmem:[%s367 + $0x978] sm:$0xff]
        %v821 = vld [vmem:[%s367 + $0x980] sm:$0xff]
        %v822 = vld [vmem:[%s367 + $0x988] sm:$0xff]
        %v823 = vld [vmem:[%s367 + $0x990] sm:$0xff]
        %v824 = vld [vmem:[%s367 + $0x998] sm:$0xff]
        %v825 = vld [vmem:[%s367 + $0x9a0] sm:$0xff]
        %v826 = vld [vmem:[%s367 + $0x9a8] sm:$0xff]
        %v827 = vld [vmem:[%s367 + $0x9b0] sm:$0xff]
        %v828 = vld [vmem:[%s367 + $0x9b8] sm:$0xff]
        %v829 = vld [vmem:[%s367 + $0x9c0] sm:$0xff]
        %v830 = vld [vmem:[%s367 + $0x9c8] sm:$0xff]
        %v831 = vld [vmem:[%s367 + $0x9d0] sm:$0xff]
        %v832 = vld [vmem:[%s367 + $0x9d8] sm:$0xff]
        %v833 = vld [vmem:[%s367 + $0x9e0] sm:$0xff]
        %v834 = vld [vmem:[%s367 + $0x9e8] sm:$0xff]
        %v835 = vld [vmem:[%s367 + $0x9f0] sm:$0xff]
        %v836 = vld [vmem:[%s367 + $0x9f8] sm:$0xff]
        %v837 = vld [vmem:[%s367 + $0xa00] sm:$0xff]
        %v838 = vld [vmem:[%s367 + $0xa08] sm:$0xff]
        %v839 = vld [vmem:[%s367 + $0xa10] sm:$0xff]
        %v840 = vld [vmem:[%s367 + $0xa18] sm:$0xff]
        %v841 = vld [vmem:[%s367 + $0xa20] sm:$0xff]
        %v842 = vld [vmem:[%s367 + $0xa28] sm:$0xff]
        %v843 = vld [vmem:[%s367 + $0xa30] sm:$0xff]
        %v844 = vld [vmem:[%s367 + $0xa38] sm:$0xff]
        %v845 = vld [vmem:[%s367 + $0xa40] sm:$0xff]
        %v846 = vld [vmem:[%s367 + $0xa48] sm:$0xff]
        %v847 = vld [vmem:[%s367 + $0xa50] sm:$0xff]
        %v848 = vld [vmem:[%s367 + $0xa58] sm:$0xff]
        %v849 = vld [vmem:[%s367 + $0xa60] sm:$0xff]
        %v850 = vld [vmem:[%s367 + $0xa68] sm:$0xff]
        %v851 = vld [vmem:[%s367 + $0xa70] sm:$0xff]
        %v852 = vld [vmem:[%s367 + $0xa78] sm:$0xff]
        %v853 = vld [vmem:[%s367 + $0xa80] sm:$0xff]
        %v854 = vld [vmem:[%s367 + $0xa88] sm:$0xff]
        %v855 = vld [vmem:[%s367 + $0xa90] sm:$0xff]
        %v856 = vld [vmem:[%s367 + $0xa98] sm:$0xff]
        %v857 = vld [vmem:[%s367 + $0xaa0] sm:$0xff]
        %v858 = vld [vmem:[%s367 + $0xaa8] sm:$0xff]
        %v859 = vld [vmem:[%s367 + $0xab0] sm:$0xff]
        %v860 = vld [vmem:[%s367 + $0xab8] sm:$0xff]
        %v861 = vld [vmem:[%s367 + $0xac0] sm:$0xff]
        %v862 = vld [vmem:[%s367 + $0xac8] sm:$0xff]
        %v863 = vld [vmem:[%s367 + $0xad0] sm:$0xff]
        %v864 = vld [vmem:[%s367 + $0xad8] sm:$0xff]
        %v865 = vld [vmem:[%s367 + $0xae0] sm:$0xff]
        %v866 = vld [vmem:[%s367 + $0xae8] sm:$0xff]
        %v867 = vld [vmem:[%s367 + $0xaf0] sm:$0xff]
        %v868 = vld [vmem:[%s367 + $0xaf8] sm:$0xff]
        %v869 = vld [vmem:[%s367 + $0xb00] sm:$0xff]
        %v870 = vld [vmem:[%s367 + $0xb08] sm:$0xff]
        %v871 = vld [vmem:[%s367 + $0xb10] sm:$0xff]
        %v872 = vld [vmem:[%s367 + $0xb18] sm:$0xff]
        %v873 = vld [vmem:[%s367 + $0xb20] sm:$0xff]
        %v874 = vld [vmem:[%s367 + $0xb28] sm:$0xff]
        %v875 = vld [vmem:[%s367 + $0xb30] sm:$0xff]
        %v876 = vld [vmem:[%s367 + $0xb38] sm:$0xff]
        %v877 = vld [vmem:[%s367 + $0xb40] sm:$0xff]
        %v878 = vld [vmem:[%s367 + $0xb48] sm:$0xff]
        %v879 = vld [vmem:[%s367 + $0xb50] sm:$0xff]
        %v880 = vld [vmem:[%s367 + $0xb58] sm:$0xff]
        %v881 = vld [vmem:[%s367 + $0xb60] sm:$0xff]
        %v882 = vld [vmem:[%s367 + $0xb68] sm:$0xff]
        %v883 = vld [vmem:[%s367 + $0xb70] sm:$0xff]
        %v884 = vld [vmem:[%s367 + $0xb78] sm:$0xff]
        %v885 = vld [vmem:[%s367 + $0xb80] sm:$0xff]
        %v886 = vld [vmem:[%s367 + $0xb88] sm:$0xff]
        %v887 = vld [vmem:[%s367 + $0xb90] sm:$0xff]
        %v888 = vld [vmem:[%s367 + $0xb98] sm:$0xff]
        %v889 = vld [vmem:[%s367 + $0xba0] sm:$0xff]
        %v890 = vld [vmem:[%s367 + $0xba8] sm:$0xff]
        %v891 = vld [vmem:[%s367 + $0xbb0] sm:$0xff]
        %v892 = vld [vmem:[%s367 + $0xbb8] sm:$0xff]
        %v893 = vld [vmem:[%s367 + $0xbc0] sm:$0xff]
        %v894 = vld [vmem:[%s367 + $0xbc8] sm:$0xff]
        %v895 = vld [vmem:[%s367 + $0xbd0] sm:$0xff]
        %v896 = vld [vmem:[%s367 + $0xbd8] sm:$0xff]
        %v897 = vld [vmem:[%s367 + $0xbe0] sm:$0xff]
        %v898 = vld [vmem:[%s367 + $0xbe8] sm:$0xff]
        %v899 = vld [vmem:[%s367 + $0xbf0] sm:$0xff]
        %v900 = vld [vmem:[%s367 + $0xbf8] sm:$0xff]
        %v901 = vld [vmem:[%s367 + $0xc00] sm:$0xff]
        %v902 = vld [vmem:[%s367 + $0xc08] sm:$0xff]
        %v903 = vld [vmem:[%s367 + $0xc10] sm:$0xff]
        %v904 = vld [vmem:[%s367 + $0xc18] sm:$0xff]
        %v905 = vld [vmem:[%s367 + $0xc20] sm:$0xff]
        %v906 = vld [vmem:[%s367 + $0xc28] sm:$0xff]
        %v907 = vld [vmem:[%s367 + $0xc30] sm:$0xff]
        %v908 = vld [vmem:[%s367 + $0xc38] sm:$0xff]
        %v909 = vld [vmem:[%s367 + $0xc40] sm:$0xff]
        %v910 = vld [vmem:[%s367 + $0xc48] sm:$0xff]
        %v911 = vld [vmem:[%s367 + $0xc50] sm:$0xff]
        %v912 = vld [vmem:[%s367 + $0xc58] sm:$0xff]
        %v913 = vld [vmem:[%s367 + $0xc60] sm:$0xff]
        %v914 = vld [vmem:[%s367 + $0xc68] sm:$0xff]
        %v915 = vld [vmem:[%s367 + $0xc70] sm:$0xff]
        %v916 = vld [vmem:[%s367 + $0xc78] sm:$0xff]
        %v917 = vld [vmem:[%s367 + $0xc80] sm:$0xff]
        %v918 = vld [vmem:[%s367 + $0xc88] sm:$0xff]
        %v919 = vld [vmem:[%s367 + $0xc90] sm:$0xff]
        %v920 = vld [vmem:[%s367 + $0xc98] sm:$0xff]
        %v921 = vld [vmem:[%s367 + $0xca0] sm:$0xff]
        %v922 = vld [vmem:[%s367 + $0xca8] sm:$0xff]
        %v923 = vld [vmem:[%s367 + $0xcb0] sm:$0xff]
        %v924 = vld [vmem:[%s367 + $0xcb8] sm:$0xff]
        %v925 = vld [vmem:[%s367 + $0xcc0] sm:$0xff]
        %v926 = vld [vmem:[%s367 + $0xcc8] sm:$0xff]
        %v927 = vld [vmem:[%s367 + $0xcd0] sm:$0xff]
        %v928 = vld [vmem:[%s367 + $0xcd8] sm:$0xff]
        %v929 = vld [vmem:[%s367 + $0xce0] sm:$0xff]
        %v930 = vld [vmem:[%s367 + $0xce8] sm:$0xff]
        %v931 = vld [vmem:[%s367 + $0xcf0] sm:$0xff]
        %v932 = vld [vmem:[%s367 + $0xcf8] sm:$0xff]
        %v933 = vld [vmem:[%s367 + $0xd00] sm:$0xff]
        %v934 = vld [vmem:[%s367 + $0xd08] sm:$0xff]
        %v935 = vld [vmem:[%s367 + $0xd10] sm:$0xff]
        %v936 = vld [vmem:[%s367 + $0xd18] sm:$0xff]
        %v937 = vld [vmem:[%s367 + $0xd20] sm:$0xff]
        %v938 = vld [vmem:[%s367 + $0xd28] sm:$0xff]
        %v939 = vld [vmem:[%s367 + $0xd30] sm:$0xff]
        %v940 = vld [vmem:[%s367 + $0xd38] sm:$0xff]
        %v941 = vld [vmem:[%s367 + $0xd40] sm:$0xff]
        %v942 = vld [vmem:[%s367 + $0xd48] sm:$0xff]
        %v943 = vld [vmem:[%s367 + $0xd50] sm:$0xff]
        %v944 = vld [vmem:[%s367 + $0xd58] sm:$0xff]
        %v945 = vld [vmem:[%s367 + $0xd60] sm:$0xff]
        %v946 = vld [vmem:[%s367 + $0xd68] sm:$0xff]
        %v947 = vld [vmem:[%s367 + $0xd70] sm:$0xff]
        %v948 = vld [vmem:[%s367 + $0xd78] sm:$0xff]
        %v949 = vld [vmem:[%s367 + $0xd80] sm:$0xff]
        %v950 = vld [vmem:[%s367 + $0xd88] sm:$0xff]
        %v951 = vld [vmem:[%s367 + $0xd90] sm:$0xff]
        %v952 = vld [vmem:[%s367 + $0xd98] sm:$0xff]
        %v953 = vld [vmem:[%s367 + $0xda0] sm:$0xff]
        %v954 = vld [vmem:[%s367 + $0xda8] sm:$0xff]
        %v955 = vld [vmem:[%s367 + $0xdb0] sm:$0xff]
        %v956 = vld [vmem:[%s367 + $0xdb8] sm:$0xff]
        %v957 = vld [vmem:[%s367 + $0xdc0] sm:$0xff]
        %v958 = vld [vmem:[%s367 + $0xdc8] sm:$0xff]
        %v959 = vld [vmem:[%s367 + $0xdd0] sm:$0xff]
        %v960 = vld [vmem:[%s367 + $0xdd8] sm:$0xff]
        %v961 = vld [vmem:[%s367 + $0xde0] sm:$0xff]
        %v962 = vld [vmem:[%s367 + $0xde8] sm:$0xff]
        %v963 = vld [vmem:[%s367 + $0xdf0] sm:$0xff]
        %v964 = vld [vmem:[%s367 + $0xdf8] sm:$0xff]
        %v965 = vld [vmem:[%s367 + $0xe00] sm:$0xff]
        %v966 = vld [vmem:[%s367 + $0xe08] sm:$0xff]
        %v967 = vld [vmem:[%s367 + $0xe10] sm:$0xff]
        %v968 = vld [vmem:[%s367 + $0xe18] sm:$0xff]
        %v969 = vld [vmem:[%s367 + $0xe20] sm:$0xff]
        %v970 = vld [vmem:[%s367 + $0xe28] sm:$0xff]
        %v971 = vld [vmem:[%s367 + $0xe30] sm:$0xff]
        %v972 = vld [vmem:[%s367 + $0xe38] sm:$0xff]
        %v973 = vld [vmem:[%s367 + $0xe40] sm:$0xff]
        %v974 = vld [vmem:[%s367 + $0xe48] sm:$0xff]
        %v975 = vld [vmem:[%s367 + $0xe50] sm:$0xff]
        %v976 = vld [vmem:[%s367 + $0xe58] sm:$0xff]
        %v977 = vld [vmem:[%s367 + $0xe60] sm:$0xff]
        %v978 = vld [vmem:[%s367 + $0xe68] sm:$0xff]
        %v979 = vld [vmem:[%s367 + $0xe70] sm:$0xff]
        %v980 = vld [vmem:[%s367 + $0xe78] sm:$0xff]
        %v981 = vld [vmem:[%s367 + $0xe80] sm:$0xff]
        %v982 = vld [vmem:[%s367 + $0xe88] sm:$0xff]
        %v983 = vld [vmem:[%s367 + $0xe90] sm:$0xff]
        %v984 = vld [vmem:[%s367 + $0xe98] sm:$0xff]
        %v985 = vld [vmem:[%s367 + $0xea0] sm:$0xff]
        %v986 = vld [vmem:[%s367 + $0xea8] sm:$0xff]
        %v987 = vld [vmem:[%s367 + $0xeb0] sm:$0xff]
        %v988 = vld [vmem:[%s367 + $0xeb8] sm:$0xff]
        %v989 = vld [vmem:[%s367 + $0xec0] sm:$0xff]
        %v990 = vld [vmem:[%s367 + $0xec8] sm:$0xff]
        %v991 = vld [vmem:[%s367 + $0xed0] sm:$0xff]
        %v992 = vld [vmem:[%s367 + $0xed8] sm:$0xff]
        %v993 = vld [vmem:[%s367 + $0xee0] sm:$0xff]
        %v994 = vld [vmem:[%s367 + $0xee8] sm:$0xff]
        %v995 = vld [vmem:[%s367 + $0xef0] sm:$0xff]
        %v996 = vld [vmem:[%s367 + $0xef8] sm:$0xff]
        %v997 = vld [vmem:[%s367 + $0xf00] sm:$0xff]
        %v998 = vld [vmem:[%s367 + $0xf08] sm:$0xff]
        %v999 = vld [vmem:[%s367 + $0xf10] sm:$0xff]
        %v1000 = vld [vmem:[%s367 + $0xf18] sm:$0xff]
        %v1001 = vld [vmem:[%s367 + $0xf20] sm:$0xff]
        %v1002 = vld [vmem:[%s367 + $0xf28] sm:$0xff]
        %v1003 = vld [vmem:[%s367 + $0xf30] sm:$0xff]
        %v1004 = vld [vmem:[%s367 + $0xf38] sm:$0xff]
        %v1005 = vld [vmem:[%s367 + $0xf40] sm:$0xff]
        %v1006 = vld [vmem:[%s367 + $0xf48] sm:$0xff]
        %v1007 = vld [vmem:[%s367 + $0xf50] sm:$0xff]
        %v1008 = vld [vmem:[%s367 + $0xf58] sm:$0xff]
        %v1009 = vld [vmem:[%s367 + $0xf60] sm:$0xff]
        %v1010 = vld [vmem:[%s367 + $0xf68] sm:$0xff]
        %v1011 = vld [vmem:[%s367 + $0xf70] sm:$0xff]
        %v1012 = vld [vmem:[%s367 + $0xf78] sm:$0xff]
        %v1013 = vld [vmem:[%s367 + $0xf80] sm:$0xff]
        %v1014 = vld [vmem:[%s367 + $0xf88] sm:$0xff]
        %v1015 = vld [vmem:[%s367 + $0xf90] sm:$0xff]
        %v1016 = vld [vmem:[%s367 + $0xf98] sm:$0xff]
        %v1017 = vld [vmem:[%s367 + $0xfa0] sm:$0xff]
        %v1018 = vld [vmem:[%s367 + $0xfa8] sm:$0xff]
        %v1019 = vld [vmem:[%s367 + $0xfb0] sm:$0xff]
        %v1020 = vld [vmem:[%s367 + $0xfb8] sm:$0xff]
        %v1021 = vld [vmem:[%s367 + $0xfc0] sm:$0xff]
        %v1022 = vld [vmem:[%s367 + $0xfc8] sm:$0xff]
        %v1023 = vld [vmem:[%s367 + $0xfd0] sm:$0xff]
        %v1024 = vld [vmem:[%s367 + $0xfd8] sm:$0xff]
        %v1025 = vld [vmem:[%s367 + $0xfe0] sm:$0xff]
        %v1026 = vld [vmem:[%s367 + $0xfe8] sm:$0xff]
        %v1027 = vld [vmem:[%s367 + $0xff0] sm:$0xff]
        %v1028 = vld [vmem:[%s367 + $0xff8] sm:$0xff]
        %v1029 = vld [vmem:[%s367 + $0x1000] sm:$0xff]
        %v1030 = vld [vmem:[%s367 + $0x1008] sm:$0xff]
        %v1031 = vld [vmem:[%s367 + $0x1010] sm:$0xff]
        %v1032 = vld [vmem:[%s367 + $0x1018] sm:$0xff]
        %v1033 = vld [vmem:[%s367 + $0x1020] sm:$0xff]
        %v1034 = vld [vmem:[%s367 + $0x1028] sm:$0xff]
        %v1035 = vld [vmem:[%s367 + $0x1030] sm:$0xff]
        %v1036 = vld [vmem:[%s367 + $0x1038] sm:$0xff]
        %v1037 = vld [vmem:[%s367 + $0x1040] sm:$0xff]
        %v1038 = vld [vmem:[%s367 + $0x1048] sm:$0xff]
        %v1039 = vld [vmem:[%s367 + $0x1050] sm:$0xff]
        %v1040 = vld [vmem:[%s367 + $0x1058] sm:$0xff]
        %v1041 = vld [vmem:[%s367 + $0x1060] sm:$0xff]
        %v1042 = vld [vmem:[%s367 + $0x1068] sm:$0xff]
        %v1043 = vld [vmem:[%s367 + $0x1070] sm:$0xff]
        %v1044 = vld [vmem:[%s367 + $0x1078] sm:$0xff]
        %v1045 = vld [vmem:[%s367 + $0x1080] sm:$0xff]
        %v1046 = vld [vmem:[%s367 + $0x1088] sm:$0xff]
        %v1047 = vld [vmem:[%s367 + $0x1090] sm:$0xff]
        %v1048 = vld [vmem:[%s367 + $0x1098] sm:$0xff]
        %v1049 = vld [vmem:[%s367 + $0x10a0] sm:$0xff]
        %v1050 = vld [vmem:[%s367 + $0x10a8] sm:$0xff]
        %v1051 = vld [vmem:[%s367 + $0x10b0] sm:$0xff]
        %v1052 = vld [vmem:[%s367 + $0x10b8] sm:$0xff]
        %v1053 = vld [vmem:[%s367 + $0x10c0] sm:$0xff]
        %v1054 = vld [vmem:[%s367 + $0x10c8] sm:$0xff]
        %v1055 = vld [vmem:[%s367 + $0x10d0] sm:$0xff]
        %v1056 = vld [vmem:[%s367 + $0x10d8] sm:$0xff]
        %v1057 = vld [vmem:[%s367 + $0x10e0] sm:$0xff]
        %v1058 = vld [vmem:[%s367 + $0x10e8] sm:$0xff]
        %v1059 = vld [vmem:[%s367 + $0x10f0] sm:$0xff]
        %v1060 = vld [vmem:[%s367 + $0x10f8] sm:$0xff]
        %v1061 = vld [vmem:[%s367 + $0x1100] sm:$0xff]
        %v1062 = vld [vmem:[%s367 + $0x1108] sm:$0xff]
        %v1063 = vld [vmem:[%s367 + $0x1110] sm:$0xff]
        %v1064 = vld [vmem:[%s367 + $0x1118] sm:$0xff]
        %v1065 = vld [vmem:[%s367 + $0x1120] sm:$0xff]
        %v1066 = vld [vmem:[%s367 + $0x1128] sm:$0xff]
        %v1067 = vld [vmem:[%s367 + $0x1130] sm:$0xff]
        %v1068 = vld [vmem:[%s367 + $0x1138] sm:$0xff]
        %v1069 = vld [vmem:[%s367 + $0x1140] sm:$0xff]
        %v1070 = vld [vmem:[%s367 + $0x1148] sm:$0xff]
        %v1071 = vld [vmem:[%s367 + $0x1150] sm:$0xff]
        %v1072 = vld [vmem:[%s367 + $0x1158] sm:$0xff]
        %v1073 = vld [vmem:[%s367 + $0x1160] sm:$0xff]
        %v1074 = vld [vmem:[%s367 + $0x1168] sm:$0xff]
        %v1075 = vld [vmem:[%s367 + $0x1170] sm:$0xff]
        %v1076 = vld [vmem:[%s367 + $0x1178] sm:$0xff]
        %v1077 = vld [vmem:[%s367 + $0x1180] sm:$0xff]
        %v1078 = vld [vmem:[%s367 + $0x1188] sm:$0xff]
        %v1079 = vld [vmem:[%s367 + $0x1190] sm:$0xff]
        %v1080 = vld [vmem:[%s367 + $0x1198] sm:$0xff]
        %v1081 = vld [vmem:[%s367 + $0x11a0] sm:$0xff]
        %v1082 = vld [vmem:[%s367 + $0x11a8] sm:$0xff]
        %v1083 = vld [vmem:[%s367 + $0x11b0] sm:$0xff]
        %v1084 = vld [vmem:[%s367 + $0x11b8] sm:$0xff]
        %v1085 = vld [vmem:[%s367 + $0x11c0] sm:$0xff]
        %v1086 = vld [vmem:[%s367 + $0x11c8] sm:$0xff]
        %v1087 = vld [vmem:[%s367 + $0x11d0] sm:$0xff]
        %v1088 = vld [vmem:[%s367 + $0x11d8] sm:$0xff]
        %v1089 = vld [vmem:[%s367 + $0x11e0] sm:$0xff]
        %v1090 = vld [vmem:[%s367 + $0x11e8] sm:$0xff]
        %v1091 = vld [vmem:[%s367 + $0x11f0] sm:$0xff]
        %v1092 = vld [vmem:[%s367 + $0x11f8] sm:$0xff]
        %v1093 = vld [vmem:[%s367 + $0x1200] sm:$0xff]
        %v1094 = vld [vmem:[%s367 + $0x1208] sm:$0xff]
        %v1095 = vld [vmem:[%s367 + $0x1210] sm:$0xff]
        %v1096 = vld [vmem:[%s367 + $0x1218] sm:$0xff]
        %v1097 = vld [vmem:[%s367 + $0x1220] sm:$0xff]
        %v1098 = vld [vmem:[%s367 + $0x1228] sm:$0xff]
        %v1099 = vld [vmem:[%s367 + $0x1230] sm:$0xff]
        %v1100 = vld [vmem:[%s367 + $0x1238] sm:$0xff]
        %v1101 = vld [vmem:[%s367 + $0x1240] sm:$0xff]
        %v1102 = vld [vmem:[%s367 + $0x1248] sm:$0xff]
        %v1103 = vld [vmem:[%s367 + $0x1250] sm:$0xff]
        %v1104 = vld [vmem:[%s367 + $0x1258] sm:$0xff]
        %v1105 = vld [vmem:[%s367 + $0x1260] sm:$0xff]
        %v1106 = vld [vmem:[%s367 + $0x1268] sm:$0xff]
        %v1107 = vld [vmem:[%s367 + $0x1270] sm:$0xff]
        %v1108 = vld [vmem:[%s367 + $0x1278] sm:$0xff]
        %v1109 = vld [vmem:[%s367 + $0x1280] sm:$0xff]
        %v1110 = vld [vmem:[%s367 + $0x1288] sm:$0xff]
        %v1111 = vld [vmem:[%s367 + $0x1290] sm:$0xff]
        %v1112 = vld [vmem:[%s367 + $0x1298] sm:$0xff]
        %v1113 = vld [vmem:[%s367 + $0x12a0] sm:$0xff]
        %v1114 = vld [vmem:[%s367 + $0x12a8] sm:$0xff]
        %v1115 = vld [vmem:[%s367 + $0x12b0] sm:$0xff]
        %v1116 = vld [vmem:[%s367 + $0x12b8] sm:$0xff]
        %v1117 = vld [vmem:[%s367 + $0x12c0] sm:$0xff]
        %v1118 = vld [vmem:[%s367 + $0x12c8] sm:$0xff]
        %v1119 = vld [vmem:[%s367 + $0x12d0] sm:$0xff]
        %v1120 = vld [vmem:[%s367 + $0x12d8] sm:$0xff]
        %v1121 = vld [vmem:[%s367 + $0x12e0] sm:$0xff]
        %v1122 = vld [vmem:[%s367 + $0x12e8] sm:$0xff]
        %v1123 = vld [vmem:[%s367 + $0x12f0] sm:$0xff]
        %v1124 = vld [vmem:[%s367 + $0x12f8] sm:$0xff]
        %v1125 = vld [vmem:[%s367 + $0x1300] sm:$0xff]
        %v1126 = vld [vmem:[%s367 + $0x1308] sm:$0xff]
        %v1127 = vld [vmem:[%s367 + $0x1310] sm:$0xff]
        %v1128 = vld [vmem:[%s367 + $0x1318] sm:$0xff]
        %v1129 = vld [vmem:[%s367 + $0x1320] sm:$0xff]
        %v1130 = vld [vmem:[%s367 + $0x1328] sm:$0xff]
        %v1131 = vld [vmem:[%s367 + $0x1330] sm:$0xff]
        %v1132 = vld [vmem:[%s367 + $0x1338] sm:$0xff]
        %v1133 = vld [vmem:[%s367 + $0x1340] sm:$0xff]
        %v1134 = vld [vmem:[%s367 + $0x1348] sm:$0xff]
        %v1135 = vld [vmem:[%s367 + $0x1350] sm:$0xff]
        %v1136 = vld [vmem:[%s367 + $0x1358] sm:$0xff]
        %v1137 = vld [vmem:[%s367 + $0x1360] sm:$0xff]
        %v1138 = vld [vmem:[%s367 + $0x1368] sm:$0xff]
        %v1139 = vld [vmem:[%s367 + $0x1370] sm:$0xff]
        %v1140 = vld [vmem:[%s367 + $0x1378] sm:$0xff]
        %v1141 = vld [vmem:[%s367 + $0x1380] sm:$0xff]
        %v1142 = vld [vmem:[%s367 + $0x1388] sm:$0xff]
        %v1143 = vld [vmem:[%s367 + $0x1390] sm:$0xff]
        %v1144 = vld [vmem:[%s367 + $0x1398] sm:$0xff]
        %v1145 = vld [vmem:[%s367 + $0x13a0] sm:$0xff]
        %v1146 = vld [vmem:[%s367 + $0x13a8] sm:$0xff]
        %v1147 = vld [vmem:[%s367 + $0x13b0] sm:$0xff]
        %v1148 = vld [vmem:[%s367 + $0x13b8] sm:$0xff]
        %v1149 = vld [vmem:[%s367 + $0x13c0] sm:$0xff]
        %v1150 = vld [vmem:[%s367 + $0x13c8] sm:$0xff]
        %v1151 = vld [vmem:[%s367 + $0x13d0] sm:$0xff]
        %v1152 = vld [vmem:[%s367 + $0x13d8] sm:$0xff]
        %v1153 = vld [vmem:[%s367 + $0x13e0] sm:$0xff]
        %v1154 = vld [vmem:[%s367 + $0x13e8] sm:$0xff]
        %v1155 = vld [vmem:[%s367 + $0x13f0] sm:$0xff]
        %v1156 = vld [vmem:[%s367 + $0x13f8] sm:$0xff]
        %v1157 = vld [vmem:[%s367 + $0x1400] sm:$0xff]
        %v1158 = vld [vmem:[%s367 + $0x1408] sm:$0xff]
        %v1159 = vld [vmem:[%s367 + $0x1410] sm:$0xff]
        %v1160 = vld [vmem:[%s367 + $0x1418] sm:$0xff]
        %v1161 = vld [vmem:[%s367 + $0x1420] sm:$0xff]
        %v1162 = vld [vmem:[%s367 + $0x1428] sm:$0xff]
        %v1163 = vld [vmem:[%s367 + $0x1430] sm:$0xff]
        %v1164 = vld [vmem:[%s367 + $0x1438] sm:$0xff]
        %v1165 = vld [vmem:[%s367 + $0x1440] sm:$0xff]
        %v1166 = vld [vmem:[%s367 + $0x1448] sm:$0xff]
        %v1167 = vld [vmem:[%s367 + $0x1450] sm:$0xff]
        %v1168 = vld [vmem:[%s367 + $0x1458] sm:$0xff]
        %v1169 = vld [vmem:[%s367 + $0x1460] sm:$0xff]
        %v1170 = vld [vmem:[%s367 + $0x1468] sm:$0xff]
        %v1171 = vld [vmem:[%s367 + $0x1470] sm:$0xff]
        %v1172 = vld [vmem:[%s367 + $0x1478] sm:$0xff]
        %v1173 = vld [vmem:[%s367 + $0x1480] sm:$0xff]
        %v1174 = vld [vmem:[%s367 + $0x1488] sm:$0xff]
        %v1175 = vld [vmem:[%s367 + $0x1490] sm:$0xff]
        %v1176 = vld [vmem:[%s367 + $0x1498] sm:$0xff]
        %v1177 = vld [vmem:[%s367 + $0x14a0] sm:$0xff]
        %v1178 = vld [vmem:[%s367 + $0x14a8] sm:$0xff]
        %v1179 = vld [vmem:[%s367 + $0x14b0] sm:$0xff]
        %v1180 = vld [vmem:[%s367 + $0x14b8] sm:$0xff]
        %v1181 = vld [vmem:[%s367 + $0x14c0] sm:$0xff]
        %v1182 = vld [vmem:[%s367 + $0x14c8] sm:$0xff]
        %v1183 = vld [vmem:[%s367 + $0x14d0] sm:$0xff]
        %v1184 = vld [vmem:[%s367 + $0x14d8] sm:$0xff]
        %v1185 = vld [vmem:[%s367 + $0x14e0] sm:$0xff]
        %v1186 = vld [vmem:[%s367 + $0x14e8] sm:$0xff]
        %v1187 = vld [vmem:[%s367 + $0x14f0] sm:$0xff]
        %v1188 = vld [vmem:[%s367 + $0x14f8] sm:$0xff]
        %v1189 = vld [vmem:[%s367 + $0x1500] sm:$0xff]
        %v1190 = vld [vmem:[%s367 + $0x1508] sm:$0xff]
        %v1191 = vld [vmem:[%s367 + $0x1510] sm:$0xff]
        %v1192 = vld [vmem:[%s367 + $0x1518] sm:$0xff]
        %v1193 = vld [vmem:[%s367 + $0x1520] sm:$0xff]
        %v1194 = vld [vmem:[%s367 + $0x1528] sm:$0xff]
        %v1195 = vld [vmem:[%s367 + $0x1530] sm:$0xff]
        %v1196 = vld [vmem:[%s367 + $0x1538] sm:$0xff]
        %v1197 = vld [vmem:[%s367 + $0x1540] sm:$0xff]
        %v1198 = vld [vmem:[%s367 + $0x1548] sm:$0xff]
        %v1199 = vld [vmem:[%s367 + $0x1550] sm:$0xff]
        %v1200 = vld [vmem:[%s367 + $0x1558] sm:$0xff]
        %v1201 = vld [vmem:[%s367 + $0x1560] sm:$0xff]
        %v1202 = vld [vmem:[%s367 + $0x1568] sm:$0xff]
        %v1203 = vld [vmem:[%s367 + $0x1570] sm:$0xff]
        %v1204 = vld [vmem:[%s367 + $0x1578] sm:$0xff]
        %v1205 = vld [vmem:[%s367 + $0x1580] sm:$0xff]
        %v1206 = vld [vmem:[%s367 + $0x1588] sm:$0xff]
        %v1207 = vld [vmem:[%s367 + $0x1590] sm:$0xff]
        %v1208 = vld [vmem:[%s367 + $0x1598] sm:$0xff]
        %v1209 = vld [vmem:[%s367 + $0x15a0] sm:$0xff]
        %v1210 = vld [vmem:[%s367 + $0x15a8] sm:$0xff]
        %v1211 = vld [vmem:[%s367 + $0x15b0] sm:$0xff]
        %v1212 = vld [vmem:[%s367 + $0x15b8] sm:$0xff]
        %v1213 = vld [vmem:[%s367 + $0x15c0] sm:$0xff]
        %v1214 = vld [vmem:[%s367 + $0x15c8] sm:$0xff]
        %v1215 = vld [vmem:[%s367 + $0x15d0] sm:$0xff]
        %v1216 = vld [vmem:[%s367 + $0x15d8] sm:$0xff]
        %v1217 = vld [vmem:[%s367 + $0x15e0] sm:$0xff]
        %v1218 = vld [vmem:[%s367 + $0x15e8] sm:$0xff]
        %v1219 = vld [vmem:[%s367 + $0x15f0] sm:$0xff]
        %v1220 = vld [vmem:[%s367 + $0x15f8] sm:$0xff]
        %v1221 = vld [vmem:[%s367 + $0x1600] sm:$0xff]
        %v1222 = vld [vmem:[%s367 + $0x1608] sm:$0xff]
        %v1223 = vld [vmem:[%s367 + $0x1610] sm:$0xff]
        %v1224 = vld [vmem:[%s367 + $0x1618] sm:$0xff]
        %v1225 = vld [vmem:[%s367 + $0x1620] sm:$0xff]
        %v1226 = vld [vmem:[%s367 + $0x1628] sm:$0xff]
        %v1227 = vld [vmem:[%s367 + $0x1630] sm:$0xff]
        %v1228 = vld [vmem:[%s367 + $0x1638] sm:$0xff]
        %v1229 = vld [vmem:[%s367 + $0x1640] sm:$0xff]
        %v1230 = vld [vmem:[%s367 + $0x1648] sm:$0xff]
        %v1231 = vld [vmem:[%s367 + $0x1650] sm:$0xff]
        %v1232 = vld [vmem:[%s367 + $0x1658] sm:$0xff]
        %v1233 = vld [vmem:[%s367 + $0x1660] sm:$0xff]
        %v1234 = vld [vmem:[%s367 + $0x1668] sm:$0xff]
        %v1235 = vld [vmem:[%s367 + $0x1670] sm:$0xff]
        %v1236 = vld [vmem:[%s367 + $0x1678] sm:$0xff]
        %v1237 = vld [vmem:[%s367 + $0x1680] sm:$0xff]
        %v1238 = vld [vmem:[%s367 + $0x1688] sm:$0xff]
        %v1239 = vld [vmem:[%s367 + $0x1690] sm:$0xff]
        %v1240 = vld [vmem:[%s367 + $0x1698] sm:$0xff]
        %v1241 = vld [vmem:[%s367 + $0x16a0] sm:$0xff]
        %v1242 = vld [vmem:[%s367 + $0x16a8] sm:$0xff]
        %v1243 = vld [vmem:[%s367 + $0x16b0] sm:$0xff]
        %v1244 = vld [vmem:[%s367 + $0x16b8] sm:$0xff]
        %v1245 = vld [vmem:[%s367 + $0x16c0] sm:$0xff]
        %v1246 = vld [vmem:[%s367 + $0x16c8] sm:$0xff]
        %v1247 = vld [vmem:[%s367 + $0x16d0] sm:$0xff]
        %v1248 = vld [vmem:[%s367 + $0x16d8] sm:$0xff]
        %v1249 = vld [vmem:[%s367 + $0x16e0] sm:$0xff]
        %v1250 = vld [vmem:[%s367 + $0x16e8] sm:$0xff]
        %v1251 = vld [vmem:[%s367 + $0x16f0] sm:$0xff]
        %v1252 = vld [vmem:[%s367 + $0x16f8] sm:$0xff]
        %v1253 = vld [vmem:[%s367 + $0x1700] sm:$0xff]
        %v1254 = vld [vmem:[%s367 + $0x1708] sm:$0xff]
        %v1255 = vld [vmem:[%s367 + $0x1710] sm:$0xff]
        %v1256 = vld [vmem:[%s367 + $0x1718] sm:$0xff]
        %v1257 = vld [vmem:[%s367 + $0x1720] sm:$0xff]
        %v1258 = vld [vmem:[%s367 + $0x1728] sm:$0xff]
        %v1259 = vld [vmem:[%s367 + $0x1730] sm:$0xff]
        %v1260 = vld [vmem:[%s367 + $0x1738] sm:$0xff]
        %v1261 = vld [vmem:[%s367 + $0x1740] sm:$0xff]
        %v1262 = vld [vmem:[%s367 + $0x1748] sm:$0xff]
        %v1263 = vld [vmem:[%s367 + $0x1750] sm:$0xff]
        %v1264 = vld [vmem:[%s367 + $0x1758] sm:$0xff]
        %v1265 = vld [vmem:[%s367 + $0x1760] sm:$0xff]
        %v1266 = vld [vmem:[%s367 + $0x1768] sm:$0xff]
        %v1267 = vld [vmem:[%s367 + $0x1770] sm:$0xff]
        %v1268 = vld [vmem:[%s367 + $0x1778] sm:$0xff]
        %v1269 = vld [vmem:[%s367 + $0x1780] sm:$0xff]
        %v1270 = vld [vmem:[%s367 + $0x1788] sm:$0xff]
        %v1271 = vld [vmem:[%s367 + $0x1790] sm:$0xff]
        %v1272 = vld [vmem:[%s367 + $0x1798] sm:$0xff]
        %v1273 = vld [vmem:[%s367 + $0x17a0] sm:$0xff]
        %v1274 = vld [vmem:[%s367 + $0x17a8] sm:$0xff]
        %v1275 = vld [vmem:[%s367 + $0x17b0] sm:$0xff]
        %v1276 = vld [vmem:[%s367 + $0x17b8] sm:$0xff]
        %v1277 = vld [vmem:[%s367 + $0x17c0] sm:$0xff]
        %v1278 = vld [vmem:[%s367 + $0x17c8] sm:$0xff]
        %v1279 = vld [vmem:[%s367 + $0x17d0] sm:$0xff]
        %v1280 = vld [vmem:[%s367 + $0x17d8] sm:$0xff]
        %v1281 = vld [vmem:[%s367 + $0x17e0] sm:$0xff]
        %v1282 = vld [vmem:[%s367 + $0x17e8] sm:$0xff]
        %v1283 = vld [vmem:[%s367 + $0x17f0] sm:$0xff]
        %v1284 = vld [vmem:[%s367 + $0x17f8] sm:$0xff]
        %v1285 = vld [vmem:[%s367 + $0x1800] sm:$0xff]
        %v1286 = vld [vmem:[%s367 + $0x1808] sm:$0xff]
        %v1287 = vld [vmem:[%s367 + $0x1810] sm:$0xff]
        %v1288 = vld [vmem:[%s367 + $0x1818] sm:$0xff]
        %v1289 = vld [vmem:[%s367 + $0x1820] sm:$0xff]
        %v1290 = vld [vmem:[%s367 + $0x1828] sm:$0xff]
        %v1291 = vld [vmem:[%s367 + $0x1830] sm:$0xff]
        %v1292 = vld [vmem:[%s367 + $0x1838] sm:$0xff]
        %v1293 = vld [vmem:[%s367 + $0x1840] sm:$0xff]
        %v1294 = vld [vmem:[%s367 + $0x1848] sm:$0xff]
        %v1295 = vld [vmem:[%s367 + $0x1850] sm:$0xff]
        %v1296 = vld [vmem:[%s367 + $0x1858] sm:$0xff]
        %v1297 = vld [vmem:[%s367 + $0x1860] sm:$0xff]
        %v1298 = vld [vmem:[%s367 + $0x1868] sm:$0xff]
        %v1299 = vld [vmem:[%s367 + $0x1870] sm:$0xff]
        %v1300 = vld [vmem:[%s367 + $0x1878] sm:$0xff]
        %v1301 = vld [vmem:[%s367 + $0x1880] sm:$0xff]
        %v1302 = vld [vmem:[%s367 + $0x1888] sm:$0xff]
        %v1303 = vld [vmem:[%s367 + $0x1890] sm:$0xff]
        %v1304 = vld [vmem:[%s367 + $0x1898] sm:$0xff]
        %v1305 = vld [vmem:[%s367 + $0x18a0] sm:$0xff]
        %v1306 = vld [vmem:[%s367 + $0x18a8] sm:$0xff]
        %v1307 = vld [vmem:[%s367 + $0x18b0] sm:$0xff]
        %v1308 = vld [vmem:[%s367 + $0x18b8] sm:$0xff]
        %v1309 = vld [vmem:[%s367 + $0x18c0] sm:$0xff]
        %v1310 = vld [vmem:[%s367 + $0x18c8] sm:$0xff]
        %v1311 = vld [vmem:[%s367 + $0x18d0] sm:$0xff]
        %v1312 = vld [vmem:[%s367 + $0x18d8] sm:$0xff]
        %v1313 = vld [vmem:[%s367 + $0x18e0] sm:$0xff]
        %v1314 = vld [vmem:[%s367 + $0x18e8] sm:$0xff]
        %v1315 = vld [vmem:[%s367 + $0x18f0] sm:$0xff]
        %v1316 = vld [vmem:[%s367 + $0x18f8] sm:$0xff]
        %v1317 = vld [vmem:[%s367 + $0x1900] sm:$0xff]
        %v1318 = vld [vmem:[%s367 + $0x1908] sm:$0xff]
        %v1319 = vld [vmem:[%s367 + $0x1910] sm:$0xff]
        %v1320 = vld [vmem:[%s367 + $0x1918] sm:$0xff]
        %v1321 = vld [vmem:[%s367 + $0x1920] sm:$0xff]
        %v1322 = vld [vmem:[%s367 + $0x1928] sm:$0xff]
        %v1323 = vld [vmem:[%s367 + $0x1930] sm:$0xff]
        %v1324 = vld [vmem:[%s367 + $0x1938] sm:$0xff]
        %v1325 = vld [vmem:[%s367 + $0x1940] sm:$0xff]
        %v1326 = vld [vmem:[%s367 + $0x1948] sm:$0xff]
        %v1327 = vld [vmem:[%s367 + $0x1950] sm:$0xff]
        %v1328 = vld [vmem:[%s367 + $0x1958] sm:$0xff]
        %v1329 = vld [vmem:[%s367 + $0x1960] sm:$0xff]
        %v1330 = vld [vmem:[%s367 + $0x1968] sm:$0xff]
        %v1331 = vld [vmem:[%s367 + $0x1970] sm:$0xff]
        %v1332 = vld [vmem:[%s367 + $0x1978] sm:$0xff]
        %v1333 = vld [vmem:[%s367 + $0x1980] sm:$0xff]
        %v1334 = vld [vmem:[%s367 + $0x1988] sm:$0xff]
        %v1335 = vld [vmem:[%s367 + $0x1990] sm:$0xff]
        %v1336 = vld [vmem:[%s367 + $0x1998] sm:$0xff]
        %v1337 = vld [vmem:[%s367 + $0x19a0] sm:$0xff]
        %v1338 = vld [vmem:[%s367 + $0x19a8] sm:$0xff]
        %v1339 = vld [vmem:[%s367 + $0x19b0] sm:$0xff]
        %v1340 = vld [vmem:[%s367 + $0x19b8] sm:$0xff]
        %v1341 = vld [vmem:[%s367 + $0x19c0] sm:$0xff]
        %v1342 = vld [vmem:[%s367 + $0x19c8] sm:$0xff]
        %v1343 = vld [vmem:[%s367 + $0x19d0] sm:$0xff]
        %v1344 = vld [vmem:[%s367 + $0x19d8] sm:$0xff]
        %v1345 = vld [vmem:[%s367 + $0x19e0] sm:$0xff]
        %v1346 = vld [vmem:[%s367 + $0x19e8] sm:$0xff]
        %v1347 = vld [vmem:[%s367 + $0x19f0] sm:$0xff]
        %v1348 = vld [vmem:[%s367 + $0x19f8] sm:$0xff]
        %v1349 = vld [vmem:[%s367 + $0x1a00] sm:$0xff]
        %v1350 = vld [vmem:[%s367 + $0x1a08] sm:$0xff]
        %v1351 = vld [vmem:[%s367 + $0x1a10] sm:$0xff]
        %v1352 = vld [vmem:[%s367 + $0x1a18] sm:$0xff]
        %v1353 = vld [vmem:[%s367 + $0x1a20] sm:$0xff]
        %v1354 = vld [vmem:[%s367 + $0x1a28] sm:$0xff]
        %v1355 = vld [vmem:[%s367 + $0x1a30] sm:$0xff]
        %v1356 = vld [vmem:[%s367 + $0x1a38] sm:$0xff]
        %v1357 = vld [vmem:[%s367 + $0x1a40] sm:$0xff]
        %v1358 = vld [vmem:[%s367 + $0x1a48] sm:$0xff]
        %v1359 = vld [vmem:[%s367 + $0x1a50] sm:$0xff]
        %v1360 = vld [vmem:[%s367 + $0x1a58] sm:$0xff]
        %v1361 = vld [vmem:[%s367 + $0x1a60] sm:$0xff]
        %v1362 = vld [vmem:[%s367 + $0x1a68] sm:$0xff]
        %v1363 = vld [vmem:[%s367 + $0x1a70] sm:$0xff]
        %v1364 = vld [vmem:[%s367 + $0x1a78] sm:$0xff]
        %v1365 = vld [vmem:[%s367 + $0x1a80] sm:$0xff]
        %v1366 = vld [vmem:[%s367 + $0x1a88] sm:$0xff]
        %v1367 = vld [vmem:[%s367 + $0x1a90] sm:$0xff]
        %v1368 = vld [vmem:[%s367 + $0x1a98] sm:$0xff]
        %v1369 = vld [vmem:[%s367 + $0x1aa0] sm:$0xff]
        %v1370 = vld [vmem:[%s367 + $0x1aa8] sm:$0xff]
        %v1371 = vld [vmem:[%s367 + $0x1ab0] sm:$0xff]
        %v1372 = vld [vmem:[%s367 + $0x1ab8] sm:$0xff]
        %v1373 = vld [vmem:[%s367 + $0x1ac0] sm:$0xff]
        %v1374 = vld [vmem:[%s367 + $0x1ac8] sm:$0xff]
        %v1375 = vld [vmem:[%s367 + $0x1ad0] sm:$0xff]
        %v1376 = vld [vmem:[%s367 + $0x1ad8] sm:$0xff]
        %v1377 = vld [vmem:[%s367 + $0x1ae0] sm:$0xff]
        %v1378 = vld [vmem:[%s367 + $0x1ae8] sm:$0xff]
        %v1379 = vld [vmem:[%s367 + $0x1af0] sm:$0xff]
        %v1380 = vld [vmem:[%s367 + $0x1af8] sm:$0xff]
        %v1381 = vld [vmem:[%s367 + $0x1b00] sm:$0xff]
        %v1382 = vld [vmem:[%s367 + $0x1b08] sm:$0xff]
        %v1383 = vld [vmem:[%s367 + $0x1b10] sm:$0xff]
        %v1384 = vld [vmem:[%s367 + $0x1b18] sm:$0xff]
        %v1385 = vld [vmem:[%s367 + $0x1b20] sm:$0xff]
        %v1386 = vld [vmem:[%s367 + $0x1b28] sm:$0xff]
        %v1387 = vld [vmem:[%s367 + $0x1b30] sm:$0xff]
        %v1388 = vld [vmem:[%s367 + $0x1b38] sm:$0xff]
        %v1389 = vld [vmem:[%s367 + $0x1b40] sm:$0xff]
        %v1390 = vld [vmem:[%s367 + $0x1b48] sm:$0xff]
        %v1391 = vld [vmem:[%s367 + $0x1b50] sm:$0xff]
        %v1392 = vld [vmem:[%s367 + $0x1b58] sm:$0xff]
        %v1393 = vld [vmem:[%s367 + $0x1b60] sm:$0xff]
        %v1394 = vld [vmem:[%s367 + $0x1b68] sm:$0xff]
        %v1395 = vld [vmem:[%s367 + $0x1b70] sm:$0xff]
        %v1396 = vld [vmem:[%s367 + $0x1b78] sm:$0xff]
        %v1397 = vld [vmem:[%s367 + $0x1b80] sm:$0xff]
        %v1398 = vld [vmem:[%s367 + $0x1b88] sm:$0xff]
        %v1399 = vld [vmem:[%s367 + $0x1b90] sm:$0xff]
        %v1400 = vld [vmem:[%s367 + $0x1b98] sm:$0xff]
        %v1401 = vld [vmem:[%s367 + $0x1ba0] sm:$0xff]
        %v1402 = vld [vmem:[%s367 + $0x1ba8] sm:$0xff]
        %v1403 = vld [vmem:[%s367 + $0x1bb0] sm:$0xff]
        %v1404 = vld [vmem:[%s367 + $0x1bb8] sm:$0xff]
        %v1405 = vld [vmem:[%s367 + $0x1bc0] sm:$0xff]
        %v1406 = vld [vmem:[%s367 + $0x1bc8] sm:$0xff]
        %v1407 = vld [vmem:[%s367 + $0x1bd0] sm:$0xff]
        %v1408 = vld [vmem:[%s367 + $0x1bd8] sm:$0xff]
        %v1409 = vld [vmem:[%s367 + $0x1be0] sm:$0xff]
        %v1410 = vld [vmem:[%s367 + $0x1be8] sm:$0xff]
        %v1411 = vld [vmem:[%s367 + $0x1bf0] sm:$0xff]
        %v1412 = vld [vmem:[%s367 + $0x1bf8] sm:$0xff]
        %v1413 = vld [vmem:[%s367 + $0x1c00] sm:$0xff]
        %v1414 = vld [vmem:[%s367 + $0x1c08] sm:$0xff]
        %v1415 = vld [vmem:[%s367 + $0x1c10] sm:$0xff]
        %v1416 = vld [vmem:[%s367 + $0x1c18] sm:$0xff]
        %v1417 = vld [vmem:[%s367 + $0x1c20] sm:$0xff]
        %v1418 = vld [vmem:[%s367 + $0x1c28] sm:$0xff]
        %v1419 = vld [vmem:[%s367 + $0x1c30] sm:$0xff]
        %v1420 = vld [vmem:[%s367 + $0x1c38] sm:$0xff]
        %v1421 = vld [vmem:[%s367 + $0x1c40] sm:$0xff]
        %v1422 = vld [vmem:[%s367 + $0x1c48] sm:$0xff]
        %v1423 = vld [vmem:[%s367 + $0x1c50] sm:$0xff]
        %v1424 = vld [vmem:[%s367 + $0x1c58] sm:$0xff]
        %v1425 = vld [vmem:[%s367 + $0x1c60] sm:$0xff]
        %v1426 = vld [vmem:[%s367 + $0x1c68] sm:$0xff]
        %v1427 = vld [vmem:[%s367 + $0x1c70] sm:$0xff]
        %v1428 = vld [vmem:[%s367 + $0x1c78] sm:$0xff]
        %v1429 = vld [vmem:[%s367 + $0x1c80] sm:$0xff]
        %v1430 = vld [vmem:[%s367 + $0x1c88] sm:$0xff]
        %v1431 = vld [vmem:[%s367 + $0x1c90] sm:$0xff]
        %v1432 = vld [vmem:[%s367 + $0x1c98] sm:$0xff]
        %v1433 = vld [vmem:[%s367 + $0x1ca0] sm:$0xff]
        %v1434 = vld [vmem:[%s367 + $0x1ca8] sm:$0xff]
        %v1435 = vld [vmem:[%s367 + $0x1cb0] sm:$0xff]
        %v1436 = vld [vmem:[%s367 + $0x1cb8] sm:$0xff]
        %v1437 = vld [vmem:[%s367 + $0x1cc0] sm:$0xff]
        %v1438 = vld [vmem:[%s367 + $0x1cc8] sm:$0xff]
        %v1439 = vld [vmem:[%s367 + $0x1cd0] sm:$0xff]
        %v1440 = vld [vmem:[%s367 + $0x1cd8] sm:$0xff]
        %v1441 = vld [vmem:[%s367 + $0x1ce0] sm:$0xff]
        %v1442 = vld [vmem:[%s367 + $0x1ce8] sm:$0xff]
        %v1443 = vld [vmem:[%s367 + $0x1cf0] sm:$0xff]
        %v1444 = vld [vmem:[%s367 + $0x1cf8] sm:$0xff]
        %v1445 = vld [vmem:[%s367 + $0x1d00] sm:$0xff]
        %v1446 = vld [vmem:[%s367 + $0x1d08] sm:$0xff]
        %v1447 = vld [vmem:[%s367 + $0x1d10] sm:$0xff]
        %v1448 = vld [vmem:[%s367 + $0x1d18] sm:$0xff]
        %v1449 = vld [vmem:[%s367 + $0x1d20] sm:$0xff]
        %v1450 = vld [vmem:[%s367 + $0x1d28] sm:$0xff]
        %v1451 = vld [vmem:[%s367 + $0x1d30] sm:$0xff]
        %v1452 = vld [vmem:[%s367 + $0x1d38] sm:$0xff]
        %v1453 = vld [vmem:[%s367 + $0x1d40] sm:$0xff]
        %v1454 = vld [vmem:[%s367 + $0x1d48] sm:$0xff]
        %v1455 = vld [vmem:[%s367 + $0x1d50] sm:$0xff]
        %v1456 = vld [vmem:[%s367 + $0x1d58] sm:$0xff]
        %v1457 = vld [vmem:[%s367 + $0x1d60] sm:$0xff]
        %v1458 = vld [vmem:[%s367 + $0x1d68] sm:$0xff]
        %v1459 = vld [vmem:[%s367 + $0x1d70] sm:$0xff]
        %v1460 = vld [vmem:[%s367 + $0x1d78] sm:$0xff]
        %v1461 = vld [vmem:[%s367 + $0x1d80] sm:$0xff]
        %v1462 = vld [vmem:[%s367 + $0x1d88] sm:$0xff]
        %v1463 = vld [vmem:[%s367 + $0x1d90] sm:$0xff]
        %v1464 = vld [vmem:[%s367 + $0x1d98] sm:$0xff]
        %v1465 = vld [vmem:[%s367 + $0x1da0] sm:$0xff]
        %v1466 = vld [vmem:[%s367 + $0x1da8] sm:$0xff]
        %v1467 = vld [vmem:[%s367 + $0x1db0] sm:$0xff]
        %v1468 = vld [vmem:[%s367 + $0x1db8] sm:$0xff]
        %v1469 = vld [vmem:[%s367 + $0x1dc0] sm:$0xff]
        %v1470 = vld [vmem:[%s367 + $0x1dc8] sm:$0xff]
        %v1471 = vld [vmem:[%s367 + $0x1dd0] sm:$0xff]
        %v1472 = vld [vmem:[%s367 + $0x1dd8] sm:$0xff]
        %v1473 = vld [vmem:[%s367 + $0x1de0] sm:$0xff]
        %v1474 = vld [vmem:[%s367 + $0x1de8] sm:$0xff]
        %v1475 = vld [vmem:[%s367 + $0x1df0] sm:$0xff]
        %v1476 = vld [vmem:[%s367 + $0x1df8] sm:$0xff]
        %v1477 = vld [vmem:[%s367 + $0x1e00] sm:$0xff]
        %v1478 = vld [vmem:[%s367 + $0x1e08] sm:$0xff]
        %v1479 = vld [vmem:[%s367 + $0x1e10] sm:$0xff]
        %v1480 = vld [vmem:[%s367 + $0x1e18] sm:$0xff]
        %v1481 = vld [vmem:[%s367 + $0x1e20] sm:$0xff]
        %v1482 = vld [vmem:[%s367 + $0x1e28] sm:$0xff]
        %v1483 = vld [vmem:[%s367 + $0x1e30] sm:$0xff]
        %v1484 = vld [vmem:[%s367 + $0x1e38] sm:$0xff]
        %v1485 = vld [vmem:[%s367 + $0x1e40] sm:$0xff]
        %v1486 = vld [vmem:[%s367 + $0x1e48] sm:$0xff]
        %v1487 = vld [vmem:[%s367 + $0x1e50] sm:$0xff]
        %v1488 = vld [vmem:[%s367 + $0x1e58] sm:$0xff]
        %v1489 = vld [vmem:[%s367 + $0x1e60] sm:$0xff]
        %v1490 = vld [vmem:[%s367 + $0x1e68] sm:$0xff]
        %v1491 = vld [vmem:[%s367 + $0x1e70] sm:$0xff]
        %v1492 = vld [vmem:[%s367 + $0x1e78] sm:$0xff]
        %v1493 = vld [vmem:[%s367 + $0x1e80] sm:$0xff]
        %v1494 = vld [vmem:[%s367 + $0x1e88] sm:$0xff]
        %v1495 = vld [vmem:[%s367 + $0x1e90] sm:$0xff]
        %v1496 = vld [vmem:[%s367 + $0x1e98] sm:$0xff]
        %v1497 = vld [vmem:[%s367 + $0x1ea0] sm:$0xff]
        %v1498 = vld [vmem:[%s367 + $0x1ea8] sm:$0xff]
        %v1499 = vld [vmem:[%s367 + $0x1eb0] sm:$0xff]
        %v1500 = vld [vmem:[%s367 + $0x1eb8] sm:$0xff]
        %v1501 = vld [vmem:[%s367 + $0x1ec0] sm:$0xff]
        %v1502 = vld [vmem:[%s367 + $0x1ec8] sm:$0xff]
        %v1503 = vld [vmem:[%s367 + $0x1ed0] sm:$0xff]
        %v1504 = vld [vmem:[%s367 + $0x1ed8] sm:$0xff]
        %v1505 = vld [vmem:[%s367 + $0x1ee0] sm:$0xff]
        %v1506 = vld [vmem:[%s367 + $0x1ee8] sm:$0xff]
        %v1507 = vld [vmem:[%s367 + $0x1ef0] sm:$0xff]
        %v1508 = vld [vmem:[%s367 + $0x1ef8] sm:$0xff]
        %v1509 = vld [vmem:[%s367 + $0x1f00] sm:$0xff]
        %v1510 = vld [vmem:[%s367 + $0x1f08] sm:$0xff]
        %v1511 = vld [vmem:[%s367 + $0x1f10] sm:$0xff]
        %v1512 = vld [vmem:[%s367 + $0x1f18] sm:$0xff]
        %v1513 = vld [vmem:[%s367 + $0x1f20] sm:$0xff]
        %v1514 = vld [vmem:[%s367 + $0x1f28] sm:$0xff]
        %v1515 = vld [vmem:[%s367 + $0x1f30] sm:$0xff]
        %v1516 = vld [vmem:[%s367 + $0x1f38] sm:$0xff]
        %v1517 = vld [vmem:[%s367 + $0x1f40] sm:$0xff]
        %v1518 = vld [vmem:[%s367 + $0x1f48] sm:$0xff]
        %v1519 = vld [vmem:[%s367 + $0x1f50] sm:$0xff]
        %v1520 = vld [vmem:[%s367 + $0x1f58] sm:$0xff]
        %v1521 = vld [vmem:[%s367 + $0x1f60] sm:$0xff]
        %v1522 = vld [vmem:[%s367 + $0x1f68] sm:$0xff]
        %v1523 = vld [vmem:[%s367 + $0x1f70] sm:$0xff]
        %v1524 = vld [vmem:[%s367 + $0x1f78] sm:$0xff]
        %v1525 = vld [vmem:[%s367 + $0x1f80] sm:$0xff]
        %v1526 = vld [vmem:[%s367 + $0x1f88] sm:$0xff]
        %v1527 = vld [vmem:[%s367 + $0x1f90] sm:$0xff]
        %v1528 = vld [vmem:[%s367 + $0x1f98] sm:$0xff]
        %v1529 = vld [vmem:[%s367 + $0x1fa0] sm:$0xff]
        %v1530 = vld [vmem:[%s367 + $0x1fa8] sm:$0xff]
        %v1531 = vld [vmem:[%s367 + $0x1fb0] sm:$0xff]
        %v1532 = vld [vmem:[%s367 + $0x1fb8] sm:$0xff]
        %v1533 = vld [vmem:[%s367 + $0x1fc0] sm:$0xff]
        %v1534 = vld [vmem:[%s367 + $0x1fc8] sm:$0xff]
        %v1535 = vld [vmem:[%s367 + $0x1fd0] sm:$0xff]
        %v1536 = vld [vmem:[%s367 + $0x1fd8] sm:$0xff]
        %v1537 = vld [vmem:[%s367 + $0x1fe0] sm:$0xff]
        %v1538 = vld [vmem:[%s367 + $0x1fe8] sm:$0xff]
        %v1539 = vld [vmem:[%s367 + $0x1ff0] sm:$0xff]
        %v1540 = vld [vmem:[%s367 + $0x1ff8] sm:$0xff]
        %v2565 = vunpack.c.l.b16 %v517
        %v2566 = vunpack.c.h.b16 %v517
        %v2567 = vunpack.c.l.b16 %v518
        %v2568 = vunpack.c.h.b16 %v518
        %v2569 = vunpack.c.l.b16 %v519
        %v2570 = vunpack.c.h.b16 %v519
        %v2571 = vunpack.c.l.b16 %v520
        %v2572 = vunpack.c.h.b16 %v520
        %v2573 = vunpack.c.l.b16 %v521
        %v2574 = vunpack.c.h.b16 %v521
        %v2575 = vunpack.c.l.b16 %v522
        %v2576 = vunpack.c.h.b16 %v522
        %v2577 = vunpack.c.l.b16 %v523
        %v2578 = vunpack.c.h.b16 %v523
        %v2579 = vunpack.c.l.b16 %v524
        %v2580 = vunpack.c.h.b16 %v524
        %v2581 = vunpack.c.l.b16 %v525
        %v2582 = vunpack.c.h.b16 %v525
        %v2583 = vunpack.c.l.b16 %v526
        %v2584 = vunpack.c.h.b16 %v526
        %v2585 = vunpack.c.l.b16 %v527
        %v2586 = vunpack.c.h.b16 %v527
        %v2587 = vunpack.c.l.b16 %v528
        %v2588 = vunpack.c.h.b16 %v528
        %v2589 = vunpack.c.l.b16 %v529
        %v2590 = vunpack.c.h.b16 %v529
        %v2591 = vunpack.c.l.b16 %v530
        %v2592 = vunpack.c.h.b16 %v530
        %v2593 = vunpack.c.l.b16 %v531
        %v2594 = vunpack.c.h.b16 %v531
        %v2595 = vunpack.c.l.b16 %v532
        %v2596 = vunpack.c.h.b16 %v532
        %v2597 = vunpack.c.l.b16 %v533
        %v2598 = vunpack.c.h.b16 %v533
        %v2599 = vunpack.c.l.b16 %v534
        %v2600 = vunpack.c.h.b16 %v534
        %v2601 = vunpack.c.l.b16 %v535
        %v2602 = vunpack.c.h.b16 %v535
        %v2603 = vunpack.c.l.b16 %v536
        %v2604 = vunpack.c.h.b16 %v536
        %v2605 = vunpack.c.l.b16 %v537
        %v2606 = vunpack.c.h.b16 %v537
        %v2607 = vunpack.c.l.b16 %v538
        %v2608 = vunpack.c.h.b16 %v538
        %v2609 = vunpack.c.l.b16 %v539
        %v2610 = vunpack.c.h.b16 %v539
        %v2611 = vunpack.c.l.b16 %v540
        %v2612 = vunpack.c.h.b16 %v540
        %v2613 = vunpack.c.l.b16 %v541
        %v2614 = vunpack.c.h.b16 %v541
        %v2615 = vunpack.c.l.b16 %v542
        %v2616 = vunpack.c.h.b16 %v542
        %v2617 = vunpack.c.l.b16 %v543
        %v2618 = vunpack.c.h.b16 %v543
        %v2619 = vunpack.c.l.b16 %v544
        %v2620 = vunpack.c.h.b16 %v544
        %v2621 = vunpack.c.l.b16 %v545
        %v2622 = vunpack.c.h.b16 %v545
        %v2623 = vunpack.c.l.b16 %v546
        %v2624 = vunpack.c.h.b16 %v546
        %v2625 = vunpack.c.l.b16 %v547
        %v2626 = vunpack.c.h.b16 %v547
        %v2627 = vunpack.c.l.b16 %v548
        %v2628 = vunpack.c.h.b16 %v548
        %v2629 = vunpack.c.l.b16 %v549
        %v2630 = vunpack.c.h.b16 %v549
        %v2631 = vunpack.c.l.b16 %v550
        %v2632 = vunpack.c.h.b16 %v550
        %v2633 = vunpack.c.l.b16 %v551
        %v2634 = vunpack.c.h.b16 %v551
        %v2635 = vunpack.c.l.b16 %v552
        %v2636 = vunpack.c.h.b16 %v552
        %v2637 = vunpack.c.l.b16 %v553
        %v2638 = vunpack.c.h.b16 %v553
        %v2639 = vunpack.c.l.b16 %v554
        %v2640 = vunpack.c.h.b16 %v554
        %v2641 = vunpack.c.l.b16 %v555
        %v2642 = vunpack.c.h.b16 %v555
        %v2643 = vunpack.c.l.b16 %v556
        %v2644 = vunpack.c.h.b16 %v556
        %v2645 = vunpack.c.l.b16 %v557
        %v2646 = vunpack.c.h.b16 %v557
        %v2647 = vunpack.c.l.b16 %v558
        %v2648 = vunpack.c.h.b16 %v558
        %v2649 = vunpack.c.l.b16 %v559
        %v2650 = vunpack.c.h.b16 %v559
        %v2651 = vunpack.c.l.b16 %v560
        %v2652 = vunpack.c.h.b16 %v560
        %v2653 = vunpack.c.l.b16 %v561
        %v2654 = vunpack.c.h.b16 %v561
        %v2655 = vunpack.c.l.b16 %v562
        %v2656 = vunpack.c.h.b16 %v562
        %v2657 = vunpack.c.l.b16 %v563
        %v2658 = vunpack.c.h.b16 %v563
        %v2659 = vunpack.c.l.b16 %v564
        %v2660 = vunpack.c.h.b16 %v564
        %v2661 = vunpack.c.l.b16 %v565
        %v2662 = vunpack.c.h.b16 %v565
        %v2663 = vunpack.c.l.b16 %v566
        %v2664 = vunpack.c.h.b16 %v566
        %v2665 = vunpack.c.l.b16 %v567
        %v2666 = vunpack.c.h.b16 %v567
        %v2667 = vunpack.c.l.b16 %v568
        %v2668 = vunpack.c.h.b16 %v568
        %v2669 = vunpack.c.l.b16 %v569
        %v2670 = vunpack.c.h.b16 %v569
        %v2671 = vunpack.c.l.b16 %v570
        %v2672 = vunpack.c.h.b16 %v570
        %v2673 = vunpack.c.l.b16 %v571
        %v2674 = vunpack.c.h.b16 %v571
        %v2675 = vunpack.c.l.b16 %v572
        %v2676 = vunpack.c.h.b16 %v572
        %v2677 = vunpack.c.l.b16 %v573
        %v2678 = vunpack.c.h.b16 %v573
        %v2679 = vunpack.c.l.b16 %v574
        %v2680 = vunpack.c.h.b16 %v574
        %v2681 = vunpack.c.l.b16 %v575
        %v2682 = vunpack.c.h.b16 %v575
        %v2683 = vunpack.c.l.b16 %v576
        %v2684 = vunpack.c.h.b16 %v576
        %v2685 = vunpack.c.l.b16 %v577
        %v2686 = vunpack.c.h.b16 %v577
        %v2687 = vunpack.c.l.b16 %v578
        %v2688 = vunpack.c.h.b16 %v578
        %v2689 = vunpack.c.l.b16 %v579
        %v2690 = vunpack.c.h.b16 %v579
        %v2691 = vunpack.c.l.b16 %v580
        %v2692 = vunpack.c.h.b16 %v580
        %v2693 = vunpack.c.l.b16 %v581
        %v2694 = vunpack.c.h.b16 %v581
        %v2695 = vunpack.c.l.b16 %v582
        %v2696 = vunpack.c.h.b16 %v582
        %v2697 = vunpack.c.l.b16 %v583
        %v2698 = vunpack.c.h.b16 %v583
        %v2699 = vunpack.c.l.b16 %v584
        %v2700 = vunpack.c.h.b16 %v584
        %v2701 = vunpack.c.l.b16 %v585
        %v2702 = vunpack.c.h.b16 %v585
        %v2703 = vunpack.c.l.b16 %v586
        %v2704 = vunpack.c.h.b16 %v586
        %v2705 = vunpack.c.l.b16 %v587
        %v2706 = vunpack.c.h.b16 %v587
        %v2707 = vunpack.c.l.b16 %v588
        %v2708 = vunpack.c.h.b16 %v588
        %v2709 = vunpack.c.l.b16 %v589
        %v2710 = vunpack.c.h.b16 %v589
        %v2711 = vunpack.c.l.b16 %v590
        %v2712 = vunpack.c.h.b16 %v590
        %v2713 = vunpack.c.l.b16 %v591
        %v2714 = vunpack.c.h.b16 %v591
        %v2715 = vunpack.c.l.b16 %v592
        %v2716 = vunpack.c.h.b16 %v592
        %v2717 = vunpack.c.l.b16 %v593
        %v2718 = vunpack.c.h.b16 %v593
        %v2719 = vunpack.c.l.b16 %v594
        %v2720 = vunpack.c.h.b16 %v594
        %v2721 = vunpack.c.l.b16 %v595
        %v2722 = vunpack.c.h.b16 %v595
        %v2723 = vunpack.c.l.b16 %v596
        %v2724 = vunpack.c.h.b16 %v596
        %v2725 = vunpack.c.l.b16 %v597
        %v2726 = vunpack.c.h.b16 %v597
        %v2727 = vunpack.c.l.b16 %v598
        %v2728 = vunpack.c.h.b16 %v598
        %v2729 = vunpack.c.l.b16 %v599
        %v2730 = vunpack.c.h.b16 %v599
        %v2731 = vunpack.c.l.b16 %v600
        %v2732 = vunpack.c.h.b16 %v600
        %v2733 = vunpack.c.l.b16 %v601
        %v2734 = vunpack.c.h.b16 %v601
        %v2735 = vunpack.c.l.b16 %v602
        %v2736 = vunpack.c.h.b16 %v602
        %v2737 = vunpack.c.l.b16 %v603
        %v2738 = vunpack.c.h.b16 %v603
        %v2739 = vunpack.c.l.b16 %v604
        %v2740 = vunpack.c.h.b16 %v604
        %v2741 = vunpack.c.l.b16 %v605
        %v2742 = vunpack.c.h.b16 %v605
        %v2743 = vunpack.c.l.b16 %v606
        %v2744 = vunpack.c.h.b16 %v606
        %v2745 = vunpack.c.l.b16 %v607
        %v2746 = vunpack.c.h.b16 %v607
        %v2747 = vunpack.c.l.b16 %v608
        %v2748 = vunpack.c.h.b16 %v608
        %v2749 = vunpack.c.l.b16 %v609
        %v2750 = vunpack.c.h.b16 %v609
        %v2751 = vunpack.c.l.b16 %v610
        %v2752 = vunpack.c.h.b16 %v610
        %v2753 = vunpack.c.l.b16 %v611
        %v2754 = vunpack.c.h.b16 %v611
        %v2755 = vunpack.c.l.b16 %v612
        %v2756 = vunpack.c.h.b16 %v612
        %v2757 = vunpack.c.l.b16 %v613
        %v2758 = vunpack.c.h.b16 %v613
        %v2759 = vunpack.c.l.b16 %v614
        %v2760 = vunpack.c.h.b16 %v614
        %v2761 = vunpack.c.l.b16 %v615
        %v2762 = vunpack.c.h.b16 %v615
        %v2763 = vunpack.c.l.b16 %v616
        %v2764 = vunpack.c.h.b16 %v616
        %v2765 = vunpack.c.l.b16 %v617
        %v2766 = vunpack.c.h.b16 %v617
        %v2767 = vunpack.c.l.b16 %v618
        %v2768 = vunpack.c.h.b16 %v618
        %v2769 = vunpack.c.l.b16 %v619
        %v2770 = vunpack.c.h.b16 %v619
        %v2771 = vunpack.c.l.b16 %v620
        %v2772 = vunpack.c.h.b16 %v620
        %v2773 = vunpack.c.l.b16 %v621
        %v2774 = vunpack.c.h.b16 %v621
        %v2775 = vunpack.c.l.b16 %v622
        %v2776 = vunpack.c.h.b16 %v622
        %v2777 = vunpack.c.l.b16 %v623
        %v2778 = vunpack.c.h.b16 %v623
        %v2779 = vunpack.c.l.b16 %v624
        %v2780 = vunpack.c.h.b16 %v624
        %v2781 = vunpack.c.l.b16 %v625
        %v2782 = vunpack.c.h.b16 %v625
        %v2783 = vunpack.c.l.b16 %v626
        %v2784 = vunpack.c.h.b16 %v626
        %v2785 = vunpack.c.l.b16 %v627
        %v2786 = vunpack.c.h.b16 %v627
        %v2787 = vunpack.c.l.b16 %v628
        %v2788 = vunpack.c.h.b16 %v628
        %v2789 = vunpack.c.l.b16 %v629
        %v2790 = vunpack.c.h.b16 %v629
        %v2791 = vunpack.c.l.b16 %v630
        %v2792 = vunpack.c.h.b16 %v630
        %v2793 = vunpack.c.l.b16 %v631
        %v2794 = vunpack.c.h.b16 %v631
        %v2795 = vunpack.c.l.b16 %v632
        %v2796 = vunpack.c.h.b16 %v632
        %v2797 = vunpack.c.l.b16 %v633
        %v2798 = vunpack.c.h.b16 %v633
        %v2799 = vunpack.c.l.b16 %v634
        %v2800 = vunpack.c.h.b16 %v634
        %v2801 = vunpack.c.l.b16 %v635
        %v2802 = vunpack.c.h.b16 %v635
        %v2803 = vunpack.c.l.b16 %v636
        %v2804 = vunpack.c.h.b16 %v636
        %v2805 = vunpack.c.l.b16 %v637
        %v2806 = vunpack.c.h.b16 %v637
        %v2807 = vunpack.c.l.b16 %v638
        %v2808 = vunpack.c.h.b16 %v638
        %v2809 = vunpack.c.l.b16 %v639
        %v2810 = vunpack.c.h.b16 %v639
        %v2811 = vunpack.c.l.b16 %v640
        %v2812 = vunpack.c.h.b16 %v640
        %v2813 = vunpack.c.l.b16 %v641
        %v2814 = vunpack.c.h.b16 %v641
        %v2815 = vunpack.c.l.b16 %v642
        %v2816 = vunpack.c.h.b16 %v642
        %v2817 = vunpack.c.l.b16 %v643
        %v2818 = vunpack.c.h.b16 %v643
        %v2819 = vunpack.c.l.b16 %v644
        %v2820 = vunpack.c.h.b16 %v644
        %v2821 = vunpack.c.l.b16 %v645
        %v2822 = vunpack.c.h.b16 %v645
        %v2823 = vunpack.c.l.b16 %v646
        %v2824 = vunpack.c.h.b16 %v646
        %v2825 = vunpack.c.l.b16 %v647
        %v2826 = vunpack.c.h.b16 %v647
        %v2827 = vunpack.c.l.b16 %v648
        %v2828 = vunpack.c.h.b16 %v648
        %v2829 = vunpack.c.l.b16 %v649
        %v2830 = vunpack.c.h.b16 %v649
        %v2831 = vunpack.c.l.b16 %v650
        %v2832 = vunpack.c.h.b16 %v650
        %v2833 = vunpack.c.l.b16 %v651
        %v2834 = vunpack.c.h.b16 %v651
        %v2835 = vunpack.c.l.b16 %v652
        %v2836 = vunpack.c.h.b16 %v652
        %v2837 = vunpack.c.l.b16 %v653
        %v2838 = vunpack.c.h.b16 %v653
        %v2839 = vunpack.c.l.b16 %v654
        %v2840 = vunpack.c.h.b16 %v654
        %v2841 = vunpack.c.l.b16 %v655
        %v2842 = vunpack.c.h.b16 %v655
        %v2843 = vunpack.c.l.b16 %v656
        %v2844 = vunpack.c.h.b16 %v656
        %v2845 = vunpack.c.l.b16 %v657
        %v2846 = vunpack.c.h.b16 %v657
        %v2847 = vunpack.c.l.b16 %v658
        %v2848 = vunpack.c.h.b16 %v658
        %v2849 = vunpack.c.l.b16 %v659
        %v2850 = vunpack.c.h.b16 %v659
        %v2851 = vunpack.c.l.b16 %v660
        %v2852 = vunpack.c.h.b16 %v660
        %v2853 = vunpack.c.l.b16 %v661
        %v2854 = vunpack.c.h.b16 %v661
        %v2855 = vunpack.c.l.b16 %v662
        %v2856 = vunpack.c.h.b16 %v662
        %v2857 = vunpack.c.l.b16 %v663
        %v2858 = vunpack.c.h.b16 %v663
        %v2859 = vunpack.c.l.b16 %v664
        %v2860 = vunpack.c.h.b16 %v664
        %v2861 = vunpack.c.l.b16 %v665
        %v2862 = vunpack.c.h.b16 %v665
        %v2863 = vunpack.c.l.b16 %v666
        %v2864 = vunpack.c.h.b16 %v666
        %v2865 = vunpack.c.l.b16 %v667
        %v2866 = vunpack.c.h.b16 %v667
        %v2867 = vunpack.c.l.b16 %v668
        %v2868 = vunpack.c.h.b16 %v668
        %v2869 = vunpack.c.l.b16 %v669
        %v2870 = vunpack.c.h.b16 %v669
        %v2871 = vunpack.c.l.b16 %v670
        %v2872 = vunpack.c.h.b16 %v670
        %v2873 = vunpack.c.l.b16 %v671
        %v2874 = vunpack.c.h.b16 %v671
        %v2875 = vunpack.c.l.b16 %v672
        %v2876 = vunpack.c.h.b16 %v672
        %v2877 = vunpack.c.l.b16 %v673
        %v2878 = vunpack.c.h.b16 %v673
        %v2879 = vunpack.c.l.b16 %v674
        %v2880 = vunpack.c.h.b16 %v674
        %v2881 = vunpack.c.l.b16 %v675
        %v2882 = vunpack.c.h.b16 %v675
        %v2883 = vunpack.c.l.b16 %v676
        %v2884 = vunpack.c.h.b16 %v676
        %v2885 = vunpack.c.l.b16 %v677
        %v2886 = vunpack.c.h.b16 %v677
        %v2887 = vunpack.c.l.b16 %v678
        %v2888 = vunpack.c.h.b16 %v678
        %v2889 = vunpack.c.l.b16 %v679
        %v2890 = vunpack.c.h.b16 %v679
        %v2891 = vunpack.c.l.b16 %v680
        %v2892 = vunpack.c.h.b16 %v680
        %v2893 = vunpack.c.l.b16 %v681
        %v2894 = vunpack.c.h.b16 %v681
        %v2895 = vunpack.c.l.b16 %v682
        %v2896 = vunpack.c.h.b16 %v682
        %v2897 = vunpack.c.l.b16 %v683
        %v2898 = vunpack.c.h.b16 %v683
        %v2899 = vunpack.c.l.b16 %v684
        %v2900 = vunpack.c.h.b16 %v684
        %v2901 = vunpack.c.l.b16 %v685
        %v2902 = vunpack.c.h.b16 %v685
        %v2903 = vunpack.c.l.b16 %v686
        %v2904 = vunpack.c.h.b16 %v686
        %v2905 = vunpack.c.l.b16 %v687
        %v2906 = vunpack.c.h.b16 %v687
        %v2907 = vunpack.c.l.b16 %v688
        %v2908 = vunpack.c.h.b16 %v688
        %v2909 = vunpack.c.l.b16 %v689
        %v2910 = vunpack.c.h.b16 %v689
        %v2911 = vunpack.c.l.b16 %v690
        %v2912 = vunpack.c.h.b16 %v690
        %v2913 = vunpack.c.l.b16 %v691
        %v2914 = vunpack.c.h.b16 %v691
        %v2915 = vunpack.c.l.b16 %v692
        %v2916 = vunpack.c.h.b16 %v692
        %v2917 = vunpack.c.l.b16 %v693
        %v2918 = vunpack.c.h.b16 %v693
        %v2919 = vunpack.c.l.b16 %v694
        %v2920 = vunpack.c.h.b16 %v694
        %v2921 = vunpack.c.l.b16 %v695
        %v2922 = vunpack.c.h.b16 %v695
        %v2923 = vunpack.c.l.b16 %v696
        %v2924 = vunpack.c.h.b16 %v696
        %v2925 = vunpack.c.l.b16 %v697
        %v2926 = vunpack.c.h.b16 %v697
        %v2927 = vunpack.c.l.b16 %v698
        %v2928 = vunpack.c.h.b16 %v698
        %v2929 = vunpack.c.l.b16 %v699
        %v2930 = vunpack.c.h.b16 %v699
        %v2931 = vunpack.c.l.b16 %v700
        %v2932 = vunpack.c.h.b16 %v700
        %v2933 = vunpack.c.l.b16 %v701
        %v2934 = vunpack.c.h.b16 %v701
        %v2935 = vunpack.c.l.b16 %v702
        %v2936 = vunpack.c.h.b16 %v702
        %v2937 = vunpack.c.l.b16 %v703
        %v2938 = vunpack.c.h.b16 %v703
        %v2939 = vunpack.c.l.b16 %v704
        %v2940 = vunpack.c.h.b16 %v704
        %v2941 = vunpack.c.l.b16 %v705
        %v2942 = vunpack.c.h.b16 %v705
        %v2943 = vunpack.c.l.b16 %v706
        %v2944 = vunpack.c.h.b16 %v706
        %v2945 = vunpack.c.l.b16 %v707
        %v2946 = vunpack.c.h.b16 %v707
        %v2947 = vunpack.c.l.b16 %v708
        %v2948 = vunpack.c.h.b16 %v708
        %v2949 = vunpack.c.l.b16 %v709
        %v2950 = vunpack.c.h.b16 %v709
        %v2951 = vunpack.c.l.b16 %v710
        %v2952 = vunpack.c.h.b16 %v710
        %v2953 = vunpack.c.l.b16 %v711
        %v2954 = vunpack.c.h.b16 %v711
        %v2955 = vunpack.c.l.b16 %v712
        %v2956 = vunpack.c.h.b16 %v712
        %v2957 = vunpack.c.l.b16 %v713
        %v2958 = vunpack.c.h.b16 %v713
        %v2959 = vunpack.c.l.b16 %v714
        %v2960 = vunpack.c.h.b16 %v714
        %v2961 = vunpack.c.l.b16 %v715
        %v2962 = vunpack.c.h.b16 %v715
        %v2963 = vunpack.c.l.b16 %v716
        %v2964 = vunpack.c.h.b16 %v716
        %v2965 = vunpack.c.l.b16 %v717
        %v2966 = vunpack.c.h.b16 %v717
        %v2967 = vunpack.c.l.b16 %v718
        %v2968 = vunpack.c.h.b16 %v718
        %v2969 = vunpack.c.l.b16 %v719
        %v2970 = vunpack.c.h.b16 %v719
        %v2971 = vunpack.c.l.b16 %v720
        %v2972 = vunpack.c.h.b16 %v720
        %v2973 = vunpack.c.l.b16 %v721
        %v2974 = vunpack.c.h.b16 %v721
        %v2975 = vunpack.c.l.b16 %v722
        %v2976 = vunpack.c.h.b16 %v722
        %v2977 = vunpack.c.l.b16 %v723
        %v2978 = vunpack.c.h.b16 %v723
        %v2979 = vunpack.c.l.b16 %v724
        %v2980 = vunpack.c.h.b16 %v724
        %v2981 = vunpack.c.l.b16 %v725
        %v2982 = vunpack.c.h.b16 %v725
        %v2983 = vunpack.c.l.b16 %v726
        %v2984 = vunpack.c.h.b16 %v726
        %v2985 = vunpack.c.l.b16 %v727
        %v2986 = vunpack.c.h.b16 %v727
        %v2987 = vunpack.c.l.b16 %v728
        %v2988 = vunpack.c.h.b16 %v728
        %v2989 = vunpack.c.l.b16 %v729
        %v2990 = vunpack.c.h.b16 %v729
        %v2991 = vunpack.c.l.b16 %v730
        %v2992 = vunpack.c.h.b16 %v730
        %v2993 = vunpack.c.l.b16 %v731
        %v2994 = vunpack.c.h.b16 %v731
        %v2995 = vunpack.c.l.b16 %v732
        %v2996 = vunpack.c.h.b16 %v732
        %v2997 = vunpack.c.l.b16 %v733
        %v2998 = vunpack.c.h.b16 %v733
        %v2999 = vunpack.c.l.b16 %v734
        %v3000 = vunpack.c.h.b16 %v734
        %v3001 = vunpack.c.l.b16 %v735
        %v3002 = vunpack.c.h.b16 %v735
        %v3003 = vunpack.c.l.b16 %v736
        %v3004 = vunpack.c.h.b16 %v736
        %v3005 = vunpack.c.l.b16 %v737
        %v3006 = vunpack.c.h.b16 %v737
        %v3007 = vunpack.c.l.b16 %v738
        %v3008 = vunpack.c.h.b16 %v738
        %v3009 = vunpack.c.l.b16 %v739
        %v3010 = vunpack.c.h.b16 %v739
        %v3011 = vunpack.c.l.b16 %v740
        %v3012 = vunpack.c.h.b16 %v740
        %v3013 = vunpack.c.l.b16 %v741
        %v3014 = vunpack.c.h.b16 %v741
        %v3015 = vunpack.c.l.b16 %v742
        %v3016 = vunpack.c.h.b16 %v742
        %v3017 = vunpack.c.l.b16 %v743
        %v3018 = vunpack.c.h.b16 %v743
        %v3019 = vunpack.c.l.b16 %v744
        %v3020 = vunpack.c.h.b16 %v744
        %v3021 = vunpack.c.l.b16 %v745
        %v3022 = vunpack.c.h.b16 %v745
        %v3023 = vunpack.c.l.b16 %v746
        %v3024 = vunpack.c.h.b16 %v746
        %v3025 = vunpack.c.l.b16 %v747
        %v3026 = vunpack.c.h.b16 %v747
        %v3027 = vunpack.c.l.b16 %v748
        %v3028 = vunpack.c.h.b16 %v748
        %v3029 = vunpack.c.l.b16 %v749
        %v3030 = vunpack.c.h.b16 %v749
        %v3031 = vunpack.c.l.b16 %v750
        %v3032 = vunpack.c.h.b16 %v750
        %v3033 = vunpack.c.l.b16 %v751
        %v3034 = vunpack.c.h.b16 %v751
        %v3035 = vunpack.c.l.b16 %v752
        %v3036 = vunpack.c.h.b16 %v752
        %v3037 = vunpack.c.l.b16 %v753
        %v3038 = vunpack.c.h.b16 %v753
        %v3039 = vunpack.c.l.b16 %v754
        %v3040 = vunpack.c.h.b16 %v754
        %v3041 = vunpack.c.l.b16 %v755
        %v3042 = vunpack.c.h.b16 %v755
        %v3043 = vunpack.c.l.b16 %v756
        %v3044 = vunpack.c.h.b16 %v756
        %v3045 = vunpack.c.l.b16 %v757
        %v3046 = vunpack.c.h.b16 %v757
        %v3047 = vunpack.c.l.b16 %v758
        %v3048 = vunpack.c.h.b16 %v758
        %v3049 = vunpack.c.l.b16 %v759
        %v3050 = vunpack.c.h.b16 %v759
        %v3051 = vunpack.c.l.b16 %v760
        %v3052 = vunpack.c.h.b16 %v760
        %v3053 = vunpack.c.l.b16 %v761
        %v3054 = vunpack.c.h.b16 %v761
        %v3055 = vunpack.c.l.b16 %v762
        %v3056 = vunpack.c.h.b16 %v762
        %v3057 = vunpack.c.l.b16 %v763
        %v3058 = vunpack.c.h.b16 %v763
        %v3059 = vunpack.c.l.b16 %v764
        %v3060 = vunpack.c.h.b16 %v764
        %v3061 = vunpack.c.l.b16 %v765
        %v3062 = vunpack.c.h.b16 %v765
        %v3063 = vunpack.c.l.b16 %v766
        %v3064 = vunpack.c.h.b16 %v766
        %v3065 = vunpack.c.l.b16 %v767
        %v3066 = vunpack.c.h.b16 %v767
        %v3067 = vunpack.c.l.b16 %v768
        %v3068 = vunpack.c.h.b16 %v768
        %v3069 = vunpack.c.l.b16 %v769
        %v3070 = vunpack.c.h.b16 %v769
        %v3071 = vunpack.c.l.b16 %v770
        %v3072 = vunpack.c.h.b16 %v770
        %v3073 = vunpack.c.l.b16 %v771
        %v3074 = vunpack.c.h.b16 %v771
        %v3075 = vunpack.c.l.b16 %v772
        %v3076 = vunpack.c.h.b16 %v772
        %v3077 = vunpack.c.l.b16 %v773
        %v3078 = vunpack.c.h.b16 %v773
        %v3079 = vunpack.c.l.b16 %v774
        %v3080 = vunpack.c.h.b16 %v774
        %v3081 = vunpack.c.l.b16 %v775
        %v3082 = vunpack.c.h.b16 %v775
        %v3083 = vunpack.c.l.b16 %v776
        %v3084 = vunpack.c.h.b16 %v776
        %v3085 = vunpack.c.l.b16 %v777
        %v3086 = vunpack.c.h.b16 %v777
        %v3087 = vunpack.c.l.b16 %v778
        %v3088 = vunpack.c.h.b16 %v778
        %v3089 = vunpack.c.l.b16 %v779
        %v3090 = vunpack.c.h.b16 %v779
        %v3091 = vunpack.c.l.b16 %v780
        %v3092 = vunpack.c.h.b16 %v780
        %v3093 = vunpack.c.l.b16 %v781
        %v3094 = vunpack.c.h.b16 %v781
        %v3095 = vunpack.c.l.b16 %v782
        %v3096 = vunpack.c.h.b16 %v782
        %v3097 = vunpack.c.l.b16 %v783
        %v3098 = vunpack.c.h.b16 %v783
        %v3099 = vunpack.c.l.b16 %v784
        %v3100 = vunpack.c.h.b16 %v784
        %v3101 = vunpack.c.l.b16 %v785
        %v3102 = vunpack.c.h.b16 %v785
        %v3103 = vunpack.c.l.b16 %v786
        %v3104 = vunpack.c.h.b16 %v786
        %v3105 = vunpack.c.l.b16 %v787
        %v3106 = vunpack.c.h.b16 %v787
        %v3107 = vunpack.c.l.b16 %v788
        %v3108 = vunpack.c.h.b16 %v788
        %v3109 = vunpack.c.l.b16 %v789
        %v3110 = vunpack.c.h.b16 %v789
        %v3111 = vunpack.c.l.b16 %v790
        %v3112 = vunpack.c.h.b16 %v790
        %v3113 = vunpack.c.l.b16 %v791
        %v3114 = vunpack.c.h.b16 %v791
        %v3115 = vunpack.c.l.b16 %v792
        %v3116 = vunpack.c.h.b16 %v792
        %v3117 = vunpack.c.l.b16 %v793
        %v3118 = vunpack.c.h.b16 %v793
        %v3119 = vunpack.c.l.b16 %v794
        %v3120 = vunpack.c.h.b16 %v794
        %v3121 = vunpack.c.l.b16 %v795
        %v3122 = vunpack.c.h.b16 %v795
        %v3123 = vunpack.c.l.b16 %v796
        %v3124 = vunpack.c.h.b16 %v796
        %v3125 = vunpack.c.l.b16 %v797
        %v3126 = vunpack.c.h.b16 %v797
        %v3127 = vunpack.c.l.b16 %v798
        %v3128 = vunpack.c.h.b16 %v798
        %v3129 = vunpack.c.l.b16 %v799
        %v3130 = vunpack.c.h.b16 %v799
        %v3131 = vunpack.c.l.b16 %v800
        %v3132 = vunpack.c.h.b16 %v800
        %v3133 = vunpack.c.l.b16 %v801
        %v3134 = vunpack.c.h.b16 %v801
        %v3135 = vunpack.c.l.b16 %v802
        %v3136 = vunpack.c.h.b16 %v802
        %v3137 = vunpack.c.l.b16 %v803
        %v3138 = vunpack.c.h.b16 %v803
        %v3139 = vunpack.c.l.b16 %v804
        %v3140 = vunpack.c.h.b16 %v804
        %v3141 = vunpack.c.l.b16 %v805
        %v3142 = vunpack.c.h.b16 %v805
        %v3143 = vunpack.c.l.b16 %v806
        %v3144 = vunpack.c.h.b16 %v806
        %v3145 = vunpack.c.l.b16 %v807
        %v3146 = vunpack.c.h.b16 %v807
        %v3147 = vunpack.c.l.b16 %v808
        %v3148 = vunpack.c.h.b16 %v808
        %v3149 = vunpack.c.l.b16 %v809
        %v3150 = vunpack.c.h.b16 %v809
        %v3151 = vunpack.c.l.b16 %v810
        %v3152 = vunpack.c.h.b16 %v810
        %v3153 = vunpack.c.l.b16 %v811
        %v3154 = vunpack.c.h.b16 %v811
        %v3155 = vunpack.c.l.b16 %v812
        %v3156 = vunpack.c.h.b16 %v812
        %v3157 = vunpack.c.l.b16 %v813
        %v3158 = vunpack.c.h.b16 %v813
        %v3159 = vunpack.c.l.b16 %v814
        %v3160 = vunpack.c.h.b16 %v814
        %v3161 = vunpack.c.l.b16 %v815
        %v3162 = vunpack.c.h.b16 %v815
        %v3163 = vunpack.c.l.b16 %v816
        %v3164 = vunpack.c.h.b16 %v816
        %v3165 = vunpack.c.l.b16 %v817
        %v3166 = vunpack.c.h.b16 %v817
        %v3167 = vunpack.c.l.b16 %v818
        %v3168 = vunpack.c.h.b16 %v818
        %v3169 = vunpack.c.l.b16 %v819
        %v3170 = vunpack.c.h.b16 %v819
        %v3171 = vunpack.c.l.b16 %v820
        %v3172 = vunpack.c.h.b16 %v820
        %v3173 = vunpack.c.l.b16 %v821
        %v3174 = vunpack.c.h.b16 %v821
        %v3175 = vunpack.c.l.b16 %v822
        %v3176 = vunpack.c.h.b16 %v822
        %v3177 = vunpack.c.l.b16 %v823
        %v3178 = vunpack.c.h.b16 %v823
        %v3179 = vunpack.c.l.b16 %v824
        %v3180 = vunpack.c.h.b16 %v824
        %v3181 = vunpack.c.l.b16 %v825
        %v3182 = vunpack.c.h.b16 %v825
        %v3183 = vunpack.c.l.b16 %v826
        %v3184 = vunpack.c.h.b16 %v826
        %v3185 = vunpack.c.l.b16 %v827
        %v3186 = vunpack.c.h.b16 %v827
        %v3187 = vunpack.c.l.b16 %v828
        %v3188 = vunpack.c.h.b16 %v828
        %v3189 = vunpack.c.l.b16 %v829
        %v3190 = vunpack.c.h.b16 %v829
        %v3191 = vunpack.c.l.b16 %v830
        %v3192 = vunpack.c.h.b16 %v830
        %v3193 = vunpack.c.l.b16 %v831
        %v3194 = vunpack.c.h.b16 %v831
        %v3195 = vunpack.c.l.b16 %v832
        %v3196 = vunpack.c.h.b16 %v832
        %v3197 = vunpack.c.l.b16 %v833
        %v3198 = vunpack.c.h.b16 %v833
        %v3199 = vunpack.c.l.b16 %v834
        %v3200 = vunpack.c.h.b16 %v834
        %v3201 = vunpack.c.l.b16 %v835
        %v3202 = vunpack.c.h.b16 %v835
        %v3203 = vunpack.c.l.b16 %v836
        %v3204 = vunpack.c.h.b16 %v836
        %v3205 = vunpack.c.l.b16 %v837
        %v3206 = vunpack.c.h.b16 %v837
        %v3207 = vunpack.c.l.b16 %v838
        %v3208 = vunpack.c.h.b16 %v838
        %v3209 = vunpack.c.l.b16 %v839
        %v3210 = vunpack.c.h.b16 %v839
        %v3211 = vunpack.c.l.b16 %v840
        %v3212 = vunpack.c.h.b16 %v840
        %v3213 = vunpack.c.l.b16 %v841
        %v3214 = vunpack.c.h.b16 %v841
        %v3215 = vunpack.c.l.b16 %v842
        %v3216 = vunpack.c.h.b16 %v842
        %v3217 = vunpack.c.l.b16 %v843
        %v3218 = vunpack.c.h.b16 %v843
        %v3219 = vunpack.c.l.b16 %v844
        %v3220 = vunpack.c.h.b16 %v844
        %v3221 = vunpack.c.l.b16 %v845
        %v3222 = vunpack.c.h.b16 %v845
        %v3223 = vunpack.c.l.b16 %v846
        %v3224 = vunpack.c.h.b16 %v846
        %v3225 = vunpack.c.l.b16 %v847
        %v3226 = vunpack.c.h.b16 %v847
        %v3227 = vunpack.c.l.b16 %v848
        %v3228 = vunpack.c.h.b16 %v848
        %v3229 = vunpack.c.l.b16 %v849
        %v3230 = vunpack.c.h.b16 %v849
        %v3231 = vunpack.c.l.b16 %v850
        %v3232 = vunpack.c.h.b16 %v850
        %v3233 = vunpack.c.l.b16 %v851
        %v3234 = vunpack.c.h.b16 %v851
        %v3235 = vunpack.c.l.b16 %v852
        %v3236 = vunpack.c.h.b16 %v852
        %v3237 = vunpack.c.l.b16 %v853
        %v3238 = vunpack.c.h.b16 %v853
        %v3239 = vunpack.c.l.b16 %v854
        %v3240 = vunpack.c.h.b16 %v854
        %v3241 = vunpack.c.l.b16 %v855
        %v3242 = vunpack.c.h.b16 %v855
        %v3243 = vunpack.c.l.b16 %v856
        %v3244 = vunpack.c.h.b16 %v856
        %v3245 = vunpack.c.l.b16 %v857
        %v3246 = vunpack.c.h.b16 %v857
        %v3247 = vunpack.c.l.b16 %v858
        %v3248 = vunpack.c.h.b16 %v858
        %v3249 = vunpack.c.l.b16 %v859
        %v3250 = vunpack.c.h.b16 %v859
        %v3251 = vunpack.c.l.b16 %v860
        %v3252 = vunpack.c.h.b16 %v860
        %v3253 = vunpack.c.l.b16 %v861
        %v3254 = vunpack.c.h.b16 %v861
        %v3255 = vunpack.c.l.b16 %v862
        %v3256 = vunpack.c.h.b16 %v862
        %v3257 = vunpack.c.l.b16 %v863
        %v3258 = vunpack.c.h.b16 %v863
        %v3259 = vunpack.c.l.b16 %v864
        %v3260 = vunpack.c.h.b16 %v864
        %v3261 = vunpack.c.l.b16 %v865
        %v3262 = vunpack.c.h.b16 %v865
        %v3263 = vunpack.c.l.b16 %v866
        %v3264 = vunpack.c.h.b16 %v866
        %v3265 = vunpack.c.l.b16 %v867
        %v3266 = vunpack.c.h.b16 %v867
        %v3267 = vunpack.c.l.b16 %v868
        %v3268 = vunpack.c.h.b16 %v868
        %v3269 = vunpack.c.l.b16 %v869
        %v3270 = vunpack.c.h.b16 %v869
        %v3271 = vunpack.c.l.b16 %v870
        %v3272 = vunpack.c.h.b16 %v870
        %v3273 = vunpack.c.l.b16 %v871
        %v3274 = vunpack.c.h.b16 %v871
        %v3275 = vunpack.c.l.b16 %v872
        %v3276 = vunpack.c.h.b16 %v872
        %v3277 = vunpack.c.l.b16 %v873
        %v3278 = vunpack.c.h.b16 %v873
        %v3279 = vunpack.c.l.b16 %v874
        %v3280 = vunpack.c.h.b16 %v874
        %v3281 = vunpack.c.l.b16 %v875
        %v3282 = vunpack.c.h.b16 %v875
        %v3283 = vunpack.c.l.b16 %v876
        %v3284 = vunpack.c.h.b16 %v876
        %v3285 = vunpack.c.l.b16 %v877
        %v3286 = vunpack.c.h.b16 %v877
        %v3287 = vunpack.c.l.b16 %v878
        %v3288 = vunpack.c.h.b16 %v878
        %v3289 = vunpack.c.l.b16 %v879
        %v3290 = vunpack.c.h.b16 %v879
        %v3291 = vunpack.c.l.b16 %v880
        %v3292 = vunpack.c.h.b16 %v880
        %v3293 = vunpack.c.l.b16 %v881
        %v3294 = vunpack.c.h.b16 %v881
        %v3295 = vunpack.c.l.b16 %v882
        %v3296 = vunpack.c.h.b16 %v882
        %v3297 = vunpack.c.l.b16 %v883
        %v3298 = vunpack.c.h.b16 %v883
        %v3299 = vunpack.c.l.b16 %v884
        %v3300 = vunpack.c.h.b16 %v884
        %v3301 = vunpack.c.l.b16 %v885
        %v3302 = vunpack.c.h.b16 %v885
        %v3303 = vunpack.c.l.b16 %v886
        %v3304 = vunpack.c.h.b16 %v886
        %v3305 = vunpack.c.l.b16 %v887
        %v3306 = vunpack.c.h.b16 %v887
        %v3307 = vunpack.c.l.b16 %v888
        %v3308 = vunpack.c.h.b16 %v888
        %v3309 = vunpack.c.l.b16 %v889
        %v3310 = vunpack.c.h.b16 %v889
        %v3311 = vunpack.c.l.b16 %v890
        %v3312 = vunpack.c.h.b16 %v890
        %v3313 = vunpack.c.l.b16 %v891
        %v3314 = vunpack.c.h.b16 %v891
        %v3315 = vunpack.c.l.b16 %v892
        %v3316 = vunpack.c.h.b16 %v892
        %v3317 = vunpack.c.l.b16 %v893
        %v3318 = vunpack.c.h.b16 %v893
        %v3319 = vunpack.c.l.b16 %v894
        %v3320 = vunpack.c.h.b16 %v894
        %v3321 = vunpack.c.l.b16 %v895
        %v3322 = vunpack.c.h.b16 %v895
        %v3323 = vunpack.c.l.b16 %v896
        %v3324 = vunpack.c.h.b16 %v896
        %v3325 = vunpack.c.l.b16 %v897
        %v3326 = vunpack.c.h.b16 %v897
        %v3327 = vunpack.c.l.b16 %v898
        %v3328 = vunpack.c.h.b16 %v898
        %v3329 = vunpack.c.l.b16 %v899
        %v3330 = vunpack.c.h.b16 %v899
        %v3331 = vunpack.c.l.b16 %v900
        %v3332 = vunpack.c.h.b16 %v900
        %v3333 = vunpack.c.l.b16 %v901
        %v3334 = vunpack.c.h.b16 %v901
        %v3335 = vunpack.c.l.b16 %v902
        %v3336 = vunpack.c.h.b16 %v902
        %v3337 = vunpack.c.l.b16 %v903
        %v3338 = vunpack.c.h.b16 %v903
        %v3339 = vunpack.c.l.b16 %v904
        %v3340 = vunpack.c.h.b16 %v904
        %v3341 = vunpack.c.l.b16 %v905
        %v3342 = vunpack.c.h.b16 %v905
        %v3343 = vunpack.c.l.b16 %v906
        %v3344 = vunpack.c.h.b16 %v906
        %v3345 = vunpack.c.l.b16 %v907
        %v3346 = vunpack.c.h.b16 %v907
        %v3347 = vunpack.c.l.b16 %v908
        %v3348 = vunpack.c.h.b16 %v908
        %v3349 = vunpack.c.l.b16 %v909
        %v3350 = vunpack.c.h.b16 %v909
        %v3351 = vunpack.c.l.b16 %v910
        %v3352 = vunpack.c.h.b16 %v910
        %v3353 = vunpack.c.l.b16 %v911
        %v3354 = vunpack.c.h.b16 %v911
        %v3355 = vunpack.c.l.b16 %v912
        %v3356 = vunpack.c.h.b16 %v912
        %v3357 = vunpack.c.l.b16 %v913
        %v3358 = vunpack.c.h.b16 %v913
        %v3359 = vunpack.c.l.b16 %v914
        %v3360 = vunpack.c.h.b16 %v914
        %v3361 = vunpack.c.l.b16 %v915
        %v3362 = vunpack.c.h.b16 %v915
        %v3363 = vunpack.c.l.b16 %v916
        %v3364 = vunpack.c.h.b16 %v916
        %v3365 = vunpack.c.l.b16 %v917
        %v3366 = vunpack.c.h.b16 %v917
        %v3367 = vunpack.c.l.b16 %v918
        %v3368 = vunpack.c.h.b16 %v918
        %v3369 = vunpack.c.l.b16 %v919
        %v3370 = vunpack.c.h.b16 %v919
        %v3371 = vunpack.c.l.b16 %v920
        %v3372 = vunpack.c.h.b16 %v920
        %v3373 = vunpack.c.l.b16 %v921
        %v3374 = vunpack.c.h.b16 %v921
        %v3375 = vunpack.c.l.b16 %v922
        %v3376 = vunpack.c.h.b16 %v922
        %v3377 = vunpack.c.l.b16 %v923
        %v3378 = vunpack.c.h.b16 %v923
        %v3379 = vunpack.c.l.b16 %v924
        %v3380 = vunpack.c.h.b16 %v924
        %v3381 = vunpack.c.l.b16 %v925
        %v3382 = vunpack.c.h.b16 %v925
        %v3383 = vunpack.c.l.b16 %v926
        %v3384 = vunpack.c.h.b16 %v926
        %v3385 = vunpack.c.l.b16 %v927
        %v3386 = vunpack.c.h.b16 %v927
        %v3387 = vunpack.c.l.b16 %v928
        %v3388 = vunpack.c.h.b16 %v928
        %v3389 = vunpack.c.l.b16 %v929
        %v3390 = vunpack.c.h.b16 %v929
        %v3391 = vunpack.c.l.b16 %v930
        %v3392 = vunpack.c.h.b16 %v930
        %v3393 = vunpack.c.l.b16 %v931
        %v3394 = vunpack.c.h.b16 %v931
        %v3395 = vunpack.c.l.b16 %v932
        %v3396 = vunpack.c.h.b16 %v932
        %v3397 = vunpack.c.l.b16 %v933
        %v3398 = vunpack.c.h.b16 %v933
        %v3399 = vunpack.c.l.b16 %v934
        %v3400 = vunpack.c.h.b16 %v934
        %v3401 = vunpack.c.l.b16 %v935
        %v3402 = vunpack.c.h.b16 %v935
        %v3403 = vunpack.c.l.b16 %v936
        %v3404 = vunpack.c.h.b16 %v936
        %v3405 = vunpack.c.l.b16 %v937
        %v3406 = vunpack.c.h.b16 %v937
        %v3407 = vunpack.c.l.b16 %v938
        %v3408 = vunpack.c.h.b16 %v938
        %v3409 = vunpack.c.l.b16 %v939
        %v3410 = vunpack.c.h.b16 %v939
        %v3411 = vunpack.c.l.b16 %v940
        %v3412 = vunpack.c.h.b16 %v940
        %v3413 = vunpack.c.l.b16 %v941
        %v3414 = vunpack.c.h.b16 %v941
        %v3415 = vunpack.c.l.b16 %v942
        %v3416 = vunpack.c.h.b16 %v942
        %v3417 = vunpack.c.l.b16 %v943
        %v3418 = vunpack.c.h.b16 %v943
        %v3419 = vunpack.c.l.b16 %v944
        %v3420 = vunpack.c.h.b16 %v944
        %v3421 = vunpack.c.l.b16 %v945
        %v3422 = vunpack.c.h.b16 %v945
        %v3423 = vunpack.c.l.b16 %v946
        %v3424 = vunpack.c.h.b16 %v946
        %v3425 = vunpack.c.l.b16 %v947
        %v3426 = vunpack.c.h.b16 %v947
        %v3427 = vunpack.c.l.b16 %v948
        %v3428 = vunpack.c.h.b16 %v948
        %v3429 = vunpack.c.l.b16 %v949
        %v3430 = vunpack.c.h.b16 %v949
        %v3431 = vunpack.c.l.b16 %v950
        %v3432 = vunpack.c.h.b16 %v950
        %v3433 = vunpack.c.l.b16 %v951
        %v3434 = vunpack.c.h.b16 %v951
        %v3435 = vunpack.c.l.b16 %v952
        %v3436 = vunpack.c.h.b16 %v952
        %v3437 = vunpack.c.l.b16 %v953
        %v3438 = vunpack.c.h.b16 %v953
        %v3439 = vunpack.c.l.b16 %v954
        %v3440 = vunpack.c.h.b16 %v954
        %v3441 = vunpack.c.l.b16 %v955
        %v3442 = vunpack.c.h.b16 %v955
        %v3443 = vunpack.c.l.b16 %v956
        %v3444 = vunpack.c.h.b16 %v956
        %v3445 = vunpack.c.l.b16 %v957
        %v3446 = vunpack.c.h.b16 %v957
        %v3447 = vunpack.c.l.b16 %v958
        %v3448 = vunpack.c.h.b16 %v958
        %v3449 = vunpack.c.l.b16 %v959
        %v3450 = vunpack.c.h.b16 %v959
        %v3451 = vunpack.c.l.b16 %v960
        %v3452 = vunpack.c.h.b16 %v960
        %v3453 = vunpack.c.l.b16 %v961
        %v3454 = vunpack.c.h.b16 %v961
        %v3455 = vunpack.c.l.b16 %v962
        %v3456 = vunpack.c.h.b16 %v962
        %v3457 = vunpack.c.l.b16 %v963
        %v3458 = vunpack.c.h.b16 %v963
        %v3459 = vunpack.c.l.b16 %v964
        %v3460 = vunpack.c.h.b16 %v964
        %v3461 = vunpack.c.l.b16 %v965
        %v3462 = vunpack.c.h.b16 %v965
        %v3463 = vunpack.c.l.b16 %v966
        %v3464 = vunpack.c.h.b16 %v966
        %v3465 = vunpack.c.l.b16 %v967
        %v3466 = vunpack.c.h.b16 %v967
        %v3467 = vunpack.c.l.b16 %v968
        %v3468 = vunpack.c.h.b16 %v968
        %v3469 = vunpack.c.l.b16 %v969
        %v3470 = vunpack.c.h.b16 %v969
        %v3471 = vunpack.c.l.b16 %v970
        %v3472 = vunpack.c.h.b16 %v970
        %v3473 = vunpack.c.l.b16 %v971
        %v3474 = vunpack.c.h.b16 %v971
        %v3475 = vunpack.c.l.b16 %v972
        %v3476 = vunpack.c.h.b16 %v972
        %v3477 = vunpack.c.l.b16 %v973
        %v3478 = vunpack.c.h.b16 %v973
        %v3479 = vunpack.c.l.b16 %v974
        %v3480 = vunpack.c.h.b16 %v974
        %v3481 = vunpack.c.l.b16 %v975
        %v3482 = vunpack.c.h.b16 %v975
        %v3483 = vunpack.c.l.b16 %v976
        %v3484 = vunpack.c.h.b16 %v976
        %v3485 = vunpack.c.l.b16 %v977
        %v3486 = vunpack.c.h.b16 %v977
        %v3487 = vunpack.c.l.b16 %v978
        %v3488 = vunpack.c.h.b16 %v978
        %v3489 = vunpack.c.l.b16 %v979
        %v3490 = vunpack.c.h.b16 %v979
        %v3491 = vunpack.c.l.b16 %v980
        %v3492 = vunpack.c.h.b16 %v980
        %v3493 = vunpack.c.l.b16 %v981
        %v3494 = vunpack.c.h.b16 %v981
        %v3495 = vunpack.c.l.b16 %v982
        %v3496 = vunpack.c.h.b16 %v982
        %v3497 = vunpack.c.l.b16 %v983
        %v3498 = vunpack.c.h.b16 %v983
        %v3499 = vunpack.c.l.b16 %v984
        %v3500 = vunpack.c.h.b16 %v984
        %v3501 = vunpack.c.l.b16 %v985
        %v3502 = vunpack.c.h.b16 %v985
        %v3503 = vunpack.c.l.b16 %v986
        %v3504 = vunpack.c.h.b16 %v986
        %v3505 = vunpack.c.l.b16 %v987
        %v3506 = vunpack.c.h.b16 %v987
        %v3507 = vunpack.c.l.b16 %v988
        %v3508 = vunpack.c.h.b16 %v988
        %v3509 = vunpack.c.l.b16 %v989
        %v3510 = vunpack.c.h.b16 %v989
        %v3511 = vunpack.c.l.b16 %v990
        %v3512 = vunpack.c.h.b16 %v990
        %v3513 = vunpack.c.l.b16 %v991
        %v3514 = vunpack.c.h.b16 %v991
        %v3515 = vunpack.c.l.b16 %v992
        %v3516 = vunpack.c.h.b16 %v992
        %v3517 = vunpack.c.l.b16 %v993
        %v3518 = vunpack.c.h.b16 %v993
        %v3519 = vunpack.c.l.b16 %v994
        %v3520 = vunpack.c.h.b16 %v994
        %v3521 = vunpack.c.l.b16 %v995
        %v3522 = vunpack.c.h.b16 %v995
        %v3523 = vunpack.c.l.b16 %v996
        %v3524 = vunpack.c.h.b16 %v996
        %v3525 = vunpack.c.l.b16 %v997
        %v3526 = vunpack.c.h.b16 %v997
        %v3527 = vunpack.c.l.b16 %v998
        %v3528 = vunpack.c.h.b16 %v998
        %v3529 = vunpack.c.l.b16 %v999
        %v3530 = vunpack.c.h.b16 %v999
        %v3531 = vunpack.c.l.b16 %v1000
        %v3532 = vunpack.c.h.b16 %v1000
        %v3533 = vunpack.c.l.b16 %v1001
        %v3534 = vunpack.c.h.b16 %v1001
        %v3535 = vunpack.c.l.b16 %v1002
        %v3536 = vunpack.c.h.b16 %v1002
        %v3537 = vunpack.c.l.b16 %v1003
        %v3538 = vunpack.c.h.b16 %v1003
        %v3539 = vunpack.c.l.b16 %v1004
        %v3540 = vunpack.c.h.b16 %v1004
        %v3541 = vunpack.c.l.b16 %v1005
        %v3542 = vunpack.c.h.b16 %v1005
        %v3543 = vunpack.c.l.b16 %v1006
        %v3544 = vunpack.c.h.b16 %v1006
        %v3545 = vunpack.c.l.b16 %v1007
        %v3546 = vunpack.c.h.b16 %v1007
        %v3547 = vunpack.c.l.b16 %v1008
        %v3548 = vunpack.c.h.b16 %v1008
        %v3549 = vunpack.c.l.b16 %v1009
        %v3550 = vunpack.c.h.b16 %v1009
        %v3551 = vunpack.c.l.b16 %v1010
        %v3552 = vunpack.c.h.b16 %v1010
        %v3553 = vunpack.c.l.b16 %v1011
        %v3554 = vunpack.c.h.b16 %v1011
        %v3555 = vunpack.c.l.b16 %v1012
        %v3556 = vunpack.c.h.b16 %v1012
        %v3557 = vunpack.c.l.b16 %v1013
        %v3558 = vunpack.c.h.b16 %v1013
        %v3559 = vunpack.c.l.b16 %v1014
        %v3560 = vunpack.c.h.b16 %v1014
        %v3561 = vunpack.c.l.b16 %v1015
        %v3562 = vunpack.c.h.b16 %v1015
        %v3563 = vunpack.c.l.b16 %v1016
        %v3564 = vunpack.c.h.b16 %v1016
        %v3565 = vunpack.c.l.b16 %v1017
        %v3566 = vunpack.c.h.b16 %v1017
        %v3567 = vunpack.c.l.b16 %v1018
        %v3568 = vunpack.c.h.b16 %v1018
        %v3569 = vunpack.c.l.b16 %v1019
        %v3570 = vunpack.c.h.b16 %v1019
        %v3571 = vunpack.c.l.b16 %v1020
        %v3572 = vunpack.c.h.b16 %v1020
        %v3573 = vunpack.c.l.b16 %v1021
        %v3574 = vunpack.c.h.b16 %v1021
        %v3575 = vunpack.c.l.b16 %v1022
        %v3576 = vunpack.c.h.b16 %v1022
        %v3577 = vunpack.c.l.b16 %v1023
        %v3578 = vunpack.c.h.b16 %v1023
        %v3579 = vunpack.c.l.b16 %v1024
        %v3580 = vunpack.c.h.b16 %v1024
        %v3581 = vunpack.c.l.b16 %v1025
        %v3582 = vunpack.c.h.b16 %v1025
        %v3583 = vunpack.c.l.b16 %v1026
        %v3584 = vunpack.c.h.b16 %v1026
        %v3585 = vunpack.c.l.b16 %v1027
        %v3586 = vunpack.c.h.b16 %v1027
        %v3587 = vunpack.c.l.b16 %v1028
        %v3588 = vunpack.c.h.b16 %v1028
        %v3589 = vunpack.c.l.b16 %v1029
        %v3590 = vunpack.c.h.b16 %v1029
        %v3591 = vunpack.c.l.b16 %v1030
        %v3592 = vunpack.c.h.b16 %v1030
        %v3593 = vunpack.c.l.b16 %v1031
        %v3594 = vunpack.c.h.b16 %v1031
        %v3595 = vunpack.c.l.b16 %v1032
        %v3596 = vunpack.c.h.b16 %v1032
        %v3597 = vunpack.c.l.b16 %v1033
        %v3598 = vunpack.c.h.b16 %v1033
        %v3599 = vunpack.c.l.b16 %v1034
        %v3600 = vunpack.c.h.b16 %v1034
        %v3601 = vunpack.c.l.b16 %v1035
        %v3602 = vunpack.c.h.b16 %v1035
        %v3603 = vunpack.c.l.b16 %v1036
        %v3604 = vunpack.c.h.b16 %v1036
        %v3605 = vunpack.c.l.b16 %v1037
        %v3606 = vunpack.c.h.b16 %v1037
        %v3607 = vunpack.c.l.b16 %v1038
        %v3608 = vunpack.c.h.b16 %v1038
        %v3609 = vunpack.c.l.b16 %v1039
        %v3610 = vunpack.c.h.b16 %v1039
        %v3611 = vunpack.c.l.b16 %v1040
        %v3612 = vunpack.c.h.b16 %v1040
        %v3613 = vunpack.c.l.b16 %v1041
        %v3614 = vunpack.c.h.b16 %v1041
        %v3615 = vunpack.c.l.b16 %v1042
        %v3616 = vunpack.c.h.b16 %v1042
        %v3617 = vunpack.c.l.b16 %v1043
        %v3618 = vunpack.c.h.b16 %v1043
        %v3619 = vunpack.c.l.b16 %v1044
        %v3620 = vunpack.c.h.b16 %v1044
        %v3621 = vunpack.c.l.b16 %v1045
        %v3622 = vunpack.c.h.b16 %v1045
        %v3623 = vunpack.c.l.b16 %v1046
        %v3624 = vunpack.c.h.b16 %v1046
        %v3625 = vunpack.c.l.b16 %v1047
        %v3626 = vunpack.c.h.b16 %v1047
        %v3627 = vunpack.c.l.b16 %v1048
        %v3628 = vunpack.c.h.b16 %v1048
        %v3629 = vunpack.c.l.b16 %v1049
        %v3630 = vunpack.c.h.b16 %v1049
        %v3631 = vunpack.c.l.b16 %v1050
        %v3632 = vunpack.c.h.b16 %v1050
        %v3633 = vunpack.c.l.b16 %v1051
        %v3634 = vunpack.c.h.b16 %v1051
        %v3635 = vunpack.c.l.b16 %v1052
        %v3636 = vunpack.c.h.b16 %v1052
        %v3637 = vunpack.c.l.b16 %v1053
        %v3638 = vunpack.c.h.b16 %v1053
        %v3639 = vunpack.c.l.b16 %v1054
        %v3640 = vunpack.c.h.b16 %v1054
        %v3641 = vunpack.c.l.b16 %v1055
        %v3642 = vunpack.c.h.b16 %v1055
        %v3643 = vunpack.c.l.b16 %v1056
        %v3644 = vunpack.c.h.b16 %v1056
        %v3645 = vunpack.c.l.b16 %v1057
        %v3646 = vunpack.c.h.b16 %v1057
        %v3647 = vunpack.c.l.b16 %v1058
        %v3648 = vunpack.c.h.b16 %v1058
        %v3649 = vunpack.c.l.b16 %v1059
        %v3650 = vunpack.c.h.b16 %v1059
        %v3651 = vunpack.c.l.b16 %v1060
        %v3652 = vunpack.c.h.b16 %v1060
        %v3653 = vunpack.c.l.b16 %v1061
        %v3654 = vunpack.c.h.b16 %v1061
        %v3655 = vunpack.c.l.b16 %v1062
        %v3656 = vunpack.c.h.b16 %v1062
        %v3657 = vunpack.c.l.b16 %v1063
        %v3658 = vunpack.c.h.b16 %v1063
        %v3659 = vunpack.c.l.b16 %v1064
        %v3660 = vunpack.c.h.b16 %v1064
        %v3661 = vunpack.c.l.b16 %v1065
        %v3662 = vunpack.c.h.b16 %v1065
        %v3663 = vunpack.c.l.b16 %v1066
        %v3664 = vunpack.c.h.b16 %v1066
        %v3665 = vunpack.c.l.b16 %v1067
        %v3666 = vunpack.c.h.b16 %v1067
        %v3667 = vunpack.c.l.b16 %v1068
        %v3668 = vunpack.c.h.b16 %v1068
        %v3669 = vunpack.c.l.b16 %v1069
        %v3670 = vunpack.c.h.b16 %v1069
        %v3671 = vunpack.c.l.b16 %v1070
        %v3672 = vunpack.c.h.b16 %v1070
        %v3673 = vunpack.c.l.b16 %v1071
        %v3674 = vunpack.c.h.b16 %v1071
        %v3675 = vunpack.c.l.b16 %v1072
        %v3676 = vunpack.c.h.b16 %v1072
        %v3677 = vunpack.c.l.b16 %v1073
        %v3678 = vunpack.c.h.b16 %v1073
        %v3679 = vunpack.c.l.b16 %v1074
        %v3680 = vunpack.c.h.b16 %v1074
        %v3681 = vunpack.c.l.b16 %v1075
        %v3682 = vunpack.c.h.b16 %v1075
        %v3683 = vunpack.c.l.b16 %v1076
        %v3684 = vunpack.c.h.b16 %v1076
        %v3685 = vunpack.c.l.b16 %v1077
        %v3686 = vunpack.c.h.b16 %v1077
        %v3687 = vunpack.c.l.b16 %v1078
        %v3688 = vunpack.c.h.b16 %v1078
        %v3689 = vunpack.c.l.b16 %v1079
        %v3690 = vunpack.c.h.b16 %v1079
        %v3691 = vunpack.c.l.b16 %v1080
        %v3692 = vunpack.c.h.b16 %v1080
        %v3693 = vunpack.c.l.b16 %v1081
        %v3694 = vunpack.c.h.b16 %v1081
        %v3695 = vunpack.c.l.b16 %v1082
        %v3696 = vunpack.c.h.b16 %v1082
        %v3697 = vunpack.c.l.b16 %v1083
        %v3698 = vunpack.c.h.b16 %v1083
        %v3699 = vunpack.c.l.b16 %v1084
        %v3700 = vunpack.c.h.b16 %v1084
        %v3701 = vunpack.c.l.b16 %v1085
        %v3702 = vunpack.c.h.b16 %v1085
        %v3703 = vunpack.c.l.b16 %v1086
        %v3704 = vunpack.c.h.b16 %v1086
        %v3705 = vunpack.c.l.b16 %v1087
        %v3706 = vunpack.c.h.b16 %v1087
        %v3707 = vunpack.c.l.b16 %v1088
        %v3708 = vunpack.c.h.b16 %v1088
        %v3709 = vunpack.c.l.b16 %v1089
        %v3710 = vunpack.c.h.b16 %v1089
        %v3711 = vunpack.c.l.b16 %v1090
        %v3712 = vunpack.c.h.b16 %v1090
        %v3713 = vunpack.c.l.b16 %v1091
        %v3714 = vunpack.c.h.b16 %v1091
        %v3715 = vunpack.c.l.b16 %v1092
        %v3716 = vunpack.c.h.b16 %v1092
        %v3717 = vunpack.c.l.b16 %v1093
        %v3718 = vunpack.c.h.b16 %v1093
        %v3719 = vunpack.c.l.b16 %v1094
        %v3720 = vunpack.c.h.b16 %v1094
        %v3721 = vunpack.c.l.b16 %v1095
        %v3722 = vunpack.c.h.b16 %v1095
        %v3723 = vunpack.c.l.b16 %v1096
        %v3724 = vunpack.c.h.b16 %v1096
        %v3725 = vunpack.c.l.b16 %v1097
        %v3726 = vunpack.c.h.b16 %v1097
        %v3727 = vunpack.c.l.b16 %v1098
        %v3728 = vunpack.c.h.b16 %v1098
        %v3729 = vunpack.c.l.b16 %v1099
        %v3730 = vunpack.c.h.b16 %v1099
        %v3731 = vunpack.c.l.b16 %v1100
        %v3732 = vunpack.c.h.b16 %v1100
        %v3733 = vunpack.c.l.b16 %v1101
        %v3734 = vunpack.c.h.b16 %v1101
        %v3735 = vunpack.c.l.b16 %v1102
        %v3736 = vunpack.c.h.b16 %v1102
        %v3737 = vunpack.c.l.b16 %v1103
        %v3738 = vunpack.c.h.b16 %v1103
        %v3739 = vunpack.c.l.b16 %v1104
        %v3740 = vunpack.c.h.b16 %v1104
        %v3741 = vunpack.c.l.b16 %v1105
        %v3742 = vunpack.c.h.b16 %v1105
        %v3743 = vunpack.c.l.b16 %v1106
        %v3744 = vunpack.c.h.b16 %v1106
        %v3745 = vunpack.c.l.b16 %v1107
        %v3746 = vunpack.c.h.b16 %v1107
        %v3747 = vunpack.c.l.b16 %v1108
        %v3748 = vunpack.c.h.b16 %v1108
        %v3749 = vunpack.c.l.b16 %v1109
        %v3750 = vunpack.c.h.b16 %v1109
        %v3751 = vunpack.c.l.b16 %v1110
        %v3752 = vunpack.c.h.b16 %v1110
        %v3753 = vunpack.c.l.b16 %v1111
        %v3754 = vunpack.c.h.b16 %v1111
        %v3755 = vunpack.c.l.b16 %v1112
        %v3756 = vunpack.c.h.b16 %v1112
        %v3757 = vunpack.c.l.b16 %v1113
        %v3758 = vunpack.c.h.b16 %v1113
        %v3759 = vunpack.c.l.b16 %v1114
        %v3760 = vunpack.c.h.b16 %v1114
        %v3761 = vunpack.c.l.b16 %v1115
        %v3762 = vunpack.c.h.b16 %v1115
        %v3763 = vunpack.c.l.b16 %v1116
        %v3764 = vunpack.c.h.b16 %v1116
        %v3765 = vunpack.c.l.b16 %v1117
        %v3766 = vunpack.c.h.b16 %v1117
        %v3767 = vunpack.c.l.b16 %v1118
        %v3768 = vunpack.c.h.b16 %v1118
        %v3769 = vunpack.c.l.b16 %v1119
        %v3770 = vunpack.c.h.b16 %v1119
        %v3771 = vunpack.c.l.b16 %v1120
        %v3772 = vunpack.c.h.b16 %v1120
        %v3773 = vunpack.c.l.b16 %v1121
        %v3774 = vunpack.c.h.b16 %v1121
        %v3775 = vunpack.c.l.b16 %v1122
        %v3776 = vunpack.c.h.b16 %v1122
        %v3777 = vunpack.c.l.b16 %v1123
        %v3778 = vunpack.c.h.b16 %v1123
        %v3779 = vunpack.c.l.b16 %v1124
        %v3780 = vunpack.c.h.b16 %v1124
        %v3781 = vunpack.c.l.b16 %v1125
        %v3782 = vunpack.c.h.b16 %v1125
        %v3783 = vunpack.c.l.b16 %v1126
        %v3784 = vunpack.c.h.b16 %v1126
        %v3785 = vunpack.c.l.b16 %v1127
        %v3786 = vunpack.c.h.b16 %v1127
        %v3787 = vunpack.c.l.b16 %v1128
        %v3788 = vunpack.c.h.b16 %v1128
        %v3789 = vunpack.c.l.b16 %v1129
        %v3790 = vunpack.c.h.b16 %v1129
        %v3791 = vunpack.c.l.b16 %v1130
        %v3792 = vunpack.c.h.b16 %v1130
        %v3793 = vunpack.c.l.b16 %v1131
        %v3794 = vunpack.c.h.b16 %v1131
        %v3795 = vunpack.c.l.b16 %v1132
        %v3796 = vunpack.c.h.b16 %v1132
        %v3797 = vunpack.c.l.b16 %v1133
        %v3798 = vunpack.c.h.b16 %v1133
        %v3799 = vunpack.c.l.b16 %v1134
        %v3800 = vunpack.c.h.b16 %v1134
        %v3801 = vunpack.c.l.b16 %v1135
        %v3802 = vunpack.c.h.b16 %v1135
        %v3803 = vunpack.c.l.b16 %v1136
        %v3804 = vunpack.c.h.b16 %v1136
        %v3805 = vunpack.c.l.b16 %v1137
        %v3806 = vunpack.c.h.b16 %v1137
        %v3807 = vunpack.c.l.b16 %v1138
        %v3808 = vunpack.c.h.b16 %v1138
        %v3809 = vunpack.c.l.b16 %v1139
        %v3810 = vunpack.c.h.b16 %v1139
        %v3811 = vunpack.c.l.b16 %v1140
        %v3812 = vunpack.c.h.b16 %v1140
        %v3813 = vunpack.c.l.b16 %v1141
        %v3814 = vunpack.c.h.b16 %v1141
        %v3815 = vunpack.c.l.b16 %v1142
        %v3816 = vunpack.c.h.b16 %v1142
        %v3817 = vunpack.c.l.b16 %v1143
        %v3818 = vunpack.c.h.b16 %v1143
        %v3819 = vunpack.c.l.b16 %v1144
        %v3820 = vunpack.c.h.b16 %v1144
        %v3821 = vunpack.c.l.b16 %v1145
        %v3822 = vunpack.c.h.b16 %v1145
        %v3823 = vunpack.c.l.b16 %v1146
        %v3824 = vunpack.c.h.b16 %v1146
        %v3825 = vunpack.c.l.b16 %v1147
        %v3826 = vunpack.c.h.b16 %v1147
        %v3827 = vunpack.c.l.b16 %v1148
        %v3828 = vunpack.c.h.b16 %v1148
        %v3829 = vunpack.c.l.b16 %v1149
        %v3830 = vunpack.c.h.b16 %v1149
        %v3831 = vunpack.c.l.b16 %v1150
        %v3832 = vunpack.c.h.b16 %v1150
        %v3833 = vunpack.c.l.b16 %v1151
        %v3834 = vunpack.c.h.b16 %v1151
        %v3835 = vunpack.c.l.b16 %v1152
        %v3836 = vunpack.c.h.b16 %v1152
        %v3837 = vunpack.c.l.b16 %v1153
        %v3838 = vunpack.c.h.b16 %v1153
        %v3839 = vunpack.c.l.b16 %v1154
        %v3840 = vunpack.c.h.b16 %v1154
        %v3841 = vunpack.c.l.b16 %v1155
        %v3842 = vunpack.c.h.b16 %v1155
        %v3843 = vunpack.c.l.b16 %v1156
        %v3844 = vunpack.c.h.b16 %v1156
        %v3845 = vunpack.c.l.b16 %v1157
        %v3846 = vunpack.c.h.b16 %v1157
        %v3847 = vunpack.c.l.b16 %v1158
        %v3848 = vunpack.c.h.b16 %v1158
        %v3849 = vunpack.c.l.b16 %v1159
        %v3850 = vunpack.c.h.b16 %v1159
        %v3851 = vunpack.c.l.b16 %v1160
        %v3852 = vunpack.c.h.b16 %v1160
        %v3853 = vunpack.c.l.b16 %v1161
        %v3854 = vunpack.c.h.b16 %v1161
        %v3855 = vunpack.c.l.b16 %v1162
        %v3856 = vunpack.c.h.b16 %v1162
        %v3857 = vunpack.c.l.b16 %v1163
        %v3858 = vunpack.c.h.b16 %v1163
        %v3859 = vunpack.c.l.b16 %v1164
        %v3860 = vunpack.c.h.b16 %v1164
        %v3861 = vunpack.c.l.b16 %v1165
        %v3862 = vunpack.c.h.b16 %v1165
        %v3863 = vunpack.c.l.b16 %v1166
        %v3864 = vunpack.c.h.b16 %v1166
        %v3865 = vunpack.c.l.b16 %v1167
        %v3866 = vunpack.c.h.b16 %v1167
        %v3867 = vunpack.c.l.b16 %v1168
        %v3868 = vunpack.c.h.b16 %v1168
        %v3869 = vunpack.c.l.b16 %v1169
        %v3870 = vunpack.c.h.b16 %v1169
        %v3871 = vunpack.c.l.b16 %v1170
        %v3872 = vunpack.c.h.b16 %v1170
        %v3873 = vunpack.c.l.b16 %v1171
        %v3874 = vunpack.c.h.b16 %v1171
        %v3875 = vunpack.c.l.b16 %v1172
        %v3876 = vunpack.c.h.b16 %v1172
        %v3877 = vunpack.c.l.b16 %v1173
        %v3878 = vunpack.c.h.b16 %v1173
        %v3879 = vunpack.c.l.b16 %v1174
        %v3880 = vunpack.c.h.b16 %v1174
        %v3881 = vunpack.c.l.b16 %v1175
        %v3882 = vunpack.c.h.b16 %v1175
        %v3883 = vunpack.c.l.b16 %v1176
        %v3884 = vunpack.c.h.b16 %v1176
        %v3885 = vunpack.c.l.b16 %v1177
        %v3886 = vunpack.c.h.b16 %v1177
        %v3887 = vunpack.c.l.b16 %v1178
        %v3888 = vunpack.c.h.b16 %v1178
        %v3889 = vunpack.c.l.b16 %v1179
        %v3890 = vunpack.c.h.b16 %v1179
        %v3891 = vunpack.c.l.b16 %v1180
        %v3892 = vunpack.c.h.b16 %v1180
        %v3893 = vunpack.c.l.b16 %v1181
        %v3894 = vunpack.c.h.b16 %v1181
        %v3895 = vunpack.c.l.b16 %v1182
        %v3896 = vunpack.c.h.b16 %v1182
        %v3897 = vunpack.c.l.b16 %v1183
        %v3898 = vunpack.c.h.b16 %v1183
        %v3899 = vunpack.c.l.b16 %v1184
        %v3900 = vunpack.c.h.b16 %v1184
        %v3901 = vunpack.c.l.b16 %v1185
        %v3902 = vunpack.c.h.b16 %v1185
        %v3903 = vunpack.c.l.b16 %v1186
        %v3904 = vunpack.c.h.b16 %v1186
        %v3905 = vunpack.c.l.b16 %v1187
        %v3906 = vunpack.c.h.b16 %v1187
        %v3907 = vunpack.c.l.b16 %v1188
        %v3908 = vunpack.c.h.b16 %v1188
        %v3909 = vunpack.c.l.b16 %v1189
        %v3910 = vunpack.c.h.b16 %v1189
        %v3911 = vunpack.c.l.b16 %v1190
        %v3912 = vunpack.c.h.b16 %v1190
        %v3913 = vunpack.c.l.b16 %v1191
        %v3914 = vunpack.c.h.b16 %v1191
        %v3915 = vunpack.c.l.b16 %v1192
        %v3916 = vunpack.c.h.b16 %v1192
        %v3917 = vunpack.c.l.b16 %v1193
        %v3918 = vunpack.c.h.b16 %v1193
        %v3919 = vunpack.c.l.b16 %v1194
        %v3920 = vunpack.c.h.b16 %v1194
        %v3921 = vunpack.c.l.b16 %v1195
        %v3922 = vunpack.c.h.b16 %v1195
        %v3923 = vunpack.c.l.b16 %v1196
        %v3924 = vunpack.c.h.b16 %v1196
        %v3925 = vunpack.c.l.b16 %v1197
        %v3926 = vunpack.c.h.b16 %v1197
        %v3927 = vunpack.c.l.b16 %v1198
        %v3928 = vunpack.c.h.b16 %v1198
        %v3929 = vunpack.c.l.b16 %v1199
        %v3930 = vunpack.c.h.b16 %v1199
        %v3931 = vunpack.c.l.b16 %v1200
        %v3932 = vunpack.c.h.b16 %v1200
        %v3933 = vunpack.c.l.b16 %v1201
        %v3934 = vunpack.c.h.b16 %v1201
        %v3935 = vunpack.c.l.b16 %v1202
        %v3936 = vunpack.c.h.b16 %v1202
        %v3937 = vunpack.c.l.b16 %v1203
        %v3938 = vunpack.c.h.b16 %v1203
        %v3939 = vunpack.c.l.b16 %v1204
        %v3940 = vunpack.c.h.b16 %v1204
        %v3941 = vunpack.c.l.b16 %v1205
        %v3942 = vunpack.c.h.b16 %v1205
        %v3943 = vunpack.c.l.b16 %v1206
        %v3944 = vunpack.c.h.b16 %v1206
        %v3945 = vunpack.c.l.b16 %v1207
        %v3946 = vunpack.c.h.b16 %v1207
        %v3947 = vunpack.c.l.b16 %v1208
        %v3948 = vunpack.c.h.b16 %v1208
        %v3949 = vunpack.c.l.b16 %v1209
        %v3950 = vunpack.c.h.b16 %v1209
        %v3951 = vunpack.c.l.b16 %v1210
        %v3952 = vunpack.c.h.b16 %v1210
        %v3953 = vunpack.c.l.b16 %v1211
        %v3954 = vunpack.c.h.b16 %v1211
        %v3955 = vunpack.c.l.b16 %v1212
        %v3956 = vunpack.c.h.b16 %v1212
        %v3957 = vunpack.c.l.b16 %v1213
        %v3958 = vunpack.c.h.b16 %v1213
        %v3959 = vunpack.c.l.b16 %v1214
        %v3960 = vunpack.c.h.b16 %v1214
        %v3961 = vunpack.c.l.b16 %v1215
        %v3962 = vunpack.c.h.b16 %v1215
        %v3963 = vunpack.c.l.b16 %v1216
        %v3964 = vunpack.c.h.b16 %v1216
        %v3965 = vunpack.c.l.b16 %v1217
        %v3966 = vunpack.c.h.b16 %v1217
        %v3967 = vunpack.c.l.b16 %v1218
        %v3968 = vunpack.c.h.b16 %v1218
        %v3969 = vunpack.c.l.b16 %v1219
        %v3970 = vunpack.c.h.b16 %v1219
        %v3971 = vunpack.c.l.b16 %v1220
        %v3972 = vunpack.c.h.b16 %v1220
        %v3973 = vunpack.c.l.b16 %v1221
        %v3974 = vunpack.c.h.b16 %v1221
        %v3975 = vunpack.c.l.b16 %v1222
        %v3976 = vunpack.c.h.b16 %v1222
        %v3977 = vunpack.c.l.b16 %v1223
        %v3978 = vunpack.c.h.b16 %v1223
        %v3979 = vunpack.c.l.b16 %v1224
        %v3980 = vunpack.c.h.b16 %v1224
        %v3981 = vunpack.c.l.b16 %v1225
        %v3982 = vunpack.c.h.b16 %v1225
        %v3983 = vunpack.c.l.b16 %v1226
        %v3984 = vunpack.c.h.b16 %v1226
        %v3985 = vunpack.c.l.b16 %v1227
        %v3986 = vunpack.c.h.b16 %v1227
        %v3987 = vunpack.c.l.b16 %v1228
        %v3988 = vunpack.c.h.b16 %v1228
        %v3989 = vunpack.c.l.b16 %v1229
        %v3990 = vunpack.c.h.b16 %v1229
        %v3991 = vunpack.c.l.b16 %v1230
        %v3992 = vunpack.c.h.b16 %v1230
        %v3993 = vunpack.c.l.b16 %v1231
        %v3994 = vunpack.c.h.b16 %v1231
        %v3995 = vunpack.c.l.b16 %v1232
        %v3996 = vunpack.c.h.b16 %v1232
        %v3997 = vunpack.c.l.b16 %v1233
        %v3998 = vunpack.c.h.b16 %v1233
        %v3999 = vunpack.c.l.b16 %v1234
        %v4000 = vunpack.c.h.b16 %v1234
        %v4001 = vunpack.c.l.b16 %v1235
        %v4002 = vunpack.c.h.b16 %v1235
        %v4003 = vunpack.c.l.b16 %v1236
        %v4004 = vunpack.c.h.b16 %v1236
        %v4005 = vunpack.c.l.b16 %v1237
        %v4006 = vunpack.c.h.b16 %v1237
        %v4007 = vunpack.c.l.b16 %v1238
        %v4008 = vunpack.c.h.b16 %v1238
        %v4009 = vunpack.c.l.b16 %v1239
        %v4010 = vunpack.c.h.b16 %v1239
        %v4011 = vunpack.c.l.b16 %v1240
        %v4012 = vunpack.c.h.b16 %v1240
        %v4013 = vunpack.c.l.b16 %v1241
        %v4014 = vunpack.c.h.b16 %v1241
        %v4015 = vunpack.c.l.b16 %v1242
        %v4016 = vunpack.c.h.b16 %v1242
        %v4017 = vunpack.c.l.b16 %v1243
        %v4018 = vunpack.c.h.b16 %v1243
        %v4019 = vunpack.c.l.b16 %v1244
        %v4020 = vunpack.c.h.b16 %v1244
        %v4021 = vunpack.c.l.b16 %v1245
        %v4022 = vunpack.c.h.b16 %v1245
        %v4023 = vunpack.c.l.b16 %v1246
        %v4024 = vunpack.c.h.b16 %v1246
        %v4025 = vunpack.c.l.b16 %v1247
        %v4026 = vunpack.c.h.b16 %v1247
        %v4027 = vunpack.c.l.b16 %v1248
        %v4028 = vunpack.c.h.b16 %v1248
        %v4029 = vunpack.c.l.b16 %v1249
        %v4030 = vunpack.c.h.b16 %v1249
        %v4031 = vunpack.c.l.b16 %v1250
        %v4032 = vunpack.c.h.b16 %v1250
        %v4033 = vunpack.c.l.b16 %v1251
        %v4034 = vunpack.c.h.b16 %v1251
        %v4035 = vunpack.c.l.b16 %v1252
        %v4036 = vunpack.c.h.b16 %v1252
        %v4037 = vunpack.c.l.b16 %v1253
        %v4038 = vunpack.c.h.b16 %v1253
        %v4039 = vunpack.c.l.b16 %v1254
        %v4040 = vunpack.c.h.b16 %v1254
        %v4041 = vunpack.c.l.b16 %v1255
        %v4042 = vunpack.c.h.b16 %v1255
        %v4043 = vunpack.c.l.b16 %v1256
        %v4044 = vunpack.c.h.b16 %v1256
        %v4045 = vunpack.c.l.b16 %v1257
        %v4046 = vunpack.c.h.b16 %v1257
        %v4047 = vunpack.c.l.b16 %v1258
        %v4048 = vunpack.c.h.b16 %v1258
        %v4049 = vunpack.c.l.b16 %v1259
        %v4050 = vunpack.c.h.b16 %v1259
        %v4051 = vunpack.c.l.b16 %v1260
        %v4052 = vunpack.c.h.b16 %v1260
        %v4053 = vunpack.c.l.b16 %v1261
        %v4054 = vunpack.c.h.b16 %v1261
        %v4055 = vunpack.c.l.b16 %v1262
        %v4056 = vunpack.c.h.b16 %v1262
        %v4057 = vunpack.c.l.b16 %v1263
        %v4058 = vunpack.c.h.b16 %v1263
        %v4059 = vunpack.c.l.b16 %v1264
        %v4060 = vunpack.c.h.b16 %v1264
        %v4061 = vunpack.c.l.b16 %v1265
        %v4062 = vunpack.c.h.b16 %v1265
        %v4063 = vunpack.c.l.b16 %v1266
        %v4064 = vunpack.c.h.b16 %v1266
        %v4065 = vunpack.c.l.b16 %v1267
        %v4066 = vunpack.c.h.b16 %v1267
        %v4067 = vunpack.c.l.b16 %v1268
        %v4068 = vunpack.c.h.b16 %v1268
        %v4069 = vunpack.c.l.b16 %v1269
        %v4070 = vunpack.c.h.b16 %v1269
        %v4071 = vunpack.c.l.b16 %v1270
        %v4072 = vunpack.c.h.b16 %v1270
        %v4073 = vunpack.c.l.b16 %v1271
        %v4074 = vunpack.c.h.b16 %v1271
        %v4075 = vunpack.c.l.b16 %v1272
        %v4076 = vunpack.c.h.b16 %v1272
        %v4077 = vunpack.c.l.b16 %v1273
        %v4078 = vunpack.c.h.b16 %v1273
        %v4079 = vunpack.c.l.b16 %v1274
        %v4080 = vunpack.c.h.b16 %v1274
        %v4081 = vunpack.c.l.b16 %v1275
        %v4082 = vunpack.c.h.b16 %v1275
        %v4083 = vunpack.c.l.b16 %v1276
        %v4084 = vunpack.c.h.b16 %v1276
        %v4085 = vunpack.c.l.b16 %v1277
        %v4086 = vunpack.c.h.b16 %v1277
        %v4087 = vunpack.c.l.b16 %v1278
        %v4088 = vunpack.c.h.b16 %v1278
        %v4089 = vunpack.c.l.b16 %v1279
        %v4090 = vunpack.c.h.b16 %v1279
        %v4091 = vunpack.c.l.b16 %v1280
        %v4092 = vunpack.c.h.b16 %v1280
        %v4093 = vunpack.c.l.b16 %v1281
        %v4094 = vunpack.c.h.b16 %v1281
        %v4095 = vunpack.c.l.b16 %v1282
        %v4096 = vunpack.c.h.b16 %v1282
        %v4097 = vunpack.c.l.b16 %v1283
        %v4098 = vunpack.c.h.b16 %v1283
        %v4099 = vunpack.c.l.b16 %v1284
        %v4100 = vunpack.c.h.b16 %v1284
        %v4101 = vunpack.c.l.b16 %v1285
        %v4102 = vunpack.c.h.b16 %v1285
        %v4103 = vunpack.c.l.b16 %v1286
        %v4104 = vunpack.c.h.b16 %v1286
        %v4105 = vunpack.c.l.b16 %v1287
        %v4106 = vunpack.c.h.b16 %v1287
        %v4107 = vunpack.c.l.b16 %v1288
        %v4108 = vunpack.c.h.b16 %v1288
        %v4109 = vunpack.c.l.b16 %v1289
        %v4110 = vunpack.c.h.b16 %v1289
        %v4111 = vunpack.c.l.b16 %v1290
        %v4112 = vunpack.c.h.b16 %v1290
        %v4113 = vunpack.c.l.b16 %v1291
        %v4114 = vunpack.c.h.b16 %v1291
        %v4115 = vunpack.c.l.b16 %v1292
        %v4116 = vunpack.c.h.b16 %v1292
        %v4117 = vunpack.c.l.b16 %v1293
        %v4118 = vunpack.c.h.b16 %v1293
        %v4119 = vunpack.c.l.b16 %v1294
        %v4120 = vunpack.c.h.b16 %v1294
        %v4121 = vunpack.c.l.b16 %v1295
        %v4122 = vunpack.c.h.b16 %v1295
        %v4123 = vunpack.c.l.b16 %v1296
        %v4124 = vunpack.c.h.b16 %v1296
        %v4125 = vunpack.c.l.b16 %v1297
        %v4126 = vunpack.c.h.b16 %v1297
        %v4127 = vunpack.c.l.b16 %v1298
        %v4128 = vunpack.c.h.b16 %v1298
        %v4129 = vunpack.c.l.b16 %v1299
        %v4130 = vunpack.c.h.b16 %v1299
        %v4131 = vunpack.c.l.b16 %v1300
        %v4132 = vunpack.c.h.b16 %v1300
        %v4133 = vunpack.c.l.b16 %v1301
        %v4134 = vunpack.c.h.b16 %v1301
        %v4135 = vunpack.c.l.b16 %v1302
        %v4136 = vunpack.c.h.b16 %v1302
        %v4137 = vunpack.c.l.b16 %v1303
        %v4138 = vunpack.c.h.b16 %v1303
        %v4139 = vunpack.c.l.b16 %v1304
        %v4140 = vunpack.c.h.b16 %v1304
        %v4141 = vunpack.c.l.b16 %v1305
        %v4142 = vunpack.c.h.b16 %v1305
        %v4143 = vunpack.c.l.b16 %v1306
        %v4144 = vunpack.c.h.b16 %v1306
        %v4145 = vunpack.c.l.b16 %v1307
        %v4146 = vunpack.c.h.b16 %v1307
        %v4147 = vunpack.c.l.b16 %v1308
        %v4148 = vunpack.c.h.b16 %v1308
        %v4149 = vunpack.c.l.b16 %v1309
        %v4150 = vunpack.c.h.b16 %v1309
        %v4151 = vunpack.c.l.b16 %v1310
        %v4152 = vunpack.c.h.b16 %v1310
        %v4153 = vunpack.c.l.b16 %v1311
        %v4154 = vunpack.c.h.b16 %v1311
        %v4155 = vunpack.c.l.b16 %v1312
        %v4156 = vunpack.c.h.b16 %v1312
        %v4157 = vunpack.c.l.b16 %v1313
        %v4158 = vunpack.c.h.b16 %v1313
        %v4159 = vunpack.c.l.b16 %v1314
        %v4160 = vunpack.c.h.b16 %v1314
        %v4161 = vunpack.c.l.b16 %v1315
        %v4162 = vunpack.c.h.b16 %v1315
        %v4163 = vunpack.c.l.b16 %v1316
        %v4164 = vunpack.c.h.b16 %v1316
        %v4165 = vunpack.c.l.b16 %v1317
        %v4166 = vunpack.c.h.b16 %v1317
        %v4167 = vunpack.c.l.b16 %v1318
        %v4168 = vunpack.c.h.b16 %v1318
        %v4169 = vunpack.c.l.b16 %v1319
        %v4170 = vunpack.c.h.b16 %v1319
        %v4171 = vunpack.c.l.b16 %v1320
        %v4172 = vunpack.c.h.b16 %v1320
        %v4173 = vunpack.c.l.b16 %v1321
        %v4174 = vunpack.c.h.b16 %v1321
        %v4175 = vunpack.c.l.b16 %v1322
        %v4176 = vunpack.c.h.b16 %v1322
        %v4177 = vunpack.c.l.b16 %v1323
        %v4178 = vunpack.c.h.b16 %v1323
        %v4179 = vunpack.c.l.b16 %v1324
        %v4180 = vunpack.c.h.b16 %v1324
        %v4181 = vunpack.c.l.b16 %v1325
        %v4182 = vunpack.c.h.b16 %v1325
        %v4183 = vunpack.c.l.b16 %v1326
        %v4184 = vunpack.c.h.b16 %v1326
        %v4185 = vunpack.c.l.b16 %v1327
        %v4186 = vunpack.c.h.b16 %v1327
        %v4187 = vunpack.c.l.b16 %v1328
        %v4188 = vunpack.c.h.b16 %v1328
        %v4189 = vunpack.c.l.b16 %v1329
        %v4190 = vunpack.c.h.b16 %v1329
        %v4191 = vunpack.c.l.b16 %v1330
        %v4192 = vunpack.c.h.b16 %v1330
        %v4193 = vunpack.c.l.b16 %v1331
        %v4194 = vunpack.c.h.b16 %v1331
        %v4195 = vunpack.c.l.b16 %v1332
        %v4196 = vunpack.c.h.b16 %v1332
        %v4197 = vunpack.c.l.b16 %v1333
        %v4198 = vunpack.c.h.b16 %v1333
        %v4199 = vunpack.c.l.b16 %v1334
        %v4200 = vunpack.c.h.b16 %v1334
        %v4201 = vunpack.c.l.b16 %v1335
        %v4202 = vunpack.c.h.b16 %v1335
        %v4203 = vunpack.c.l.b16 %v1336
        %v4204 = vunpack.c.h.b16 %v1336
        %v4205 = vunpack.c.l.b16 %v1337
        %v4206 = vunpack.c.h.b16 %v1337
        %v4207 = vunpack.c.l.b16 %v1338
        %v4208 = vunpack.c.h.b16 %v1338
        %v4209 = vunpack.c.l.b16 %v1339
        %v4210 = vunpack.c.h.b16 %v1339
        %v4211 = vunpack.c.l.b16 %v1340
        %v4212 = vunpack.c.h.b16 %v1340
        %v4213 = vunpack.c.l.b16 %v1341
        %v4214 = vunpack.c.h.b16 %v1341
        %v4215 = vunpack.c.l.b16 %v1342
        %v4216 = vunpack.c.h.b16 %v1342
        %v4217 = vunpack.c.l.b16 %v1343
        %v4218 = vunpack.c.h.b16 %v1343
        %v4219 = vunpack.c.l.b16 %v1344
        %v4220 = vunpack.c.h.b16 %v1344
        %v4221 = vunpack.c.l.b16 %v1345
        %v4222 = vunpack.c.h.b16 %v1345
        %v4223 = vunpack.c.l.b16 %v1346
        %v4224 = vunpack.c.h.b16 %v1346
        %v4225 = vunpack.c.l.b16 %v1347
        %v4226 = vunpack.c.h.b16 %v1347
        %v4227 = vunpack.c.l.b16 %v1348
        %v4228 = vunpack.c.h.b16 %v1348
        %v4229 = vunpack.c.l.b16 %v1349
        %v4230 = vunpack.c.h.b16 %v1349
        %v4231 = vunpack.c.l.b16 %v1350
        %v4232 = vunpack.c.h.b16 %v1350
        %v4233 = vunpack.c.l.b16 %v1351
        %v4234 = vunpack.c.h.b16 %v1351
        %v4235 = vunpack.c.l.b16 %v1352
        %v4236 = vunpack.c.h.b16 %v1352
        %v4237 = vunpack.c.l.b16 %v1353
        %v4238 = vunpack.c.h.b16 %v1353
        %v4239 = vunpack.c.l.b16 %v1354
        %v4240 = vunpack.c.h.b16 %v1354
        %v4241 = vunpack.c.l.b16 %v1355
        %v4242 = vunpack.c.h.b16 %v1355
        %v4243 = vunpack.c.l.b16 %v1356
        %v4244 = vunpack.c.h.b16 %v1356
        %v4245 = vunpack.c.l.b16 %v1357
        %v4246 = vunpack.c.h.b16 %v1357
        %v4247 = vunpack.c.l.b16 %v1358
        %v4248 = vunpack.c.h.b16 %v1358
        %v4249 = vunpack.c.l.b16 %v1359
        %v4250 = vunpack.c.h.b16 %v1359
        %v4251 = vunpack.c.l.b16 %v1360
        %v4252 = vunpack.c.h.b16 %v1360
        %v4253 = vunpack.c.l.b16 %v1361
        %v4254 = vunpack.c.h.b16 %v1361
        %v4255 = vunpack.c.l.b16 %v1362
        %v4256 = vunpack.c.h.b16 %v1362
        %v4257 = vunpack.c.l.b16 %v1363
        %v4258 = vunpack.c.h.b16 %v1363
        %v4259 = vunpack.c.l.b16 %v1364
        %v4260 = vunpack.c.h.b16 %v1364
        %v4261 = vunpack.c.l.b16 %v1365
        %v4262 = vunpack.c.h.b16 %v1365
        %v4263 = vunpack.c.l.b16 %v1366
        %v4264 = vunpack.c.h.b16 %v1366
        %v4265 = vunpack.c.l.b16 %v1367
        %v4266 = vunpack.c.h.b16 %v1367
        %v4267 = vunpack.c.l.b16 %v1368
        %v4268 = vunpack.c.h.b16 %v1368
        %v4269 = vunpack.c.l.b16 %v1369
        %v4270 = vunpack.c.h.b16 %v1369
        %v4271 = vunpack.c.l.b16 %v1370
        %v4272 = vunpack.c.h.b16 %v1370
        %v4273 = vunpack.c.l.b16 %v1371
        %v4274 = vunpack.c.h.b16 %v1371
        %v4275 = vunpack.c.l.b16 %v1372
        %v4276 = vunpack.c.h.b16 %v1372
        %v4277 = vunpack.c.l.b16 %v1373
        %v4278 = vunpack.c.h.b16 %v1373
        %v4279 = vunpack.c.l.b16 %v1374
        %v4280 = vunpack.c.h.b16 %v1374
        %v4281 = vunpack.c.l.b16 %v1375
        %v4282 = vunpack.c.h.b16 %v1375
        %v4283 = vunpack.c.l.b16 %v1376
        %v4284 = vunpack.c.h.b16 %v1376
        %v4285 = vunpack.c.l.b16 %v1377
        %v4286 = vunpack.c.h.b16 %v1377
        %v4287 = vunpack.c.l.b16 %v1378
        %v4288 = vunpack.c.h.b16 %v1378
        %v4289 = vunpack.c.l.b16 %v1379
        %v4290 = vunpack.c.h.b16 %v1379
        %v4291 = vunpack.c.l.b16 %v1380
        %v4292 = vunpack.c.h.b16 %v1380
        %v4293 = vunpack.c.l.b16 %v1381
        %v4294 = vunpack.c.h.b16 %v1381
        %v4295 = vunpack.c.l.b16 %v1382
        %v4296 = vunpack.c.h.b16 %v1382
        %v4297 = vunpack.c.l.b16 %v1383
        %v4298 = vunpack.c.h.b16 %v1383
        %v4299 = vunpack.c.l.b16 %v1384
        %v4300 = vunpack.c.h.b16 %v1384
        %v4301 = vunpack.c.l.b16 %v1385
        %v4302 = vunpack.c.h.b16 %v1385
        %v4303 = vunpack.c.l.b16 %v1386
        %v4304 = vunpack.c.h.b16 %v1386
        %v4305 = vunpack.c.l.b16 %v1387
        %v4306 = vunpack.c.h.b16 %v1387
        %v4307 = vunpack.c.l.b16 %v1388
        %v4308 = vunpack.c.h.b16 %v1388
        %v4309 = vunpack.c.l.b16 %v1389
        %v4310 = vunpack.c.h.b16 %v1389
        %v4311 = vunpack.c.l.b16 %v1390
        %v4312 = vunpack.c.h.b16 %v1390
        %v4313 = vunpack.c.l.b16 %v1391
        %v4314 = vunpack.c.h.b16 %v1391
        %v4315 = vunpack.c.l.b16 %v1392
        %v4316 = vunpack.c.h.b16 %v1392
        %v4317 = vunpack.c.l.b16 %v1393
        %v4318 = vunpack.c.h.b16 %v1393
        %v4319 = vunpack.c.l.b16 %v1394
        %v4320 = vunpack.c.h.b16 %v1394
        %v4321 = vunpack.c.l.b16 %v1395
        %v4322 = vunpack.c.h.b16 %v1395
        %v4323 = vunpack.c.l.b16 %v1396
        %v4324 = vunpack.c.h.b16 %v1396
        %v4325 = vunpack.c.l.b16 %v1397
        %v4326 = vunpack.c.h.b16 %v1397
        %v4327 = vunpack.c.l.b16 %v1398
        %v4328 = vunpack.c.h.b16 %v1398
        %v4329 = vunpack.c.l.b16 %v1399
        %v4330 = vunpack.c.h.b16 %v1399
        %v4331 = vunpack.c.l.b16 %v1400
        %v4332 = vunpack.c.h.b16 %v1400
        %v4333 = vunpack.c.l.b16 %v1401
        %v4334 = vunpack.c.h.b16 %v1401
        %v4335 = vunpack.c.l.b16 %v1402
        %v4336 = vunpack.c.h.b16 %v1402
        %v4337 = vunpack.c.l.b16 %v1403
        %v4338 = vunpack.c.h.b16 %v1403
        %v4339 = vunpack.c.l.b16 %v1404
        %v4340 = vunpack.c.h.b16 %v1404
        %v4341 = vunpack.c.l.b16 %v1405
        %v4342 = vunpack.c.h.b16 %v1405
        %v4343 = vunpack.c.l.b16 %v1406
        %v4344 = vunpack.c.h.b16 %v1406
        %v4345 = vunpack.c.l.b16 %v1407
        %v4346 = vunpack.c.h.b16 %v1407
        %v4347 = vunpack.c.l.b16 %v1408
        %v4348 = vunpack.c.h.b16 %v1408
        %v4349 = vunpack.c.l.b16 %v1409
        %v4350 = vunpack.c.h.b16 %v1409
        %v4351 = vunpack.c.l.b16 %v1410
        %v4352 = vunpack.c.h.b16 %v1410
        %v4353 = vunpack.c.l.b16 %v1411
        %v4354 = vunpack.c.h.b16 %v1411
        %v4355 = vunpack.c.l.b16 %v1412
        %v4356 = vunpack.c.h.b16 %v1412
        %v4357 = vunpack.c.l.b16 %v1413
        %v4358 = vunpack.c.h.b16 %v1413
        %v4359 = vunpack.c.l.b16 %v1414
        %v4360 = vunpack.c.h.b16 %v1414
        %v4361 = vunpack.c.l.b16 %v1415
        %v4362 = vunpack.c.h.b16 %v1415
        %v4363 = vunpack.c.l.b16 %v1416
        %v4364 = vunpack.c.h.b16 %v1416
        %v4365 = vunpack.c.l.b16 %v1417
        %v4366 = vunpack.c.h.b16 %v1417
        %v4367 = vunpack.c.l.b16 %v1418
        %v4368 = vunpack.c.h.b16 %v1418
        %v4369 = vunpack.c.l.b16 %v1419
        %v4370 = vunpack.c.h.b16 %v1419
        %v4371 = vunpack.c.l.b16 %v1420
        %v4372 = vunpack.c.h.b16 %v1420
        %v4373 = vunpack.c.l.b16 %v1421
        %v4374 = vunpack.c.h.b16 %v1421
        %v4375 = vunpack.c.l.b16 %v1422
        %v4376 = vunpack.c.h.b16 %v1422
        %v4377 = vunpack.c.l.b16 %v1423
        %v4378 = vunpack.c.h.b16 %v1423
        %v4379 = vunpack.c.l.b16 %v1424
        %v4380 = vunpack.c.h.b16 %v1424
        %v4381 = vunpack.c.l.b16 %v1425
        %v4382 = vunpack.c.h.b16 %v1425
        %v4383 = vunpack.c.l.b16 %v1426
        %v4384 = vunpack.c.h.b16 %v1426
        %v4385 = vunpack.c.l.b16 %v1427
        %v4386 = vunpack.c.h.b16 %v1427
        %v4387 = vunpack.c.l.b16 %v1428
        %v4388 = vunpack.c.h.b16 %v1428
        %v4389 = vunpack.c.l.b16 %v1429
        %v4390 = vunpack.c.h.b16 %v1429
        %v4391 = vunpack.c.l.b16 %v1430
        %v4392 = vunpack.c.h.b16 %v1430
        %v4393 = vunpack.c.l.b16 %v1431
        %v4394 = vunpack.c.h.b16 %v1431
        %v4395 = vunpack.c.l.b16 %v1432
        %v4396 = vunpack.c.h.b16 %v1432
        %v4397 = vunpack.c.l.b16 %v1433
        %v4398 = vunpack.c.h.b16 %v1433
        %v4399 = vunpack.c.l.b16 %v1434
        %v4400 = vunpack.c.h.b16 %v1434
        %v4401 = vunpack.c.l.b16 %v1435
        %v4402 = vunpack.c.h.b16 %v1435
        %v4403 = vunpack.c.l.b16 %v1436
        %v4404 = vunpack.c.h.b16 %v1436
        %v4405 = vunpack.c.l.b16 %v1437
        %v4406 = vunpack.c.h.b16 %v1437
        %v4407 = vunpack.c.l.b16 %v1438
        %v4408 = vunpack.c.h.b16 %v1438
        %v4409 = vunpack.c.l.b16 %v1439
        %v4410 = vunpack.c.h.b16 %v1439
        %v4411 = vunpack.c.l.b16 %v1440
        %v4412 = vunpack.c.h.b16 %v1440
        %v4413 = vunpack.c.l.b16 %v1441
        %v4414 = vunpack.c.h.b16 %v1441
        %v4415 = vunpack.c.l.b16 %v1442
        %v4416 = vunpack.c.h.b16 %v1442
        %v4417 = vunpack.c.l.b16 %v1443
        %v4418 = vunpack.c.h.b16 %v1443
        %v4419 = vunpack.c.l.b16 %v1444
        %v4420 = vunpack.c.h.b16 %v1444
        %v4421 = vunpack.c.l.b16 %v1445
        %v4422 = vunpack.c.h.b16 %v1445
        %v4423 = vunpack.c.l.b16 %v1446
        %v4424 = vunpack.c.h.b16 %v1446
        %v4425 = vunpack.c.l.b16 %v1447
        %v4426 = vunpack.c.h.b16 %v1447
        %v4427 = vunpack.c.l.b16 %v1448
        %v4428 = vunpack.c.h.b16 %v1448
        %v4429 = vunpack.c.l.b16 %v1449
        %v4430 = vunpack.c.h.b16 %v1449
        %v4431 = vunpack.c.l.b16 %v1450
        %v4432 = vunpack.c.h.b16 %v1450
        %v4433 = vunpack.c.l.b16 %v1451
        %v4434 = vunpack.c.h.b16 %v1451
        %v4435 = vunpack.c.l.b16 %v1452
        %v4436 = vunpack.c.h.b16 %v1452
        %v4437 = vunpack.c.l.b16 %v1453
        %v4438 = vunpack.c.h.b16 %v1453
        %v4439 = vunpack.c.l.b16 %v1454
        %v4440 = vunpack.c.h.b16 %v1454
        %v4441 = vunpack.c.l.b16 %v1455
        %v4442 = vunpack.c.h.b16 %v1455
        %v4443 = vunpack.c.l.b16 %v1456
        %v4444 = vunpack.c.h.b16 %v1456
        %v4445 = vunpack.c.l.b16 %v1457
        %v4446 = vunpack.c.h.b16 %v1457
        %v4447 = vunpack.c.l.b16 %v1458
        %v4448 = vunpack.c.h.b16 %v1458
        %v4449 = vunpack.c.l.b16 %v1459
        %v4450 = vunpack.c.h.b16 %v1459
        %v4451 = vunpack.c.l.b16 %v1460
        %v4452 = vunpack.c.h.b16 %v1460
        %v4453 = vunpack.c.l.b16 %v1461
        %v4454 = vunpack.c.h.b16 %v1461
        %v4455 = vunpack.c.l.b16 %v1462
        %v4456 = vunpack.c.h.b16 %v1462
        %v4457 = vunpack.c.l.b16 %v1463
        %v4458 = vunpack.c.h.b16 %v1463
        %v4459 = vunpack.c.l.b16 %v1464
        %v4460 = vunpack.c.h.b16 %v1464
        %v4461 = vunpack.c.l.b16 %v1465
        %v4462 = vunpack.c.h.b16 %v1465
        %v4463 = vunpack.c.l.b16 %v1466
        %v4464 = vunpack.c.h.b16 %v1466
        %v4465 = vunpack.c.l.b16 %v1467
        %v4466 = vunpack.c.h.b16 %v1467
        %v4467 = vunpack.c.l.b16 %v1468
        %v4468 = vunpack.c.h.b16 %v1468
        %v4469 = vunpack.c.l.b16 %v1469
        %v4470 = vunpack.c.h.b16 %v1469
        %v4471 = vunpack.c.l.b16 %v1470
        %v4472 = vunpack.c.h.b16 %v1470
        %v4473 = vunpack.c.l.b16 %v1471
        %v4474 = vunpack.c.h.b16 %v1471
        %v4475 = vunpack.c.l.b16 %v1472
        %v4476 = vunpack.c.h.b16 %v1472
        %v4477 = vunpack.c.l.b16 %v1473
        %v4478 = vunpack.c.h.b16 %v1473
        %v4479 = vunpack.c.l.b16 %v1474
        %v4480 = vunpack.c.h.b16 %v1474
        %v4481 = vunpack.c.l.b16 %v1475
        %v4482 = vunpack.c.h.b16 %v1475
        %v4483 = vunpack.c.l.b16 %v1476
        %v4484 = vunpack.c.h.b16 %v1476
        %v4485 = vunpack.c.l.b16 %v1477
        %v4486 = vunpack.c.h.b16 %v1477
        %v4487 = vunpack.c.l.b16 %v1478
        %v4488 = vunpack.c.h.b16 %v1478
        %v4489 = vunpack.c.l.b16 %v1479
        %v4490 = vunpack.c.h.b16 %v1479
        %v4491 = vunpack.c.l.b16 %v1480
        %v4492 = vunpack.c.h.b16 %v1480
        %v4493 = vunpack.c.l.b16 %v1481
        %v4494 = vunpack.c.h.b16 %v1481
        %v4495 = vunpack.c.l.b16 %v1482
        %v4496 = vunpack.c.h.b16 %v1482
        %v4497 = vunpack.c.l.b16 %v1483
        %v4498 = vunpack.c.h.b16 %v1483
        %v4499 = vunpack.c.l.b16 %v1484
        %v4500 = vunpack.c.h.b16 %v1484
        %v4501 = vunpack.c.l.b16 %v1485
        %v4502 = vunpack.c.h.b16 %v1485
        %v4503 = vunpack.c.l.b16 %v1486
        %v4504 = vunpack.c.h.b16 %v1486
        %v4505 = vunpack.c.l.b16 %v1487
        %v4506 = vunpack.c.h.b16 %v1487
        %v4507 = vunpack.c.l.b16 %v1488
        %v4508 = vunpack.c.h.b16 %v1488
        %v4509 = vunpack.c.l.b16 %v1489
        %v4510 = vunpack.c.h.b16 %v1489
        %v4511 = vunpack.c.l.b16 %v1490
        %v4512 = vunpack.c.h.b16 %v1490
        %v4513 = vunpack.c.l.b16 %v1491
        %v4514 = vunpack.c.h.b16 %v1491
        %v4515 = vunpack.c.l.b16 %v1492
        %v4516 = vunpack.c.h.b16 %v1492
        %v4517 = vunpack.c.l.b16 %v1493
        %v4518 = vunpack.c.h.b16 %v1493
        %v4519 = vunpack.c.l.b16 %v1494
        %v4520 = vunpack.c.h.b16 %v1494
        %v4521 = vunpack.c.l.b16 %v1495
        %v4522 = vunpack.c.h.b16 %v1495
        %v4523 = vunpack.c.l.b16 %v1496
        %v4524 = vunpack.c.h.b16 %v1496
        %v4525 = vunpack.c.l.b16 %v1497
        %v4526 = vunpack.c.h.b16 %v1497
        %v4527 = vunpack.c.l.b16 %v1498
        %v4528 = vunpack.c.h.b16 %v1498
        %v4529 = vunpack.c.l.b16 %v1499
        %v4530 = vunpack.c.h.b16 %v1499
        %v4531 = vunpack.c.l.b16 %v1500
        %v4532 = vunpack.c.h.b16 %v1500
        %v4533 = vunpack.c.l.b16 %v1501
        %v4534 = vunpack.c.h.b16 %v1501
        %v4535 = vunpack.c.l.b16 %v1502
        %v4536 = vunpack.c.h.b16 %v1502
        %v4537 = vunpack.c.l.b16 %v1503
        %v4538 = vunpack.c.h.b16 %v1503
        %v4539 = vunpack.c.l.b16 %v1504
        %v4540 = vunpack.c.h.b16 %v1504
        %v4541 = vunpack.c.l.b16 %v1505
        %v4542 = vunpack.c.h.b16 %v1505
        %v4543 = vunpack.c.l.b16 %v1506
        %v4544 = vunpack.c.h.b16 %v1506
        %v4545 = vunpack.c.l.b16 %v1507
        %v4546 = vunpack.c.h.b16 %v1507
        %v4547 = vunpack.c.l.b16 %v1508
        %v4548 = vunpack.c.h.b16 %v1508
        %v4549 = vunpack.c.l.b16 %v1509
        %v4550 = vunpack.c.h.b16 %v1509
        %v4551 = vunpack.c.l.b16 %v1510
        %v4552 = vunpack.c.h.b16 %v1510
        %v4553 = vunpack.c.l.b16 %v1511
        %v4554 = vunpack.c.h.b16 %v1511
        %v4555 = vunpack.c.l.b16 %v1512
        %v4556 = vunpack.c.h.b16 %v1512
        %v4557 = vunpack.c.l.b16 %v1513
        %v4558 = vunpack.c.h.b16 %v1513
        %v4559 = vunpack.c.l.b16 %v1514
        %v4560 = vunpack.c.h.b16 %v1514
        %v4561 = vunpack.c.l.b16 %v1515
        %v4562 = vunpack.c.h.b16 %v1515
        %v4563 = vunpack.c.l.b16 %v1516
        %v4564 = vunpack.c.h.b16 %v1516
        %v4565 = vunpack.c.l.b16 %v1517
        %v4566 = vunpack.c.h.b16 %v1517
        %v4567 = vunpack.c.l.b16 %v1518
        %v4568 = vunpack.c.h.b16 %v1518
        %v4569 = vunpack.c.l.b16 %v1519
        %v4570 = vunpack.c.h.b16 %v1519
        %v4571 = vunpack.c.l.b16 %v1520
        %v4572 = vunpack.c.h.b16 %v1520
        %v4573 = vunpack.c.l.b16 %v1521
        %v4574 = vunpack.c.h.b16 %v1521
        %v4575 = vunpack.c.l.b16 %v1522
        %v4576 = vunpack.c.h.b16 %v1522
        %v4577 = vunpack.c.l.b16 %v1523
        %v4578 = vunpack.c.h.b16 %v1523
        %v4579 = vunpack.c.l.b16 %v1524
        %v4580 = vunpack.c.h.b16 %v1524
        %v4581 = vunpack.c.l.b16 %v1525
        %v4582 = vunpack.c.h.b16 %v1525
        %v4583 = vunpack.c.l.b16 %v1526
        %v4584 = vunpack.c.h.b16 %v1526
        %v4585 = vunpack.c.l.b16 %v1527
        %v4586 = vunpack.c.h.b16 %v1527
        %v4587 = vunpack.c.l.b16 %v1528
        %v4588 = vunpack.c.h.b16 %v1528
        %v4589 = vunpack.c.l.b16 %v1529
        %v4590 = vunpack.c.h.b16 %v1529
        %v4591 = vunpack.c.l.b16 %v1530
        %v4592 = vunpack.c.h.b16 %v1530
        %v4593 = vunpack.c.l.b16 %v1531
        %v4594 = vunpack.c.h.b16 %v1531
        %v4595 = vunpack.c.l.b16 %v1532
        %v4596 = vunpack.c.h.b16 %v1532
        %v4597 = vunpack.c.l.b16 %v1533
        %v4598 = vunpack.c.h.b16 %v1533
        %v4599 = vunpack.c.l.b16 %v1534
        %v4600 = vunpack.c.h.b16 %v1534
        %v4601 = vunpack.c.l.b16 %v1535
        %v4602 = vunpack.c.h.b16 %v1535
        %v4603 = vunpack.c.l.b16 %v1536
        %v4604 = vunpack.c.h.b16 %v1536
        %v4605 = vunpack.c.l.b16 %v1537
        %v4606 = vunpack.c.h.b16 %v1537
        %v4607 = vunpack.c.l.b16 %v1538
        %v4608 = vunpack.c.h.b16 %v1538
        %v4609 = vunpack.c.l.b16 %v1539
        %v4610 = vunpack.c.h.b16 %v1539
        %v4611 = vunpack.c.l.b16 %v1540
        %v4612 = vunpack.c.h.b16 %v1540
        %v4613 = vpack.c.b16 %v2573, %v2565
        %v4614 = vpack.c.b16 %v2574, %v2566
        %v4615 = vpack.c.b16 %v2575, %v2567
        %v4616 = vpack.c.b16 %v2576, %v2568
        %v4617 = vpack.c.b16 %v2577, %v2569
        %v4618 = vpack.c.b16 %v2578, %v2570
        %v4619 = vpack.c.b16 %v2579, %v2571
        %v4620 = vpack.c.b16 %v2580, %v2572
        %v4621 = vpack.c.b16 %v2589, %v2581
        %v4622 = vpack.c.b16 %v2590, %v2582
        %v4623 = vpack.c.b16 %v2591, %v2583
        %v4624 = vpack.c.b16 %v2592, %v2584
        %v4625 = vpack.c.b16 %v2593, %v2585
        %v4626 = vpack.c.b16 %v2594, %v2586
        %v4627 = vpack.c.b16 %v2595, %v2587
        %v4628 = vpack.c.b16 %v2596, %v2588
        %v4629 = vpack.c.b16 %v2605, %v2597
        %v4630 = vpack.c.b16 %v2606, %v2598
        %v4631 = vpack.c.b16 %v2607, %v2599
        %v4632 = vpack.c.b16 %v2608, %v2600
        %v4633 = vpack.c.b16 %v2609, %v2601
        %v4634 = vpack.c.b16 %v2610, %v2602
        %v4635 = vpack.c.b16 %v2611, %v2603
        %v4636 = vpack.c.b16 %v2612, %v2604
        %v4637 = vpack.c.b16 %v2621, %v2613
        %v4638 = vpack.c.b16 %v2622, %v2614
        %v4639 = vpack.c.b16 %v2623, %v2615
        %v4640 = vpack.c.b16 %v2624, %v2616
        %v4641 = vpack.c.b16 %v2625, %v2617
        %v4642 = vpack.c.b16 %v2626, %v2618
        %v4643 = vpack.c.b16 %v2627, %v2619
        %v4644 = vpack.c.b16 %v2628, %v2620
        %v4645 = vpack.c.b16 %v2637, %v2629
        %v4646 = vpack.c.b16 %v2638, %v2630
        %v4647 = vpack.c.b16 %v2639, %v2631
        %v4648 = vpack.c.b16 %v2640, %v2632
        %v4649 = vpack.c.b16 %v2641, %v2633
        %v4650 = vpack.c.b16 %v2642, %v2634
        %v4651 = vpack.c.b16 %v2643, %v2635
        %v4652 = vpack.c.b16 %v2644, %v2636
        %v4653 = vpack.c.b16 %v2653, %v2645
        %v4654 = vpack.c.b16 %v2654, %v2646
        %v4655 = vpack.c.b16 %v2655, %v2647
        %v4656 = vpack.c.b16 %v2656, %v2648
        %v4657 = vpack.c.b16 %v2657, %v2649
        %v4658 = vpack.c.b16 %v2658, %v2650
        %v4659 = vpack.c.b16 %v2659, %v2651
        %v4660 = vpack.c.b16 %v2660, %v2652
        %v4661 = vpack.c.b16 %v2669, %v2661
        %v4662 = vpack.c.b16 %v2670, %v2662
        %v4663 = vpack.c.b16 %v2671, %v2663
        %v4664 = vpack.c.b16 %v2672, %v2664
        %v4665 = vpack.c.b16 %v2673, %v2665
        %v4666 = vpack.c.b16 %v2674, %v2666
        %v4667 = vpack.c.b16 %v2675, %v2667
        %v4668 = vpack.c.b16 %v2676, %v2668
        %v4669 = vpack.c.b16 %v2685, %v2677
        %v4670 = vpack.c.b16 %v2686, %v2678
        %v4671 = vpack.c.b16 %v2687, %v2679
        %v4672 = vpack.c.b16 %v2688, %v2680
        %v4673 = vpack.c.b16 %v2689, %v2681
        %v4674 = vpack.c.b16 %v2690, %v2682
        %v4675 = vpack.c.b16 %v2691, %v2683
        %v4676 = vpack.c.b16 %v2692, %v2684
        %v4677 = vpack.c.b16 %v2701, %v2693
        %v4678 = vpack.c.b16 %v2702, %v2694
        %v4679 = vpack.c.b16 %v2703, %v2695
        %v4680 = vpack.c.b16 %v2704, %v2696
        %v4681 = vpack.c.b16 %v2705, %v2697
        %v4682 = vpack.c.b16 %v2706, %v2698
        %v4683 = vpack.c.b16 %v2707, %v2699
        %v4684 = vpack.c.b16 %v2708, %v2700
        %v4685 = vpack.c.b16 %v2717, %v2709
        %v4686 = vpack.c.b16 %v2718, %v2710
        %v4687 = vpack.c.b16 %v2719, %v2711
        %v4688 = vpack.c.b16 %v2720, %v2712
        %v4689 = vpack.c.b16 %v2721, %v2713
        %v4690 = vpack.c.b16 %v2722, %v2714
        %v4691 = vpack.c.b16 %v2723, %v2715
        %v4692 = vpack.c.b16 %v2724, %v2716
        %v4693 = vpack.c.b16 %v2733, %v2725
        %v4694 = vpack.c.b16 %v2734, %v2726
        %v4695 = vpack.c.b16 %v2735, %v2727
        %v4696 = vpack.c.b16 %v2736, %v2728
        %v4697 = vpack.c.b16 %v2737, %v2729
        %v4698 = vpack.c.b16 %v2738, %v2730
        %v4699 = vpack.c.b16 %v2739, %v2731
        %v4700 = vpack.c.b16 %v2740, %v2732
        %v4701 = vpack.c.b16 %v2749, %v2741
        %v4702 = vpack.c.b16 %v2750, %v2742
        %v4703 = vpack.c.b16 %v2751, %v2743
        %v4704 = vpack.c.b16 %v2752, %v2744
        %v4705 = vpack.c.b16 %v2753, %v2745
        %v4706 = vpack.c.b16 %v2754, %v2746
        %v4707 = vpack.c.b16 %v2755, %v2747
        %v4708 = vpack.c.b16 %v2756, %v2748
        %v4709 = vpack.c.b16 %v2765, %v2757
        %v4710 = vpack.c.b16 %v2766, %v2758
        %v4711 = vpack.c.b16 %v2767, %v2759
        %v4712 = vpack.c.b16 %v2768, %v2760
        %v4713 = vpack.c.b16 %v2769, %v2761
        %v4714 = vpack.c.b16 %v2770, %v2762
        %v4715 = vpack.c.b16 %v2771, %v2763
        %v4716 = vpack.c.b16 %v2772, %v2764
        %v4717 = vpack.c.b16 %v2781, %v2773
        %v4718 = vpack.c.b16 %v2782, %v2774
        %v4719 = vpack.c.b16 %v2783, %v2775
        %v4720 = vpack.c.b16 %v2784, %v2776
        %v4721 = vpack.c.b16 %v2785, %v2777
        %v4722 = vpack.c.b16 %v2786, %v2778
        %v4723 = vpack.c.b16 %v2787, %v2779
        %v4724 = vpack.c.b16 %v2788, %v2780
        %v4725 = vpack.c.b16 %v2797, %v2789
        %v4726 = vpack.c.b16 %v2798, %v2790
        %v4727 = vpack.c.b16 %v2799, %v2791
        %v4728 = vpack.c.b16 %v2800, %v2792
        %v4729 = vpack.c.b16 %v2801, %v2793
        %v4730 = vpack.c.b16 %v2802, %v2794
        %v4731 = vpack.c.b16 %v2803, %v2795
        %v4732 = vpack.c.b16 %v2804, %v2796
        %v4733 = vpack.c.b16 %v2813, %v2805
        %v4734 = vpack.c.b16 %v2814, %v2806
        %v4735 = vpack.c.b16 %v2815, %v2807
        %v4736 = vpack.c.b16 %v2816, %v2808
        %v4737 = vpack.c.b16 %v2817, %v2809
        %v4738 = vpack.c.b16 %v2818, %v2810
        %v4739 = vpack.c.b16 %v2819, %v2811
        %v4740 = vpack.c.b16 %v2820, %v2812
        %v4741 = vpack.c.b16 %v2829, %v2821
        %v4742 = vpack.c.b16 %v2830, %v2822
        %v4743 = vpack.c.b16 %v2831, %v2823
        %v4744 = vpack.c.b16 %v2832, %v2824
        %v4745 = vpack.c.b16 %v2833, %v2825
        %v4746 = vpack.c.b16 %v2834, %v2826
        %v4747 = vpack.c.b16 %v2835, %v2827
        %v4748 = vpack.c.b16 %v2836, %v2828
        %v4749 = vpack.c.b16 %v2845, %v2837
        %v4750 = vpack.c.b16 %v2846, %v2838
        %v4751 = vpack.c.b16 %v2847, %v2839
        %v4752 = vpack.c.b16 %v2848, %v2840
        %v4753 = vpack.c.b16 %v2849, %v2841
        %v4754 = vpack.c.b16 %v2850, %v2842
        %v4755 = vpack.c.b16 %v2851, %v2843
        %v4756 = vpack.c.b16 %v2852, %v2844
        %v4757 = vpack.c.b16 %v2861, %v2853
        %v4758 = vpack.c.b16 %v2862, %v2854
        %v4759 = vpack.c.b16 %v2863, %v2855
        %v4760 = vpack.c.b16 %v2864, %v2856
        %v4761 = vpack.c.b16 %v2865, %v2857
        %v4762 = vpack.c.b16 %v2866, %v2858
        %v4763 = vpack.c.b16 %v2867, %v2859
        %v4764 = vpack.c.b16 %v2868, %v2860
        %v4765 = vpack.c.b16 %v2877, %v2869
        %v4766 = vpack.c.b16 %v2878, %v2870
        %v4767 = vpack.c.b16 %v2879, %v2871
        %v4768 = vpack.c.b16 %v2880, %v2872
        %v4769 = vpack.c.b16 %v2881, %v2873
        %v4770 = vpack.c.b16 %v2882, %v2874
        %v4771 = vpack.c.b16 %v2883, %v2875
        %v4772 = vpack.c.b16 %v2884, %v2876
        %v4773 = vpack.c.b16 %v2893, %v2885
        %v4774 = vpack.c.b16 %v2894, %v2886
        %v4775 = vpack.c.b16 %v2895, %v2887
        %v4776 = vpack.c.b16 %v2896, %v2888
        %v4777 = vpack.c.b16 %v2897, %v2889
        %v4778 = vpack.c.b16 %v2898, %v2890
        %v4779 = vpack.c.b16 %v2899, %v2891
        %v4780 = vpack.c.b16 %v2900, %v2892
        %v4781 = vpack.c.b16 %v2909, %v2901
        %v4782 = vpack.c.b16 %v2910, %v2902
        %v4783 = vpack.c.b16 %v2911, %v2903
        %v4784 = vpack.c.b16 %v2912, %v2904
        %v4785 = vpack.c.b16 %v2913, %v2905
        %v4786 = vpack.c.b16 %v2914, %v2906
        %v4787 = vpack.c.b16 %v2915, %v2907
        %v4788 = vpack.c.b16 %v2916, %v2908
        %v4789 = vpack.c.b16 %v2925, %v2917
        %v4790 = vpack.c.b16 %v2926, %v2918
        %v4791 = vpack.c.b16 %v2927, %v2919
        %v4792 = vpack.c.b16 %v2928, %v2920
        %v4793 = vpack.c.b16 %v2929, %v2921
        %v4794 = vpack.c.b16 %v2930, %v2922
        %v4795 = vpack.c.b16 %v2931, %v2923
        %v4796 = vpack.c.b16 %v2932, %v2924
        %v4797 = vpack.c.b16 %v2941, %v2933
        %v4798 = vpack.c.b16 %v2942, %v2934
        %v4799 = vpack.c.b16 %v2943, %v2935
        %v4800 = vpack.c.b16 %v2944, %v2936
        %v4801 = vpack.c.b16 %v2945, %v2937
        %v4802 = vpack.c.b16 %v2946, %v2938
        %v4803 = vpack.c.b16 %v2947, %v2939
        %v4804 = vpack.c.b16 %v2948, %v2940
        %v4805 = vpack.c.b16 %v2957, %v2949
        %v4806 = vpack.c.b16 %v2958, %v2950
        %v4807 = vpack.c.b16 %v2959, %v2951
        %v4808 = vpack.c.b16 %v2960, %v2952
        %v4809 = vpack.c.b16 %v2961, %v2953
        %v4810 = vpack.c.b16 %v2962, %v2954
        %v4811 = vpack.c.b16 %v2963, %v2955
        %v4812 = vpack.c.b16 %v2964, %v2956
        %v4813 = vpack.c.b16 %v2973, %v2965
        %v4814 = vpack.c.b16 %v2974, %v2966
        %v4815 = vpack.c.b16 %v2975, %v2967
        %v4816 = vpack.c.b16 %v2976, %v2968
        %v4817 = vpack.c.b16 %v2977, %v2969
        %v4818 = vpack.c.b16 %v2978, %v2970
        %v4819 = vpack.c.b16 %v2979, %v2971
        %v4820 = vpack.c.b16 %v2980, %v2972
        %v4821 = vpack.c.b16 %v2989, %v2981
        %v4822 = vpack.c.b16 %v2990, %v2982
        %v4823 = vpack.c.b16 %v2991, %v2983
        %v4824 = vpack.c.b16 %v2992, %v2984
        %v4825 = vpack.c.b16 %v2993, %v2985
        %v4826 = vpack.c.b16 %v2994, %v2986
        %v4827 = vpack.c.b16 %v2995, %v2987
        %v4828 = vpack.c.b16 %v2996, %v2988
        %v4829 = vpack.c.b16 %v3005, %v2997
        %v4830 = vpack.c.b16 %v3006, %v2998
        %v4831 = vpack.c.b16 %v3007, %v2999
        %v4832 = vpack.c.b16 %v3008, %v3000
        %v4833 = vpack.c.b16 %v3009, %v3001
        %v4834 = vpack.c.b16 %v3010, %v3002
        %v4835 = vpack.c.b16 %v3011, %v3003
        %v4836 = vpack.c.b16 %v3012, %v3004
        %v4837 = vpack.c.b16 %v3021, %v3013
        %v4838 = vpack.c.b16 %v3022, %v3014
        %v4839 = vpack.c.b16 %v3023, %v3015
        %v4840 = vpack.c.b16 %v3024, %v3016
        %v4841 = vpack.c.b16 %v3025, %v3017
        %v4842 = vpack.c.b16 %v3026, %v3018
        %v4843 = vpack.c.b16 %v3027, %v3019
        %v4844 = vpack.c.b16 %v3028, %v3020
        %v4845 = vpack.c.b16 %v3037, %v3029
        %v4846 = vpack.c.b16 %v3038, %v3030
        %v4847 = vpack.c.b16 %v3039, %v3031
        %v4848 = vpack.c.b16 %v3040, %v3032
        %v4849 = vpack.c.b16 %v3041, %v3033
        %v4850 = vpack.c.b16 %v3042, %v3034
        %v4851 = vpack.c.b16 %v3043, %v3035
        %v4852 = vpack.c.b16 %v3044, %v3036
        %v4853 = vpack.c.b16 %v3053, %v3045
        %v4854 = vpack.c.b16 %v3054, %v3046
        %v4855 = vpack.c.b16 %v3055, %v3047
        %v4856 = vpack.c.b16 %v3056, %v3048
        %v4857 = vpack.c.b16 %v3057, %v3049
        %v4858 = vpack.c.b16 %v3058, %v3050
        %v4859 = vpack.c.b16 %v3059, %v3051
        %v4860 = vpack.c.b16 %v3060, %v3052
        %v4861 = vpack.c.b16 %v3069, %v3061
        %v4862 = vpack.c.b16 %v3070, %v3062
        %v4863 = vpack.c.b16 %v3071, %v3063
        %v4864 = vpack.c.b16 %v3072, %v3064
        %v4865 = vpack.c.b16 %v3073, %v3065
        %v4866 = vpack.c.b16 %v3074, %v3066
        %v4867 = vpack.c.b16 %v3075, %v3067
        %v4868 = vpack.c.b16 %v3076, %v3068
        %v4869 = vpack.c.b16 %v3085, %v3077
        %v4870 = vpack.c.b16 %v3086, %v3078
        %v4871 = vpack.c.b16 %v3087, %v3079
        %v4872 = vpack.c.b16 %v3088, %v3080
        %v4873 = vpack.c.b16 %v3089, %v3081
        %v4874 = vpack.c.b16 %v3090, %v3082
        %v4875 = vpack.c.b16 %v3091, %v3083
        %v4876 = vpack.c.b16 %v3092, %v3084
        %v4877 = vpack.c.b16 %v3101, %v3093
        %v4878 = vpack.c.b16 %v3102, %v3094
        %v4879 = vpack.c.b16 %v3103, %v3095
        %v4880 = vpack.c.b16 %v3104, %v3096
        %v4881 = vpack.c.b16 %v3105, %v3097
        %v4882 = vpack.c.b16 %v3106, %v3098
        %v4883 = vpack.c.b16 %v3107, %v3099
        %v4884 = vpack.c.b16 %v3108, %v3100
        %v4885 = vpack.c.b16 %v3117, %v3109
        %v4886 = vpack.c.b16 %v3118, %v3110
        %v4887 = vpack.c.b16 %v3119, %v3111
        %v4888 = vpack.c.b16 %v3120, %v3112
        %v4889 = vpack.c.b16 %v3121, %v3113
        %v4890 = vpack.c.b16 %v3122, %v3114
        %v4891 = vpack.c.b16 %v3123, %v3115
        %v4892 = vpack.c.b16 %v3124, %v3116
        %v4893 = vpack.c.b16 %v3133, %v3125
        %v4894 = vpack.c.b16 %v3134, %v3126
        %v4895 = vpack.c.b16 %v3135, %v3127
        %v4896 = vpack.c.b16 %v3136, %v3128
        %v4897 = vpack.c.b16 %v3137, %v3129
        %v4898 = vpack.c.b16 %v3138, %v3130
        %v4899 = vpack.c.b16 %v3139, %v3131
        %v4900 = vpack.c.b16 %v3140, %v3132
        %v4901 = vpack.c.b16 %v3149, %v3141
        %v4902 = vpack.c.b16 %v3150, %v3142
        %v4903 = vpack.c.b16 %v3151, %v3143
        %v4904 = vpack.c.b16 %v3152, %v3144
        %v4905 = vpack.c.b16 %v3153, %v3145
        %v4906 = vpack.c.b16 %v3154, %v3146
        %v4907 = vpack.c.b16 %v3155, %v3147
        %v4908 = vpack.c.b16 %v3156, %v3148
        %v4909 = vpack.c.b16 %v3165, %v3157
        %v4910 = vpack.c.b16 %v3166, %v3158
        %v4911 = vpack.c.b16 %v3167, %v3159
        %v4912 = vpack.c.b16 %v3168, %v3160
        %v4913 = vpack.c.b16 %v3169, %v3161
        %v4914 = vpack.c.b16 %v3170, %v3162
        %v4915 = vpack.c.b16 %v3171, %v3163
        %v4916 = vpack.c.b16 %v3172, %v3164
        %v4917 = vpack.c.b16 %v3181, %v3173
        %v4918 = vpack.c.b16 %v3182, %v3174
        %v4919 = vpack.c.b16 %v3183, %v3175
        %v4920 = vpack.c.b16 %v3184, %v3176
        %v4921 = vpack.c.b16 %v3185, %v3177
        %v4922 = vpack.c.b16 %v3186, %v3178
        %v4923 = vpack.c.b16 %v3187, %v3179
        %v4924 = vpack.c.b16 %v3188, %v3180
        %v4925 = vpack.c.b16 %v3197, %v3189
        %v4926 = vpack.c.b16 %v3198, %v3190
        %v4927 = vpack.c.b16 %v3199, %v3191
        %v4928 = vpack.c.b16 %v3200, %v3192
        %v4929 = vpack.c.b16 %v3201, %v3193
        %v4930 = vpack.c.b16 %v3202, %v3194
        %v4931 = vpack.c.b16 %v3203, %v3195
        %v4932 = vpack.c.b16 %v3204, %v3196
        %v4933 = vpack.c.b16 %v3213, %v3205
        %v4934 = vpack.c.b16 %v3214, %v3206
        %v4935 = vpack.c.b16 %v3215, %v3207
        %v4936 = vpack.c.b16 %v3216, %v3208
        %v4937 = vpack.c.b16 %v3217, %v3209
        %v4938 = vpack.c.b16 %v3218, %v3210
        %v4939 = vpack.c.b16 %v3219, %v3211
        %v4940 = vpack.c.b16 %v3220, %v3212
        %v4941 = vpack.c.b16 %v3229, %v3221
        %v4942 = vpack.c.b16 %v3230, %v3222
        %v4943 = vpack.c.b16 %v3231, %v3223
        %v4944 = vpack.c.b16 %v3232, %v3224
        %v4945 = vpack.c.b16 %v3233, %v3225
        %v4946 = vpack.c.b16 %v3234, %v3226
        %v4947 = vpack.c.b16 %v3235, %v3227
        %v4948 = vpack.c.b16 %v3236, %v3228
        %v4949 = vpack.c.b16 %v3245, %v3237
        %v4950 = vpack.c.b16 %v3246, %v3238
        %v4951 = vpack.c.b16 %v3247, %v3239
        %v4952 = vpack.c.b16 %v3248, %v3240
        %v4953 = vpack.c.b16 %v3249, %v3241
        %v4954 = vpack.c.b16 %v3250, %v3242
        %v4955 = vpack.c.b16 %v3251, %v3243
        %v4956 = vpack.c.b16 %v3252, %v3244
        %v4957 = vpack.c.b16 %v3261, %v3253
        %v4958 = vpack.c.b16 %v3262, %v3254
        %v4959 = vpack.c.b16 %v3263, %v3255
        %v4960 = vpack.c.b16 %v3264, %v3256
        %v4961 = vpack.c.b16 %v3265, %v3257
        %v4962 = vpack.c.b16 %v3266, %v3258
        %v4963 = vpack.c.b16 %v3267, %v3259
        %v4964 = vpack.c.b16 %v3268, %v3260
        %v4965 = vpack.c.b16 %v3277, %v3269
        %v4966 = vpack.c.b16 %v3278, %v3270
        %v4967 = vpack.c.b16 %v3279, %v3271
        %v4968 = vpack.c.b16 %v3280, %v3272
        %v4969 = vpack.c.b16 %v3281, %v3273
        %v4970 = vpack.c.b16 %v3282, %v3274
        %v4971 = vpack.c.b16 %v3283, %v3275
        %v4972 = vpack.c.b16 %v3284, %v3276
        %v4973 = vpack.c.b16 %v3293, %v3285
        %v4974 = vpack.c.b16 %v3294, %v3286
        %v4975 = vpack.c.b16 %v3295, %v3287
        %v4976 = vpack.c.b16 %v3296, %v3288
        %v4977 = vpack.c.b16 %v3297, %v3289
        %v4978 = vpack.c.b16 %v3298, %v3290
        %v4979 = vpack.c.b16 %v3299, %v3291
        %v4980 = vpack.c.b16 %v3300, %v3292
        %v4981 = vpack.c.b16 %v3309, %v3301
        %v4982 = vpack.c.b16 %v3310, %v3302
        %v4983 = vpack.c.b16 %v3311, %v3303
        %v4984 = vpack.c.b16 %v3312, %v3304
        %v4985 = vpack.c.b16 %v3313, %v3305
        %v4986 = vpack.c.b16 %v3314, %v3306
        %v4987 = vpack.c.b16 %v3315, %v3307
        %v4988 = vpack.c.b16 %v3316, %v3308
        %v4989 = vpack.c.b16 %v3325, %v3317
        %v4990 = vpack.c.b16 %v3326, %v3318
        %v4991 = vpack.c.b16 %v3327, %v3319
        %v4992 = vpack.c.b16 %v3328, %v3320
        %v4993 = vpack.c.b16 %v3329, %v3321
        %v4994 = vpack.c.b16 %v3330, %v3322
        %v4995 = vpack.c.b16 %v3331, %v3323
        %v4996 = vpack.c.b16 %v3332, %v3324
        %v4997 = vpack.c.b16 %v3341, %v3333
        %v4998 = vpack.c.b16 %v3342, %v3334
        %v4999 = vpack.c.b16 %v3343, %v3335
        %v5000 = vpack.c.b16 %v3344, %v3336
        %v5001 = vpack.c.b16 %v3345, %v3337
        %v5002 = vpack.c.b16 %v3346, %v3338
        %v5003 = vpack.c.b16 %v3347, %v3339
        %v5004 = vpack.c.b16 %v3348, %v3340
        %v5005 = vpack.c.b16 %v3357, %v3349
        %v5006 = vpack.c.b16 %v3358, %v3350
        %v5007 = vpack.c.b16 %v3359, %v3351
        %v5008 = vpack.c.b16 %v3360, %v3352
        %v5009 = vpack.c.b16 %v3361, %v3353
        %v5010 = vpack.c.b16 %v3362, %v3354
        %v5011 = vpack.c.b16 %v3363, %v3355
        %v5012 = vpack.c.b16 %v3364, %v3356
        %v5013 = vpack.c.b16 %v3373, %v3365
        %v5014 = vpack.c.b16 %v3374, %v3366
        %v5015 = vpack.c.b16 %v3375, %v3367
        %v5016 = vpack.c.b16 %v3376, %v3368
        %v5017 = vpack.c.b16 %v3377, %v3369
        %v5018 = vpack.c.b16 %v3378, %v3370
        %v5019 = vpack.c.b16 %v3379, %v3371
        %v5020 = vpack.c.b16 %v3380, %v3372
        %v5021 = vpack.c.b16 %v3389, %v3381
        %v5022 = vpack.c.b16 %v3390, %v3382
        %v5023 = vpack.c.b16 %v3391, %v3383
        %v5024 = vpack.c.b16 %v3392, %v3384
        %v5025 = vpack.c.b16 %v3393, %v3385
        %v5026 = vpack.c.b16 %v3394, %v3386
        %v5027 = vpack.c.b16 %v3395, %v3387
        %v5028 = vpack.c.b16 %v3396, %v3388
        %v5029 = vpack.c.b16 %v3405, %v3397
        %v5030 = vpack.c.b16 %v3406, %v3398
        %v5031 = vpack.c.b16 %v3407, %v3399
        %v5032 = vpack.c.b16 %v3408, %v3400
        %v5033 = vpack.c.b16 %v3409, %v3401
        %v5034 = vpack.c.b16 %v3410, %v3402
        %v5035 = vpack.c.b16 %v3411, %v3403
        %v5036 = vpack.c.b16 %v3412, %v3404
        %v5037 = vpack.c.b16 %v3421, %v3413
        %v5038 = vpack.c.b16 %v3422, %v3414
        %v5039 = vpack.c.b16 %v3423, %v3415
        %v5040 = vpack.c.b16 %v3424, %v3416
        %v5041 = vpack.c.b16 %v3425, %v3417
        %v5042 = vpack.c.b16 %v3426, %v3418
        %v5043 = vpack.c.b16 %v3427, %v3419
        %v5044 = vpack.c.b16 %v3428, %v3420
        %v5045 = vpack.c.b16 %v3437, %v3429
        %v5046 = vpack.c.b16 %v3438, %v3430
        %v5047 = vpack.c.b16 %v3439, %v3431
        %v5048 = vpack.c.b16 %v3440, %v3432
        %v5049 = vpack.c.b16 %v3441, %v3433
        %v5050 = vpack.c.b16 %v3442, %v3434
        %v5051 = vpack.c.b16 %v3443, %v3435
        %v5052 = vpack.c.b16 %v3444, %v3436
        %v5053 = vpack.c.b16 %v3453, %v3445
        %v5054 = vpack.c.b16 %v3454, %v3446
        %v5055 = vpack.c.b16 %v3455, %v3447
        %v5056 = vpack.c.b16 %v3456, %v3448
        %v5057 = vpack.c.b16 %v3457, %v3449
        %v5058 = vpack.c.b16 %v3458, %v3450
        %v5059 = vpack.c.b16 %v3459, %v3451
        %v5060 = vpack.c.b16 %v3460, %v3452
        %v5061 = vpack.c.b16 %v3469, %v3461
        %v5062 = vpack.c.b16 %v3470, %v3462
        %v5063 = vpack.c.b16 %v3471, %v3463
        %v5064 = vpack.c.b16 %v3472, %v3464
        %v5065 = vpack.c.b16 %v3473, %v3465
        %v5066 = vpack.c.b16 %v3474, %v3466
        %v5067 = vpack.c.b16 %v3475, %v3467
        %v5068 = vpack.c.b16 %v3476, %v3468
        %v5069 = vpack.c.b16 %v3485, %v3477
        %v5070 = vpack.c.b16 %v3486, %v3478
        %v5071 = vpack.c.b16 %v3487, %v3479
        %v5072 = vpack.c.b16 %v3488, %v3480
        %v5073 = vpack.c.b16 %v3489, %v3481
        %v5074 = vpack.c.b16 %v3490, %v3482
        %v5075 = vpack.c.b16 %v3491, %v3483
        %v5076 = vpack.c.b16 %v3492, %v3484
        %v5077 = vpack.c.b16 %v3501, %v3493
        %v5078 = vpack.c.b16 %v3502, %v3494
        %v5079 = vpack.c.b16 %v3503, %v3495
        %v5080 = vpack.c.b16 %v3504, %v3496
        %v5081 = vpack.c.b16 %v3505, %v3497
        %v5082 = vpack.c.b16 %v3506, %v3498
        %v5083 = vpack.c.b16 %v3507, %v3499
        %v5084 = vpack.c.b16 %v3508, %v3500
        %v5085 = vpack.c.b16 %v3517, %v3509
        %v5086 = vpack.c.b16 %v3518, %v3510
        %v5087 = vpack.c.b16 %v3519, %v3511
        %v5088 = vpack.c.b16 %v3520, %v3512
        %v5089 = vpack.c.b16 %v3521, %v3513
        %v5090 = vpack.c.b16 %v3522, %v3514
        %v5091 = vpack.c.b16 %v3523, %v3515
        %v5092 = vpack.c.b16 %v3524, %v3516
        %v5093 = vpack.c.b16 %v3533, %v3525
        %v5094 = vpack.c.b16 %v3534, %v3526
        %v5095 = vpack.c.b16 %v3535, %v3527
        %v5096 = vpack.c.b16 %v3536, %v3528
        %v5097 = vpack.c.b16 %v3537, %v3529
        %v5098 = vpack.c.b16 %v3538, %v3530
        %v5099 = vpack.c.b16 %v3539, %v3531
        %v5100 = vpack.c.b16 %v3540, %v3532
        %v5101 = vpack.c.b16 %v3549, %v3541
        %v5102 = vpack.c.b16 %v3550, %v3542
        %v5103 = vpack.c.b16 %v3551, %v3543
        %v5104 = vpack.c.b16 %v3552, %v3544
        %v5105 = vpack.c.b16 %v3553, %v3545
        %v5106 = vpack.c.b16 %v3554, %v3546
        %v5107 = vpack.c.b16 %v3555, %v3547
        %v5108 = vpack.c.b16 %v3556, %v3548
        %v5109 = vpack.c.b16 %v3565, %v3557
        %v5110 = vpack.c.b16 %v3566, %v3558
        %v5111 = vpack.c.b16 %v3567, %v3559
        %v5112 = vpack.c.b16 %v3568, %v3560
        %v5113 = vpack.c.b16 %v3569, %v3561
        %v5114 = vpack.c.b16 %v3570, %v3562
        %v5115 = vpack.c.b16 %v3571, %v3563
        %v5116 = vpack.c.b16 %v3572, %v3564
        %v5117 = vpack.c.b16 %v3581, %v3573
        %v5118 = vpack.c.b16 %v3582, %v3574
        %v5119 = vpack.c.b16 %v3583, %v3575
        %v5120 = vpack.c.b16 %v3584, %v3576
        %v5121 = vpack.c.b16 %v3585, %v3577
        %v5122 = vpack.c.b16 %v3586, %v3578
        %v5123 = vpack.c.b16 %v3587, %v3579
        %v5124 = vpack.c.b16 %v3588, %v3580
        %v5125 = vpack.c.b16 %v3597, %v3589
        %v5126 = vpack.c.b16 %v3598, %v3590
        %v5127 = vpack.c.b16 %v3599, %v3591
        %v5128 = vpack.c.b16 %v3600, %v3592
        %v5129 = vpack.c.b16 %v3601, %v3593
        %v5130 = vpack.c.b16 %v3602, %v3594
        %v5131 = vpack.c.b16 %v3603, %v3595
        %v5132 = vpack.c.b16 %v3604, %v3596
        %v5133 = vpack.c.b16 %v3613, %v3605
        %v5134 = vpack.c.b16 %v3614, %v3606
        %v5135 = vpack.c.b16 %v3615, %v3607
        %v5136 = vpack.c.b16 %v3616, %v3608
        %v5137 = vpack.c.b16 %v3617, %v3609
        %v5138 = vpack.c.b16 %v3618, %v3610
        %v5139 = vpack.c.b16 %v3619, %v3611
        %v5140 = vpack.c.b16 %v3620, %v3612
        %v5141 = vpack.c.b16 %v3629, %v3621
        %v5142 = vpack.c.b16 %v3630, %v3622
        %v5143 = vpack.c.b16 %v3631, %v3623
        %v5144 = vpack.c.b16 %v3632, %v3624
        %v5145 = vpack.c.b16 %v3633, %v3625
        %v5146 = vpack.c.b16 %v3634, %v3626
        %v5147 = vpack.c.b16 %v3635, %v3627
        %v5148 = vpack.c.b16 %v3636, %v3628
        %v5149 = vpack.c.b16 %v3645, %v3637
        %v5150 = vpack.c.b16 %v3646, %v3638
        %v5151 = vpack.c.b16 %v3647, %v3639
        %v5152 = vpack.c.b16 %v3648, %v3640
        %v5153 = vpack.c.b16 %v3649, %v3641
        %v5154 = vpack.c.b16 %v3650, %v3642
        %v5155 = vpack.c.b16 %v3651, %v3643
        %v5156 = vpack.c.b16 %v3652, %v3644
        %v5157 = vpack.c.b16 %v3661, %v3653
        %v5158 = vpack.c.b16 %v3662, %v3654
        %v5159 = vpack.c.b16 %v3663, %v3655
        %v5160 = vpack.c.b16 %v3664, %v3656
        %v5161 = vpack.c.b16 %v3665, %v3657
        %v5162 = vpack.c.b16 %v3666, %v3658
        %v5163 = vpack.c.b16 %v3667, %v3659
        %v5164 = vpack.c.b16 %v3668, %v3660
        %v5165 = vpack.c.b16 %v3677, %v3669
        %v5166 = vpack.c.b16 %v3678, %v3670
        %v5167 = vpack.c.b16 %v3679, %v3671
        %v5168 = vpack.c.b16 %v3680, %v3672
        %v5169 = vpack.c.b16 %v3681, %v3673
        %v5170 = vpack.c.b16 %v3682, %v3674
        %v5171 = vpack.c.b16 %v3683, %v3675
        %v5172 = vpack.c.b16 %v3684, %v3676
        %v5173 = vpack.c.b16 %v3693, %v3685
        %v5174 = vpack.c.b16 %v3694, %v3686
        %v5175 = vpack.c.b16 %v3695, %v3687
        %v5176 = vpack.c.b16 %v3696, %v3688
        %v5177 = vpack.c.b16 %v3697, %v3689
        %v5178 = vpack.c.b16 %v3698, %v3690
        %v5179 = vpack.c.b16 %v3699, %v3691
        %v5180 = vpack.c.b16 %v3700, %v3692
        %v5181 = vpack.c.b16 %v3709, %v3701
        %v5182 = vpack.c.b16 %v3710, %v3702
        %v5183 = vpack.c.b16 %v3711, %v3703
        %v5184 = vpack.c.b16 %v3712, %v3704
        %v5185 = vpack.c.b16 %v3713, %v3705
        %v5186 = vpack.c.b16 %v3714, %v3706
        %v5187 = vpack.c.b16 %v3715, %v3707
        %v5188 = vpack.c.b16 %v3716, %v3708
        %v5189 = vpack.c.b16 %v3725, %v3717
        %v5190 = vpack.c.b16 %v3726, %v3718
        %v5191 = vpack.c.b16 %v3727, %v3719
        %v5192 = vpack.c.b16 %v3728, %v3720
        %v5193 = vpack.c.b16 %v3729, %v3721
        %v5194 = vpack.c.b16 %v3730, %v3722
        %v5195 = vpack.c.b16 %v3731, %v3723
        %v5196 = vpack.c.b16 %v3732, %v3724
        %v5197 = vpack.c.b16 %v3741, %v3733
        %v5198 = vpack.c.b16 %v3742, %v3734
        %v5199 = vpack.c.b16 %v3743, %v3735
        %v5200 = vpack.c.b16 %v3744, %v3736
        %v5201 = vpack.c.b16 %v3745, %v3737
        %v5202 = vpack.c.b16 %v3746, %v3738
        %v5203 = vpack.c.b16 %v3747, %v3739
        %v5204 = vpack.c.b16 %v3748, %v3740
        %v5205 = vpack.c.b16 %v3757, %v3749
        %v5206 = vpack.c.b16 %v3758, %v3750
        %v5207 = vpack.c.b16 %v3759, %v3751
        %v5208 = vpack.c.b16 %v3760, %v3752
        %v5209 = vpack.c.b16 %v3761, %v3753
        %v5210 = vpack.c.b16 %v3762, %v3754
        %v5211 = vpack.c.b16 %v3763, %v3755
        %v5212 = vpack.c.b16 %v3764, %v3756
        %v5213 = vpack.c.b16 %v3773, %v3765
        %v5214 = vpack.c.b16 %v3774, %v3766
        %v5215 = vpack.c.b16 %v3775, %v3767
        %v5216 = vpack.c.b16 %v3776, %v3768
        %v5217 = vpack.c.b16 %v3777, %v3769
        %v5218 = vpack.c.b16 %v3778, %v3770
        %v5219 = vpack.c.b16 %v3779, %v3771
        %v5220 = vpack.c.b16 %v3780, %v3772
        %v5221 = vpack.c.b16 %v3789, %v3781
        %v5222 = vpack.c.b16 %v3790, %v3782
        %v5223 = vpack.c.b16 %v3791, %v3783
        %v5224 = vpack.c.b16 %v3792, %v3784
        %v5225 = vpack.c.b16 %v3793, %v3785
        %v5226 = vpack.c.b16 %v3794, %v3786
        %v5227 = vpack.c.b16 %v3795, %v3787
        %v5228 = vpack.c.b16 %v3796, %v3788
        %v5229 = vpack.c.b16 %v3805, %v3797
        %v5230 = vpack.c.b16 %v3806, %v3798
        %v5231 = vpack.c.b16 %v3807, %v3799
        %v5232 = vpack.c.b16 %v3808, %v3800
        %v5233 = vpack.c.b16 %v3809, %v3801
        %v5234 = vpack.c.b16 %v3810, %v3802
        %v5235 = vpack.c.b16 %v3811, %v3803
        %v5236 = vpack.c.b16 %v3812, %v3804
        %v5237 = vpack.c.b16 %v3821, %v3813
        %v5238 = vpack.c.b16 %v3822, %v3814
        %v5239 = vpack.c.b16 %v3823, %v3815
        %v5240 = vpack.c.b16 %v3824, %v3816
        %v5241 = vpack.c.b16 %v3825, %v3817
        %v5242 = vpack.c.b16 %v3826, %v3818
        %v5243 = vpack.c.b16 %v3827, %v3819
        %v5244 = vpack.c.b16 %v3828, %v3820
        %v5245 = vpack.c.b16 %v3837, %v3829
        %v5246 = vpack.c.b16 %v3838, %v3830
        %v5247 = vpack.c.b16 %v3839, %v3831
        %v5248 = vpack.c.b16 %v3840, %v3832
        %v5249 = vpack.c.b16 %v3841, %v3833
        %v5250 = vpack.c.b16 %v3842, %v3834
        %v5251 = vpack.c.b16 %v3843, %v3835
        %v5252 = vpack.c.b16 %v3844, %v3836
        %v5253 = vpack.c.b16 %v3853, %v3845
        %v5254 = vpack.c.b16 %v3854, %v3846
        %v5255 = vpack.c.b16 %v3855, %v3847
        %v5256 = vpack.c.b16 %v3856, %v3848
        %v5257 = vpack.c.b16 %v3857, %v3849
        %v5258 = vpack.c.b16 %v3858, %v3850
        %v5259 = vpack.c.b16 %v3859, %v3851
        %v5260 = vpack.c.b16 %v3860, %v3852
        %v5261 = vpack.c.b16 %v3869, %v3861
        %v5262 = vpack.c.b16 %v3870, %v3862
        %v5263 = vpack.c.b16 %v3871, %v3863
        %v5264 = vpack.c.b16 %v3872, %v3864
        %v5265 = vpack.c.b16 %v3873, %v3865
        %v5266 = vpack.c.b16 %v3874, %v3866
        %v5267 = vpack.c.b16 %v3875, %v3867
        %v5268 = vpack.c.b16 %v3876, %v3868
        %v5269 = vpack.c.b16 %v3885, %v3877
        %v5270 = vpack.c.b16 %v3886, %v3878
        %v5271 = vpack.c.b16 %v3887, %v3879
        %v5272 = vpack.c.b16 %v3888, %v3880
        %v5273 = vpack.c.b16 %v3889, %v3881
        %v5274 = vpack.c.b16 %v3890, %v3882
        %v5275 = vpack.c.b16 %v3891, %v3883
        %v5276 = vpack.c.b16 %v3892, %v3884
        %v5277 = vpack.c.b16 %v3901, %v3893
        %v5278 = vpack.c.b16 %v3902, %v3894
        %v5279 = vpack.c.b16 %v3903, %v3895
        %v5280 = vpack.c.b16 %v3904, %v3896
        %v5281 = vpack.c.b16 %v3905, %v3897
        %v5282 = vpack.c.b16 %v3906, %v3898
        %v5283 = vpack.c.b16 %v3907, %v3899
        %v5284 = vpack.c.b16 %v3908, %v3900
        %v5285 = vpack.c.b16 %v3917, %v3909
        %v5286 = vpack.c.b16 %v3918, %v3910
        %v5287 = vpack.c.b16 %v3919, %v3911
        %v5288 = vpack.c.b16 %v3920, %v3912
        %v5289 = vpack.c.b16 %v3921, %v3913
        %v5290 = vpack.c.b16 %v3922, %v3914
        %v5291 = vpack.c.b16 %v3923, %v3915
        %v5292 = vpack.c.b16 %v3924, %v3916
        %v5293 = vpack.c.b16 %v3933, %v3925
        %v5294 = vpack.c.b16 %v3934, %v3926
        %v5295 = vpack.c.b16 %v3935, %v3927
        %v5296 = vpack.c.b16 %v3936, %v3928
        %v5297 = vpack.c.b16 %v3937, %v3929
        %v5298 = vpack.c.b16 %v3938, %v3930
        %v5299 = vpack.c.b16 %v3939, %v3931
        %v5300 = vpack.c.b16 %v3940, %v3932
        %v5301 = vpack.c.b16 %v3949, %v3941
        %v5302 = vpack.c.b16 %v3950, %v3942
        %v5303 = vpack.c.b16 %v3951, %v3943
        %v5304 = vpack.c.b16 %v3952, %v3944
        %v5305 = vpack.c.b16 %v3953, %v3945
        %v5306 = vpack.c.b16 %v3954, %v3946
        %v5307 = vpack.c.b16 %v3955, %v3947
        %v5308 = vpack.c.b16 %v3956, %v3948
        %v5309 = vpack.c.b16 %v3965, %v3957
        %v5310 = vpack.c.b16 %v3966, %v3958
        %v5311 = vpack.c.b16 %v3967, %v3959
        %v5312 = vpack.c.b16 %v3968, %v3960
        %v5313 = vpack.c.b16 %v3969, %v3961
        %v5314 = vpack.c.b16 %v3970, %v3962
        %v5315 = vpack.c.b16 %v3971, %v3963
        %v5316 = vpack.c.b16 %v3972, %v3964
        %v5317 = vpack.c.b16 %v3981, %v3973
        %v5318 = vpack.c.b16 %v3982, %v3974
        %v5319 = vpack.c.b16 %v3983, %v3975
        %v5320 = vpack.c.b16 %v3984, %v3976
        %v5321 = vpack.c.b16 %v3985, %v3977
        %v5322 = vpack.c.b16 %v3986, %v3978
        %v5323 = vpack.c.b16 %v3987, %v3979
        %v5324 = vpack.c.b16 %v3988, %v3980
        %v5325 = vpack.c.b16 %v3997, %v3989
        %v5326 = vpack.c.b16 %v3998, %v3990
        %v5327 = vpack.c.b16 %v3999, %v3991
        %v5328 = vpack.c.b16 %v4000, %v3992
        %v5329 = vpack.c.b16 %v4001, %v3993
        %v5330 = vpack.c.b16 %v4002, %v3994
        %v5331 = vpack.c.b16 %v4003, %v3995
        %v5332 = vpack.c.b16 %v4004, %v3996
        %v5333 = vpack.c.b16 %v4013, %v4005
        %v5334 = vpack.c.b16 %v4014, %v4006
        %v5335 = vpack.c.b16 %v4015, %v4007
        %v5336 = vpack.c.b16 %v4016, %v4008
        %v5337 = vpack.c.b16 %v4017, %v4009
        %v5338 = vpack.c.b16 %v4018, %v4010
        %v5339 = vpack.c.b16 %v4019, %v4011
        %v5340 = vpack.c.b16 %v4020, %v4012
        %v5341 = vpack.c.b16 %v4029, %v4021
        %v5342 = vpack.c.b16 %v4030, %v4022
        %v5343 = vpack.c.b16 %v4031, %v4023
        %v5344 = vpack.c.b16 %v4032, %v4024
        %v5345 = vpack.c.b16 %v4033, %v4025
        %v5346 = vpack.c.b16 %v4034, %v4026
        %v5347 = vpack.c.b16 %v4035, %v4027
        %v5348 = vpack.c.b16 %v4036, %v4028
        %v5349 = vpack.c.b16 %v4045, %v4037
        %v5350 = vpack.c.b16 %v4046, %v4038
        %v5351 = vpack.c.b16 %v4047, %v4039
        %v5352 = vpack.c.b16 %v4048, %v4040
        %v5353 = vpack.c.b16 %v4049, %v4041
        %v5354 = vpack.c.b16 %v4050, %v4042
        %v5355 = vpack.c.b16 %v4051, %v4043
        %v5356 = vpack.c.b16 %v4052, %v4044
        %v5357 = vpack.c.b16 %v4061, %v4053
        %v5358 = vpack.c.b16 %v4062, %v4054
        %v5359 = vpack.c.b16 %v4063, %v4055
        %v5360 = vpack.c.b16 %v4064, %v4056
        %v5361 = vpack.c.b16 %v4065, %v4057
        %v5362 = vpack.c.b16 %v4066, %v4058
        %v5363 = vpack.c.b16 %v4067, %v4059
        %v5364 = vpack.c.b16 %v4068, %v4060
        %v5365 = vpack.c.b16 %v4077, %v4069
        %v5366 = vpack.c.b16 %v4078, %v4070
        %v5367 = vpack.c.b16 %v4079, %v4071
        %v5368 = vpack.c.b16 %v4080, %v4072
        %v5369 = vpack.c.b16 %v4081, %v4073
        %v5370 = vpack.c.b16 %v4082, %v4074
        %v5371 = vpack.c.b16 %v4083, %v4075
        %v5372 = vpack.c.b16 %v4084, %v4076
        %v5373 = vpack.c.b16 %v4093, %v4085
        %v5374 = vpack.c.b16 %v4094, %v4086
        %v5375 = vpack.c.b16 %v4095, %v4087
        %v5376 = vpack.c.b16 %v4096, %v4088
        %v5377 = vpack.c.b16 %v4097, %v4089
        %v5378 = vpack.c.b16 %v4098, %v4090
        %v5379 = vpack.c.b16 %v4099, %v4091
        %v5380 = vpack.c.b16 %v4100, %v4092
        %v5381 = vpack.c.b16 %v4109, %v4101
        %v5382 = vpack.c.b16 %v4110, %v4102
        %v5383 = vpack.c.b16 %v4111, %v4103
        %v5384 = vpack.c.b16 %v4112, %v4104
        %v5385 = vpack.c.b16 %v4113, %v4105
        %v5386 = vpack.c.b16 %v4114, %v4106
        %v5387 = vpack.c.b16 %v4115, %v4107
        %v5388 = vpack.c.b16 %v4116, %v4108
        %v5389 = vpack.c.b16 %v4125, %v4117
        %v5390 = vpack.c.b16 %v4126, %v4118
        %v5391 = vpack.c.b16 %v4127, %v4119
        %v5392 = vpack.c.b16 %v4128, %v4120
        %v5393 = vpack.c.b16 %v4129, %v4121
        %v5394 = vpack.c.b16 %v4130, %v4122
        %v5395 = vpack.c.b16 %v4131, %v4123
        %v5396 = vpack.c.b16 %v4132, %v4124
        %v5397 = vpack.c.b16 %v4141, %v4133
        %v5398 = vpack.c.b16 %v4142, %v4134
        %v5399 = vpack.c.b16 %v4143, %v4135
        %v5400 = vpack.c.b16 %v4144, %v4136
        %v5401 = vpack.c.b16 %v4145, %v4137
        %v5402 = vpack.c.b16 %v4146, %v4138
        %v5403 = vpack.c.b16 %v4147, %v4139
        %v5404 = vpack.c.b16 %v4148, %v4140
        %v5405 = vpack.c.b16 %v4157, %v4149
        %v5406 = vpack.c.b16 %v4158, %v4150
        %v5407 = vpack.c.b16 %v4159, %v4151
        %v5408 = vpack.c.b16 %v4160, %v4152
        %v5409 = vpack.c.b16 %v4161, %v4153
        %v5410 = vpack.c.b16 %v4162, %v4154
        %v5411 = vpack.c.b16 %v4163, %v4155
        %v5412 = vpack.c.b16 %v4164, %v4156
        %v5413 = vpack.c.b16 %v4173, %v4165
        %v5414 = vpack.c.b16 %v4174, %v4166
        %v5415 = vpack.c.b16 %v4175, %v4167
        %v5416 = vpack.c.b16 %v4176, %v4168
        %v5417 = vpack.c.b16 %v4177, %v4169
        %v5418 = vpack.c.b16 %v4178, %v4170
        %v5419 = vpack.c.b16 %v4179, %v4171
        %v5420 = vpack.c.b16 %v4180, %v4172
        %v5421 = vpack.c.b16 %v4189, %v4181
        %v5422 = vpack.c.b16 %v4190, %v4182
        %v5423 = vpack.c.b16 %v4191, %v4183
        %v5424 = vpack.c.b16 %v4192, %v4184
        %v5425 = vpack.c.b16 %v4193, %v4185
        %v5426 = vpack.c.b16 %v4194, %v4186
        %v5427 = vpack.c.b16 %v4195, %v4187
        %v5428 = vpack.c.b16 %v4196, %v4188
        %v5429 = vpack.c.b16 %v4205, %v4197
        %v5430 = vpack.c.b16 %v4206, %v4198
        %v5431 = vpack.c.b16 %v4207, %v4199
        %v5432 = vpack.c.b16 %v4208, %v4200
        %v5433 = vpack.c.b16 %v4209, %v4201
        %v5434 = vpack.c.b16 %v4210, %v4202
        %v5435 = vpack.c.b16 %v4211, %v4203
        %v5436 = vpack.c.b16 %v4212, %v4204
        %v5437 = vpack.c.b16 %v4221, %v4213
        %v5438 = vpack.c.b16 %v4222, %v4214
        %v5439 = vpack.c.b16 %v4223, %v4215
        %v5440 = vpack.c.b16 %v4224, %v4216
        %v5441 = vpack.c.b16 %v4225, %v4217
        %v5442 = vpack.c.b16 %v4226, %v4218
        %v5443 = vpack.c.b16 %v4227, %v4219
        %v5444 = vpack.c.b16 %v4228, %v4220
        %v5445 = vpack.c.b16 %v4237, %v4229
        %v5446 = vpack.c.b16 %v4238, %v4230
        %v5447 = vpack.c.b16 %v4239, %v4231
        %v5448 = vpack.c.b16 %v4240, %v4232
        %v5449 = vpack.c.b16 %v4241, %v4233
        %v5450 = vpack.c.b16 %v4242, %v4234
        %v5451 = vpack.c.b16 %v4243, %v4235
        %v5452 = vpack.c.b16 %v4244, %v4236
        %v5453 = vpack.c.b16 %v4253, %v4245
        %v5454 = vpack.c.b16 %v4254, %v4246
        %v5455 = vpack.c.b16 %v4255, %v4247
        %v5456 = vpack.c.b16 %v4256, %v4248
        %v5457 = vpack.c.b16 %v4257, %v4249
        %v5458 = vpack.c.b16 %v4258, %v4250
        %v5459 = vpack.c.b16 %v4259, %v4251
        %v5460 = vpack.c.b16 %v4260, %v4252
        %v5461 = vpack.c.b16 %v4269, %v4261
        %v5462 = vpack.c.b16 %v4270, %v4262
        %v5463 = vpack.c.b16 %v4271, %v4263
        %v5464 = vpack.c.b16 %v4272, %v4264
        %v5465 = vpack.c.b16 %v4273, %v4265
        %v5466 = vpack.c.b16 %v4274, %v4266
        %v5467 = vpack.c.b16 %v4275, %v4267
        %v5468 = vpack.c.b16 %v4276, %v4268
        %v5469 = vpack.c.b16 %v4285, %v4277
        %v5470 = vpack.c.b16 %v4286, %v4278
        %v5471 = vpack.c.b16 %v4287, %v4279
        %v5472 = vpack.c.b16 %v4288, %v4280
        %v5473 = vpack.c.b16 %v4289, %v4281
        %v5474 = vpack.c.b16 %v4290, %v4282
        %v5475 = vpack.c.b16 %v4291, %v4283
        %v5476 = vpack.c.b16 %v4292, %v4284
        %v5477 = vpack.c.b16 %v4301, %v4293
        %v5478 = vpack.c.b16 %v4302, %v4294
        %v5479 = vpack.c.b16 %v4303, %v4295
        %v5480 = vpack.c.b16 %v4304, %v4296
        %v5481 = vpack.c.b16 %v4305, %v4297
        %v5482 = vpack.c.b16 %v4306, %v4298
        %v5483 = vpack.c.b16 %v4307, %v4299
        %v5484 = vpack.c.b16 %v4308, %v4300
        %v5485 = vpack.c.b16 %v4317, %v4309
        %v5486 = vpack.c.b16 %v4318, %v4310
        %v5487 = vpack.c.b16 %v4319, %v4311
        %v5488 = vpack.c.b16 %v4320, %v4312
        %v5489 = vpack.c.b16 %v4321, %v4313
        %v5490 = vpack.c.b16 %v4322, %v4314
        %v5491 = vpack.c.b16 %v4323, %v4315
        %v5492 = vpack.c.b16 %v4324, %v4316
        %v5493 = vpack.c.b16 %v4333, %v4325
        %v5494 = vpack.c.b16 %v4334, %v4326
        %v5495 = vpack.c.b16 %v4335, %v4327
        %v5496 = vpack.c.b16 %v4336, %v4328
        %v5497 = vpack.c.b16 %v4337, %v4329
        %v5498 = vpack.c.b16 %v4338, %v4330
        %v5499 = vpack.c.b16 %v4339, %v4331
        %v5500 = vpack.c.b16 %v4340, %v4332
        %v5501 = vpack.c.b16 %v4349, %v4341
        %v5502 = vpack.c.b16 %v4350, %v4342
        %v5503 = vpack.c.b16 %v4351, %v4343
        %v5504 = vpack.c.b16 %v4352, %v4344
        %v5505 = vpack.c.b16 %v4353, %v4345
        %v5506 = vpack.c.b16 %v4354, %v4346
        %v5507 = vpack.c.b16 %v4355, %v4347
        %v5508 = vpack.c.b16 %v4356, %v4348
        %v5509 = vpack.c.b16 %v4365, %v4357
        %v5510 = vpack.c.b16 %v4366, %v4358
        %v5511 = vpack.c.b16 %v4367, %v4359
        %v5512 = vpack.c.b16 %v4368, %v4360
        %v5513 = vpack.c.b16 %v4369, %v4361
        %v5514 = vpack.c.b16 %v4370, %v4362
        %v5515 = vpack.c.b16 %v4371, %v4363
        %v5516 = vpack.c.b16 %v4372, %v4364
        %v5517 = vpack.c.b16 %v4381, %v4373
        %v5518 = vpack.c.b16 %v4382, %v4374
        %v5519 = vpack.c.b16 %v4383, %v4375
        %v5520 = vpack.c.b16 %v4384, %v4376
        %v5521 = vpack.c.b16 %v4385, %v4377
        %v5522 = vpack.c.b16 %v4386, %v4378
        %v5523 = vpack.c.b16 %v4387, %v4379
        %v5524 = vpack.c.b16 %v4388, %v4380
        %v5525 = vpack.c.b16 %v4397, %v4389
        %v5526 = vpack.c.b16 %v4398, %v4390
        %v5527 = vpack.c.b16 %v4399, %v4391
        %v5528 = vpack.c.b16 %v4400, %v4392
        %v5529 = vpack.c.b16 %v4401, %v4393
        %v5530 = vpack.c.b16 %v4402, %v4394
        %v5531 = vpack.c.b16 %v4403, %v4395
        %v5532 = vpack.c.b16 %v4404, %v4396
        %v5533 = vpack.c.b16 %v4413, %v4405
        %v5534 = vpack.c.b16 %v4414, %v4406
        %v5535 = vpack.c.b16 %v4415, %v4407
        %v5536 = vpack.c.b16 %v4416, %v4408
        %v5537 = vpack.c.b16 %v4417, %v4409
        %v5538 = vpack.c.b16 %v4418, %v4410
        %v5539 = vpack.c.b16 %v4419, %v4411
        %v5540 = vpack.c.b16 %v4420, %v4412
        %v5541 = vpack.c.b16 %v4429, %v4421
        %v5542 = vpack.c.b16 %v4430, %v4422
        %v5543 = vpack.c.b16 %v4431, %v4423
        %v5544 = vpack.c.b16 %v4432, %v4424
        %v5545 = vpack.c.b16 %v4433, %v4425
        %v5546 = vpack.c.b16 %v4434, %v4426
        %v5547 = vpack.c.b16 %v4435, %v4427
        %v5548 = vpack.c.b16 %v4436, %v4428
        %v5549 = vpack.c.b16 %v4445, %v4437
        %v5550 = vpack.c.b16 %v4446, %v4438
        %v5551 = vpack.c.b16 %v4447, %v4439
        %v5552 = vpack.c.b16 %v4448, %v4440
        %v5553 = vpack.c.b16 %v4449, %v4441
        %v5554 = vpack.c.b16 %v4450, %v4442
        %v5555 = vpack.c.b16 %v4451, %v4443
        %v5556 = vpack.c.b16 %v4452, %v4444
        %v5557 = vpack.c.b16 %v4461, %v4453
        %v5558 = vpack.c.b16 %v4462, %v4454
        %v5559 = vpack.c.b16 %v4463, %v4455
        %v5560 = vpack.c.b16 %v4464, %v4456
        %v5561 = vpack.c.b16 %v4465, %v4457
        %v5562 = vpack.c.b16 %v4466, %v4458
        %v5563 = vpack.c.b16 %v4467, %v4459
        %v5564 = vpack.c.b16 %v4468, %v4460
        %v5565 = vpack.c.b16 %v4477, %v4469
        %v5566 = vpack.c.b16 %v4478, %v4470
        %v5567 = vpack.c.b16 %v4479, %v4471
        %v5568 = vpack.c.b16 %v4480, %v4472
        %v5569 = vpack.c.b16 %v4481, %v4473
        %v5570 = vpack.c.b16 %v4482, %v4474
        %v5571 = vpack.c.b16 %v4483, %v4475
        %v5572 = vpack.c.b16 %v4484, %v4476
        %v5573 = vpack.c.b16 %v4493, %v4485
        %v5574 = vpack.c.b16 %v4494, %v4486
        %v5575 = vpack.c.b16 %v4495, %v4487
        %v5576 = vpack.c.b16 %v4496, %v4488
        %v5577 = vpack.c.b16 %v4497, %v4489
        %v5578 = vpack.c.b16 %v4498, %v4490
        %v5579 = vpack.c.b16 %v4499, %v4491
        %v5580 = vpack.c.b16 %v4500, %v4492
        %v5581 = vpack.c.b16 %v4509, %v4501
        %v5582 = vpack.c.b16 %v4510, %v4502
        %v5583 = vpack.c.b16 %v4511, %v4503
        %v5584 = vpack.c.b16 %v4512, %v4504
        %v5585 = vpack.c.b16 %v4513, %v4505
        %v5586 = vpack.c.b16 %v4514, %v4506
        %v5587 = vpack.c.b16 %v4515, %v4507
        %v5588 = vpack.c.b16 %v4516, %v4508
        %v5589 = vpack.c.b16 %v4525, %v4517
        %v5590 = vpack.c.b16 %v4526, %v4518
        %v5591 = vpack.c.b16 %v4527, %v4519
        %v5592 = vpack.c.b16 %v4528, %v4520
        %v5593 = vpack.c.b16 %v4529, %v4521
        %v5594 = vpack.c.b16 %v4530, %v4522
        %v5595 = vpack.c.b16 %v4531, %v4523
        %v5596 = vpack.c.b16 %v4532, %v4524
        %v5597 = vpack.c.b16 %v4541, %v4533
        %v5598 = vpack.c.b16 %v4542, %v4534
        %v5599 = vpack.c.b16 %v4543, %v4535
        %v5600 = vpack.c.b16 %v4544, %v4536
        %v5601 = vpack.c.b16 %v4545, %v4537
        %v5602 = vpack.c.b16 %v4546, %v4538
        %v5603 = vpack.c.b16 %v4547, %v4539
        %v5604 = vpack.c.b16 %v4548, %v4540
        %v5605 = vpack.c.b16 %v4557, %v4549
        %v5606 = vpack.c.b16 %v4558, %v4550
        %v5607 = vpack.c.b16 %v4559, %v4551
        %v5608 = vpack.c.b16 %v4560, %v4552
        %v5609 = vpack.c.b16 %v4561, %v4553
        %v5610 = vpack.c.b16 %v4562, %v4554
        %v5611 = vpack.c.b16 %v4563, %v4555
        %v5612 = vpack.c.b16 %v4564, %v4556
        %v5613 = vpack.c.b16 %v4573, %v4565
        %v5614 = vpack.c.b16 %v4574, %v4566
        %v5615 = vpack.c.b16 %v4575, %v4567
        %v5616 = vpack.c.b16 %v4576, %v4568
        %v5617 = vpack.c.b16 %v4577, %v4569
        %v5618 = vpack.c.b16 %v4578, %v4570
        %v5619 = vpack.c.b16 %v4579, %v4571
        %v5620 = vpack.c.b16 %v4580, %v4572
        %v5621 = vpack.c.b16 %v4589, %v4581
        %v5622 = vpack.c.b16 %v4590, %v4582
        %v5623 = vpack.c.b16 %v4591, %v4583
        %v5624 = vpack.c.b16 %v4592, %v4584
        %v5625 = vpack.c.b16 %v4593, %v4585
        %v5626 = vpack.c.b16 %v4594, %v4586
        %v5627 = vpack.c.b16 %v4595, %v4587
        %v5628 = vpack.c.b16 %v4596, %v4588
        %v5629 = vpack.c.b16 %v4605, %v4597
        %v5630 = vpack.c.b16 %v4606, %v4598
        %v5631 = vpack.c.b16 %v4607, %v4599
        %v5632 = vpack.c.b16 %v4608, %v4600
        %v5633 = vpack.c.b16 %v4609, %v4601
        %v5634 = vpack.c.b16 %v4610, %v4602
        %v5635 = vpack.c.b16 %v4611, %v4603
        %v5636 = vpack.c.b16 %v4612, %v4604
        %6661 = vmatprep.subr.bf16.mxu0 %v4614
        %6662 = vmatpush1.bf16.msra.mxu0 %v4613
        %6663 = vmatprep.subr.bf16.mxu0 %v4622
        %6664 = vmatpush1.bf16.msra.mxu0 %v4621
        %6665 = vmatprep.subr.bf16.mxu0 %v4630
        %6666 = vmatpush1.bf16.msra.mxu0 %v4629
        %6667 = vmatprep.subr.bf16.mxu0 %v4638
        %6668 = vmatpush1.bf16.msra.mxu0 %v4637
        %6669 = vmatprep.subr.bf16.mxu0 %v4646
        %6670 = vmatpush1.bf16.msra.mxu0 %v4645
        %6671 = vmatprep.subr.bf16.mxu0 %v4654
        %6672 = vmatpush1.bf16.msra.mxu0 %v4653
        %6673 = vmatprep.subr.bf16.mxu0 %v4662
        %6674 = vmatpush1.bf16.msra.mxu0 %v4661
        %6675 = vmatprep.subr.bf16.mxu0 %v4670
        %6676 = vmatpush1.bf16.msra.mxu0 %v4669
        %6677 = vmatprep.subr.bf16.mxu0 %v4678
        %6678 = vmatpush1.bf16.msra.mxu0 %v4677
        %6679 = vmatprep.subr.bf16.mxu0 %v4686
        %6680 = vmatpush1.bf16.msra.mxu0 %v4685
        %6681 = vmatprep.subr.bf16.mxu0 %v4694
        %6682 = vmatpush1.bf16.msra.mxu0 %v4693
        %6683 = vmatprep.subr.bf16.mxu0 %v4702
        %6684 = vmatpush1.bf16.msra.mxu0 %v4701
        %6685 = vmatprep.subr.bf16.mxu0 %v4710
        %6686 = vmatpush1.bf16.msra.mxu0 %v4709
        %6687 = vmatprep.subr.bf16.mxu0 %v4718
        %6688 = vmatpush1.bf16.msra.mxu0 %v4717
        %6689 = vmatprep.subr.bf16.mxu0 %v4726
        %6690 = vmatpush1.bf16.msra.mxu0 %v4725
        %6691 = vmatprep.subr.bf16.mxu0 %v4734
        %6692 = vmatpush1.bf16.msra.mxu0 %v4733
        %6693 = vmatprep.mubr.bf16.mxu0 %v494
        %6694 = vmatmul.mubr.bf16.gmra.mrb[0].mxu0 %v493
        %v6695 = vpop.f32.mrb[0].mxu0
        %v6696 = vadd.f32 0.0, %v6695
        %v6697 = vpop.f32.mrb[0].mxu0
        %v6698 = vadd.f32 0.0, %v6697
        %v6699 = vpop.f32.mrb[0].mxu0
        %v6700 = vpop.f32.mrb[0].mxu0
        %6701 = vdwg.mxu0
        %6702 = vmatprep.subr.bf16.mxu0 %v4742
        %6703 = vmatpush1.bf16.msra.mxu0 %v4741
        %6704 = vmatprep.subr.bf16.mxu0 %v4750
        %6705 = vmatpush1.bf16.msra.mxu0 %v4749
        %6706 = vmatprep.subr.bf16.mxu0 %v4758
        %6707 = vmatpush1.bf16.msra.mxu0 %v4757
        %6708 = vmatprep.subr.bf16.mxu0 %v4766
        %6709 = vmatpush1.bf16.msra.mxu0 %v4765
        %6710 = vmatprep.subr.bf16.mxu0 %v4774
        %6711 = vmatpush1.bf16.msra.mxu0 %v4773
        %6712 = vmatprep.subr.bf16.mxu0 %v4782
        %6713 = vmatpush1.bf16.msra.mxu0 %v4781
        %6714 = vmatprep.subr.bf16.mxu0 %v4790
        %6715 = vmatpush1.bf16.msra.mxu0 %v4789
        %6716 = vmatprep.subr.bf16.mxu0 %v4798
        %6717 = vmatpush1.bf16.msra.mxu0 %v4797
        %6718 = vmatprep.subr.bf16.mxu0 %v4806
        %6719 = vmatpush1.bf16.msra.mxu0 %v4805
        %6720 = vmatprep.subr.bf16.mxu0 %v4814
        %6721 = vmatpush1.bf16.msra.mxu0 %v4813
        %6722 = vmatprep.subr.bf16.mxu0 %v4822
        %6723 = vmatpush1.bf16.msra.mxu0 %v4821
        %6724 = vmatprep.subr.bf16.mxu0 %v4830
        %6725 = vmatpush1.bf16.msra.mxu0 %v4829
        %6726 = vmatprep.subr.bf16.mxu0 %v4838
        %6727 = vmatpush1.bf16.msra.mxu0 %v4837
        %6728 = vmatprep.subr.bf16.mxu0 %v4846
        %6729 = vmatpush1.bf16.msra.mxu0 %v4845
        %6730 = vmatprep.subr.bf16.mxu0 %v4854
        %6731 = vmatpush1.bf16.msra.mxu0 %v4853
        %6732 = vmatprep.subr.bf16.mxu0 %v4862
        %6733 = vmatpush1.bf16.msra.mxu0 %v4861
        %6734 = vmatprep.mubr.bf16.mxu0 %v496
        %6735 = vmatmul.mubr.bf16.gmra.mrb[0].mxu0 %v495
        %v6736 = vpop.f32.mrb[0].mxu0
        %v6737 = vadd.f32 %v6696, %v6736
        %v6738 = vpop.f32.mrb[0].mxu0
        %v6739 = vadd.f32 %v6698, %v6738
        %v6740 = vpop.f32.mrb[0].mxu0
        %v6741 = vpop.f32.mrb[0].mxu0
        %6742 = vdwg.mxu0
        %6743 = vmatprep.subr.bf16.mxu0 %v4870
        %6744 = vmatpush1.bf16.msra.mxu0 %v4869
        %6745 = vmatprep.subr.bf16.mxu0 %v4878
        %6746 = vmatpush1.bf16.msra.mxu0 %v4877
        %6747 = vmatprep.subr.bf16.mxu0 %v4886
        %6748 = vmatpush1.bf16.msra.mxu0 %v4885
        %6749 = vmatprep.subr.bf16.mxu0 %v4894
        %6750 = vmatpush1.bf16.msra.mxu0 %v4893
        %6751 = vmatprep.subr.bf16.mxu0 %v4902
        %6752 = vmatpush1.bf16.msra.mxu0 %v4901
        %6753 = vmatprep.subr.bf16.mxu0 %v4910
        %6754 = vmatpush1.bf16.msra.mxu0 %v4909
        %6755 = vmatprep.subr.bf16.mxu0 %v4918
        %6756 = vmatpush1.bf16.msra.mxu0 %v4917
        %6757 = vmatprep.subr.bf16.mxu0 %v4926
        %6758 = vmatpush1.bf16.msra.mxu0 %v4925
        %6759 = vmatprep.subr.bf16.mxu0 %v4934
        %6760 = vmatpush1.bf16.msra.mxu0 %v4933
        %6761 = vmatprep.subr.bf16.mxu0 %v4942
        %6762 = vmatpush1.bf16.msra.mxu0 %v4941
        %6763 = vmatprep.subr.bf16.mxu0 %v4950
        %6764 = vmatpush1.bf16.msra.mxu0 %v4949
        %6765 = vmatprep.subr.bf16.mxu0 %v4958
        %6766 = vmatpush1.bf16.msra.mxu0 %v4957
        %6767 = vmatprep.subr.bf16.mxu0 %v4966
        %6768 = vmatpush1.bf16.msra.mxu0 %v4965
        %6769 = vmatprep.subr.bf16.mxu0 %v4974
        %6770 = vmatpush1.bf16.msra.mxu0 %v4973
        %6771 = vmatprep.subr.bf16.mxu0 %v4982
        %6772 = vmatpush1.bf16.msra.mxu0 %v4981
        %6773 = vmatprep.subr.bf16.mxu0 %v4990
        %6774 = vmatpush1.bf16.msra.mxu0 %v4989
        %6775 = vmatprep.mubr.bf16.mxu0 %v498
        %6776 = vmatmul.mubr.bf16.gmra.mrb[0].mxu0 %v497
        %v6777 = vpop.f32.mrb[0].mxu0
        %v6778 = vadd.f32 %v6737, %v6777
        %v6779 = vpop.f32.mrb[0].mxu0
        %v6780 = vadd.f32 %v6739, %v6779
        %v6781 = vpop.f32.mrb[0].mxu0
        %v6782 = vpop.f32.mrb[0].mxu0
        %6783 = vdwg.mxu0
        %6784 = vmatprep.subr.bf16.mxu0 %v4998
        %6785 = vmatpush1.bf16.msra.mxu0 %v4997
        %6786 = vmatprep.subr.bf16.mxu0 %v5006
        %6787 = vmatpush1.bf16.msra.mxu0 %v5005
        %6788 = vmatprep.subr.bf16.mxu0 %v5014
        %6789 = vmatpush1.bf16.msra.mxu0 %v5013
        %6790 = vmatprep.subr.bf16.mxu0 %v5022
        %6791 = vmatpush1.bf16.msra.mxu0 %v5021
        %6792 = vmatprep.subr.bf16.mxu0 %v5030
        %6793 = vmatpush1.bf16.msra.mxu0 %v5029
        %6794 = vmatprep.subr.bf16.mxu0 %v5038
        %6795 = vmatpush1.bf16.msra.mxu0 %v5037
        %6796 = vmatprep.subr.bf16.mxu0 %v5046
        %6797 = vmatpush1.bf16.msra.mxu0 %v5045
        %6798 = vmatprep.subr.bf16.mxu0 %v5054
        %6799 = vmatpush1.bf16.msra.mxu0 %v5053
        %6800 = vmatprep.subr.bf16.mxu0 %v5062
        %6801 = vmatpush1.bf16.msra.mxu0 %v5061
        %6802 = vmatprep.subr.bf16.mxu0 %v5070
        %6803 = vmatpush1.bf16.msra.mxu0 %v5069
        %6804 = vmatprep.subr.bf16.mxu0 %v5078
        %6805 = vmatpush1.bf16.msra.mxu0 %v5077
        %6806 = vmatprep.subr.bf16.mxu0 %v5086
        %6807 = vmatpush1.bf16.msra.mxu0 %v5085
        %6808 = vmatprep.subr.bf16.mxu0 %v5094
        %6809 = vmatpush1.bf16.msra.mxu0 %v5093
        %6810 = vmatprep.subr.bf16.mxu0 %v5102
        %6811 = vmatpush1.bf16.msra.mxu0 %v5101
        %6812 = vmatprep.subr.bf16.mxu0 %v5110
        %6813 = vmatpush1.bf16.msra.mxu0 %v5109
        %6814 = vmatprep.subr.bf16.mxu0 %v5118
        %6815 = vmatpush1.bf16.msra.mxu0 %v5117
        %6816 = vmatprep.mubr.bf16.mxu0 %v500
        %6817 = vmatmul.mubr.bf16.gmra.mrb[0].mxu0 %v499
        %v6818 = vpop.f32.mrb[0].mxu0
        %v6819 = vadd.f32 %v6778, %v6818
        %v6820 = vpop.f32.mrb[0].mxu0
        %v6821 = vadd.f32 %v6780, %v6820
        %v6822 = vpop.f32.mrb[0].mxu0
        %v6823 = vpop.f32.mrb[0].mxu0
        %6824 = vdwg.mxu0
        %6825 = vmatprep.subr.bf16.mxu0 %v5126
        %6826 = vmatpush1.bf16.msra.mxu0 %v5125
        %6827 = vmatprep.subr.bf16.mxu0 %v5134
        %6828 = vmatpush1.bf16.msra.mxu0 %v5133
        %6829 = vmatprep.subr.bf16.mxu0 %v5142
        %6830 = vmatpush1.bf16.msra.mxu0 %v5141
        %6831 = vmatprep.subr.bf16.mxu0 %v5150
        %6832 = vmatpush1.bf16.msra.mxu0 %v5149
        %6833 = vmatprep.subr.bf16.mxu0 %v5158
        %6834 = vmatpush1.bf16.msra.mxu0 %v5157
        %6835 = vmatprep.subr.bf16.mxu0 %v5166
        %6836 = vmatpush1.bf16.msra.mxu0 %v5165
        %6837 = vmatprep.subr.bf16.mxu0 %v5174
        %6838 = vmatpush1.bf16.msra.mxu0 %v5173
        %6839 = vmatprep.subr.bf16.mxu0 %v5182
        %6840 = vmatpush1.bf16.msra.mxu0 %v5181
        %6841 = vmatprep.subr.bf16.mxu0 %v5190
        %6842 = vmatpush1.bf16.msra.mxu0 %v5189
        %6843 = vmatprep.subr.bf16.mxu0 %v5198
        %6844 = vmatpush1.bf16.msra.mxu0 %v5197
        %6845 = vmatprep.subr.bf16.mxu0 %v5206
        %6846 = vmatpush1.bf16.msra.mxu0 %v5205
        %6847 = vmatprep.subr.bf16.mxu0 %v5214
        %6848 = vmatpush1.bf16.msra.mxu0 %v5213
        %6849 = vmatprep.subr.bf16.mxu0 %v5222
        %6850 = vmatpush1.bf16.msra.mxu0 %v5221
        %6851 = vmatprep.subr.bf16.mxu0 %v5230
        %6852 = vmatpush1.bf16.msra.mxu0 %v5229
        %6853 = vmatprep.subr.bf16.mxu0 %v5238
        %6854 = vmatpush1.bf16.msra.mxu0 %v5237
        %6855 = vmatprep.subr.bf16.mxu0 %v5246
        %6856 = vmatpush1.bf16.msra.mxu0 %v5245
        %6857 = vmatprep.mubr.bf16.mxu0 %v502
        %6858 = vmatmul.mubr.bf16.gmra.mrb[0].mxu0 %v501
        %v6859 = vpop.f32.mrb[0].mxu0
        %v6860 = vadd.f32 %v6819, %v6859
        %v6861 = vpop.f32.mrb[0].mxu0
        %v6862 = vadd.f32 %v6821, %v6861
        %v6863 = vpop.f32.mrb[0].mxu0
        %v6864 = vpop.f32.mrb[0].mxu0
        %6865 = vdwg.mxu0
        %6866 = vmatprep.subr.bf16.mxu0 %v5254
        %6867 = vmatpush1.bf16.msra.mxu0 %v5253
        %6868 = vmatprep.subr.bf16.mxu0 %v5262
        %6869 = vmatpush1.bf16.msra.mxu0 %v5261
        %6870 = vmatprep.subr.bf16.mxu0 %v5270
        %6871 = vmatpush1.bf16.msra.mxu0 %v5269
        %6872 = vmatprep.subr.bf16.mxu0 %v5278
        %6873 = vmatpush1.bf16.msra.mxu0 %v5277
        %6874 = vmatprep.subr.bf16.mxu0 %v5286
        %6875 = vmatpush1.bf16.msra.mxu0 %v5285
        %6876 = vmatprep.subr.bf16.mxu0 %v5294
        %6877 = vmatpush1.bf16.msra.mxu0 %v5293
        %6878 = vmatprep.subr.bf16.mxu0 %v5302
        %6879 = vmatpush1.bf16.msra.mxu0 %v5301
        %6880 = vmatprep.subr.bf16.mxu0 %v5310
        %6881 = vmatpush1.bf16.msra.mxu0 %v5309
        %6882 = vmatprep.subr.bf16.mxu0 %v5318
        %6883 = vmatpush1.bf16.msra.mxu0 %v5317
        %6884 = vmatprep.subr.bf16.mxu0 %v5326
        %6885 = vmatpush1.bf16.msra.mxu0 %v5325
        %6886 = vmatprep.subr.bf16.mxu0 %v5334
        %6887 = vmatpush1.bf16.msra.mxu0 %v5333
        %6888 = vmatprep.subr.bf16.mxu0 %v5342
        %6889 = vmatpush1.bf16.msra.mxu0 %v5341
        %6890 = vmatprep.subr.bf16.mxu0 %v5350
        %6891 = vmatpush1.bf16.msra.mxu0 %v5349
        %6892 = vmatprep.subr.bf16.mxu0 %v5358
        %6893 = vmatpush1.bf16.msra.mxu0 %v5357
        %6894 = vmatprep.subr.bf16.mxu0 %v5366
        %6895 = vmatpush1.bf16.msra.mxu0 %v5365
        %6896 = vmatprep.subr.bf16.mxu0 %v5374
        %6897 = vmatpush1.bf16.msra.mxu0 %v5373
        %6898 = vmatprep.mubr.bf16.mxu0 %v504
        %6899 = vmatmul.mubr.bf16.gmra.mrb[0].mxu0 %v503
        %v6900 = vpop.f32.mrb[0].mxu0
        %v6901 = vadd.f32 %v6860, %v6900
        %v6902 = vpop.f32.mrb[0].mxu0
        %v6903 = vadd.f32 %v6862, %v6902
        %v6904 = vpop.f32.mrb[0].mxu0
        %v6905 = vpop.f32.mrb[0].mxu0
        %6906 = vdwg.mxu0
        %6907 = vmatprep.subr.bf16.mxu0 %v5382
        %6908 = vmatpush1.bf16.msra.mxu0 %v5381
        %6909 = vmatprep.subr.bf16.mxu0 %v5390
        %6910 = vmatpush1.bf16.msra.mxu0 %v5389
        %6911 = vmatprep.subr.bf16.mxu0 %v5398
        %6912 = vmatpush1.bf16.msra.mxu0 %v5397
        %6913 = vmatprep.subr.bf16.mxu0 %v5406
        %6914 = vmatpush1.bf16.msra.mxu0 %v5405
        %6915 = vmatprep.subr.bf16.mxu0 %v5414
        %6916 = vmatpush1.bf16.msra.mxu0 %v5413
        %6917 = vmatprep.subr.bf16.mxu0 %v5422
        %6918 = vmatpush1.bf16.msra.mxu0 %v5421
        %6919 = vmatprep.subr.bf16.mxu0 %v5430
        %6920 = vmatpush1.bf16.msra.mxu0 %v5429
        %6921 = vmatprep.subr.bf16.mxu0 %v5438
        %6922 = vmatpush1.bf16.msra.mxu0 %v5437
        %6923 = vmatprep.subr.bf16.mxu0 %v5446
        %6924 = vmatpush1.bf16.msra.mxu0 %v5445
        %6925 = vmatprep.subr.bf16.mxu0 %v5454
        %6926 = vmatpush1.bf16.msra.mxu0 %v5453
        %6927 = vmatprep.subr.bf16.mxu0 %v5462
        %6928 = vmatpush1.bf16.msra.mxu0 %v5461
        %6929 = vmatprep.subr.bf16.mxu0 %v5470
        %6930 = vmatpush1.bf16.msra.mxu0 %v5469
        %6931 = vmatprep.subr.bf16.mxu0 %v5478
        %6932 = vmatpush1.bf16.msra.mxu0 %v5477
        %6933 = vmatprep.subr.bf16.mxu0 %v5486
        %6934 = vmatpush1.bf16.msra.mxu0 %v5485
        %6935 = vmatprep.subr.bf16.mxu0 %v5494
        %6936 = vmatpush1.bf16.msra.mxu0 %v5493
        %6937 = vmatprep.subr.bf16.mxu0 %v5502
        %6938 = vmatpush1.bf16.msra.mxu0 %v5501
        %6939 = vmatprep.mubr.bf16.mxu0 %v506
        %6940 = vmatmul.mubr.bf16.gmra.mrb[0].mxu0 %v505
        %v6941 = vpop.f32.mrb[0].mxu0
        %v6942 = vadd.f32 %v6901, %v6941
        %v6943 = vpop.f32.mrb[0].mxu0
        %v6944 = vadd.f32 %v6903, %v6943
        %v6945 = vpop.f32.mrb[0].mxu0
        %v6946 = vpop.f32.mrb[0].mxu0
        %6947 = vdwg.mxu0
        %6948 = vmatprep.subr.bf16.mxu0 %v5510
        %6949 = vmatpush1.bf16.msra.mxu0 %v5509
        %6950 = vmatprep.subr.bf16.mxu0 %v5518
        %6951 = vmatpush1.bf16.msra.mxu0 %v5517
        %6952 = vmatprep.subr.bf16.mxu0 %v5526
        %6953 = vmatpush1.bf16.msra.mxu0 %v5525
        %6954 = vmatprep.subr.bf16.mxu0 %v5534
        %6955 = vmatpush1.bf16.msra.mxu0 %v5533
        %6956 = vmatprep.subr.bf16.mxu0 %v5542
        %6957 = vmatpush1.bf16.msra.mxu0 %v5541
        %6958 = vmatprep.subr.bf16.mxu0 %v5550
        %6959 = vmatpush1.bf16.msra.mxu0 %v5549
        %6960 = vmatprep.subr.bf16.mxu0 %v5558
        %6961 = vmatpush1.bf16.msra.mxu0 %v5557
        %6962 = vmatprep.subr.bf16.mxu0 %v5566
        %6963 = vmatpush1.bf16.msra.mxu0 %v5565
        %6964 = vmatprep.subr.bf16.mxu0 %v5574
        %6965 = vmatpush1.bf16.msra.mxu0 %v5573
        %6966 = vmatprep.subr.bf16.mxu0 %v5582
        %6967 = vmatpush1.bf16.msra.mxu0 %v5581
        %6968 = vmatprep.subr.bf16.mxu0 %v5590
        %6969 = vmatpush1.bf16.msra.mxu0 %v5589
        %6970 = vmatprep.subr.bf16.mxu0 %v5598
        %6971 = vmatpush1.bf16.msra.mxu0 %v5597
        %6972 = vmatprep.subr.bf16.mxu0 %v5606
        %6973 = vmatpush1.bf16.msra.mxu0 %v5605
        %6974 = vmatprep.subr.bf16.mxu0 %v5614
        %6975 = vmatpush1.bf16.msra.mxu0 %v5613
        %6976 = vmatprep.subr.bf16.mxu0 %v5622
        %6977 = vmatpush1.bf16.msra.mxu0 %v5621
        %6978 = vmatprep.subr.bf16.mxu0 %v5630
        %6979 = vmatpush1.bf16.msra.mxu0 %v5629
        %6980 = vmatprep.mubr.bf16.mxu0 %v508
        %6981 = vmatmul.mubr.bf16.gmra.mrb[0].mxu0 %v507
        %v6982 = vpop.f32.mrb[0].mxu0
        %v6983 = vadd.f32 %v6942, %v6982
        %v6984 = vpop.f32.mrb[0].mxu0
        %v6985 = vadd.f32 %v6944, %v6984
        %v6986 = vpop.f32.mrb[0].mxu0
        %v6987 = vpop.f32.mrb[0].mxu0
        %6988 = vdwg.mxu0
        %6989 = vmatprep.subr.bf16.mxu0 %v4616
        %6990 = vmatpush1.bf16.msra.mxu0 %v4615
        %6991 = vmatprep.subr.bf16.mxu0 %v4624
        %6992 = vmatpush1.bf16.msra.mxu0 %v4623
        %6993 = vmatprep.subr.bf16.mxu0 %v4632
        %6994 = vmatpush1.bf16.msra.mxu0 %v4631
        %6995 = vmatprep.subr.bf16.mxu0 %v4640
        %6996 = vmatpush1.bf16.msra.mxu0 %v4639
        %6997 = vmatprep.subr.bf16.mxu0 %v4648
        %6998 = vmatpush1.bf16.msra.mxu0 %v4647
        %6999 = vmatprep.subr.bf16.mxu0 %v4656
        %7000 = vmatpush1.bf16.msra.mxu0 %v4655
        %7001 = vmatprep.subr.bf16.mxu0 %v4664
        %7002 = vmatpush1.bf16.msra.mxu0 %v4663
        %7003 = vmatprep.subr.bf16.mxu0 %v4672
        %7004 = vmatpush1.bf16.msra.mxu0 %v4671
        %7005 = vmatprep.subr.bf16.mxu0 %v4680
        %7006 = vmatpush1.bf16.msra.mxu0 %v4679
        %7007 = vmatprep.subr.bf16.mxu0 %v4688
        %7008 = vmatpush1.bf16.msra.mxu0 %v4687
        %7009 = vmatprep.subr.bf16.mxu0 %v4696
        %7010 = vmatpush1.bf16.msra.mxu0 %v4695
        %7011 = vmatprep.subr.bf16.mxu0 %v4704
        %7012 = vmatpush1.bf16.msra.mxu0 %v4703
        %7013 = vmatprep.subr.bf16.mxu0 %v4712
        %7014 = vmatpush1.bf16.msra.mxu0 %v4711
        %7015 = vmatprep.subr.bf16.mxu0 %v4720
        %7016 = vmatpush1.bf16.msra.mxu0 %v4719
        %7017 = vmatprep.subr.bf16.mxu0 %v4728
        %7018 = vmatpush1.bf16.msra.mxu0 %v4727
        %7019 = vmatprep.subr.bf16.mxu0 %v4736
        %7020 = vmatpush1.bf16.msra.mxu0 %v4735
        %7021 = vmatprep.mubr.bf16.mxu0 %v494
        %7022 = vmatmul.mubr.bf16.gmra.mrb[0].mxu0 %v493
        %v7023 = vpop.f32.mrb[0].mxu0
        %v7024 = vadd.f32 0.0, %v7023
        %v7025 = vpop.f32.mrb[0].mxu0
        %v7026 = vadd.f32 0.0, %v7025
        %v7027 = vpop.f32.mrb[0].mxu0
        %v7028 = vpop.f32.mrb[0].mxu0
        %7029 = vdwg.mxu0
        %7030 = vmatprep.subr.bf16.mxu0 %v4744
        %7031 = vmatpush1.bf16.msra.mxu0 %v4743
        %7032 = vmatprep.subr.bf16.mxu0 %v4752
        %7033 = vmatpush1.bf16.msra.mxu0 %v4751
        %7034 = vmatprep.subr.bf16.mxu0 %v4760
        %7035 = vmatpush1.bf16.msra.mxu0 %v4759
        %7036 = vmatprep.subr.bf16.mxu0 %v4768
        %7037 = vmatpush1.bf16.msra.mxu0 %v4767
        %7038 = vmatprep.subr.bf16.mxu0 %v4776
        %7039 = vmatpush1.bf16.msra.mxu0 %v4775
        %7040 = vmatprep.subr.bf16.mxu0 %v4784
        %7041 = vmatpush1.bf16.msra.mxu0 %v4783
        %7042 = vmatprep.subr.bf16.mxu0 %v4792
        %7043 = vmatpush1.bf16.msra.mxu0 %v4791
        %7044 = vmatprep.subr.bf16.mxu0 %v4800
        %7045 = vmatpush1.bf16.msra.mxu0 %v4799
        %7046 = vmatprep.subr.bf16.mxu0 %v4808
        %7047 = vmatpush1.bf16.msra.mxu0 %v4807
        %7048 = vmatprep.subr.bf16.mxu0 %v4816
        %7049 = vmatpush1.bf16.msra.mxu0 %v4815
        %7050 = vmatprep.subr.bf16.mxu0 %v4824
        %7051 = vmatpush1.bf16.msra.mxu0 %v4823
        %7052 = vmatprep.subr.bf16.mxu0 %v4832
        %7053 = vmatpush1.bf16.msra.mxu0 %v4831
        %7054 = vmatprep.subr.bf16.mxu0 %v4840
        %7055 = vmatpush1.bf16.msra.mxu0 %v4839
        %7056 = vmatprep.subr.bf16.mxu0 %v4848
        %7057 = vmatpush1.bf16.msra.mxu0 %v4847
        %7058 = vmatprep.subr.bf16.mxu0 %v4856
        %7059 = vmatpush1.bf16.msra.mxu0 %v4855
        %7060 = vmatprep.subr.bf16.mxu0 %v4864
        %7061 = vmatpush1.bf16.msra.mxu0 %v4863
        %7062 = vmatprep.mubr.bf16.mxu0 %v496
        %7063 = vmatmul.mubr.bf16.gmra.mrb[0].mxu0 %v495
        %v7064 = vpop.f32.mrb[0].mxu0
        %v7065 = vadd.f32 %v7024, %v7064
        %v7066 = vpop.f32.mrb[0].mxu0
        %v7067 = vadd.f32 %v7026, %v7066
        %v7068 = vpop.f32.mrb[0].mxu0
        %v7069 = vpop.f32.mrb[0].mxu0
        %7070 = vdwg.mxu0
        %7071 = vmatprep.subr.bf16.mxu0 %v4872
        %7072 = vmatpush1.bf16.msra.mxu0 %v4871
        %7073 = vmatprep.subr.bf16.mxu0 %v4880
        %7074 = vmatpush1.bf16.msra.mxu0 %v4879
        %7075 = vmatprep.subr.bf16.mxu0 %v4888
        %7076 = vmatpush1.bf16.msra.mxu0 %v4887
        %7077 = vmatprep.subr.bf16.mxu0 %v4896
        %7078 = vmatpush1.bf16.msra.mxu0 %v4895
        %7079 = vmatprep.subr.bf16.mxu0 %v4904
        %7080 = vmatpush1.bf16.msra.mxu0 %v4903
        %7081 = vmatprep.subr.bf16.mxu0 %v4912
        %7082 = vmatpush1.bf16.msra.mxu0 %v4911
        %7083 = vmatprep.subr.bf16.mxu0 %v4920
        %7084 = vmatpush1.bf16.msra.mxu0 %v4919
        %7085 = vmatprep.subr.bf16.mxu0 %v4928
        %7086 = vmatpush1.bf16.msra.mxu0 %v4927
        %7087 = vmatprep.subr.bf16.mxu0 %v4936
        %7088 = vmatpush1.bf16.msra.mxu0 %v4935
        %7089 = vmatprep.subr.bf16.mxu0 %v4944
        %7090 = vmatpush1.bf16.msra.mxu0 %v4943
        %7091 = vmatprep.subr.bf16.mxu0 %v4952
        %7092 = vmatpush1.bf16.msra.mxu0 %v4951
        %7093 = vmatprep.subr.bf16.mxu0 %v4960
        %7094 = vmatpush1.bf16.msra.mxu0 %v4959
        %7095 = vmatprep.subr.bf16.mxu0 %v4968
        %7096 = vmatpush1.bf16.msra.mxu0 %v4967
        %7097 = vmatprep.subr.bf16.mxu0 %v4976
        %7098 = vmatpush1.bf16.msra.mxu0 %v4975
        %7099 = vmatprep.subr.bf16.mxu0 %v4984
        %7100 = vmatpush1.bf16.msra.mxu0 %v4983
        %7101 = vmatprep.subr.bf16.mxu0 %v4992
        %7102 = vmatpush1.bf16.msra.mxu0 %v4991
        %7103 = vmatprep.mubr.bf16.mxu0 %v498
        %7104 = vmatmul.mubr.bf16.gmra.mrb[0].mxu0 %v497
        %v7105 = vpop.f32.mrb[0].mxu0
        %v7106 = vadd.f32 %v7065, %v7105
        %v7107 = vpop.f32.mrb[0].mxu0
        %v7108 = vadd.f32 %v7067, %v7107
        %v7109 = vpop.f32.mrb[0].mxu0
        %v7110 = vpop.f32.mrb[0].mxu0
        %7111 = vdwg.mxu0
        %7112 = vmatprep.subr.bf16.mxu0 %v5000
        %7113 = vmatpush1.bf16.msra.mxu0 %v4999
        %7114 = vmatprep.subr.bf16.mxu0 %v5008
        %7115 = vmatpush1.bf16.msra.mxu0 %v5007
        %7116 = vmatprep.subr.bf16.mxu0 %v5016
        %7117 = vmatpush1.bf16.msra.mxu0 %v5015
        %7118 = vmatprep.subr.bf16.mxu0 %v5024
        %7119 = vmatpush1.bf16.msra.mxu0 %v5023
        %7120 = vmatprep.subr.bf16.mxu0 %v5032
        %7121 = vmatpush1.bf16.msra.mxu0 %v5031
        %7122 = vmatprep.subr.bf16.mxu0 %v5040
        %7123 = vmatpush1.bf16.msra.mxu0 %v5039
        %7124 = vmatprep.subr.bf16.mxu0 %v5048
        %7125 = vmatpush1.bf16.msra.mxu0 %v5047
        %7126 = vmatprep.subr.bf16.mxu0 %v5056
        %7127 = vmatpush1.bf16.msra.mxu0 %v5055
        %7128 = vmatprep.subr.bf16.mxu0 %v5064
        %7129 = vmatpush1.bf16.msra.mxu0 %v5063
        %7130 = vmatprep.subr.bf16.mxu0 %v5072
        %7131 = vmatpush1.bf16.msra.mxu0 %v5071
        %7132 = vmatprep.subr.bf16.mxu0 %v5080
        %7133 = vmatpush1.bf16.msra.mxu0 %v5079
        %7134 = vmatprep.subr.bf16.mxu0 %v5088
        %7135 = vmatpush1.bf16.msra.mxu0 %v5087
        %7136 = vmatprep.subr.bf16.mxu0 %v5096
        %7137 = vmatpush1.bf16.msra.mxu0 %v5095
        %7138 = vmatprep.subr.bf16.mxu0 %v5104
        %7139 = vmatpush1.bf16.msra.mxu0 %v5103
        %7140 = vmatprep.subr.bf16.mxu0 %v5112
        %7141 = vmatpush1.bf16.msra.mxu0 %v5111
        %7142 = vmatprep.subr.bf16.mxu0 %v5120
        %7143 = vmatpush1.bf16.msra.mxu0 %v5119
        %7144 = vmatprep.mubr.bf16.mxu0 %v500
        %7145 = vmatmul.mubr.bf16.gmra.mrb[0].mxu0 %v499
        %v7146 = vpop.f32.mrb[0].mxu0
        %v7147 = vadd.f32 %v7106, %v7146
        %v7148 = vpop.f32.mrb[0].mxu0
        %v7149 = vadd.f32 %v7108, %v7148
        %v7150 = vpop.f32.mrb[0].mxu0
        %v7151 = vpop.f32.mrb[0].mxu0
        %7152 = vdwg.mxu0
        %7153 = vmatprep.subr.bf16.mxu0 %v5128
        %7154 = vmatpush1.bf16.msra.mxu0 %v5127
        %7155 = vmatprep.subr.bf16.mxu0 %v5136
        %7156 = vmatpush1.bf16.msra.mxu0 %v5135
        %7157 = vmatprep.subr.bf16.mxu0 %v5144
        %7158 = vmatpush1.bf16.msra.mxu0 %v5143
        %7159 = vmatprep.subr.bf16.mxu0 %v5152
        %7160 = vmatpush1.bf16.msra.mxu0 %v5151
        %7161 = vmatprep.subr.bf16.mxu0 %v5160
        %7162 = vmatpush1.bf16.msra.mxu0 %v5159
        %7163 = vmatprep.subr.bf16.mxu0 %v5168
        %7164 = vmatpush1.bf16.msra.mxu0 %v5167
        %7165 = vmatprep.subr.bf16.mxu0 %v5176
        %7166 = vmatpush1.bf16.msra.mxu0 %v5175
        %7167 = vmatprep.subr.bf16.mxu0 %v5184
        %7168 = vmatpush1.bf16.msra.mxu0 %v5183
        %7169 = vmatprep.subr.bf16.mxu0 %v5192
        %7170 = vmatpush1.bf16.msra.mxu0 %v5191
        %7171 = vmatprep.subr.bf16.mxu0 %v5200
        %7172 = vmatpush1.bf16.msra.mxu0 %v5199
        %7173 = vmatprep.subr.bf16.mxu0 %v5208
        %7174 = vmatpush1.bf16.msra.mxu0 %v5207
        %7175 = vmatprep.subr.bf16.mxu0 %v5216
        %7176 = vmatpush1.bf16.msra.mxu0 %v5215
        %7177 = vmatprep.subr.bf16.mxu0 %v5224
        %7178 = vmatpush1.bf16.msra.mxu0 %v5223
        %7179 = vmatprep.subr.bf16.mxu0 %v5232
        %7180 = vmatpush1.bf16.msra.mxu0 %v5231
        %7181 = vmatprep.subr.bf16.mxu0 %v5240
        %7182 = vmatpush1.bf16.msra.mxu0 %v5239
        %7183 = vmatprep.subr.bf16.mxu0 %v5248
        %7184 = vmatpush1.bf16.msra.mxu0 %v5247
        %7185 = vmatprep.mubr.bf16.mxu0 %v502
        %7186 = vmatmul.mubr.bf16.gmra.mrb[0].mxu0 %v501
        %v7187 = vpop.f32.mrb[0].mxu0
        %v7188 = vadd.f32 %v7147, %v7187
        %v7189 = vpop.f32.mrb[0].mxu0
        %v7190 = vadd.f32 %v7149, %v7189
        %v7191 = vpop.f32.mrb[0].mxu0
        %v7192 = vpop.f32.mrb[0].mxu0
        %7193 = vdwg.mxu0
        %7194 = vmatprep.subr.bf16.mxu0 %v5256
        %7195 = vmatpush1.bf16.msra.mxu0 %v5255
        %7196 = vmatprep.subr.bf16.mxu0 %v5264
        %7197 = vmatpush1.bf16.msra.mxu0 %v5263
        %7198 = vmatprep.subr.bf16.mxu0 %v5272
        %7199 = vmatpush1.bf16.msra.mxu0 %v5271
        %7200 = vmatprep.subr.bf16.mxu0 %v5280
        %7201 = vmatpush1.bf16.msra.mxu0 %v5279
        %7202 = vmatprep.subr.bf16.mxu0 %v5288
        %7203 = vmatpush1.bf16.msra.mxu0 %v5287
        %7204 = vmatprep.subr.bf16.mxu0 %v5296
        %7205 = vmatpush1.bf16.msra.mxu0 %v5295
        %7206 = vmatprep.subr.bf16.mxu0 %v5304
        %7207 = vmatpush1.bf16.msra.mxu0 %v5303
        %7208 = vmatprep.subr.bf16.mxu0 %v5312
        %7209 = vmatpush1.bf16.msra.mxu0 %v5311
        %7210 = vmatprep.subr.bf16.mxu0 %v5320
        %7211 = vmatpush1.bf16.msra.mxu0 %v5319
        %7212 = vmatprep.subr.bf16.mxu0 %v5328
        %7213 = vmatpush1.bf16.msra.mxu0 %v5327
        %7214 = vmatprep.subr.bf16.mxu0 %v5336
        %7215 = vmatpush1.bf16.msra.mxu0 %v5335
        %7216 = vmatprep.subr.bf16.mxu0 %v5344
        %7217 = vmatpush1.bf16.msra.mxu0 %v5343
        %7218 = vmatprep.subr.bf16.mxu0 %v5352
        %7219 = vmatpush1.bf16.msra.mxu0 %v5351
        %7220 = vmatprep.subr.bf16.mxu0 %v5360
        %7221 = vmatpush1.bf16.msra.mxu0 %v5359
        %7222 = vmatprep.subr.bf16.mxu0 %v5368
        %7223 = vmatpush1.bf16.msra.mxu0 %v5367
        %7224 = vmatprep.subr.bf16.mxu0 %v5376
        %7225 = vmatpush1.bf16.msra.mxu0 %v5375
        %7226 = vmatprep.mubr.bf16.mxu0 %v504
        %7227 = vmatmul.mubr.bf16.gmra.mrb[0].mxu0 %v503
        %v7228 = vpop.f32.mrb[0].mxu0
        %v7229 = vadd.f32 %v7188, %v7228
        %v7230 = vpop.f32.mrb[0].mxu0
        %v7231 = vadd.f32 %v7190, %v7230
        %v7232 = vpop.f32.mrb[0].mxu0
        %v7233 = vpop.f32.mrb[0].mxu0
        %7234 = vdwg.mxu0
        %7235 = vmatprep.subr.bf16.mxu0 %v5384
        %7236 = vmatpush1.bf16.msra.mxu0 %v5383
        %7237 = vmatprep.subr.bf16.mxu0 %v5392
        %7238 = vmatpush1.bf16.msra.mxu0 %v5391
        %7239 = vmatprep.subr.bf16.mxu0 %v5400
        %7240 = vmatpush1.bf16.msra.mxu0 %v5399
        %7241 = vmatprep.subr.bf16.mxu0 %v5408
        %7242 = vmatpush1.bf16.msra.mxu0 %v5407
        %7243 = vmatprep.subr.bf16.mxu0 %v5416
        %7244 = vmatpush1.bf16.msra.mxu0 %v5415
        %7245 = vmatprep.subr.bf16.mxu0 %v5424
        %7246 = vmatpush1.bf16.msra.mxu0 %v5423
        %7247 = vmatprep.subr.bf16.mxu0 %v5432
        %7248 = vmatpush1.bf16.msra.mxu0 %v5431
        %7249 = vmatprep.subr.bf16.mxu0 %v5440
        %7250 = vmatpush1.bf16.msra.mxu0 %v5439
        %7251 = vmatprep.subr.bf16.mxu0 %v5448
        %7252 = vmatpush1.bf16.msra.mxu0 %v5447
        %7253 = vmatprep.subr.bf16.mxu0 %v5456
        %7254 = vmatpush1.bf16.msra.mxu0 %v5455
        %7255 = vmatprep.subr.bf16.mxu0 %v5464
        %7256 = vmatpush1.bf16.msra.mxu0 %v5463
        %7257 = vmatprep.subr.bf16.mxu0 %v5472
        %7258 = vmatpush1.bf16.msra.mxu0 %v5471
        %7259 = vmatprep.subr.bf16.mxu0 %v5480
        %7260 = vmatpush1.bf16.msra.mxu0 %v5479
        %7261 = vmatprep.subr.bf16.mxu0 %v5488
        %7262 = vmatpush1.bf16.msra.mxu0 %v5487
        %7263 = vmatprep.subr.bf16.mxu0 %v5496
        %7264 = vmatpush1.bf16.msra.mxu0 %v5495
        %7265 = vmatprep.subr.bf16.mxu0 %v5504
        %7266 = vmatpush1.bf16.msra.mxu0 %v5503
        %7267 = vmatprep.mubr.bf16.mxu0 %v506
        %7268 = vmatmul.mubr.bf16.gmra.mrb[0].mxu0 %v505
        %v7269 = vpop.f32.mrb[0].mxu0
        %v7270 = vadd.f32 %v7229, %v7269
        %v7271 = vpop.f32.mrb[0].mxu0
        %v7272 = vadd.f32 %v7231, %v7271
        %v7273 = vpop.f32.mrb[0].mxu0
        %v7274 = vpop.f32.mrb[0].mxu0
        %7275 = vdwg.mxu0
        %7276 = vmatprep.subr.bf16.mxu0 %v5512
        %7277 = vmatpush1.bf16.msra.mxu0 %v5511
        %7278 = vmatprep.subr.bf16.mxu0 %v5520
        %7279 = vmatpush1.bf16.msra.mxu0 %v5519
        %7280 = vmatprep.subr.bf16.mxu0 %v5528
        %7281 = vmatpush1.bf16.msra.mxu0 %v5527
        %7282 = vmatprep.subr.bf16.mxu0 %v5536
        %7283 = vmatpush1.bf16.msra.mxu0 %v5535
        %7284 = vmatprep.subr.bf16.mxu0 %v5544
        %7285 = vmatpush1.bf16.msra.mxu0 %v5543
        %7286 = vmatprep.subr.bf16.mxu0 %v5552
        %7287 = vmatpush1.bf16.msra.mxu0 %v5551
        %7288 = vmatprep.subr.bf16.mxu0 %v5560
        %7289 = vmatpush1.bf16.msra.mxu0 %v5559
        %7290 = vmatprep.subr.bf16.mxu0 %v5568
        %7291 = vmatpush1.bf16.msra.mxu0 %v5567
        %7292 = vmatprep.subr.bf16.mxu0 %v5576
        %7293 = vmatpush1.bf16.msra.mxu0 %v5575
        %7294 = vmatprep.subr.bf16.mxu0 %v5584
        %7295 = vmatpush1.bf16.msra.mxu0 %v5583
        %7296 = vmatprep.subr.bf16.mxu0 %v5592
        %7297 = vmatpush1.bf16.msra.mxu0 %v5591
        %7298 = vmatprep.subr.bf16.mxu0 %v5600
        %7299 = vmatpush1.bf16.msra.mxu0 %v5599
        %7300 = vmatprep.subr.bf16.mxu0 %v5608
        %7301 = vmatpush1.bf16.msra.mxu0 %v5607
        %7302 = vmatprep.subr.bf16.mxu0 %v5616
        %7303 = vmatpush1.bf16.msra.mxu0 %v5615
        %7304 = vmatprep.subr.bf16.mxu0 %v5624
        %7305 = vmatpush1.bf16.msra.mxu0 %v5623
        %7306 = vmatprep.subr.bf16.mxu0 %v5632
        %7307 = vmatpush1.bf16.msra.mxu0 %v5631
        %7308 = vmatprep.mubr.bf16.mxu0 %v508
        %7309 = vmatmul.mubr.bf16.gmra.mrb[0].mxu0 %v507
        %v7310 = vpop.f32.mrb[0].mxu0
        %v7311 = vadd.f32 %v7270, %v7310
        %v7312 = vpop.f32.mrb[0].mxu0
        %v7313 = vadd.f32 %v7272, %v7312
        %v7314 = vpop.f32.mrb[0].mxu0
        %v7315 = vpop.f32.mrb[0].mxu0
        %7316 = vdwg.mxu0
        %7317 = vmatprep.subr.bf16.mxu0 %v4618
        %7318 = vmatpush1.bf16.msra.mxu0 %v4617
        %7319 = vmatprep.subr.bf16.mxu0 %v4626
        %7320 = vmatpush1.bf16.msra.mxu0 %v4625
        %7321 = vmatprep.subr.bf16.mxu0 %v4634
        %7322 = vmatpush1.bf16.msra.mxu0 %v4633
        %7323 = vmatprep.subr.bf16.mxu0 %v4642
        %7324 = vmatpush1.bf16.msra.mxu0 %v4641
        %7325 = vmatprep.subr.bf16.mxu0 %v4650
        %7326 = vmatpush1.bf16.msra.mxu0 %v4649
        %7327 = vmatprep.subr.bf16.mxu0 %v4658
        %7328 = vmatpush1.bf16.msra.mxu0 %v4657
        %7329 = vmatprep.subr.bf16.mxu0 %v4666
        %7330 = vmatpush1.bf16.msra.mxu0 %v4665
        %7331 = vmatprep.subr.bf16.mxu0 %v4674
        %7332 = vmatpush1.bf16.msra.mxu0 %v4673
        %7333 = vmatprep.subr.bf16.mxu0 %v4682
        %7334 = vmatpush1.bf16.msra.mxu0 %v4681
        %7335 = vmatprep.subr.bf16.mxu0 %v4690
        %7336 = vmatpush1.bf16.msra.mxu0 %v4689
        %7337 = vmatprep.subr.bf16.mxu0 %v4698
        %7338 = vmatpush1.bf16.msra.mxu0 %v4697
        %7339 = vmatprep.subr.bf16.mxu0 %v4706
        %7340 = vmatpush1.bf16.msra.mxu0 %v4705
        %7341 = vmatprep.subr.bf16.mxu0 %v4714
        %7342 = vmatpush1.bf16.msra.mxu0 %v4713
        %7343 = vmatprep.subr.bf16.mxu0 %v4722
        %7344 = vmatpush1.bf16.msra.mxu0 %v4721
        %7345 = vmatprep.subr.bf16.mxu0 %v4730
        %7346 = vmatpush1.bf16.msra.mxu0 %v4729
        %7347 = vmatprep.subr.bf16.mxu0 %v4738
        %7348 = vmatpush1.bf16.msra.mxu0 %v4737
        %7349 = vmatprep.mubr.bf16.mxu0 %v494
        %7350 = vmatmul.mubr.bf16.gmra.mrb[0].mxu0 %v493
        %v7351 = vpop.f32.mrb[0].mxu0
        %v7352 = vadd.f32 0.0, %v7351
        %v7353 = vpop.f32.mrb[0].mxu0
        %v7354 = vadd.f32 0.0, %v7353
        %v7355 = vpop.f32.mrb[0].mxu0
        %v7356 = vpop.f32.mrb[0].mxu0
        %7357 = vdwg.mxu0
        %7358 = vmatprep.subr.bf16.mxu0 %v4746
        %7359 = vmatpush1.bf16.msra.mxu0 %v4745
        %7360 = vmatprep.subr.bf16.mxu0 %v4754
        %7361 = vmatpush1.bf16.msra.mxu0 %v4753
        %7362 = vmatprep.subr.bf16.mxu0 %v4762
        %7363 = vmatpush1.bf16.msra.mxu0 %v4761
        %7364 = vmatprep.subr.bf16.mxu0 %v4770
        %7365 = vmatpush1.bf16.msra.mxu0 %v4769
        %7366 = vmatprep.subr.bf16.mxu0 %v4778
        %7367 = vmatpush1.bf16.msra.mxu0 %v4777
        %7368 = vmatprep.subr.bf16.mxu0 %v4786
        %7369 = vmatpush1.bf16.msra.mxu0 %v4785
        %7370 = vmatprep.subr.bf16.mxu0 %v4794
        %7371 = vmatpush1.bf16.msra.mxu0 %v4793
        %7372 = vmatprep.subr.bf16.mxu0 %v4802
        %7373 = vmatpush1.bf16.msra.mxu0 %v4801
        %7374 = vmatprep.subr.bf16.mxu0 %v4810
        %7375 = vmatpush1.bf16.msra.mxu0 %v4809
        %7376 = vmatprep.subr.bf16.mxu0 %v4818
        %7377 = vmatpush1.bf16.msra.mxu0 %v4817
        %7378 = vmatprep.subr.bf16.mxu0 %v4826
        %7379 = vmatpush1.bf16.msra.mxu0 %v4825
        %7380 = vmatprep.subr.bf16.mxu0 %v4834
        %7381 = vmatpush1.bf16.msra.mxu0 %v4833
        %7382 = vmatprep.subr.bf16.mxu0 %v4842
        %7383 = vmatpush1.bf16.msra.mxu0 %v4841
        %7384 = vmatprep.subr.bf16.mxu0 %v4850
        %7385 = vmatpush1.bf16.msra.mxu0 %v4849
        %7386 = vmatprep.subr.bf16.mxu0 %v4858
        %7387 = vmatpush1.bf16.msra.mxu0 %v4857
        %7388 = vmatprep.subr.bf16.mxu0 %v4866
        %7389 = vmatpush1.bf16.msra.mxu0 %v4865
        %7390 = vmatprep.mubr.bf16.mxu0 %v496
        %7391 = vmatmul.mubr.bf16.gmra.mrb[0].mxu0 %v495
        %v7392 = vpop.f32.mrb[0].mxu0
        %v7393 = vadd.f32 %v7352, %v7392
        %v7394 = vpop.f32.mrb[0].mxu0
        %v7395 = vadd.f32 %v7354, %v7394
        %v7396 = vpop.f32.mrb[0].mxu0
        %v7397 = vpop.f32.mrb[0].mxu0
        %7398 = vdwg.mxu0
        %7399 = vmatprep.subr.bf16.mxu0 %v4874
        %7400 = vmatpush1.bf16.msra.mxu0 %v4873
        %7401 = vmatprep.subr.bf16.mxu0 %v4882
        %7402 = vmatpush1.bf16.msra.mxu0 %v4881
        %7403 = vmatprep.subr.bf16.mxu0 %v4890
        %7404 = vmatpush1.bf16.msra.mxu0 %v4889
        %7405 = vmatprep.subr.bf16.mxu0 %v4898
        %7406 = vmatpush1.bf16.msra.mxu0 %v4897
        %7407 = vmatprep.subr.bf16.mxu0 %v4906
        %7408 = vmatpush1.bf16.msra.mxu0 %v4905
        %7409 = vmatprep.subr.bf16.mxu0 %v4914
        %7410 = vmatpush1.bf16.msra.mxu0 %v4913
        %7411 = vmatprep.subr.bf16.mxu0 %v4922
        %7412 = vmatpush1.bf16.msra.mxu0 %v4921
        %7413 = vmatprep.subr.bf16.mxu0 %v4930
        %7414 = vmatpush1.bf16.msra.mxu0 %v4929
        %7415 = vmatprep.subr.bf16.mxu0 %v4938
        %7416 = vmatpush1.bf16.msra.mxu0 %v4937
        %7417 = vmatprep.subr.bf16.mxu0 %v4946
        %7418 = vmatpush1.bf16.msra.mxu0 %v4945
        %7419 = vmatprep.subr.bf16.mxu0 %v4954
        %7420 = vmatpush1.bf16.msra.mxu0 %v4953
        %7421 = vmatprep.subr.bf16.mxu0 %v4962
        %7422 = vmatpush1.bf16.msra.mxu0 %v4961
        %7423 = vmatprep.subr.bf16.mxu0 %v4970
        %7424 = vmatpush1.bf16.msra.mxu0 %v4969
        %7425 = vmatprep.subr.bf16.mxu0 %v4978
        %7426 = vmatpush1.bf16.msra.mxu0 %v4977
        %7427 = vmatprep.subr.bf16.mxu0 %v4986
        %7428 = vmatpush1.bf16.msra.mxu0 %v4985
        %7429 = vmatprep.subr.bf16.mxu0 %v4994
        %7430 = vmatpush1.bf16.msra.mxu0 %v4993
        %7431 = vmatprep.mubr.bf16.mxu0 %v498
        %7432 = vmatmul.mubr.bf16.gmra.mrb[0].mxu0 %v497
        %v7433 = vpop.f32.mrb[0].mxu0
        %v7434 = vadd.f32 %v7393, %v7433
        %v7435 = vpop.f32.mrb[0].mxu0
        %v7436 = vadd.f32 %v7395, %v7435
        %v7437 = vpop.f32.mrb[0].mxu0
        %v7438 = vpop.f32.mrb[0].mxu0
        %7439 = vdwg.mxu0
        %7440 = vmatprep.subr.bf16.mxu0 %v5002
        %7441 = vmatpush1.bf16.msra.mxu0 %v5001
        %7442 = vmatprep.subr.bf16.mxu0 %v5010
        %7443 = vmatpush1.bf16.msra.mxu0 %v5009
        %7444 = vmatprep.subr.bf16.mxu0 %v5018
        %7445 = vmatpush1.bf16.msra.mxu0 %v5017
        %7446 = vmatprep.subr.bf16.mxu0 %v5026
        %7447 = vmatpush1.bf16.msra.mxu0 %v5025
        %7448 = vmatprep.subr.bf16.mxu0 %v5034
        %7449 = vmatpush1.bf16.msra.mxu0 %v5033
        %7450 = vmatprep.subr.bf16.mxu0 %v5042
        %7451 = vmatpush1.bf16.msra.mxu0 %v5041
        %7452 = vmatprep.subr.bf16.mxu0 %v5050
        %7453 = vmatpush1.bf16.msra.mxu0 %v5049
        %7454 = vmatprep.subr.bf16.mxu0 %v5058
        %7455 = vmatpush1.bf16.msra.mxu0 %v5057
        %7456 = vmatprep.subr.bf16.mxu0 %v5066
        %7457 = vmatpush1.bf16.msra.mxu0 %v5065
        %7458 = vmatprep.subr.bf16.mxu0 %v5074
        %7459 = vmatpush1.bf16.msra.mxu0 %v5073
        %7460 = vmatprep.subr.bf16.mxu0 %v5082
        %7461 = vmatpush1.bf16.msra.mxu0 %v5081
        %7462 = vmatprep.subr.bf16.mxu0 %v5090
        %7463 = vmatpush1.bf16.msra.mxu0 %v5089
        %7464 = vmatprep.subr.bf16.mxu0 %v5098
        %7465 = vmatpush1.bf16.msra.mxu0 %v5097
        %7466 = vmatprep.subr.bf16.mxu0 %v5106
        %7467 = vmatpush1.bf16.msra.mxu0 %v5105
        %7468 = vmatprep.subr.bf16.mxu0 %v5114
        %7469 = vmatpush1.bf16.msra.mxu0 %v5113
        %7470 = vmatprep.subr.bf16.mxu0 %v5122
        %7471 = vmatpush1.bf16.msra.mxu0 %v5121
        %7472 = vmatprep.mubr.bf16.mxu0 %v500
        %7473 = vmatmul.mubr.bf16.gmra.mrb[0].mxu0 %v499
        %v7474 = vpop.f32.mrb[0].mxu0
        %v7475 = vadd.f32 %v7434, %v7474
        %v7476 = vpop.f32.mrb[0].mxu0
        %v7477 = vadd.f32 %v7436, %v7476
        %v7478 = vpop.f32.mrb[0].mxu0
        %v7479 = vpop.f32.mrb[0].mxu0
        %7480 = vdwg.mxu0
        %7481 = vmatprep.subr.bf16.mxu0 %v5130
        %7482 = vmatpush1.bf16.msra.mxu0 %v5129
        %7483 = vmatprep.subr.bf16.mxu0 %v5138
        %7484 = vmatpush1.bf16.msra.mxu0 %v5137
        %7485 = vmatprep.subr.bf16.mxu0 %v5146
        %7486 = vmatpush1.bf16.msra.mxu0 %v5145
        %7487 = vmatprep.subr.bf16.mxu0 %v5154
        %7488 = vmatpush1.bf16.msra.mxu0 %v5153
        %7489 = vmatprep.subr.bf16.mxu0 %v5162
        %7490 = vmatpush1.bf16.msra.mxu0 %v5161
        %7491 = vmatprep.subr.bf16.mxu0 %v5170
        %7492 = vmatpush1.bf16.msra.mxu0 %v5169
        %7493 = vmatprep.subr.bf16.mxu0 %v5178
        %7494 = vmatpush1.bf16.msra.mxu0 %v5177
        %7495 = vmatprep.subr.bf16.mxu0 %v5186
        %7496 = vmatpush1.bf16.msra.mxu0 %v5185
        %7497 = vmatprep.subr.bf16.mxu0 %v5194
        %7498 = vmatpush1.bf16.msra.mxu0 %v5193
        %7499 = vmatprep.subr.bf16.mxu0 %v5202
        %7500 = vmatpush1.bf16.msra.mxu0 %v5201
        %7501 = vmatprep.subr.bf16.mxu0 %v5210
        %7502 = vmatpush1.bf16.msra.mxu0 %v5209
        %7503 = vmatprep.subr.bf16.mxu0 %v5218
        %7504 = vmatpush1.bf16.msra.mxu0 %v5217
        %7505 = vmatprep.subr.bf16.mxu0 %v5226
        %7506 = vmatpush1.bf16.msra.mxu0 %v5225
        %7507 = vmatprep.subr.bf16.mxu0 %v5234
        %7508 = vmatpush1.bf16.msra.mxu0 %v5233
        %7509 = vmatprep.subr.bf16.mxu0 %v5242
        %7510 = vmatpush1.bf16.msra.mxu0 %v5241
        %7511 = vmatprep.subr.bf16.mxu0 %v5250
        %7512 = vmatpush1.bf16.msra.mxu0 %v5249
        %7513 = vmatprep.mubr.bf16.mxu0 %v502
        %7514 = vmatmul.mubr.bf16.gmra.mrb[0].mxu0 %v501
        %v7515 = vpop.f32.mrb[0].mxu0
        %v7516 = vadd.f32 %v7475, %v7515
        %v7517 = vpop.f32.mrb[0].mxu0
        %v7518 = vadd.f32 %v7477, %v7517
        %v7519 = vpop.f32.mrb[0].mxu0
        %v7520 = vpop.f32.mrb[0].mxu0
        %7521 = vdwg.mxu0
        %7522 = vmatprep.subr.bf16.mxu0 %v5258
        %7523 = vmatpush1.bf16.msra.mxu0 %v5257
        %7524 = vmatprep.subr.bf16.mxu0 %v5266
        %7525 = vmatpush1.bf16.msra.mxu0 %v5265
        %7526 = vmatprep.subr.bf16.mxu0 %v5274
        %7527 = vmatpush1.bf16.msra.mxu0 %v5273
        %7528 = vmatprep.subr.bf16.mxu0 %v5282
        %7529 = vmatpush1.bf16.msra.mxu0 %v5281
        %7530 = vmatprep.subr.bf16.mxu0 %v5290
        %7531 = vmatpush1.bf16.msra.mxu0 %v5289
        %7532 = vmatprep.subr.bf16.mxu0 %v5298
        %7533 = vmatpush1.bf16.msra.mxu0 %v5297
        %7534 = vmatprep.subr.bf16.mxu0 %v5306
        %7535 = vmatpush1.bf16.msra.mxu0 %v5305
        %7536 = vmatprep.subr.bf16.mxu0 %v5314
        %7537 = vmatpush1.bf16.msra.mxu0 %v5313
        %7538 = vmatprep.subr.bf16.mxu0 %v5322
        %7539 = vmatpush1.bf16.msra.mxu0 %v5321
        %7540 = vmatprep.subr.bf16.mxu0 %v5330
        %7541 = vmatpush1.bf16.msra.mxu0 %v5329
        %7542 = vmatprep.subr.bf16.mxu0 %v5338
        %7543 = vmatpush1.bf16.msra.mxu0 %v5337
        %7544 = vmatprep.subr.bf16.mxu0 %v5346
        %7545 = vmatpush1.bf16.msra.mxu0 %v5345
        %7546 = vmatprep.subr.bf16.mxu0 %v5354
        %7547 = vmatpush1.bf16.msra.mxu0 %v5353
        %7548 = vmatprep.subr.bf16.mxu0 %v5362
        %7549 = vmatpush1.bf16.msra.mxu0 %v5361
        %7550 = vmatprep.subr.bf16.mxu0 %v5370
        %7551 = vmatpush1.bf16.msra.mxu0 %v5369
        %7552 = vmatprep.subr.bf16.mxu0 %v5378
        %7553 = vmatpush1.bf16.msra.mxu0 %v5377
        %7554 = vmatprep.mubr.bf16.mxu0 %v504
        %7555 = vmatmul.mubr.bf16.gmra.mrb[0].mxu0 %v503
        %v7556 = vpop.f32.mrb[0].mxu0
        %v7557 = vadd.f32 %v7516, %v7556
        %v7558 = vpop.f32.mrb[0].mxu0
        %v7559 = vadd.f32 %v7518, %v7558
        %v7560 = vpop.f32.mrb[0].mxu0
        %v7561 = vpop.f32.mrb[0].mxu0
        %7562 = vdwg.mxu0
        %7563 = vmatprep.subr.bf16.mxu0 %v5386
        %7564 = vmatpush1.bf16.msra.mxu0 %v5385
        %7565 = vmatprep.subr.bf16.mxu0 %v5394
        %7566 = vmatpush1.bf16.msra.mxu0 %v5393
        %7567 = vmatprep.subr.bf16.mxu0 %v5402
        %7568 = vmatpush1.bf16.msra.mxu0 %v5401
        %7569 = vmatprep.subr.bf16.mxu0 %v5410
        %7570 = vmatpush1.bf16.msra.mxu0 %v5409
        %7571 = vmatprep.subr.bf16.mxu0 %v5418
        %7572 = vmatpush1.bf16.msra.mxu0 %v5417
        %7573 = vmatprep.subr.bf16.mxu0 %v5426
        %7574 = vmatpush1.bf16.msra.mxu0 %v5425
        %7575 = vmatprep.subr.bf16.mxu0 %v5434
        %7576 = vmatpush1.bf16.msra.mxu0 %v5433
        %7577 = vmatprep.subr.bf16.mxu0 %v5442
        %7578 = vmatpush1.bf16.msra.mxu0 %v5441
        %7579 = vmatprep.subr.bf16.mxu0 %v5450
        %7580 = vmatpush1.bf16.msra.mxu0 %v5449
        %7581 = vmatprep.subr.bf16.mxu0 %v5458
        %7582 = vmatpush1.bf16.msra.mxu0 %v5457
        %7583 = vmatprep.subr.bf16.mxu0 %v5466
        %7584 = vmatpush1.bf16.msra.mxu0 %v5465
        %7585 = vmatprep.subr.bf16.mxu0 %v5474
        %7586 = vmatpush1.bf16.msra.mxu0 %v5473
        %7587 = vmatprep.subr.bf16.mxu0 %v5482
        %7588 = vmatpush1.bf16.msra.mxu0 %v5481
        %7589 = vmatprep.subr.bf16.mxu0 %v5490
        %7590 = vmatpush1.bf16.msra.mxu0 %v5489
        %7591 = vmatprep.subr.bf16.mxu0 %v5498
        %7592 = vmatpush1.bf16.msra.mxu0 %v5497
        %7593 = vmatprep.subr.bf16.mxu0 %v5506
        %7594 = vmatpush1.bf16.msra.mxu0 %v5505
        %7595 = vmatprep.mubr.bf16.mxu0 %v506
        %7596 = vmatmul.mubr.bf16.gmra.mrb[0].mxu0 %v505
        %v7597 = vpop.f32.mrb[0].mxu0
        %v7598 = vadd.f32 %v7557, %v7597
        %v7599 = vpop.f32.mrb[0].mxu0
        %v7600 = vadd.f32 %v7559, %v7599
        %v7601 = vpop.f32.mrb[0].mxu0
        %v7602 = vpop.f32.mrb[0].mxu0
        %7603 = vdwg.mxu0
        %7604 = vmatprep.subr.bf16.mxu0 %v5514
        %7605 = vmatpush1.bf16.msra.mxu0 %v5513
        %7606 = vmatprep.subr.bf16.mxu0 %v5522
        %7607 = vmatpush1.bf16.msra.mxu0 %v5521
        %7608 = vmatprep.subr.bf16.mxu0 %v5530
        %7609 = vmatpush1.bf16.msra.mxu0 %v5529
        %7610 = vmatprep.subr.bf16.mxu0 %v5538
        %7611 = vmatpush1.bf16.msra.mxu0 %v5537
        %7612 = vmatprep.subr.bf16.mxu0 %v5546
        %7613 = vmatpush1.bf16.msra.mxu0 %v5545
        %7614 = vmatprep.subr.bf16.mxu0 %v5554
        %7615 = vmatpush1.bf16.msra.mxu0 %v5553
        %7616 = vmatprep.subr.bf16.mxu0 %v5562
        %7617 = vmatpush1.bf16.msra.mxu0 %v5561
        %7618 = vmatprep.subr.bf16.mxu0 %v5570
        %7619 = vmatpush1.bf16.msra.mxu0 %v5569
        %7620 = vmatprep.subr.bf16.mxu0 %v5578
        %7621 = vmatpush1.bf16.msra.mxu0 %v5577
        %7622 = vmatprep.subr.bf16.mxu0 %v5586
        %7623 = vmatpush1.bf16.msra.mxu0 %v5585
        %7624 = vmatprep.subr.bf16.mxu0 %v5594
        %7625 = vmatpush1.bf16.msra.mxu0 %v5593
        %7626 = vmatprep.subr.bf16.mxu0 %v5602
        %7627 = vmatpush1.bf16.msra.mxu0 %v5601
        %7628 = vmatprep.subr.bf16.mxu0 %v5610
        %7629 = vmatpush1.bf16.msra.mxu0 %v5609
        %7630 = vmatprep.subr.bf16.mxu0 %v5618
        %7631 = vmatpush1.bf16.msra.mxu0 %v5617
        %7632 = vmatprep.subr.bf16.mxu0 %v5626
        %7633 = vmatpush1.bf16.msra.mxu0 %v5625
        %7634 = vmatprep.subr.bf16.mxu0 %v5634
        %7635 = vmatpush1.bf16.msra.mxu0 %v5633
        %7636 = vmatprep.mubr.bf16.mxu0 %v508
        %7637 = vmatmul.mubr.bf16.gmra.mrb[0].mxu0 %v507
        %v7638 = vpop.f32.mrb[0].mxu0
        %v7639 = vadd.f32 %v7598, %v7638
        %v7640 = vpop.f32.mrb[0].mxu0
        %v7641 = vadd.f32 %v7600, %v7640
        %v7642 = vpop.f32.mrb[0].mxu0
        %v7643 = vpop.f32.mrb[0].mxu0
        %7644 = vdwg.mxu0
        %7645 = vmatprep.subr.bf16.mxu0 %v4620
        %7646 = vmatpush1.bf16.msra.mxu0 %v4619
        %7647 = vmatprep.subr.bf16.mxu0 %v4628
        %7648 = vmatpush1.bf16.msra.mxu0 %v4627
        %7649 = vmatprep.subr.bf16.mxu0 %v4636
        %7650 = vmatpush1.bf16.msra.mxu0 %v4635
        %7651 = vmatprep.subr.bf16.mxu0 %v4644
        %7652 = vmatpush1.bf16.msra.mxu0 %v4643
        %7653 = vmatprep.subr.bf16.mxu0 %v4652
        %7654 = vmatpush1.bf16.msra.mxu0 %v4651
        %7655 = vmatprep.subr.bf16.mxu0 %v4660
        %7656 = vmatpush1.bf16.msra.mxu0 %v4659
        %7657 = vmatprep.subr.bf16.mxu0 %v4668
        %7658 = vmatpush1.bf16.msra.mxu0 %v4667
        %7659 = vmatprep.subr.bf16.mxu0 %v4676
        %7660 = vmatpush1.bf16.msra.mxu0 %v4675
        %7661 = vmatprep.subr.bf16.mxu0 %v4684
        %7662 = vmatpush1.bf16.msra.mxu0 %v4683
        %7663 = vmatprep.subr.bf16.mxu0 %v4692
        %7664 = vmatpush1.bf16.msra.mxu0 %v4691
        %7665 = vmatprep.subr.bf16.mxu0 %v4700
        %7666 = vmatpush1.bf16.msra.mxu0 %v4699
        %7667 = vmatprep.subr.bf16.mxu0 %v4708
        %7668 = vmatpush1.bf16.msra.mxu0 %v4707
        %7669 = vmatprep.subr.bf16.mxu0 %v4716
        %7670 = vmatpush1.bf16.msra.mxu0 %v4715
        %7671 = vmatprep.subr.bf16.mxu0 %v4724
        %7672 = vmatpush1.bf16.msra.mxu0 %v4723
        %7673 = vmatprep.subr.bf16.mxu0 %v4732
        %7674 = vmatpush1.bf16.msra.mxu0 %v4731
        %7675 = vmatprep.subr.bf16.mxu0 %v4740
        %7676 = vmatpush1.bf16.msra.mxu0 %v4739
        %7677 = vmatprep.mubr.bf16.mxu0 %v494
        %7678 = vmatmul.mubr.bf16.gmra.mrb[0].mxu0 %v493
        %v7679 = vpop.f32.mrb[0].mxu0
        %v7680 = vadd.f32 0.0, %v7679
        %v7681 = vpop.f32.mrb[0].mxu0
        %v7682 = vadd.f32 0.0, %v7681
        %v7683 = vpop.f32.mrb[0].mxu0
        %v7684 = vpop.f32.mrb[0].mxu0
        %7685 = vdwg.mxu0
        %7686 = vmatprep.subr.bf16.mxu0 %v4748
        %7687 = vmatpush1.bf16.msra.mxu0 %v4747
        %7688 = vmatprep.subr.bf16.mxu0 %v4756
        %7689 = vmatpush1.bf16.msra.mxu0 %v4755
        %7690 = vmatprep.subr.bf16.mxu0 %v4764
        %7691 = vmatpush1.bf16.msra.mxu0 %v4763
        %7692 = vmatprep.subr.bf16.mxu0 %v4772
        %7693 = vmatpush1.bf16.msra.mxu0 %v4771
        %7694 = vmatprep.subr.bf16.mxu0 %v4780
        %7695 = vmatpush1.bf16.msra.mxu0 %v4779
        %7696 = vmatprep.subr.bf16.mxu0 %v4788
        %7697 = vmatpush1.bf16.msra.mxu0 %v4787
        %7698 = vmatprep.subr.bf16.mxu0 %v4796
        %7699 = vmatpush1.bf16.msra.mxu0 %v4795
        %7700 = vmatprep.subr.bf16.mxu0 %v4804
        %7701 = vmatpush1.bf16.msra.mxu0 %v4803
        %7702 = vmatprep.subr.bf16.mxu0 %v4812
        %7703 = vmatpush1.bf16.msra.mxu0 %v4811
        %7704 = vmatprep.subr.bf16.mxu0 %v4820
        %7705 = vmatpush1.bf16.msra.mxu0 %v4819
        %7706 = vmatprep.subr.bf16.mxu0 %v4828
        %7707 = vmatpush1.bf16.msra.mxu0 %v4827
        %7708 = vmatprep.subr.bf16.mxu0 %v4836
        %7709 = vmatpush1.bf16.msra.mxu0 %v4835
        %7710 = vmatprep.subr.bf16.mxu0 %v4844
        %7711 = vmatpush1.bf16.msra.mxu0 %v4843
        %7712 = vmatprep.subr.bf16.mxu0 %v4852
        %7713 = vmatpush1.bf16.msra.mxu0 %v4851
        %7714 = vmatprep.subr.bf16.mxu0 %v4860
        %7715 = vmatpush1.bf16.msra.mxu0 %v4859
        %7716 = vmatprep.subr.bf16.mxu0 %v4868
        %7717 = vmatpush1.bf16.msra.mxu0 %v4867
        %7718 = vmatprep.mubr.bf16.mxu0 %v496
        %7719 = vmatmul.mubr.bf16.gmra.mrb[0].mxu0 %v495
        %v7720 = vpop.f32.mrb[0].mxu0
        %v7721 = vadd.f32 %v7680, %v7720
        %v7722 = vpop.f32.mrb[0].mxu0
        %v7723 = vadd.f32 %v7682, %v7722
        %v7724 = vpop.f32.mrb[0].mxu0
        %v7725 = vpop.f32.mrb[0].mxu0
        %7726 = vdwg.mxu0
        %7727 = vmatprep.subr.bf16.mxu0 %v4876
        %7728 = vmatpush1.bf16.msra.mxu0 %v4875
        %7729 = vmatprep.subr.bf16.mxu0 %v4884
        %7730 = vmatpush1.bf16.msra.mxu0 %v4883
        %7731 = vmatprep.subr.bf16.mxu0 %v4892
        %7732 = vmatpush1.bf16.msra.mxu0 %v4891
        %7733 = vmatprep.subr.bf16.mxu0 %v4900
        %7734 = vmatpush1.bf16.msra.mxu0 %v4899
        %7735 = vmatprep.subr.bf16.mxu0 %v4908
        %7736 = vmatpush1.bf16.msra.mxu0 %v4907
        %7737 = vmatprep.subr.bf16.mxu0 %v4916
        %7738 = vmatpush1.bf16.msra.mxu0 %v4915
        %7739 = vmatprep.subr.bf16.mxu0 %v4924
        %7740 = vmatpush1.bf16.msra.mxu0 %v4923
        %7741 = vmatprep.subr.bf16.mxu0 %v4932
        %7742 = vmatpush1.bf16.msra.mxu0 %v4931
        %7743 = vmatprep.subr.bf16.mxu0 %v4940
        %7744 = vmatpush1.bf16.msra.mxu0 %v4939
        %7745 = vmatprep.subr.bf16.mxu0 %v4948
        %7746 = vmatpush1.bf16.msra.mxu0 %v4947
        %7747 = vmatprep.subr.bf16.mxu0 %v4956
        %7748 = vmatpush1.bf16.msra.mxu0 %v4955
        %7749 = vmatprep.subr.bf16.mxu0 %v4964
        %7750 = vmatpush1.bf16.msra.mxu0 %v4963
        %7751 = vmatprep.subr.bf16.mxu0 %v4972
        %7752 = vmatpush1.bf16.msra.mxu0 %v4971
        %7753 = vmatprep.subr.bf16.mxu0 %v4980
        %7754 = vmatpush1.bf16.msra.mxu0 %v4979
        %7755 = vmatprep.subr.bf16.mxu0 %v4988
        %7756 = vmatpush1.bf16.msra.mxu0 %v4987
        %7757 = vmatprep.subr.bf16.mxu0 %v4996
        %7758 = vmatpush1.bf16.msra.mxu0 %v4995
        %7759 = vmatprep.mubr.bf16.mxu0 %v498
        %7760 = vmatmul.mubr.bf16.gmra.mrb[0].mxu0 %v497
        %v7761 = vpop.f32.mrb[0].mxu0
        %v7762 = vadd.f32 %v7721, %v7761
        %v7763 = vpop.f32.mrb[0].mxu0
        %v7764 = vadd.f32 %v7723, %v7763
        %v7765 = vpop.f32.mrb[0].mxu0
        %v7766 = vpop.f32.mrb[0].mxu0
        %7767 = vdwg.mxu0
        %7768 = vmatprep.subr.bf16.mxu0 %v5004
        %7769 = vmatpush1.bf16.msra.mxu0 %v5003
        %7770 = vmatprep.subr.bf16.mxu0 %v5012
        %7771 = vmatpush1.bf16.msra.mxu0 %v5011
        %7772 = vmatprep.subr.bf16.mxu0 %v5020
        %7773 = vmatpush1.bf16.msra.mxu0 %v5019
        %7774 = vmatprep.subr.bf16.mxu0 %v5028
        %7775 = vmatpush1.bf16.msra.mxu0 %v5027
        %7776 = vmatprep.subr.bf16.mxu0 %v5036
        %7777 = vmatpush1.bf16.msra.mxu0 %v5035
        %7778 = vmatprep.subr.bf16.mxu0 %v5044
        %7779 = vmatpush1.bf16.msra.mxu0 %v5043
        %7780 = vmatprep.subr.bf16.mxu0 %v5052
        %7781 = vmatpush1.bf16.msra.mxu0 %v5051
        %7782 = vmatprep.subr.bf16.mxu0 %v5060
        %7783 = vmatpush1.bf16.msra.mxu0 %v5059
        %7784 = vmatprep.subr.bf16.mxu0 %v5068
        %7785 = vmatpush1.bf16.msra.mxu0 %v5067
        %7786 = vmatprep.subr.bf16.mxu0 %v5076
        %7787 = vmatpush1.bf16.msra.mxu0 %v5075
        %7788 = vmatprep.subr.bf16.mxu0 %v5084
        %7789 = vmatpush1.bf16.msra.mxu0 %v5083
        %7790 = vmatprep.subr.bf16.mxu0 %v5092
        %7791 = vmatpush1.bf16.msra.mxu0 %v5091
        %7792 = vmatprep.subr.bf16.mxu0 %v5100
        %7793 = vmatpush1.bf16.msra.mxu0 %v5099
        %7794 = vmatprep.subr.bf16.mxu0 %v5108
        %7795 = vmatpush1.bf16.msra.mxu0 %v5107
        %7796 = vmatprep.subr.bf16.mxu0 %v5116
        %7797 = vmatpush1.bf16.msra.mxu0 %v5115
        %7798 = vmatprep.subr.bf16.mxu0 %v5124
        %7799 = vmatpush1.bf16.msra.mxu0 %v5123
        %7800 = vmatprep.mubr.bf16.mxu0 %v500
        %7801 = vmatmul.mubr.bf16.gmra.mrb[0].mxu0 %v499
        %v7802 = vpop.f32.mrb[0].mxu0
        %v7803 = vadd.f32 %v7762, %v7802
        %v7804 = vpop.f32.mrb[0].mxu0
        %v7805 = vadd.f32 %v7764, %v7804
        %v7806 = vpop.f32.mrb[0].mxu0
        %v7807 = vpop.f32.mrb[0].mxu0
        %7808 = vdwg.mxu0
        %7809 = vmatprep.subr.bf16.mxu0 %v5132
        %7810 = vmatpush1.bf16.msra.mxu0 %v5131
        %7811 = vmatprep.subr.bf16.mxu0 %v5140
        %7812 = vmatpush1.bf16.msra.mxu0 %v5139
        %7813 = vmatprep.subr.bf16.mxu0 %v5148
        %7814 = vmatpush1.bf16.msra.mxu0 %v5147
        %7815 = vmatprep.subr.bf16.mxu0 %v5156
        %7816 = vmatpush1.bf16.msra.mxu0 %v5155
        %7817 = vmatprep.subr.bf16.mxu0 %v5164
        %7818 = vmatpush1.bf16.msra.mxu0 %v5163
        %7819 = vmatprep.subr.bf16.mxu0 %v5172
        %7820 = vmatpush1.bf16.msra.mxu0 %v5171
        %7821 = vmatprep.subr.bf16.mxu0 %v5180
        %7822 = vmatpush1.bf16.msra.mxu0 %v5179
        %7823 = vmatprep.subr.bf16.mxu0 %v5188
        %7824 = vmatpush1.bf16.msra.mxu0 %v5187
        %7825 = vmatprep.subr.bf16.mxu0 %v5196
        %7826 = vmatpush1.bf16.msra.mxu0 %v5195
        %7827 = vmatprep.subr.bf16.mxu0 %v5204
        %7828 = vmatpush1.bf16.msra.mxu0 %v5203
        %7829 = vmatprep.subr.bf16.mxu0 %v5212
        %7830 = vmatpush1.bf16.msra.mxu0 %v5211
        %7831 = vmatprep.subr.bf16.mxu0 %v5220
        %7832 = vmatpush1.bf16.msra.mxu0 %v5219
        %7833 = vmatprep.subr.bf16.mxu0 %v5228
        %7834 = vmatpush1.bf16.msra.mxu0 %v5227
        %7835 = vmatprep.subr.bf16.mxu0 %v5236
        %7836 = vmatpush1.bf16.msra.mxu0 %v5235
        %7837 = vmatprep.subr.bf16.mxu0 %v5244
        %7838 = vmatpush1.bf16.msra.mxu0 %v5243
        %7839 = vmatprep.subr.bf16.mxu0 %v5252
        %7840 = vmatpush1.bf16.msra.mxu0 %v5251
        %7841 = vmatprep.mubr.bf16.mxu0 %v502
        %7842 = vmatmul.mubr.bf16.gmra.mrb[0].mxu0 %v501
        %v7843 = vpop.f32.mrb[0].mxu0
        %v7844 = vadd.f32 %v7803, %v7843
        %v7845 = vpop.f32.mrb[0].mxu0
        %v7846 = vadd.f32 %v7805, %v7845
        %v7847 = vpop.f32.mrb[0].mxu0
        %v7848 = vpop.f32.mrb[0].mxu0
        %7849 = vdwg.mxu0
        %7850 = vmatprep.subr.bf16.mxu0 %v5260
        %7851 = vmatpush1.bf16.msra.mxu0 %v5259
        %7852 = vmatprep.subr.bf16.mxu0 %v5268
        %7853 = vmatpush1.bf16.msra.mxu0 %v5267
        %7854 = vmatprep.subr.bf16.mxu0 %v5276
        %7855 = vmatpush1.bf16.msra.mxu0 %v5275
        %7856 = vmatprep.subr.bf16.mxu0 %v5284
        %7857 = vmatpush1.bf16.msra.mxu0 %v5283
        %7858 = vmatprep.subr.bf16.mxu0 %v5292
        %7859 = vmatpush1.bf16.msra.mxu0 %v5291
        %7860 = vmatprep.subr.bf16.mxu0 %v5300
        %7861 = vmatpush1.bf16.msra.mxu0 %v5299
        %7862 = vmatprep.subr.bf16.mxu0 %v5308
        %7863 = vmatpush1.bf16.msra.mxu0 %v5307
        %7864 = vmatprep.subr.bf16.mxu0 %v5316
        %7865 = vmatpush1.bf16.msra.mxu0 %v5315
        %7866 = vmatprep.subr.bf16.mxu0 %v5324
        %7867 = vmatpush1.bf16.msra.mxu0 %v5323
        %7868 = vmatprep.subr.bf16.mxu0 %v5332
        %7869 = vmatpush1.bf16.msra.mxu0 %v5331
        %7870 = vmatprep.subr.bf16.mxu0 %v5340
        %7871 = vmatpush1.bf16.msra.mxu0 %v5339
        %7872 = vmatprep.subr.bf16.mxu0 %v5348
        %7873 = vmatpush1.bf16.msra.mxu0 %v5347
        %7874 = vmatprep.subr.bf16.mxu0 %v5356
        %7875 = vmatpush1.bf16.msra.mxu0 %v5355
        %7876 = vmatprep.subr.bf16.mxu0 %v5364
        %7877 = vmatpush1.bf16.msra.mxu0 %v5363
        %7878 = vmatprep.subr.bf16.mxu0 %v5372
        %7879 = vmatpush1.bf16.msra.mxu0 %v5371
        %7880 = vmatprep.subr.bf16.mxu0 %v5380
        %7881 = vmatpush1.bf16.msra.mxu0 %v5379
        %7882 = vmatprep.mubr.bf16.mxu0 %v504
        %7883 = vmatmul.mubr.bf16.gmra.mrb[0].mxu0 %v503
        %v7884 = vpop.f32.mrb[0].mxu0
        %v7885 = vadd.f32 %v7844, %v7884
        %v7886 = vpop.f32.mrb[0].mxu0
        %v7887 = vadd.f32 %v7846, %v7886
        %v7888 = vpop.f32.mrb[0].mxu0
        %v7889 = vpop.f32.mrb[0].mxu0
        %7890 = vdwg.mxu0
        %7891 = vmatprep.subr.bf16.mxu0 %v5388
        %7892 = vmatpush1.bf16.msra.mxu0 %v5387
        %7893 = vmatprep.subr.bf16.mxu0 %v5396
        %7894 = vmatpush1.bf16.msra.mxu0 %v5395
        %7895 = vmatprep.subr.bf16.mxu0 %v5404
        %7896 = vmatpush1.bf16.msra.mxu0 %v5403
        %7897 = vmatprep.subr.bf16.mxu0 %v5412
        %7898 = vmatpush1.bf16.msra.mxu0 %v5411
        %7899 = vmatprep.subr.bf16.mxu0 %v5420
        %7900 = vmatpush1.bf16.msra.mxu0 %v5419
        %7901 = vmatprep.subr.bf16.mxu0 %v5428
        %7902 = vmatpush1.bf16.msra.mxu0 %v5427
        %7903 = vmatprep.subr.bf16.mxu0 %v5436
        %7904 = vmatpush1.bf16.msra.mxu0 %v5435
        %7905 = vmatprep.subr.bf16.mxu0 %v5444
        %7906 = vmatpush1.bf16.msra.mxu0 %v5443
        %7907 = vmatprep.subr.bf16.mxu0 %v5452
        %7908 = vmatpush1.bf16.msra.mxu0 %v5451
        %7909 = vmatprep.subr.bf16.mxu0 %v5460
        %7910 = vmatpush1.bf16.msra.mxu0 %v5459
        %7911 = vmatprep.subr.bf16.mxu0 %v5468
        %7912 = vmatpush1.bf16.msra.mxu0 %v5467
        %7913 = vmatprep.subr.bf16.mxu0 %v5476
        %7914 = vmatpush1.bf16.msra.mxu0 %v5475
        %7915 = vmatprep.subr.bf16.mxu0 %v5484
        %7916 = vmatpush1.bf16.msra.mxu0 %v5483
        %7917 = vmatprep.subr.bf16.mxu0 %v5492
        %7918 = vmatpush1.bf16.msra.mxu0 %v5491
        %7919 = vmatprep.subr.bf16.mxu0 %v5500
        %7920 = vmatpush1.bf16.msra.mxu0 %v5499
        %7921 = vmatprep.subr.bf16.mxu0 %v5508
        %7922 = vmatpush1.bf16.msra.mxu0 %v5507
        %7923 = vmatprep.mubr.bf16.mxu0 %v506
        %7924 = vmatmul.mubr.bf16.gmra.mrb[0].mxu0 %v505
        %v7925 = vpop.f32.mrb[0].mxu0
        %v7926 = vadd.f32 %v7885, %v7925
        %v7927 = vpop.f32.mrb[0].mxu0
        %v7928 = vadd.f32 %v7887, %v7927
        %v7929 = vpop.f32.mrb[0].mxu0
        %v7930 = vpop.f32.mrb[0].mxu0
        %7931 = vdwg.mxu0
        %7932 = vmatprep.subr.bf16.mxu0 %v5516
        %7933 = vmatpush1.bf16.msra.mxu0 %v5515
        %7934 = vmatprep.subr.bf16.mxu0 %v5524
        %7935 = vmatpush1.bf16.msra.mxu0 %v5523
        %7936 = vmatprep.subr.bf16.mxu0 %v5532
        %7937 = vmatpush1.bf16.msra.mxu0 %v5531
        %7938 = vmatprep.subr.bf16.mxu0 %v5540
        %7939 = vmatpush1.bf16.msra.mxu0 %v5539
        %7940 = vmatprep.subr.bf16.mxu0 %v5548
        %7941 = vmatpush1.bf16.msra.mxu0 %v5547
        %7942 = vmatprep.subr.bf16.mxu0 %v5556
        %7943 = vmatpush1.bf16.msra.mxu0 %v5555
        %7944 = vmatprep.subr.bf16.mxu0 %v5564
        %7945 = vmatpush1.bf16.msra.mxu0 %v5563
        %7946 = vmatprep.subr.bf16.mxu0 %v5572
        %7947 = vmatpush1.bf16.msra.mxu0 %v5571
        %7948 = vmatprep.subr.bf16.mxu0 %v5580
        %7949 = vmatpush1.bf16.msra.mxu0 %v5579
        %7950 = vmatprep.subr.bf16.mxu0 %v5588
        %7951 = vmatpush1.bf16.msra.mxu0 %v5587
        %7952 = vmatprep.subr.bf16.mxu0 %v5596
        %7953 = vmatpush1.bf16.msra.mxu0 %v5595
        %7954 = vmatprep.subr.bf16.mxu0 %v5604
        %7955 = vmatpush1.bf16.msra.mxu0 %v5603
        %7956 = vmatprep.subr.bf16.mxu0 %v5612
        %7957 = vmatpush1.bf16.msra.mxu0 %v5611
        %7958 = vmatprep.subr.bf16.mxu0 %v5620
        %7959 = vmatpush1.bf16.msra.mxu0 %v5619
        %7960 = vmatprep.subr.bf16.mxu0 %v5628
        %7961 = vmatpush1.bf16.msra.mxu0 %v5627
        %7962 = vmatprep.subr.bf16.mxu0 %v5636
        %7963 = vmatpush1.bf16.msra.mxu0 %v5635
        %7964 = vmatprep.mubr.bf16.mxu0 %v508
        %7965 = vmatmul.mubr.bf16.gmra.mrb[0].mxu0 %v507
        %v7966 = vpop.f32.mrb[0].mxu0
        %v7967 = vadd.f32 %v7926, %v7966
        %v7968 = vpop.f32.mrb[0].mxu0
        %v7969 = vadd.f32 %v7928, %v7968
        %v7970 = vpop.f32.mrb[0].mxu0
        %v7971 = vpop.f32.mrb[0].mxu0
        %7972 = vdwg.mxu0
        %v7973 = vadd.f32 %v509, %v6983
        %v7974 = vadd.f32 %v510, %v6985
        %v7975 = vadd.f32 %v511, %v7311
        %v7976 = vadd.f32 %v512, %v7313
        %v7977 = vadd.f32 %v513, %v7639
        %v7978 = vadd.f32 %v514, %v7641
        %v7979 = vadd.f32 %v515, %v7967
        %v7980 = vadd.f32 %v516, %v7969
        %7981 = vst [vmem:[#allocation2] sm:$0xff] %v7973
        %7982 = vst [vmem:[#allocation2 + $0x8] sm:$0xff] %v7974
        %7983 = vst [vmem:[#allocation2 + $0x10] sm:$0xff] %v7975
        %7984 = vst [vmem:[#allocation2 + $0x18] sm:$0xff] %v7976
        %7985 = vst [vmem:[#allocation2 + $0x20] sm:$0xff] %v7977
        %7986 = vst [vmem:[#allocation2 + $0x28] sm:$0xff] %v7978
        %7987 = vst [vmem:[#allocation2 + $0x30] sm:$0xff] %v7979
        %7988 = vst [vmem:[#allocation2 + $0x38] sm:$0xff] %v7980
        %p7989 = scmp.eq.s32.totalorder %s27, 1
        // Predicated region
        $region89: #{tpu_custom_call.1} parent=55 // pred_check
          %p7990 = pneg %p7989
        $region90: #{tpu_custom_call.1} parent=55 // pred_check_branch
          %7992 = sbr.rel (%p7990) target = $region92
        $region91: #{tpu_custom_call.1} parent=55 // pred_region
          %v7993 = vld [vmem:[#allocation2] sm:$0xff]
          %v7994 = vld [vmem:[#allocation2 + $0x8] sm:$0xff]
          %v7995 = vld [vmem:[#allocation2 + $0x10] sm:$0xff]
          %v7996 = vld [vmem:[#allocation2 + $0x18] sm:$0xff]
          %v7997 = vld [vmem:[#allocation2 + $0x20] sm:$0xff]
          %v7998 = vld [vmem:[#allocation2 + $0x28] sm:$0xff]
          %v7999 = vld [vmem:[#allocation2 + $0x30] sm:$0xff]
          %v8000 = vld [vmem:[#allocation2 + $0x38] sm:$0xff]
          %v8001 = vmax.f32 %v7993, 0.0
          %v8002 = vmax.f32 %v7994, 0.0
          %v8003 = vmax.f32 %v7995, 0.0
          %v8004 = vmax.f32 %v7996, 0.0
          %v8005 = vmax.f32 %v7997, 0.0
          %v8006 = vmax.f32 %v7998, 0.0
          %v8007 = vmax.f32 %v7999, 0.0
          %v8008 = vmax.f32 %v8000, 0.0
          %v8009 = vpack.c.bf16 %v8001, %v8001
          %v8010 = vpack.c.bf16 %v8002, %v8002
          %v8011 = vpack.c.bf16 %v8003, %v8003
          %v8012 = vpack.c.bf16 %v8004, %v8004
          %v8013 = vpack.c.bf16 %v8005, %v8005
          %v8014 = vpack.c.bf16 %v8006, %v8006
          %v8015 = vpack.c.bf16 %v8007, %v8007
          %v8016 = vpack.c.bf16 %v8008, %v8008
          %v8017 = vld [vmem:[#allocation9] sm:$0xff]
          %v8018 = vld [vmem:[#allocation9 + $0x8] sm:$0xff]
          %v8019 = vld [vmem:[#allocation9 + $0x10] sm:$0xff]
          %v8020 = vld [vmem:[#allocation9 + $0x18] sm:$0xff]
          %v8021 = vld [vmem:[#allocation9 + $0x20] sm:$0xff]
          %v8022 = vld [vmem:[#allocation9 + $0x28] sm:$0xff]
          %v8023 = vld [vmem:[#allocation9 + $0x30] sm:$0xff]
          %v8024 = vld [vmem:[#allocation9 + $0x38] sm:$0xff]
          %v8025 = vld [vmem:[#allocation9 + $0x40] sm:$0xff]
          %v8026 = vld [vmem:[#allocation9 + $0x48] sm:$0xff]
          %v8027 = vld [vmem:[#allocation9 + $0x50] sm:$0xff]
          %v8028 = vld [vmem:[#allocation9 + $0x58] sm:$0xff]
          %v8029 = vld [vmem:[#allocation9 + $0x60] sm:$0xff]
          %v8030 = vld [vmem:[#allocation9 + $0x68] sm:$0xff]
          %v8031 = vld [vmem:[#allocation9 + $0x70] sm:$0xff]
          %v8032 = vld [vmem:[#allocation9 + $0x78] sm:$0xff]
          %v8033 = vld [vmem:[#allocation9 + $0x80] sm:$0xff]
          %v8034 = vld [vmem:[#allocation9 + $0x88] sm:$0xff]
          %v8035 = vld [vmem:[#allocation9 + $0x90] sm:$0xff]
          %v8036 = vld [vmem:[#allocation9 + $0x98] sm:$0xff]
          %v8037 = vld [vmem:[#allocation9 + $0xa0] sm:$0xff]
          %v8038 = vld [vmem:[#allocation9 + $0xa8] sm:$0xff]
          %v8039 = vld [vmem:[#allocation9 + $0xb0] sm:$0xff]
          %v8040 = vld [vmem:[#allocation9 + $0xb8] sm:$0xff]
          %v8041 = vld [vmem:[#allocation9 + $0xc0] sm:$0xff]
          %v8042 = vld [vmem:[#allocation9 + $0xc8] sm:$0xff]
          %v8043 = vld [vmem:[#allocation9 + $0xd0] sm:$0xff]
          %v8044 = vld [vmem:[#allocation9 + $0xd8] sm:$0xff]
          %v8045 = vld [vmem:[#allocation9 + $0xe0] sm:$0xff]
          %v8046 = vld [vmem:[#allocation9 + $0xe8] sm:$0xff]
          %v8047 = vld [vmem:[#allocation9 + $0xf0] sm:$0xff]
          %v8048 = vld [vmem:[#allocation9 + $0xf8] sm:$0xff]
          %v8049 = vld [vmem:[#allocation9 + $0x100] sm:$0xff]
          %v8050 = vld [vmem:[#allocation9 + $0x108] sm:$0xff]
          %v8051 = vld [vmem:[#allocation9 + $0x110] sm:$0xff]
          %v8052 = vld [vmem:[#allocation9 + $0x118] sm:$0xff]
          %v8053 = vld [vmem:[#allocation9 + $0x120] sm:$0xff]
          %v8054 = vld [vmem:[#allocation9 + $0x128] sm:$0xff]
          %v8055 = vld [vmem:[#allocation9 + $0x130] sm:$0xff]
          %v8056 = vld [vmem:[#allocation9 + $0x138] sm:$0xff]
          %v8057 = vld [vmem:[#allocation9 + $0x140] sm:$0xff]
          %v8058 = vld [vmem:[#allocation9 + $0x148] sm:$0xff]
          %v8059 = vld [vmem:[#allocation9 + $0x150] sm:$0xff]
          %v8060 = vld [vmem:[#allocation9 + $0x158] sm:$0xff]
          %v8061 = vld [vmem:[#allocation9 + $0x160] sm:$0xff]
          %v8062 = vld [vmem:[#allocation9 + $0x168] sm:$0xff]
          %v8063 = vld [vmem:[#allocation9 + $0x170] sm:$0xff]
          %v8064 = vld [vmem:[#allocation9 + $0x178] sm:$0xff]
          %v8065 = vld [vmem:[#allocation9 + $0x180] sm:$0xff]
          %v8066 = vld [vmem:[#allocation9 + $0x188] sm:$0xff]
          %v8067 = vld [vmem:[#allocation9 + $0x190] sm:$0xff]
          %v8068 = vld [vmem:[#allocation9 + $0x198] sm:$0xff]
          %v8069 = vld [vmem:[#allocation9 + $0x1a0] sm:$0xff]
          %v8070 = vld [vmem:[#allocation9 + $0x1a8] sm:$0xff]
          %v8071 = vld [vmem:[#allocation9 + $0x1b0] sm:$0xff]
          %v8072 = vld [vmem:[#allocation9 + $0x1b8] sm:$0xff]
          %v8073 = vld [vmem:[#allocation9 + $0x1c0] sm:$0xff]
          %v8074 = vld [vmem:[#allocation9 + $0x1c8] sm:$0xff]
          %v8075 = vld [vmem:[#allocation9 + $0x1d0] sm:$0xff]
          %v8076 = vld [vmem:[#allocation9 + $0x1d8] sm:$0xff]
          %v8077 = vld [vmem:[#allocation9 + $0x1e0] sm:$0xff]
          %v8078 = vld [vmem:[#allocation9 + $0x1e8] sm:$0xff]
          %v8079 = vld [vmem:[#allocation9 + $0x1f0] sm:$0xff]
          %v8080 = vld [vmem:[#allocation9 + $0x1f8] sm:$0xff]
          %v8081 = vld [vmem:[#allocation9 + $0x200] sm:$0xff]
          %v8082 = vld [vmem:[#allocation9 + $0x208] sm:$0xff]
          %v8083 = vld [vmem:[#allocation9 + $0x210] sm:$0xff]
          %v8084 = vld [vmem:[#allocation9 + $0x218] sm:$0xff]
          %v8085 = vld [vmem:[#allocation9 + $0x220] sm:$0xff]
          %v8086 = vld [vmem:[#allocation9 + $0x228] sm:$0xff]
          %v8087 = vld [vmem:[#allocation9 + $0x230] sm:$0xff]
          %v8088 = vld [vmem:[#allocation9 + $0x238] sm:$0xff]
          %v8089 = vld [vmem:[#allocation9 + $0x240] sm:$0xff]
          %v8090 = vld [vmem:[#allocation9 + $0x248] sm:$0xff]
          %v8091 = vld [vmem:[#allocation9 + $0x250] sm:$0xff]
          %v8092 = vld [vmem:[#allocation9 + $0x258] sm:$0xff]
          %v8093 = vld [vmem:[#allocation9 + $0x260] sm:$0xff]
          %v8094 = vld [vmem:[#allocation9 + $0x268] sm:$0xff]
          %v8095 = vld [vmem:[#allocation9 + $0x270] sm:$0xff]
          %v8096 = vld [vmem:[#allocation9 + $0x278] sm:$0xff]
          %v8097 = vld [vmem:[#allocation9 + $0x280] sm:$0xff]
          %v8098 = vld [vmem:[#allocation9 + $0x288] sm:$0xff]
          %v8099 = vld [vmem:[#allocation9 + $0x290] sm:$0xff]
          %v8100 = vld [vmem:[#allocation9 + $0x298] sm:$0xff]
          %v8101 = vld [vmem:[#allocation9 + $0x2a0] sm:$0xff]
          %v8102 = vld [vmem:[#allocation9 + $0x2a8] sm:$0xff]
          %v8103 = vld [vmem:[#allocation9 + $0x2b0] sm:$0xff]
          %v8104 = vld [vmem:[#allocation9 + $0x2b8] sm:$0xff]
          %v8105 = vld [vmem:[#allocation9 + $0x2c0] sm:$0xff]
          %v8106 = vld [vmem:[#allocation9 + $0x2c8] sm:$0xff]
          %v8107 = vld [vmem:[#allocation9 + $0x2d0] sm:$0xff]
          %v8108 = vld [vmem:[#allocation9 + $0x2d8] sm:$0xff]
          %v8109 = vld [vmem:[#allocation9 + $0x2e0] sm:$0xff]
          %v8110 = vld [vmem:[#allocation9 + $0x2e8] sm:$0xff]
          %v8111 = vld [vmem:[#allocation9 + $0x2f0] sm:$0xff]
          %v8112 = vld [vmem:[#allocation9 + $0x2f8] sm:$0xff]
          %v8113 = vld [vmem:[#allocation9 + $0x300] sm:$0xff]
          %v8114 = vld [vmem:[#allocation9 + $0x308] sm:$0xff]
          %v8115 = vld [vmem:[#allocation9 + $0x310] sm:$0xff]
          %v8116 = vld [vmem:[#allocation9 + $0x318] sm:$0xff]
          %v8117 = vld [vmem:[#allocation9 + $0x320] sm:$0xff]
          %v8118 = vld [vmem:[#allocation9 + $0x328] sm:$0xff]
          %v8119 = vld [vmem:[#allocation9 + $0x330] sm:$0xff]
          %v8120 = vld [vmem:[#allocation9 + $0x338] sm:$0xff]
          %v8121 = vld [vmem:[#allocation9 + $0x340] sm:$0xff]
          %v8122 = vld [vmem:[#allocation9 + $0x348] sm:$0xff]
          %v8123 = vld [vmem:[#allocation9 + $0x350] sm:$0xff]
          %v8124 = vld [vmem:[#allocation9 + $0x358] sm:$0xff]
          %v8125 = vld [vmem:[#allocation9 + $0x360] sm:$0xff]
          %v8126 = vld [vmem:[#allocation9 + $0x368] sm:$0xff]
          %v8127 = vld [vmem:[#allocation9 + $0x370] sm:$0xff]
          %v8128 = vld [vmem:[#allocation9 + $0x378] sm:$0xff]
          %v8129 = vld [vmem:[#allocation9 + $0x380] sm:$0xff]
          %v8130 = vld [vmem:[#allocation9 + $0x388] sm:$0xff]
          %v8131 = vld [vmem:[#allocation9 + $0x390] sm:$0xff]
          %v8132 = vld [vmem:[#allocation9 + $0x398] sm:$0xff]
          %v8133 = vld [vmem:[#allocation9 + $0x3a0] sm:$0xff]
          %v8134 = vld [vmem:[#allocation9 + $0x3a8] sm:$0xff]
          %v8135 = vld [vmem:[#allocation9 + $0x3b0] sm:$0xff]
          %v8136 = vld [vmem:[#allocation9 + $0x3b8] sm:$0xff]
          %v8137 = vld [vmem:[#allocation9 + $0x3c0] sm:$0xff]
          %v8138 = vld [vmem:[#allocation9 + $0x3c8] sm:$0xff]
          %v8139 = vld [vmem:[#allocation9 + $0x3d0] sm:$0xff]
          %v8140 = vld [vmem:[#allocation9 + $0x3d8] sm:$0xff]
          %v8141 = vld [vmem:[#allocation9 + $0x3e0] sm:$0xff]
          %v8142 = vld [vmem:[#allocation9 + $0x3e8] sm:$0xff]
          %v8143 = vld [vmem:[#allocation9 + $0x3f0] sm:$0xff]
          %v8144 = vld [vmem:[#allocation9 + $0x3f8] sm:$0xff]
          %v8145 = vld [vmem:[#allocation11] sm:$0x3]
          %v8147 = vlaneseq
          %v8148 = vshrl.u32 %v8147, 7
          %v8149 = vsub.s32 0, %v8148
          %v8150 = vrot.slane %v8145, %v8149
          %v8151 = vlaneseq
          %v8152 = vshrl.u32 %v8151, 7
          %v8153 = vsub.s32 1, %v8152
          %v8154 = vrot.slane %v8145, %v8153
          %v8285 = vunpack.c.l.b16 %v8017
          %v8286 = vunpack.c.h.b16 %v8017
          %v8287 = vunpack.c.l.b16 %v8018
          %v8288 = vunpack.c.h.b16 %v8018
          %v8289 = vunpack.c.l.b16 %v8019
          %v8290 = vunpack.c.h.b16 %v8019
          %v8291 = vunpack.c.l.b16 %v8020
          %v8292 = vunpack.c.h.b16 %v8020
          %v8293 = vunpack.c.l.b16 %v8021
          %v8294 = vunpack.c.h.b16 %v8021
          %v8295 = vunpack.c.l.b16 %v8022
          %v8296 = vunpack.c.h.b16 %v8022
          %v8297 = vunpack.c.l.b16 %v8023
          %v8298 = vunpack.c.h.b16 %v8023
          %v8299 = vunpack.c.l.b16 %v8024
          %v8300 = vunpack.c.h.b16 %v8024
          %v8301 = vunpack.c.l.b16 %v8025
          %v8302 = vunpack.c.h.b16 %v8025
          %v8303 = vunpack.c.l.b16 %v8026
          %v8304 = vunpack.c.h.b16 %v8026
          %v8305 = vunpack.c.l.b16 %v8027
          %v8306 = vunpack.c.h.b16 %v8027
          %v8307 = vunpack.c.l.b16 %v8028
          %v8308 = vunpack.c.h.b16 %v8028
          %v8309 = vunpack.c.l.b16 %v8029
          %v8310 = vunpack.c.h.b16 %v8029
          %v8311 = vunpack.c.l.b16 %v8030
          %v8312 = vunpack.c.h.b16 %v8030
          %v8313 = vunpack.c.l.b16 %v8031
          %v8314 = vunpack.c.h.b16 %v8031
          %v8315 = vunpack.c.l.b16 %v8032
          %v8316 = vunpack.c.h.b16 %v8032
          %v8317 = vunpack.c.l.b16 %v8033
          %v8318 = vunpack.c.h.b16 %v8033
          %v8319 = vunpack.c.l.b16 %v8034
          %v8320 = vunpack.c.h.b16 %v8034
          %v8321 = vunpack.c.l.b16 %v8035
          %v8322 = vunpack.c.h.b16 %v8035
          %v8323 = vunpack.c.l.b16 %v8036
          %v8324 = vunpack.c.h.b16 %v8036
          %v8325 = vunpack.c.l.b16 %v8037
          %v8326 = vunpack.c.h.b16 %v8037
          %v8327 = vunpack.c.l.b16 %v8038
          %v8328 = vunpack.c.h.b16 %v8038
          %v8329 = vunpack.c.l.b16 %v8039
          %v8330 = vunpack.c.h.b16 %v8039
          %v8331 = vunpack.c.l.b16 %v8040
          %v8332 = vunpack.c.h.b16 %v8040
          %v8333 = vunpack.c.l.b16 %v8041
          %v8334 = vunpack.c.h.b16 %v8041
          %v8335 = vunpack.c.l.b16 %v8042
          %v8336 = vunpack.c.h.b16 %v8042
          %v8337 = vunpack.c.l.b16 %v8043
          %v8338 = vunpack.c.h.b16 %v8043
          %v8339 = vunpack.c.l.b16 %v8044
          %v8340 = vunpack.c.h.b16 %v8044
          %v8341 = vunpack.c.l.b16 %v8045
          %v8342 = vunpack.c.h.b16 %v8045
          %v8343 = vunpack.c.l.b16 %v8046
          %v8344 = vunpack.c.h.b16 %v8046
          %v8345 = vunpack.c.l.b16 %v8047
          %v8346 = vunpack.c.h.b16 %v8047
          %v8347 = vunpack.c.l.b16 %v8048
          %v8348 = vunpack.c.h.b16 %v8048
          %v8349 = vunpack.c.l.b16 %v8049
          %v8350 = vunpack.c.h.b16 %v8049
          %v8351 = vunpack.c.l.b16 %v8050
          %v8352 = vunpack.c.h.b16 %v8050
          %v8353 = vunpack.c.l.b16 %v8051
          %v8354 = vunpack.c.h.b16 %v8051
          %v8355 = vunpack.c.l.b16 %v8052
          %v8356 = vunpack.c.h.b16 %v8052
          %v8357 = vunpack.c.l.b16 %v8053
          %v8358 = vunpack.c.h.b16 %v8053
          %v8359 = vunpack.c.l.b16 %v8054
          %v8360 = vunpack.c.h.b16 %v8054
          %v8361 = vunpack.c.l.b16 %v8055
          %v8362 = vunpack.c.h.b16 %v8055
          %v8363 = vunpack.c.l.b16 %v8056
          %v8364 = vunpack.c.h.b16 %v8056
          %v8365 = vunpack.c.l.b16 %v8057
          %v8366 = vunpack.c.h.b16 %v8057
          %v8367 = vunpack.c.l.b16 %v8058
          %v8368 = vunpack.c.h.b16 %v8058
          %v8369 = vunpack.c.l.b16 %v8059
          %v8370 = vunpack.c.h.b16 %v8059
          %v8371 = vunpack.c.l.b16 %v8060
          %v8372 = vunpack.c.h.b16 %v8060
          %v8373 = vunpack.c.l.b16 %v8061
          %v8374 = vunpack.c.h.b16 %v8061
          %v8375 = vunpack.c.l.b16 %v8062
          %v8376 = vunpack.c.h.b16 %v8062
          %v8377 = vunpack.c.l.b16 %v8063
          %v8378 = vunpack.c.h.b16 %v8063
          %v8379 = vunpack.c.l.b16 %v8064
          %v8380 = vunpack.c.h.b16 %v8064
          %v8381 = vunpack.c.l.b16 %v8065
          %v8382 = vunpack.c.h.b16 %v8065
          %v8383 = vunpack.c.l.b16 %v8066
          %v8384 = vunpack.c.h.b16 %v8066
          %v8385 = vunpack.c.l.b16 %v8067
          %v8386 = vunpack.c.h.b16 %v8067
          %v8387 = vunpack.c.l.b16 %v8068
          %v8388 = vunpack.c.h.b16 %v8068
          %v8389 = vunpack.c.l.b16 %v8069
          %v8390 = vunpack.c.h.b16 %v8069
          %v8391 = vunpack.c.l.b16 %v8070
          %v8392 = vunpack.c.h.b16 %v8070
          %v8393 = vunpack.c.l.b16 %v8071
          %v8394 = vunpack.c.h.b16 %v8071
          %v8395 = vunpack.c.l.b16 %v8072
          %v8396 = vunpack.c.h.b16 %v8072
          %v8397 = vunpack.c.l.b16 %v8073
          %v8398 = vunpack.c.h.b16 %v8073
          %v8399 = vunpack.c.l.b16 %v8074
          %v8400 = vunpack.c.h.b16 %v8074
          %v8401 = vunpack.c.l.b16 %v8075
          %v8402 = vunpack.c.h.b16 %v8075
          %v8403 = vunpack.c.l.b16 %v8076
          %v8404 = vunpack.c.h.b16 %v8076
          %v8405 = vunpack.c.l.b16 %v8077
          %v8406 = vunpack.c.h.b16 %v8077
          %v8407 = vunpack.c.l.b16 %v8078
          %v8408 = vunpack.c.h.b16 %v8078
          %v8409 = vunpack.c.l.b16 %v8079
          %v8410 = vunpack.c.h.b16 %v8079
          %v8411 = vunpack.c.l.b16 %v8080
          %v8412 = vunpack.c.h.b16 %v8080
          %v8413 = vunpack.c.l.b16 %v8081
          %v8414 = vunpack.c.h.b16 %v8081
          %v8415 = vunpack.c.l.b16 %v8082
          %v8416 = vunpack.c.h.b16 %v8082
          %v8417 = vunpack.c.l.b16 %v8083
          %v8418 = vunpack.c.h.b16 %v8083
          %v8419 = vunpack.c.l.b16 %v8084
          %v8420 = vunpack.c.h.b16 %v8084
          %v8421 = vunpack.c.l.b16 %v8085
          %v8422 = vunpack.c.h.b16 %v8085
          %v8423 = vunpack.c.l.b16 %v8086
          %v8424 = vunpack.c.h.b16 %v8086
          %v8425 = vunpack.c.l.b16 %v8087
          %v8426 = vunpack.c.h.b16 %v8087
          %v8427 = vunpack.c.l.b16 %v8088
          %v8428 = vunpack.c.h.b16 %v8088
          %v8429 = vunpack.c.l.b16 %v8089
          %v8430 = vunpack.c.h.b16 %v8089
          %v8431 = vunpack.c.l.b16 %v8090
          %v8432 = vunpack.c.h.b16 %v8090
          %v8433 = vunpack.c.l.b16 %v8091
          %v8434 = vunpack.c.h.b16 %v8091
          %v8435 = vunpack.c.l.b16 %v8092
          %v8436 = vunpack.c.h.b16 %v8092
          %v8437 = vunpack.c.l.b16 %v8093
          %v8438 = vunpack.c.h.b16 %v8093
          %v8439 = vunpack.c.l.b16 %v8094
          %v8440 = vunpack.c.h.b16 %v8094
          %v8441 = vunpack.c.l.b16 %v8095
          %v8442 = vunpack.c.h.b16 %v8095
          %v8443 = vunpack.c.l.b16 %v8096
          %v8444 = vunpack.c.h.b16 %v8096
          %v8445 = vunpack.c.l.b16 %v8097
          %v8446 = vunpack.c.h.b16 %v8097
          %v8447 = vunpack.c.l.b16 %v8098
          %v8448 = vunpack.c.h.b16 %v8098
          %v8449 = vunpack.c.l.b16 %v8099
          %v8450 = vunpack.c.h.b16 %v8099
          %v8451 = vunpack.c.l.b16 %v8100
          %v8452 = vunpack.c.h.b16 %v8100
          %v8453 = vunpack.c.l.b16 %v8101
          %v8454 = vunpack.c.h.b16 %v8101
          %v8455 = vunpack.c.l.b16 %v8102
          %v8456 = vunpack.c.h.b16 %v8102
          %v8457 = vunpack.c.l.b16 %v8103
          %v8458 = vunpack.c.h.b16 %v8103
          %v8459 = vunpack.c.l.b16 %v8104
          %v8460 = vunpack.c.h.b16 %v8104
          %v8461 = vunpack.c.l.b16 %v8105
          %v8462 = vunpack.c.h.b16 %v8105
          %v8463 = vunpack.c.l.b16 %v8106
          %v8464 = vunpack.c.h.b16 %v8106
          %v8465 = vunpack.c.l.b16 %v8107
          %v8466 = vunpack.c.h.b16 %v8107
          %v8467 = vunpack.c.l.b16 %v8108
          %v8468 = vunpack.c.h.b16 %v8108
          %v8469 = vunpack.c.l.b16 %v8109
          %v8470 = vunpack.c.h.b16 %v8109
          %v8471 = vunpack.c.l.b16 %v8110
          %v8472 = vunpack.c.h.b16 %v8110
          %v8473 = vunpack.c.l.b16 %v8111
          %v8474 = vunpack.c.h.b16 %v8111
          %v8475 = vunpack.c.l.b16 %v8112
          %v8476 = vunpack.c.h.b16 %v8112
          %v8477 = vunpack.c.l.b16 %v8113
          %v8478 = vunpack.c.h.b16 %v8113
          %v8479 = vunpack.c.l.b16 %v8114
          %v8480 = vunpack.c.h.b16 %v8114
          %v8481 = vunpack.c.l.b16 %v8115
          %v8482 = vunpack.c.h.b16 %v8115
          %v8483 = vunpack.c.l.b16 %v8116
          %v8484 = vunpack.c.h.b16 %v8116
          %v8485 = vunpack.c.l.b16 %v8117
          %v8486 = vunpack.c.h.b16 %v8117
          %v8487 = vunpack.c.l.b16 %v8118
          %v8488 = vunpack.c.h.b16 %v8118
          %v8489 = vunpack.c.l.b16 %v8119
          %v8490 = vunpack.c.h.b16 %v8119
          %v8491 = vunpack.c.l.b16 %v8120
          %v8492 = vunpack.c.h.b16 %v8120
          %v8493 = vunpack.c.l.b16 %v8121
          %v8494 = vunpack.c.h.b16 %v8121
          %v8495 = vunpack.c.l.b16 %v8122
          %v8496 = vunpack.c.h.b16 %v8122
          %v8497 = vunpack.c.l.b16 %v8123
          %v8498 = vunpack.c.h.b16 %v8123
          %v8499 = vunpack.c.l.b16 %v8124
          %v8500 = vunpack.c.h.b16 %v8124
          %v8501 = vunpack.c.l.b16 %v8125
          %v8502 = vunpack.c.h.b16 %v8125
          %v8503 = vunpack.c.l.b16 %v8126
          %v8504 = vunpack.c.h.b16 %v8126
          %v8505 = vunpack.c.l.b16 %v8127
          %v8506 = vunpack.c.h.b16 %v8127
          %v8507 = vunpack.c.l.b16 %v8128
          %v8508 = vunpack.c.h.b16 %v8128
          %v8509 = vunpack.c.l.b16 %v8129
          %v8510 = vunpack.c.h.b16 %v8129
          %v8511 = vunpack.c.l.b16 %v8130
          %v8512 = vunpack.c.h.b16 %v8130
          %v8513 = vunpack.c.l.b16 %v8131
          %v8514 = vunpack.c.h.b16 %v8131
          %v8515 = vunpack.c.l.b16 %v8132
          %v8516 = vunpack.c.h.b16 %v8132
          %v8517 = vunpack.c.l.b16 %v8133
          %v8518 = vunpack.c.h.b16 %v8133
          %v8519 = vunpack.c.l.b16 %v8134
          %v8520 = vunpack.c.h.b16 %v8134
          %v8521 = vunpack.c.l.b16 %v8135
          %v8522 = vunpack.c.h.b16 %v8135
          %v8523 = vunpack.c.l.b16 %v8136
          %v8524 = vunpack.c.h.b16 %v8136
          %v8525 = vunpack.c.l.b16 %v8137
          %v8526 = vunpack.c.h.b16 %v8137
          %v8527 = vunpack.c.l.b16 %v8138
          %v8528 = vunpack.c.h.b16 %v8138
          %v8529 = vunpack.c.l.b16 %v8139
          %v8530 = vunpack.c.h.b16 %v8139
          %v8531 = vunpack.c.l.b16 %v8140
          %v8532 = vunpack.c.h.b16 %v8140
          %v8533 = vunpack.c.l.b16 %v8141
          %v8534 = vunpack.c.h.b16 %v8141
          %v8535 = vunpack.c.l.b16 %v8142
          %v8536 = vunpack.c.h.b16 %v8142
          %v8537 = vunpack.c.l.b16 %v8143
          %v8538 = vunpack.c.h.b16 %v8143
          %v8539 = vunpack.c.l.b16 %v8144
          %v8540 = vunpack.c.h.b16 %v8144
          %v8541 = vpack.c.b16 %v8287, %v8285
          %v8542 = vpack.c.b16 %v8288, %v8286
          %v8543 = vpack.c.b16 %v8291, %v8289
          %v8544 = vpack.c.b16 %v8292, %v8290
          %v8545 = vpack.c.b16 %v8295, %v8293
          %v8546 = vpack.c.b16 %v8296, %v8294
          %v8547 = vpack.c.b16 %v8299, %v8297
          %v8548 = vpack.c.b16 %v8300, %v8298
          %v8549 = vpack.c.b16 %v8303, %v8301
          %v8550 = vpack.c.b16 %v8304, %v8302
          %v8551 = vpack.c.b16 %v8307, %v8305
          %v8552 = vpack.c.b16 %v8308, %v8306
          %v8553 = vpack.c.b16 %v8311, %v8309
          %v8554 = vpack.c.b16 %v8312, %v8310
          %v8555 = vpack.c.b16 %v8315, %v8313
          %v8556 = vpack.c.b16 %v8316, %v8314
          %v8557 = vpack.c.b16 %v8319, %v8317
          %v8558 = vpack.c.b16 %v8320, %v8318
          %v8559 = vpack.c.b16 %v8323, %v8321
          %v8560 = vpack.c.b16 %v8324, %v8322
          %v8561 = vpack.c.b16 %v8327, %v8325
          %v8562 = vpack.c.b16 %v8328, %v8326
          %v8563 = vpack.c.b16 %v8331, %v8329
          %v8564 = vpack.c.b16 %v8332, %v8330
          %v8565 = vpack.c.b16 %v8335, %v8333
          %v8566 = vpack.c.b16 %v8336, %v8334
          %v8567 = vpack.c.b16 %v8339, %v8337
          %v8568 = vpack.c.b16 %v8340, %v8338
          %v8569 = vpack.c.b16 %v8343, %v8341
          %v8570 = vpack.c.b16 %v8344, %v8342
          %v8571 = vpack.c.b16 %v8347, %v8345
          %v8572 = vpack.c.b16 %v8348, %v8346
          %v8573 = vpack.c.b16 %v8351, %v8349
          %v8574 = vpack.c.b16 %v8352, %v8350
          %v8575 = vpack.c.b16 %v8355, %v8353
          %v8576 = vpack.c.b16 %v8356, %v8354
          %v8577 = vpack.c.b16 %v8359, %v8357
          %v8578 = vpack.c.b16 %v8360, %v8358
          %v8579 = vpack.c.b16 %v8363, %v8361
          %v8580 = vpack.c.b16 %v8364, %v8362
          %v8581 = vpack.c.b16 %v8367, %v8365
          %v8582 = vpack.c.b16 %v8368, %v8366
          %v8583 = vpack.c.b16 %v8371, %v8369
          %v8584 = vpack.c.b16 %v8372, %v8370
          %v8585 = vpack.c.b16 %v8375, %v8373
          %v8586 = vpack.c.b16 %v8376, %v8374
          %v8587 = vpack.c.b16 %v8379, %v8377
          %v8588 = vpack.c.b16 %v8380, %v8378
          %v8589 = vpack.c.b16 %v8383, %v8381
          %v8590 = vpack.c.b16 %v8384, %v8382
          %v8591 = vpack.c.b16 %v8387, %v8385
          %v8592 = vpack.c.b16 %v8388, %v8386
          %v8593 = vpack.c.b16 %v8391, %v8389
          %v8594 = vpack.c.b16 %v8392, %v8390
          %v8595 = vpack.c.b16 %v8395, %v8393
          %v8596 = vpack.c.b16 %v8396, %v8394
          %v8597 = vpack.c.b16 %v8399, %v8397
          %v8598 = vpack.c.b16 %v8400, %v8398
          %v8599 = vpack.c.b16 %v8403, %v8401
          %v8600 = vpack.c.b16 %v8404, %v8402
          %v8601 = vpack.c.b16 %v8407, %v8405
          %v8602 = vpack.c.b16 %v8408, %v8406
          %v8603 = vpack.c.b16 %v8411, %v8409
          %v8604 = vpack.c.b16 %v8412, %v8410
          %v8605 = vpack.c.b16 %v8415, %v8413
          %v8606 = vpack.c.b16 %v8416, %v8414
          %v8607 = vpack.c.b16 %v8419, %v8417
          %v8608 = vpack.c.b16 %v8420, %v8418
          %v8609 = vpack.c.b16 %v8423, %v8421
          %v8610 = vpack.c.b16 %v8424, %v8422
          %v8611 = vpack.c.b16 %v8427, %v8425
          %v8612 = vpack.c.b16 %v8428, %v8426
          %v8613 = vpack.c.b16 %v8431, %v8429
          %v8614 = vpack.c.b16 %v8432, %v8430
          %v8615 = vpack.c.b16 %v8435, %v8433
          %v8616 = vpack.c.b16 %v8436, %v8434
          %v8617 = vpack.c.b16 %v8439, %v8437
          %v8618 = vpack.c.b16 %v8440, %v8438
          %v8619 = vpack.c.b16 %v8443, %v8441
          %v8620 = vpack.c.b16 %v8444, %v8442
          %v8621 = vpack.c.b16 %v8447, %v8445
          %v8622 = vpack.c.b16 %v8448, %v8446
          %v8623 = vpack.c.b16 %v8451, %v8449
          %v8624 = vpack.c.b16 %v8452, %v8450
          %v8625 = vpack.c.b16 %v8455, %v8453
          %v8626 = vpack.c.b16 %v8456, %v8454
          %v8627 = vpack.c.b16 %v8459, %v8457
          %v8628 = vpack.c.b16 %v8460, %v8458
          %v8629 = vpack.c.b16 %v8463, %v8461
          %v8630 = vpack.c.b16 %v8464, %v8462
          %v8631 = vpack.c.b16 %v8467, %v8465
          %v8632 = vpack.c.b16 %v8468, %v8466
          %v8633 = vpack.c.b16 %v8471, %v8469
          %v8634 = vpack.c.b16 %v8472, %v8470
          %v8635 = vpack.c.b16 %v8475, %v8473
          %v8636 = vpack.c.b16 %v8476, %v8474
          %v8637 = vpack.c.b16 %v8479, %v8477
          %v8638 = vpack.c.b16 %v8480, %v8478
          %v8639 = vpack.c.b16 %v8483, %v8481
          %v8640 = vpack.c.b16 %v8484, %v8482
          %v8641 = vpack.c.b16 %v8487, %v8485
          %v8642 = vpack.c.b16 %v8488, %v8486
          %v8643 = vpack.c.b16 %v8491, %v8489
          %v8644 = vpack.c.b16 %v8492, %v8490
          %v8645 = vpack.c.b16 %v8495, %v8493
          %v8646 = vpack.c.b16 %v8496, %v8494
          %v8647 = vpack.c.b16 %v8499, %v8497
          %v8648 = vpack.c.b16 %v8500, %v8498
          %v8649 = vpack.c.b16 %v8503, %v8501
          %v8650 = vpack.c.b16 %v8504, %v8502
          %v8651 = vpack.c.b16 %v8507, %v8505
          %v8652 = vpack.c.b16 %v8508, %v8506
          %v8653 = vpack.c.b16 %v8511, %v8509
          %v8654 = vpack.c.b16 %v8512, %v8510
          %v8655 = vpack.c.b16 %v8515, %v8513
          %v8656 = vpack.c.b16 %v8516, %v8514
          %v8657 = vpack.c.b16 %v8519, %v8517
          %v8658 = vpack.c.b16 %v8520, %v8518
          %v8659 = vpack.c.b16 %v8523, %v8521
          %v8660 = vpack.c.b16 %v8524, %v8522
          %v8661 = vpack.c.b16 %v8527, %v8525
          %v8662 = vpack.c.b16 %v8528, %v8526
          %v8663 = vpack.c.b16 %v8531, %v8529
          %v8664 = vpack.c.b16 %v8532, %v8530
          %v8665 = vpack.c.b16 %v8535, %v8533
          %v8666 = vpack.c.b16 %v8536, %v8534
          %v8667 = vpack.c.b16 %v8539, %v8537
          %v8668 = vpack.c.b16 %v8540, %v8538
          %8797 = vmatprep.subr.bf16.mxu0 %v8542
          %8798 = vmatpush1.bf16.msra.mxu0 %v8541
          %8799 = vmatprep.subr.bf16.mxu0 %v8544
          %8800 = vmatpush1.bf16.msra.mxu0 %v8543
          %8801 = vmatprep.subr.bf16.mxu0 %v8546
          %8802 = vmatpush1.bf16.msra.mxu0 %v8545
          %8803 = vmatprep.subr.bf16.mxu0 %v8548
          %8804 = vmatpush1.bf16.msra.mxu0 %v8547
          %8805 = vmatprep.subr.bf16.mxu0 %v8550
          %8806 = vmatpush1.bf16.msra.mxu0 %v8549
          %8807 = vmatprep.subr.bf16.mxu0 %v8552
          %8808 = vmatpush1.bf16.msra.mxu0 %v8551
          %8809 = vmatprep.subr.bf16.mxu0 %v8554
          %8810 = vmatpush1.bf16.msra.mxu0 %v8553
          %8811 = vmatprep.subr.bf16.mxu0 %v8556
          %8812 = vmatpush1.bf16.msra.mxu0 %v8555
          %8813 = vmatprep.subr.bf16.mxu0 %v8558
          %8814 = vmatpush1.bf16.msra.mxu0 %v8557
          %8815 = vmatprep.subr.bf16.mxu0 %v8560
          %8816 = vmatpush1.bf16.msra.mxu0 %v8559
          %8817 = vmatprep.subr.bf16.mxu0 %v8562
          %8818 = vmatpush1.bf16.msra.mxu0 %v8561
          %8819 = vmatprep.subr.bf16.mxu0 %v8564
          %8820 = vmatpush1.bf16.msra.mxu0 %v8563
          %8821 = vmatprep.subr.bf16.mxu0 %v8566
          %8822 = vmatpush1.bf16.msra.mxu0 %v8565
          %8823 = vmatprep.subr.bf16.mxu0 %v8568
          %8824 = vmatpush1.bf16.msra.mxu0 %v8567
          %8825 = vmatprep.subr.bf16.mxu0 %v8570
          %8826 = vmatpush1.bf16.msra.mxu0 %v8569
          %8827 = vmatprep.subr.bf16.mxu0 %v8572
          %8828 = vmatpush1.bf16.msra.mxu0 %v8571
          %8829 = vmatprep.mubr.bf16.mxu0 %v8010
          %8830 = vmatmul.mubr.bf16.gmra.mrb[0].mxu0 %v8009
          %v8831 = vpop.f32.mrb[0].mxu0
          %v8832 = vadd.f32 %v8150, %v8831
          %v8833 = vpop.f32.mrb[0].mxu0
          %v8834 = vadd.f32 %v8154, %v8833
          %v8835 = vpop.f32.mrb[0].mxu0
          %v8836 = vpop.f32.mrb[0].mxu0
          %8837 = vdwg.mxu0
          %8838 = vmatprep.subr.bf16.mxu0 %v8574
          %8839 = vmatpush1.bf16.msra.mxu0 %v8573
          %8840 = vmatprep.subr.bf16.mxu0 %v8576
          %8841 = vmatpush1.bf16.msra.mxu0 %v8575
          %8842 = vmatprep.subr.bf16.mxu0 %v8578
          %8843 = vmatpush1.bf16.msra.mxu0 %v8577
          %8844 = vmatprep.subr.bf16.mxu0 %v8580
          %8845 = vmatpush1.bf16.msra.mxu0 %v8579
          %8846 = vmatprep.subr.bf16.mxu0 %v8582
          %8847 = vmatpush1.bf16.msra.mxu0 %v8581
          %8848 = vmatprep.subr.bf16.mxu0 %v8584
          %8849 = vmatpush1.bf16.msra.mxu0 %v8583
          %8850 = vmatprep.subr.bf16.mxu0 %v8586
          %8851 = vmatpush1.bf16.msra.mxu0 %v8585
          %8852 = vmatprep.subr.bf16.mxu0 %v8588
          %8853 = vmatpush1.bf16.msra.mxu0 %v8587
          %8854 = vmatprep.subr.bf16.mxu0 %v8590
          %8855 = vmatpush1.bf16.msra.mxu0 %v8589
          %8856 = vmatprep.subr.bf16.mxu0 %v8592
          %8857 = vmatpush1.bf16.msra.mxu0 %v8591
          %8858 = vmatprep.subr.bf16.mxu0 %v8594
          %8859 = vmatpush1.bf16.msra.mxu0 %v8593
          %8860 = vmatprep.subr.bf16.mxu0 %v8596
          %8861 = vmatpush1.bf16.msra.mxu0 %v8595
          %8862 = vmatprep.subr.bf16.mxu0 %v8598
          %8863 = vmatpush1.bf16.msra.mxu0 %v8597
          %8864 = vmatprep.subr.bf16.mxu0 %v8600
          %8865 = vmatpush1.bf16.msra.mxu0 %v8599
          %8866 = vmatprep.subr.bf16.mxu0 %v8602
          %8867 = vmatpush1.bf16.msra.mxu0 %v8601
          %8868 = vmatprep.subr.bf16.mxu0 %v8604
          %8869 = vmatpush1.bf16.msra.mxu0 %v8603
          %8870 = vmatprep.mubr.bf16.mxu0 %v8012
          %8871 = vmatmul.mubr.bf16.gmra.mrb[0].mxu0 %v8011
          %v8872 = vpop.f32.mrb[0].mxu0
          %v8873 = vadd.f32 %v8832, %v8872
          %v8874 = vpop.f32.mrb[0].mxu0
          %v8875 = vadd.f32 %v8834, %v8874
          %v8876 = vpop.f32.mrb[0].mxu0
          %v8877 = vpop.f32.mrb[0].mxu0
          %8878 = vdwg.mxu0
          %8879 = vmatprep.subr.bf16.mxu0 %v8606
          %8880 = vmatpush1.bf16.msra.mxu0 %v8605
          %8881 = vmatprep.subr.bf16.mxu0 %v8608
          %8882 = vmatpush1.bf16.msra.mxu0 %v8607
          %8883 = vmatprep.subr.bf16.mxu0 %v8610
          %8884 = vmatpush1.bf16.msra.mxu0 %v8609
          %8885 = vmatprep.subr.bf16.mxu0 %v8612
          %8886 = vmatpush1.bf16.msra.mxu0 %v8611
          %8887 = vmatprep.subr.bf16.mxu0 %v8614
          %8888 = vmatpush1.bf16.msra.mxu0 %v8613
          %8889 = vmatprep.subr.bf16.mxu0 %v8616
          %8890 = vmatpush1.bf16.msra.mxu0 %v8615
          %8891 = vmatprep.subr.bf16.mxu0 %v8618
          %8892 = vmatpush1.bf16.msra.mxu0 %v8617
          %8893 = vmatprep.subr.bf16.mxu0 %v8620
          %8894 = vmatpush1.bf16.msra.mxu0 %v8619
          %8895 = vmatprep.subr.bf16.mxu0 %v8622
          %8896 = vmatpush1.bf16.msra.mxu0 %v8621
          %8897 = vmatprep.subr.bf16.mxu0 %v8624
          %8898 = vmatpush1.bf16.msra.mxu0 %v8623
          %8899 = vmatprep.subr.bf16.mxu0 %v8626
          %8900 = vmatpush1.bf16.msra.mxu0 %v8625
          %8901 = vmatprep.subr.bf16.mxu0 %v8628
          %8902 = vmatpush1.bf16.msra.mxu0 %v8627
          %8903 = vmatprep.subr.bf16.mxu0 %v8630
          %8904 = vmatpush1.bf16.msra.mxu0 %v8629
          %8905 = vmatprep.subr.bf16.mxu0 %v8632
          %8906 = vmatpush1.bf16.msra.mxu0 %v8631
          %8907 = vmatprep.subr.bf16.mxu0 %v8634
          %8908 = vmatpush1.bf16.msra.mxu0 %v8633
          %8909 = vmatprep.subr.bf16.mxu0 %v8636
          %8910 = vmatpush1.bf16.msra.mxu0 %v8635
          %8911 = vmatprep.mubr.bf16.mxu0 %v8014
          %8912 = vmatmul.mubr.bf16.gmra.mrb[0].mxu0 %v8013
          %v8913 = vpop.f32.mrb[0].mxu0
          %v8914 = vadd.f32 %v8873, %v8913
          %v8915 = vpop.f32.mrb[0].mxu0
          %v8916 = vadd.f32 %v8875, %v8915
          %v8917 = vpop.f32.mrb[0].mxu0
          %v8918 = vpop.f32.mrb[0].mxu0
          %8919 = vdwg.mxu0
          %8920 = vmatprep.subr.bf16.mxu0 %v8638
          %8921 = vmatpush1.bf16.msra.mxu0 %v8637
          %8922 = vmatprep.subr.bf16.mxu0 %v8640
          %8923 = vmatpush1.bf16.msra.mxu0 %v8639
          %8924 = vmatprep.subr.bf16.mxu0 %v8642
          %8925 = vmatpush1.bf16.msra.mxu0 %v8641
          %8926 = vmatprep.subr.bf16.mxu0 %v8644
          %8927 = vmatpush1.bf16.msra.mxu0 %v8643
          %8928 = vmatprep.subr.bf16.mxu0 %v8646
          %8929 = vmatpush1.bf16.msra.mxu0 %v8645
          %8930 = vmatprep.subr.bf16.mxu0 %v8648
          %8931 = vmatpush1.bf16.msra.mxu0 %v8647
          %8932 = vmatprep.subr.bf16.mxu0 %v8650
          %8933 = vmatpush1.bf16.msra.mxu0 %v8649
          %8934 = vmatprep.subr.bf16.mxu0 %v8652
          %8935 = vmatpush1.bf16.msra.mxu0 %v8651
          %8936 = vmatprep.subr.bf16.mxu0 %v8654
          %8937 = vmatpush1.bf16.msra.mxu0 %v8653
          %8938 = vmatprep.subr.bf16.mxu0 %v8656
          %8939 = vmatpush1.bf16.msra.mxu0 %v8655
          %8940 = vmatprep.subr.bf16.mxu0 %v8658
          %8941 = vmatpush1.bf16.msra.mxu0 %v8657
          %8942 = vmatprep.subr.bf16.mxu0 %v8660
          %8943 = vmatpush1.bf16.msra.mxu0 %v8659
          %8944 = vmatprep.subr.bf16.mxu0 %v8662
          %8945 = vmatpush1.bf16.msra.mxu0 %v8661
          %8946 = vmatprep.subr.bf16.mxu0 %v8664
          %8947 = vmatpush1.bf16.msra.mxu0 %v8663
          %8948 = vmatprep.subr.bf16.mxu0 %v8666
          %8949 = vmatpush1.bf16.msra.mxu0 %v8665
          %8950 = vmatprep.subr.bf16.mxu0 %v8668
          %8951 = vmatpush1.bf16.msra.mxu0 %v8667
          %8952 = vmatprep.mubr.bf16.mxu0 %v8016
          %8953 = vmatmul.mubr.bf16.gmra.mrb[0].mxu0 %v8015
          %v8954 = vpop.f32.mrb[0].mxu0
          %v8955 = vadd.f32 %v8914, %v8954
          %v8956 = vpop.f32.mrb[0].mxu0
          %v8957 = vadd.f32 %v8916, %v8956
          %v8958 = vpop.f32.mrb[0].mxu0
          %v8959 = vpop.f32.mrb[0].mxu0
          %8960 = vdwg.mxu0
          %v8961 = vmax.f32 %v8955, 0.0
          %v8962 = vmax.f32 %v8957, 0.0
          %v8963 = vld [vmem:[%s5] sm:$0xff]
          %v8964 = vld [vmem:[%s5 + $0x8] sm:$0xff]
          %v8965 = vld [vmem:[%s5 + $0x10] sm:$0xff]
          %v8966 = vld [vmem:[%s5 + $0x18] sm:$0xff]
          %v8967 = vld [vmem:[%s5 + $0x20] sm:$0xff]
          %v8968 = vld [vmem:[%s5 + $0x28] sm:$0xff]
          %v8969 = vld [vmem:[%s5 + $0x30] sm:$0xff]
          %v8970 = vld [vmem:[%s5 + $0x38] sm:$0xff]
          %v8971 = vld [vmem:[%s5 + $0x40] sm:$0xff]
          %v8972 = vld [vmem:[%s5 + $0x48] sm:$0xff]
          %v8973 = vld [vmem:[%s5 + $0x50] sm:$0xff]
          %v8974 = vld [vmem:[%s5 + $0x58] sm:$0xff]
          %v8975 = vld [vmem:[%s5 + $0x60] sm:$0xff]
          %v8976 = vld [vmem:[%s5 + $0x68] sm:$0xff]
          %v8977 = vld [vmem:[%s5 + $0x70] sm:$0xff]
          %v8978 = vld [vmem:[%s5 + $0x78] sm:$0xff]
          %v8979 = vld [vmem:[%s5 + $0x80] sm:$0xff]
          %v8980 = vld [vmem:[%s5 + $0x88] sm:$0xff]
          %v8981 = vld [vmem:[%s5 + $0x90] sm:$0xff]
          %v8982 = vld [vmem:[%s5 + $0x98] sm:$0xff]
          %v8983 = vld [vmem:[%s5 + $0xa0] sm:$0xff]
          %v8984 = vld [vmem:[%s5 + $0xa8] sm:$0xff]
          %v8985 = vld [vmem:[%s5 + $0xb0] sm:$0xff]
          %v8986 = vld [vmem:[%s5 + $0xb8] sm:$0xff]
          %v8987 = vld [vmem:[%s5 + $0xc0] sm:$0xff]
          %v8988 = vld [vmem:[%s5 + $0xc8] sm:$0xff]
          %v8989 = vld [vmem:[%s5 + $0xd0] sm:$0xff]
          %v8990 = vld [vmem:[%s5 + $0xd8] sm:$0xff]
          %v8991 = vld [vmem:[%s5 + $0xe0] sm:$0xff]
          %v8992 = vld [vmem:[%s5 + $0xe8] sm:$0xff]
          %v8993 = vld [vmem:[%s5 + $0xf0] sm:$0xff]
          %v8994 = vld [vmem:[%s5 + $0xf8] sm:$0xff]
          %v8995 = vld [vmem:[#allocation12] sm:$0x1]
          %v8997 = vlaneseq
          %v8998 = vshrl.u32 %v8997, 7
          %v8999 = vsub.s32 0, %v8998
          %v9000 = vrot.slane %v8995, %v8999
          %9002 = vmatprep.subr.mxu0 0.0
          %9003 = vmatpush1.msra.mxu0 %v8963
          %9004 = vmatprep.subr.mxu0 0.0
          %9005 = vmatpush1.msra.mxu0 %v8964
          %9006 = vmatprep.subr.mxu0 0.0
          %9007 = vmatpush1.msra.mxu0 %v8965
          %9008 = vmatprep.subr.mxu0 0.0
          %9009 = vmatpush1.msra.mxu0 %v8966
          %9010 = vmatprep.subr.mxu0 0.0
          %9011 = vmatpush1.msra.mxu0 %v8967
          %9012 = vmatprep.subr.mxu0 0.0
          %9013 = vmatpush1.msra.mxu0 %v8968
          %9014 = vmatprep.subr.mxu0 0.0
          %9015 = vmatpush1.msra.mxu0 %v8969
          %9016 = vmatprep.subr.mxu0 0.0
          %9017 = vmatpush1.msra.mxu0 %v8970
          %9018 = vmatprep.subr.mxu0 0.0
          %9019 = vmatpush1.msra.mxu0 %v8971
          %9020 = vmatprep.subr.mxu0 0.0
          %9021 = vmatpush1.msra.mxu0 %v8972
          %9022 = vmatprep.subr.mxu0 0.0
          %9023 = vmatpush1.msra.mxu0 %v8973
          %9024 = vmatprep.subr.mxu0 0.0
          %9025 = vmatpush1.msra.mxu0 %v8974
          %9026 = vmatprep.subr.mxu0 0.0
          %9027 = vmatpush1.msra.mxu0 %v8975
          %9028 = vmatprep.subr.mxu0 0.0
          %9029 = vmatpush1.msra.mxu0 %v8976
          %9030 = vmatprep.subr.mxu0 0.0
          %9031 = vmatpush1.msra.mxu0 %v8977
          %9032 = vmatprep.subr.mxu0 0.0
          %9033 = vmatpush1.msra.mxu0 %v8978
          %9034 = vmatprep.subr.mxu0 0.0
          %9035 = vmatpush1.msra.mxu0 %v8979
          %9036 = vmatprep.subr.mxu0 0.0
          %9037 = vmatpush1.msra.mxu0 %v8980
          %9038 = vmatprep.subr.mxu0 0.0
          %9039 = vmatpush1.msra.mxu0 %v8981
          %9040 = vmatprep.subr.mxu0 0.0
          %9041 = vmatpush1.msra.mxu0 %v8982
          %9042 = vmatprep.subr.mxu0 0.0
          %9043 = vmatpush1.msra.mxu0 %v8983
          %9044 = vmatprep.subr.mxu0 0.0
          %9045 = vmatpush1.msra.mxu0 %v8984
          %9046 = vmatprep.subr.mxu0 0.0
          %9047 = vmatpush1.msra.mxu0 %v8985
          %9048 = vmatprep.subr.mxu0 0.0
          %9049 = vmatpush1.msra.mxu0 %v8986
          %9050 = vmatprep.subr.mxu0 0.0
          %9051 = vmatpush1.msra.mxu0 %v8987
          %9052 = vmatprep.subr.mxu0 0.0
          %9053 = vmatpush1.msra.mxu0 %v8988
          %9054 = vmatprep.subr.mxu0 0.0
          %9055 = vmatpush1.msra.mxu0 %v8989
          %9056 = vmatprep.subr.mxu0 0.0
          %9057 = vmatpush1.msra.mxu0 %v8990
          %9058 = vmatprep.subr.mxu0 0.0
          %9059 = vmatpush1.msra.mxu0 %v8991
          %9060 = vmatprep.subr.mxu0 0.0
          %9061 = vmatpush1.msra.mxu0 %v8992
          %9062 = vmatprep.subr.mxu0 0.0
          %9063 = vmatpush1.msra.mxu0 %v8993
          %9064 = vmatprep.subr.mxu0 0.0
          %9065 = vmatpush1.msra.mxu0 %v8994
          %9066 = vmatprep.mubr.f32.mxu0 %v8962
          %9067 = vmatmul.mubr.f32.gmra.mrb[0].mxu0 %v8961
          %v9068 = vpop.f32.mrb[0].mxu0
          %v9069 = vadd.f32 %v9000, %v9068
          %v9070 = vpop.f32.mrb[0].mxu0
          %9071 = vdwg.mxu0
          %v9072 = vmax.f32 %v9069, 0.0
          %v9073 = vld [vmem:[%s7] sm:$0xff]
          %v9074 = vld [vmem:[%s7 + $0x8] sm:$0xff]
          %v9075 = vld [vmem:[%s7 + $0x10] sm:$0xff]
          %v9076 = vld [vmem:[%s7 + $0x18] sm:$0xff]
          %v9077 = vld [vmem:[%s7 + $0x20] sm:$0xff]
          %v9078 = vld [vmem:[%s7 + $0x28] sm:$0xff]
          %v9079 = vld [vmem:[%s7 + $0x30] sm:$0xff]
          %v9080 = vld [vmem:[%s7 + $0x38] sm:$0xff]
          %v9081 = vld [vmem:[#allocation14] sm:$0x1]
          %v9083 = vlaneseq
          %v9084 = vshrl.u32 %v9083, 7
          %v9085 = vsub.s32 0, %v9084
          %v9086 = vrot.slane %v9081, %v9085
          %vm9088 = vcmask 523264
          %v9090 = vsel %vm9088, %v9072, 0
          %9092 = vmatprep.subr.mxu0 0.0
          %9093 = vmatpush1.msra.mxu0 %v9073
          %9094 = vmatprep.subr.mxu0 0.0
          %9095 = vmatpush1.msra.mxu0 %v9074
          %9096 = vmatprep.subr.mxu0 0.0
          %9097 = vmatpush1.msra.mxu0 %v9075
          %9098 = vmatprep.subr.mxu0 0.0
          %9099 = vmatpush1.msra.mxu0 %v9076
          %9100 = vmatprep.subr.mxu0 0.0
          %9101 = vmatpush1.msra.mxu0 %v9077
          %9102 = vmatprep.subr.mxu0 0.0
          %9103 = vmatpush1.msra.mxu0 %v9078
          %9104 = vmatprep.subr.mxu0 0.0
          %9105 = vmatpush1.msra.mxu0 %v9079
          %9106 = vmatprep.subr.mxu0 0.0
          %9107 = vmatpush1.msra.mxu0 %v9080
          %9108 = vmatprep.subr.mxu0 0.0
          %9109 = vmatpush1.msra.mxu0 0.0
          %9110 = vmatprep.subr.mxu0 0.0
          %9111 = vmatpush1.msra.mxu0 0.0
          %9112 = vmatprep.subr.mxu0 0.0
          %9113 = vmatpush1.msra.mxu0 0.0
          %9114 = vmatprep.subr.mxu0 0.0
          %9115 = vmatpush1.msra.mxu0 0.0
          %9116 = vmatprep.subr.mxu0 0.0
          %9117 = vmatpush1.msra.mxu0 0.0
          %9118 = vmatprep.subr.mxu0 0.0
          %9119 = vmatpush1.msra.mxu0 0.0
          %9120 = vmatprep.subr.mxu0 0.0
          %9121 = vmatpush1.msra.mxu0 0.0
          %9122 = vmatprep.subr.mxu0 0.0
          %9123 = vmatpush1.msra.mxu0 0.0
          %9124 = vmatprep.subr.mxu0 0.0
          %9125 = vmatpush1.msra.mxu0 0.0
          %9126 = vmatprep.subr.mxu0 0.0
          %9127 = vmatpush1.msra.mxu0 0.0
          %9128 = vmatprep.subr.mxu0 0.0
          %9129 = vmatpush1.msra.mxu0 0.0
          %9130 = vmatprep.subr.mxu0 0.0
          %9131 = vmatpush1.msra.mxu0 0.0
          %9132 = vmatprep.subr.mxu0 0.0
          %9133 = vmatpush1.msra.mxu0 0.0
          %9134 = vmatprep.subr.mxu0 0.0
          %9135 = vmatpush1.msra.mxu0 0.0
          %9136 = vmatprep.subr.mxu0 0.0
          %9137 = vmatpush1.msra.mxu0 0.0
          %9138 = vmatprep.subr.mxu0 0.0
          %9139 = vmatpush1.msra.mxu0 0.0
          %9140 = vmatprep.subr.mxu0 0.0
          %9141 = vmatpush1.msra.mxu0 0.0
          %9142 = vmatprep.subr.mxu0 0.0
          %9143 = vmatpush1.msra.mxu0 0.0
          %9144 = vmatprep.subr.mxu0 0.0
          %9145 = vmatpush1.msra.mxu0 0.0
          %9146 = vmatprep.subr.mxu0 0.0
          %9147 = vmatpush1.msra.mxu0 0.0
          %9148 = vmatprep.subr.mxu0 0.0
          %9149 = vmatpush1.msra.mxu0 0.0
          %9150 = vmatprep.subr.mxu0 0.0
          %9151 = vmatpush1.msra.mxu0 0.0
          %9152 = vmatprep.subr.mxu0 0.0
          %9153 = vmatpush1.msra.mxu0 0.0
          %9154 = vmatprep.subr.mxu0 0.0
          %9155 = vmatpush1.msra.mxu0 0.0
          %9156 = vmatprep.mubr.f32.mxu0 0.0
          %9157 = vmatmul.mubr.f32.gmra.mrb[0].mxu0 %v9090
          %v9158 = vpop.f32.mrb[0].mxu0
          %v9159 = vadd.f32 %v9086, %v9158
          %v9160 = vpop.f32.mrb[0].mxu0
          %9161 = vdwg.mxu0
          %vm9162 = vcmask 56320
          %9163 = vst.msk [vmem:[#allocation15] sm:$0xff] %vm9162, %v9159
        $region92: #{tpu_custom_call.1} parent=55 // pred_fallthru
          _
        // Predicated region
        $region93: #{tpu_custom_call.1} parent=55 // pred_check
          %p9164 = pneg %p234
        $region94: #{tpu_custom_call.1} parent=55 // pred_check_branch
          %9166 = sbr.rel (%p9164) target = $region96
        $region95: #{tpu_custom_call.1} parent=55 // pred_region
          %s9168 = ssub.s32 128, 128
          %9169 = vsyncadd [#allocation5], %s9168
          %s9171 = sshll.u32 [#allocation15], 4
          %s9172 = int_to_ptr.vmem [resolvable:$true] %s9171
          %9174 = dma.vmem_to_hbm [thread:$0]  %s9172, 128, %s9, [#allocation5]
        $region96: #{tpu_custom_call.1} parent=55 // pred_fallthru
          _
        // Predicated region
        $region97: #{tpu_custom_call.1} parent=55 // pred_check
          %p9175 = pneg %p234
        $region98: #{tpu_custom_call.1} parent=55 // pred_check_branch
          %9177 = sbr.rel (%p9175) target = $region100
        $region99: #{tpu_custom_call.1} parent=55 // pred_region
          %9178 = dma.done [#allocation5], 128
        $region100: #{tpu_custom_call.1} parent=55 // pred_fallthru
          _
      $region56: #{tpu_custom_call.1} parent=5 // pred_fallthru
        _
      %p9179 = scmp.le.s32.totalorder 2, %s22
      // Predicated region
      $region101: #{tpu_custom_call.1} parent=5 // pred_check
        %p9180 = pneg %p9179
      $region102: #{tpu_custom_call.1} parent=5 // pred_check_branch
        %9182 = sbr.rel (%p9180) target = $region104
      $region103: #{tpu_custom_call.1} parent=5 // pred_region
        %s9183 = ssub.s32 %s22, 2
      $region104: #{tpu_custom_call.1} parent=5 // pred_fallthru
        _
    $region6: #{tpu_custom_call.1} parent=1 // loop_footer
      %s26 = sadd.s32 1, %s22
    $region7: #{tpu_custom_call.1} parent=1 // loop_footer_branch
      %21 = sbr.rel target = $region3
    $region8: #{tpu_custom_call.1} parent=1 // loop_exit
      _
    %9184 = vsyncpa [#allocation4], 1
    %s9185 = scalar_lea.sflag [#allocation4], 1
    %9186 = vsyncpa %s9185, 1
    %9187 = vsyncpa [#allocation7], 1
    %s9188 = scalar_lea.sflag [#allocation7], 1
    %9189 = vsyncpa %s9188, 1
    %9190 = vsyncpa [#allocation10], 1
    %9191 = vsyncpa [#allocation13], 1
    %9192 = vsyncpa [#allocation5], 1
    %s9193 = scalar_lea.sflag [#allocation5], 1
    %9194 = vsyncpa %s9193, 1

</llo_original>
